<compile_context>
chip_gen: v7x
topology: tpu7x:2x2x1
jax: 0.10.0
libtpu: 0.0.40
codegen_flags: <defaults>
</compile_context>

<pallas_src>
import math

import jax
import jax.numpy as jnp
from jax.experimental import pallas as pl
from jax.experimental.pallas import tpu as pltpu


# ----------------------------------------------------------------------------
# Kernel 1: 3x3 "same" conv (9 shifted-window matmuls) + bias, plus per-image
# PARTIAL channel sum / sum-of-squares for the BatchNorm batch statistics.
# One grid step == one image; partial stats go to their own (i)-indexed block,
# so the grid axis is safely "parallel".
# ----------------------------------------------------------------------------
def _conv3x3_stats_kernel(x_ref, w_ref, b_ref, y_ref, sum_ref, sq_ref):
    _, hp, wp, cin = x_ref.shape          # padded image block (1, H+2, W+2, Cin)
    h, w = hp - 2, wp - 2
    cout = w_ref.shape[2]

    acc = jnp.zeros((h * w, cout), jnp.float32)
    for dy in range(3):
        for dx in range(3):
            # shifted (H, W, Cin) window loaded straight from the VMEM block
            win = x_ref[0, dy:dy + h, dx:dx + w, :]
            acc += jnp.dot(win.reshape(h * w, cin), w_ref[dy * 3 + dx],
                           preferred_element_type=jnp.float32)

    y = acc + b_ref[...]                   # (H*W, Cout) + (1, Cout)
    y_ref[0] = y
    sum_ref[0] = jnp.sum(y, axis=0, keepdims=True)
    sq_ref[0] = jnp.sum(y * y, axis=0, keepdims=True)


# ----------------------------------------------------------------------------
# Kernel 2/3: pointwise BN affine (precomputed scale/shift) + ReLU, optionally
# fused with the (pre-scaled) dropout keep mask.  Operates on a lane-dense
# (rows, G*Cout) regrouping of the flattened activations.
# ----------------------------------------------------------------------------
def _bn_relu_dropout_kernel(y_ref, d_ref, scale_ref, shift_ref, o_ref):
    z = y_ref[...] * scale_ref[...] + shift_ref[...]
    o_ref[...] = jnp.maximum(z, 0.0) * d_ref[...]


def _bn_relu_kernel(y_ref, scale_ref, shift_ref, o_ref):
    z = y_ref[...] * scale_ref[...] + shift_ref[...]
    o_ref[...] = jnp.maximum(z, 0.0)


# ----------------------------------------------------------------------------
# Wrappers
# ----------------------------------------------------------------------------
_VMEM_LIMIT = 32 * 1024 * 1024   # stays well inside v7x's 64 MiB physical VMEM


def _conv3x3_stats(x_nhwc, w_oihw, b):
    """x_nhwc: (N, H, W, Cin); w_oihw: (Cout, Cin, 3, 3); b: (Cout,)."""
    n, h, w_, cin = x_nhwc.shape
    cout = w_oihw.shape[0]

    x_pad = jnp.pad(x_nhwc.astype(jnp.float32), ((0, 0), (1, 1), (1, 1), (0, 0)))
    # (Cout, Cin, 3, 3) -> (3, 3, Cin, Cout) -> (9, Cin, Cout)
    w_taps = jnp.transpose(w_oihw.astype(jnp.float32), (2, 3, 1, 0)).reshape(
        9, cin, cout)
    b2 = b.reshape(1, cout).astype(jnp.float32)

    y, csum, csq = pl.pallas_call(
        _conv3x3_stats_kernel,
        out_shape=(
            jax.ShapeDtypeStruct((n, h * w_, cout), jnp.float32),
            jax.ShapeDtypeStruct((n, 1, cout), jnp.float32),   # partial sums
            jax.ShapeDtypeStruct((n, 1, cout), jnp.float32),   # partial sum-sq
        ),
        grid_spec=pltpu.PrefetchScalarGridSpec(
            num_scalar_prefetch=0,
            grid=(n,),
            in_specs=[
                pl.BlockSpec((1, h + 2, w_ + 2, cin), lambda i: (i, 0, 0, 0)),
                pl.BlockSpec((9, cin, cout), lambda i: (0, 0, 0)),
                pl.BlockSpec((1, cout), lambda i: (0, 0)),
            ],
            out_specs=(
                pl.BlockSpec((1, h * w_, cout), lambda i: (i, 0, 0)),
                pl.BlockSpec((1, 1, cout), lambda i: (i, 0, 0)),
                pl.BlockSpec((1, 1, cout), lambda i: (i, 0, 0)),
            ),
        ),
        compiler_params=pltpu.CompilerParams(
            dimension_semantics=("parallel",),
            vmem_limit_bytes=_VMEM_LIMIT,
        ),
    )(x_pad, w_taps, b2)
    return y.reshape(n * h * w_, cout), csum, csq


def _bn_scale_shift(csum, csq, count, gamma, beta, eps):
    """Fold partial batch stats into BN scale/shift (training-mode, biased var)."""
    mean = jnp.sum(csum, axis=0) / count          # (1, Cout)
    ex2 = jnp.sum(csq, axis=0) / count
    var = ex2 - mean * mean
    inv_std = jax.lax.rsqrt(var + eps)
    scale = gamma.reshape(1, -1).astype(jnp.float32) * inv_std
    shift = beta.reshape(1, -1).astype(jnp.float32) - mean * scale
    return scale, shift


def _lane_group(cout, m):
    g = 128 // math.gcd(cout, 128)
    return g if (g > 1 and m % g == 0) else 1


def _pointwise_bn_relu(y_flat, scale, shift, drop=None, *, max_rows=2048):
    """y_flat: (M, Cout). Applies y*scale+shift, ReLU, optional dropout mask."""
    m, cout = y_flat.shape
    g = _lane_group(cout, m)                 # lane-dense regrouping factor
    rows, lanes = m // g, g * cout

    y_g = y_flat.reshape(rows, lanes)
    scale_g = jnp.tile(scale, (1, g))
    shift_g = jnp.tile(shift, (1, g))

    tr = rows
    for cand in (2048, 1024, 512, 256, 128, 64, 32, 16, 8):
        if cand <= min(rows, max_rows) and rows % cand == 0:
            tr = cand
            break
    grid = (rows // tr,)

    row_spec = pl.BlockSpec((tr, lanes), lambda i: (i, 0))
    vec_spec = pl.BlockSpec((1, lanes), lambda i: (0, 0))
    cparams = pltpu.CompilerParams(dimension_semantics=("parallel",),
                                   vmem_limit_bytes=_VMEM_LIMIT)

    if drop is not None:
        out = pl.pallas_call(
            _bn_relu_dropout_kernel,
            out_shape=jax.ShapeDtypeStruct((rows, lanes), jnp.float32),
            grid_spec=pltpu.PrefetchScalarGridSpec(
                num_scalar_prefetch=0, grid=grid,
                in_specs=[row_spec, row_spec, vec_spec, vec_spec],
                out_specs=row_spec,
            ),
            compiler_params=cparams,
        )(y_g, drop.reshape(rows, lanes), scale_g, shift_g)
    else:
        out = pl.pallas_call(
            _bn_relu_kernel,
            out_shape=jax.ShapeDtypeStruct((rows, lanes), jnp.float32),
            grid_spec=pltpu.PrefetchScalarGridSpec(
                num_scalar_prefetch=0, grid=grid,
                in_specs=[row_spec, vec_spec, vec_spec],
                out_specs=row_spec,
            ),
            compiler_params=cparams,
        )(y_g, scale_g, shift_g)
    return out.reshape(m, cout)


def conv_block_forward(x, w1, b1, gamma1, beta1, w2, b2, gamma2, beta2,
                       drop_keep, *, eps=1e-5, drop_p=0.5):
    """x: (N, Cin, H, W) NCHW.  drop_keep: (N, H, W, Cout) {0,1} keep mask."""
    n, cin, h, w_ = x.shape
    cout = w1.shape[0]
    m = n * h * w_

    x_nhwc = jnp.transpose(x, (0, 2, 3, 1))

    # ---- conv1 + partial BN stats -> fold stats -> BN + ReLU + dropout -----
    y1, s1, q1 = _conv3x3_stats(x_nhwc, w1, b1)
    scale1, shift1 = _bn_scale_shift(s1, q1, float(m), gamma1, beta1, eps)
    # TODO(synk): dropout keep-mask is generated in glue (deterministic) and
    # streamed in; an in-kernel pltpu.prng_random_bits mask would remove this
    # HBM read but can't be bit-matched against a pure-JAX reference.
    drop = drop_keep.reshape(m, cout).astype(jnp.float32) / (1.0 - drop_p)
    z1 = _pointwise_bn_relu(y1, scale1, shift1, drop)

    # ---- conv2 + partial BN stats -> fold stats -> BN + ReLU ----------------
    y2, s2, q2 = _conv3x3_stats(z1.reshape(n, h, w_, cout), w2, b2)
    scale2, shift2 = _bn_scale_shift(s2, q2, float(m), gamma2, beta2, eps)
    out_flat = _pointwise_bn_relu(y2, scale2, shift2, None)

    return jnp.transpose(out_flat.reshape(n, h, w_, cout), (0, 3, 1, 2))


# ----------------------------------------------------------------------------
# Pure-JAX reference mirroring the PyTorch forward (train-mode BN + dropout)
# ----------------------------------------------------------------------------
def reference_forward(x, w1, b1, gamma1, beta1, w2, b2, gamma2, beta2,
                      drop_keep, *, eps=1e-5, drop_p=0.5):
    def conv(xin, w, b):
        y = jax.lax.conv_general_dilated(
            xin, w, window_strides=(1, 1), padding=((1, 1), (1, 1)),
            dimension_numbers=("NCHW", "OIHW", "NCHW"))
        return y + b[None, :, None, None]

    def bn_relu(y, gamma, beta):
        mean = y.mean(axis=(0, 2, 3), keepdims=True)
        var = y.var(axis=(0, 2, 3), keepdims=True)          # biased batch var
        y = (y - mean) * jax.lax.rsqrt(var + eps)
        y = y * gamma[None, :, None, None] + beta[None, :, None, None]
        return jnp.maximum(y, 0.0)

    y = bn_relu(conv(x, w1, b1), gamma1, beta1)
    y = y * jnp.transpose(drop_keep, (0, 3, 1, 2)).astype(jnp.float32) / (1.0 - drop_p)
    y = bn_relu(conv(y, w2, b2), gamma2, beta2)
    return y


if __name__ == "__main__":
    key = jax.random.PRNGKey(0)
    (k_x, k_w1, k_b1, k_g1, k_be1,
     k_w2, k_b2, k_g2, k_be2, k_d) = jax.random.split(key, 10)

    n, cin, h, w_ = 2, 4, 16, 16
    cout = 8

    x = jax.random.normal(k_x, (n, cin, h, w_), dtype=jnp.float32)

    w1 = jax.random.normal(k_w1, (cout, cin, 3, 3), dtype=jnp.float32) * 0.2
    b1 = jax.random.normal(k_b1, (cout,), dtype=jnp.float32) * 0.1
    gamma1 = 1.0 + 0.1 * jax.random.normal(k_g1, (cout,), dtype=jnp.float32)
    beta1 = 0.1 * jax.random.normal(k_be1, (cout,), dtype=jnp.float32)

    w2 = jax.random.normal(k_w2, (cout, cout, 3, 3), dtype=jnp.float32) * 0.2
    b2 = jax.random.normal(k_b2, (cout,), dtype=jnp.float32) * 0.1
    gamma2 = 1.0 + 0.1 * jax.random.normal(k_g2, (cout,), dtype=jnp.float32)
    beta2 = 0.1 * jax.random.normal(k_be2, (cout,), dtype=jnp.float32)

    # deterministic Dropout(0.5) keep-mask (training mode), channels-last
    drop_keep = jax.random.bernoulli(k_d, 0.5, (n, h, w_, cout))

    fwd = jax.jit(conv_block_forward)
    out = fwd(x, w1, b1, gamma1, beta1, w2, b2, gamma2, beta2, drop_keep)
    out = jax.block_until_ready(out)

    ref = reference_forward(x, w1, b1, gamma1, beta1, w2, b2, gamma2, beta2,
                            drop_keep)
    assert out.shape == (n, cout, h, w_), out.shape
    max_err = float(jnp.max(jnp.abs(out - ref)))
    assert jnp.allclose(out, ref, atol=1e-3, rtol=1e-3), max_err

    print("KERNEL_OK")
</pallas_src>

<mosaic_0001>
module attributes {stable_mosaic.version = 11 : i64} {
  func.func @_conv3x3_stats_kernel(%arg0: i32, %arg1: memref<1x18x18x4xf32, #tpu.memory_space<vmem>>, %arg2: memref<9x4x8xf32, #tpu.memory_space<vmem>>, %arg3: memref<1x8xf32, #tpu.memory_space<vmem>>, %arg4: memref<1x256x8xf32, #tpu.memory_space<vmem>>, %arg5: memref<1x1x8xf32, #tpu.memory_space<vmem>>, %arg6: memref<1x1x8xf32, #tpu.memory_space<vmem>>) attributes {dimension_semantics = [#tpu.dimension_semantics<parallel>], iteration_bounds = array<i64: 2>, scalar_prefetch = 0 : i64, scratch_operands = 0 : i64, tpu.core_type = #tpu.core_type<tc>, window_params = [{transform_indices = @transform_0, window_bounds = array<i64: 1, 18, 18, 4>}, {pipeline_mode = #tpu.pipeline_mode<synchronous>, transform_indices = @transform_1, window_bounds = array<i64: 9, 4, 8>}, {pipeline_mode = #tpu.pipeline_mode<synchronous>, transform_indices = @transform_2, window_bounds = array<i64: 1, 8>}, {transform_indices = @transform_3, window_bounds = array<i64: 1, 256, 8>}, {transform_indices = @transform_4, window_bounds = array<i64: 1, 1, 8>}, {transform_indices = @transform_5, window_bounds = array<i64: 1, 1, 8>}]} {
    %cst = arith.constant 0.000000e+00 : f32
    %0 = vector.broadcast %cst : f32 to vector<256x8xf32>
    %c0 = arith.constant 0 : index
    %c0_0 = arith.constant 0 : index
    %c0_1 = arith.constant 0 : index
    %c0_2 = arith.constant 0 : index
    %1 = vector.load %arg1[%c0, %c0_0, %c0_1, %c0_2] : memref<1x18x18x4xf32, #tpu.memory_space<vmem>>, vector<1x16x16x4xf32>
    %2 = vector.shape_cast %1 : vector<1x16x16x4xf32> to vector<16x16x4xf32>
    %3 = vector.shape_cast %2 : vector<16x16x4xf32> to vector<256x4xf32>
    %c0_3 = arith.constant 0 : index
    %c0_4 = arith.constant 0 : index
    %c0_5 = arith.constant 0 : index
    %4 = vector.load %arg2[%c0_3, %c0_4, %c0_5] : memref<9x4x8xf32, #tpu.memory_space<vmem>>, vector<1x4x8xf32>
    %5 = vector.shape_cast %4 : vector<1x4x8xf32> to vector<4x8xf32>
    %cst_6 = arith.constant dense<0.000000e+00> : vector<256x8xf32>
    %6 = tpu.matmul %3, %5, %cst_6 {dimension_numbers = #tpu.dot_dimension_numbers<[1], [0], [0], [1], [0, 0, 1, 1], [], []>} : vector<256x4xf32>, vector<4x8xf32>, vector<256x8xf32> -> vector<256x8xf32>
    %7 = arith.addf %0, %6 : vector<256x8xf32>
    %c0_7 = arith.constant 0 : index
    %c0_8 = arith.constant 0 : index
    %c1 = arith.constant 1 : index
    %c0_9 = arith.constant 0 : index
    %8 = vector.load %arg1[%c0_7, %c0_8, %c1, %c0_9] : memref<1x18x18x4xf32, #tpu.memory_space<vmem>>, vector<1x16x16x4xf32>
    %9 = vector.shape_cast %8 : vector<1x16x16x4xf32> to vector<16x16x4xf32>
    %10 = vector.shape_cast %9 : vector<16x16x4xf32> to vector<256x4xf32>
    %c1_10 = arith.constant 1 : index
    %c0_11 = arith.constant 0 : index
    %c0_12 = arith.constant 0 : index
    %11 = vector.load %arg2[%c1_10, %c0_11, %c0_12] : memref<9x4x8xf32, #tpu.memory_space<vmem>>, vector<1x4x8xf32>
    %12 = vector.shape_cast %11 : vector<1x4x8xf32> to vector<4x8xf32>
    %cst_13 = arith.constant dense<0.000000e+00> : vector<256x8xf32>
    %13 = tpu.matmul %10, %12, %cst_13 {dimension_numbers = #tpu.dot_dimension_numbers<[1], [0], [0], [1], [0, 0, 1, 1], [], []>} : vector<256x4xf32>, vector<4x8xf32>, vector<256x8xf32> -> vector<256x8xf32>
    %14 = arith.addf %7, %13 : vector<256x8xf32>
    %c0_14 = arith.constant 0 : index
    %c0_15 = arith.constant 0 : index
    %c2 = arith.constant 2 : index
    %c0_16 = arith.constant 0 : index
    %15 = vector.load %arg1[%c0_14, %c0_15, %c2, %c0_16] : memref<1x18x18x4xf32, #tpu.memory_space<vmem>>, vector<1x16x16x4xf32>
    %16 = vector.shape_cast %15 : vector<1x16x16x4xf32> to vector<16x16x4xf32>
    %17 = vector.shape_cast %16 : vector<16x16x4xf32> to vector<256x4xf32>
    %c2_17 = arith.constant 2 : index
    %c0_18 = arith.constant 0 : index
    %c0_19 = arith.constant 0 : index
    %18 = vector.load %arg2[%c2_17, %c0_18, %c0_19] : memref<9x4x8xf32, #tpu.memory_space<vmem>>, vector<1x4x8xf32>
    %19 = vector.shape_cast %18 : vector<1x4x8xf32> to vector<4x8xf32>
    %cst_20 = arith.constant dense<0.000000e+00> : vector<256x8xf32>
    %20 = tpu.matmul %17, %19, %cst_20 {dimension_numbers = #tpu.dot_dimension_numbers<[1], [0], [0], [1], [0, 0, 1, 1], [], []>} : vector<256x4xf32>, vector<4x8xf32>, vector<256x8xf32> -> vector<256x8xf32>
    %21 = arith.addf %14, %20 : vector<256x8xf32>
    %c0_21 = arith.constant 0 : index
    %c1_22 = arith.constant 1 : index
    %c0_23 = arith.constant 0 : index
    %c0_24 = arith.constant 0 : index
    %22 = vector.load %arg1[%c0_21, %c1_22, %c0_23, %c0_24] : memref<1x18x18x4xf32, #tpu.memory_space<vmem>>, vector<1x16x16x4xf32>
    %23 = vector.shape_cast %22 : vector<1x16x16x4xf32> to vector<16x16x4xf32>
    %24 = vector.shape_cast %23 : vector<16x16x4xf32> to vector<256x4xf32>
    %c3 = arith.constant 3 : index
    %c0_25 = arith.constant 0 : index
    %c0_26 = arith.constant 0 : index
    %25 = vector.load %arg2[%c3, %c0_25, %c0_26] : memref<9x4x8xf32, #tpu.memory_space<vmem>>, vector<1x4x8xf32>
    %26 = vector.shape_cast %25 : vector<1x4x8xf32> to vector<4x8xf32>
    %cst_27 = arith.constant dense<0.000000e+00> : vector<256x8xf32>
    %27 = tpu.matmul %24, %26, %cst_27 {dimension_numbers = #tpu.dot_dimension_numbers<[1], [0], [0], [1], [0, 0, 1, 1], [], []>} : vector<256x4xf32>, vector<4x8xf32>, vector<256x8xf32> -> vector<256x8xf32>
    %28 = arith.addf %21, %27 : vector<256x8xf32>
    %c0_28 = arith.constant 0 : index
    %c1_29 = arith.constant 1 : index
    %c1_30 = arith.constant 1 : index
    %c0_31 = arith.constant 0 : index
    %29 = vector.load %arg1[%c0_28, %c1_29, %c1_30, %c0_31] : memref<1x18x18x4xf32, #tpu.memory_space<vmem>>, vector<1x16x16x4xf32>
    %30 = vector.shape_cast %29 : vector<1x16x16x4xf32> to vector<16x16x4xf32>
    %31 = vector.shape_cast %30 : vector<16x16x4xf32> to vector<256x4xf32>
    %c4 = arith.constant 4 : index
    %c0_32 = arith.constant 0 : index
    %c0_33 = arith.constant 0 : index
    %32 = vector.load %arg2[%c4, %c0_32, %c0_33] : memref<9x4x8xf32, #tpu.memory_space<vmem>>, vector<1x4x8xf32>
    %33 = vector.shape_cast %32 : vector<1x4x8xf32> to vector<4x8xf32>
    %cst_34 = arith.constant dense<0.000000e+00> : vector<256x8xf32>
    %34 = tpu.matmul %31, %33, %cst_34 {dimension_numbers = #tpu.dot_dimension_numbers<[1], [0], [0], [1], [0, 0, 1, 1], [], []>} : vector<256x4xf32>, vector<4x8xf32>, vector<256x8xf32> -> vector<256x8xf32>
    %35 = arith.addf %28, %34 : vector<256x8xf32>
    %c0_35 = arith.constant 0 : index
    %c1_36 = arith.constant 1 : index
    %c2_37 = arith.constant 2 : index
    %c0_38 = arith.constant 0 : index
    %36 = vector.load %arg1[%c0_35, %c1_36, %c2_37, %c0_38] : memref<1x18x18x4xf32, #tpu.memory_space<vmem>>, vector<1x16x16x4xf32>
    %37 = vector.shape_cast %36 : vector<1x16x16x4xf32> to vector<16x16x4xf32>
    %38 = vector.shape_cast %37 : vector<16x16x4xf32> to vector<256x4xf32>
    %c5 = arith.constant 5 : index
    %c0_39 = arith.constant 0 : index
    %c0_40 = arith.constant 0 : index
    %39 = vector.load %arg2[%c5, %c0_39, %c0_40] : memref<9x4x8xf32, #tpu.memory_space<vmem>>, vector<1x4x8xf32>
    %40 = vector.shape_cast %39 : vector<1x4x8xf32> to vector<4x8xf32>
    %cst_41 = arith.constant dense<0.000000e+00> : vector<256x8xf32>
    %41 = tpu.matmul %38, %40, %cst_41 {dimension_numbers = #tpu.dot_dimension_numbers<[1], [0], [0], [1], [0, 0, 1, 1], [], []>} : vector<256x4xf32>, vector<4x8xf32>, vector<256x8xf32> -> vector<256x8xf32>
    %42 = arith.addf %35, %41 : vector<256x8xf32>
    %c0_42 = arith.constant 0 : index
    %c2_43 = arith.constant 2 : index
    %c0_44 = arith.constant 0 : index
    %c0_45 = arith.constant 0 : index
    %43 = vector.load %arg1[%c0_42, %c2_43, %c0_44, %c0_45] : memref<1x18x18x4xf32, #tpu.memory_space<vmem>>, vector<1x16x16x4xf32>
    %44 = vector.shape_cast %43 : vector<1x16x16x4xf32> to vector<16x16x4xf32>
    %45 = vector.shape_cast %44 : vector<16x16x4xf32> to vector<256x4xf32>
    %c6 = arith.constant 6 : index
    %c0_46 = arith.constant 0 : index
    %c0_47 = arith.constant 0 : index
    %46 = vector.load %arg2[%c6, %c0_46, %c0_47] : memref<9x4x8xf32, #tpu.memory_space<vmem>>, vector<1x4x8xf32>
    %47 = vector.shape_cast %46 : vector<1x4x8xf32> to vector<4x8xf32>
    %cst_48 = arith.constant dense<0.000000e+00> : vector<256x8xf32>
    %48 = tpu.matmul %45, %47, %cst_48 {dimension_numbers = #tpu.dot_dimension_numbers<[1], [0], [0], [1], [0, 0, 1, 1], [], []>} : vector<256x4xf32>, vector<4x8xf32>, vector<256x8xf32> -> vector<256x8xf32>
    %49 = arith.addf %42, %48 : vector<256x8xf32>
    %c0_49 = arith.constant 0 : index
    %c2_50 = arith.constant 2 : index
    %c1_51 = arith.constant 1 : index
    %c0_52 = arith.constant 0 : index
    %50 = vector.load %arg1[%c0_49, %c2_50, %c1_51, %c0_52] : memref<1x18x18x4xf32, #tpu.memory_space<vmem>>, vector<1x16x16x4xf32>
    %51 = vector.shape_cast %50 : vector<1x16x16x4xf32> to vector<16x16x4xf32>
    %52 = vector.shape_cast %51 : vector<16x16x4xf32> to vector<256x4xf32>
    %c7 = arith.constant 7 : index
    %c0_53 = arith.constant 0 : index
    %c0_54 = arith.constant 0 : index
    %53 = vector.load %arg2[%c7, %c0_53, %c0_54] : memref<9x4x8xf32, #tpu.memory_space<vmem>>, vector<1x4x8xf32>
    %54 = vector.shape_cast %53 : vector<1x4x8xf32> to vector<4x8xf32>
    %cst_55 = arith.constant dense<0.000000e+00> : vector<256x8xf32>
    %55 = tpu.matmul %52, %54, %cst_55 {dimension_numbers = #tpu.dot_dimension_numbers<[1], [0], [0], [1], [0, 0, 1, 1], [], []>} : vector<256x4xf32>, vector<4x8xf32>, vector<256x8xf32> -> vector<256x8xf32>
    %56 = arith.addf %49, %55 : vector<256x8xf32>
    %c0_56 = arith.constant 0 : index
    %c2_57 = arith.constant 2 : index
    %c2_58 = arith.constant 2 : index
    %c0_59 = arith.constant 0 : index
    %57 = vector.load %arg1[%c0_56, %c2_57, %c2_58, %c0_59] : memref<1x18x18x4xf32, #tpu.memory_space<vmem>>, vector<1x16x16x4xf32>
    %58 = vector.shape_cast %57 : vector<1x16x16x4xf32> to vector<16x16x4xf32>
    %59 = vector.shape_cast %58 : vector<16x16x4xf32> to vector<256x4xf32>
    %c8 = arith.constant 8 : index
    %c0_60 = arith.constant 0 : index
    %c0_61 = arith.constant 0 : index
    %60 = vector.load %arg2[%c8, %c0_60, %c0_61] : memref<9x4x8xf32, #tpu.memory_space<vmem>>, vector<1x4x8xf32>
    %61 = vector.shape_cast %60 : vector<1x4x8xf32> to vector<4x8xf32>
    %cst_62 = arith.constant dense<0.000000e+00> : vector<256x8xf32>
    %62 = tpu.matmul %59, %61, %cst_62 {dimension_numbers = #tpu.dot_dimension_numbers<[1], [0], [0], [1], [0, 0, 1, 1], [], []>} : vector<256x4xf32>, vector<4x8xf32>, vector<256x8xf32> -> vector<256x8xf32>
    %63 = arith.addf %56, %62 : vector<256x8xf32>
    %c0_63 = arith.constant 0 : index
    %c0_64 = arith.constant 0 : index
    %64 = vector.load %arg3[%c0_63, %c0_64] : memref<1x8xf32, #tpu.memory_space<vmem>>, vector<1x8xf32>
    %65 = vector.broadcast %64 : vector<1x8xf32> to vector<256x8xf32>
    %66 = arith.addf %63, %65 : vector<256x8xf32>
    %c0_65 = arith.constant 0 : index
    %c0_66 = arith.constant 0 : index
    %c0_67 = arith.constant 0 : index
    %67 = vector.load %arg4[%c0_65, %c0_66, %c0_67] : memref<1x256x8xf32, #tpu.memory_space<vmem>>, vector<1x256x8xf32>
    %68 = vector.shape_cast %67 : vector<1x256x8xf32> to vector<256x8xf32>
    %69 = vector.shape_cast %66 : vector<256x8xf32> to vector<1x256x8xf32>
    tpu.vector_store %arg4[%c0_65, %c0_66, %c0_67], %69 {strides = array<i32>} : memref<1x256x8xf32, #tpu.memory_space<vmem>>, vector<1x256x8xf32>,
    %cst_68 = arith.constant dense<0.000000e+00> : vector<8xf32>
    %70 = vector.multi_reduction <add>, %66, %cst_68 [0] : vector<256x8xf32> to vector<8xf32>
    %71 = vector.shape_cast %70 : vector<8xf32> to vector<1x8xf32>
    %c0_69 = arith.constant 0 : index
    %c0_70 = arith.constant 0 : index
    %c0_71 = arith.constant 0 : index
    %72 = vector.load %arg5[%c0_69, %c0_70, %c0_71] : memref<1x1x8xf32, #tpu.memory_space<vmem>>, vector<1x1x8xf32>
    %73 = vector.shape_cast %72 : vector<1x1x8xf32> to vector<1x8xf32>
    %74 = vector.shape_cast %71 : vector<1x8xf32> to vector<1x1x8xf32>
    tpu.vector_store %arg5[%c0_69, %c0_70, %c0_71], %74 {strides = array<i32>} : memref<1x1x8xf32, #tpu.memory_space<vmem>>, vector<1x1x8xf32>,
    %75 = arith.mulf %66, %66 : vector<256x8xf32>
    %cst_72 = arith.constant dense<0.000000e+00> : vector<8xf32>
    %76 = vector.multi_reduction <add>, %75, %cst_72 [0] : vector<256x8xf32> to vector<8xf32>
    %77 = vector.shape_cast %76 : vector<8xf32> to vector<1x8xf32>
    %c0_73 = arith.constant 0 : index
    %c0_74 = arith.constant 0 : index
    %c0_75 = arith.constant 0 : index
    %78 = vector.load %arg6[%c0_73, %c0_74, %c0_75] : memref<1x1x8xf32, #tpu.memory_space<vmem>>, vector<1x1x8xf32>
    %79 = vector.shape_cast %78 : vector<1x1x8xf32> to vector<1x8xf32>
    %80 = vector.shape_cast %77 : vector<1x8xf32> to vector<1x1x8xf32>
    tpu.vector_store %arg6[%c0_73, %c0_74, %c0_75], %80 {strides = array<i32>} : memref<1x1x8xf32, #tpu.memory_space<vmem>>, vector<1x1x8xf32>,
    return
  }
  func.func @transform_0(%arg0: i32) -> (i32, i32, i32, i32) {
    %c0_i32 = arith.constant 0 : i32
    %c0_i32_0 = arith.constant 0 : i32
    %c0_i32_1 = arith.constant 0 : i32
    %c0_i32_2 = arith.constant 0 : i32
    return %arg0, %c0_i32, %c0_i32_0, %c0_i32_1 : i32, i32, i32, i32
  }
  func.func @transform_1(%arg0: i32) -> (i32, i32, i32) {
    %c0_i32 = arith.constant 0 : i32
    %c0_i32_0 = arith.constant 0 : i32
    %c0_i32_1 = arith.constant 0 : i32
    %c0_i32_2 = arith.constant 0 : i32
    return %c0_i32, %c0_i32_0, %c0_i32_1 : i32, i32, i32
  }
  func.func @transform_2(%arg0: i32) -> (i32, i32) {
    %c0_i32 = arith.constant 0 : i32
    %c0_i32_0 = arith.constant 0 : i32
    %c0_i32_1 = arith.constant 0 : i32
    return %c0_i32, %c0_i32_0 : i32, i32
  }
  func.func @transform_3(%arg0: i32) -> (i32, i32, i32) {
    %c0_i32 = arith.constant 0 : i32
    %c0_i32_0 = arith.constant 0 : i32
    %c0_i32_1 = arith.constant 0 : i32
    return %arg0, %c0_i32, %c0_i32_0 : i32, i32, i32
  }
  func.func @transform_4(%arg0: i32) -> (i32, i32, i32) {
    %c0_i32 = arith.constant 0 : i32
    %c0_i32_0 = arith.constant 0 : i32
    %c0_i32_1 = arith.constant 0 : i32
    return %arg0, %c0_i32, %c0_i32_0 : i32, i32, i32
  }
  func.func @transform_5(%arg0: i32) -> (i32, i32, i32) {
    %c0_i32 = arith.constant 0 : i32
    %c0_i32_0 = arith.constant 0 : i32
    %c0_i32_1 = arith.constant 0 : i32
    return %arg0, %c0_i32, %c0_i32_0 : i32, i32, i32
  }
}

module attributes {stable_mosaic.version = 11 : i64} {
  func.func @_bn_relu_dropout_kernel(%arg0: i32, %arg1: memref<32x128xf32, #tpu.memory_space<vmem>>, %arg2: memref<32x128xf32, #tpu.memory_space<vmem>>, %arg3: memref<1x128xf32, #tpu.memory_space<vmem>>, %arg4: memref<1x128xf32, #tpu.memory_space<vmem>>, %arg5: memref<32x128xf32, #tpu.memory_space<vmem>>) attributes {dimension_semantics = [#tpu.dimension_semantics<parallel>], iteration_bounds = array<i64: 1>, scalar_prefetch = 0 : i64, scratch_operands = 0 : i64, tpu.core_type = #tpu.core_type<tc>, window_params = [{transform_indices = @transform_0, window_bounds = array<i64: 32, 128>}, {transform_indices = @transform_1, window_bounds = array<i64: 32, 128>}, {pipeline_mode = #tpu.pipeline_mode<synchronous>, transform_indices = @transform_2, window_bounds = array<i64: 1, 128>}, {pipeline_mode = #tpu.pipeline_mode<synchronous>, transform_indices = @transform_3, window_bounds = array<i64: 1, 128>}, {transform_indices = @transform_4, window_bounds = array<i64: 32, 128>}]} {
    %c0 = arith.constant 0 : index
    %c0_0 = arith.constant 0 : index
    %0 = vector.load %arg1[%c0, %c0_0] : memref<32x128xf32, #tpu.memory_space<vmem>>, vector<32x128xf32>
    %c0_1 = arith.constant 0 : index
    %c0_2 = arith.constant 0 : index
    %1 = vector.load %arg3[%c0_1, %c0_2] : memref<1x128xf32, #tpu.memory_space<vmem>>, vector<1x128xf32>
    %2 = vector.broadcast %1 : vector<1x128xf32> to vector<32x128xf32>
    %3 = arith.mulf %0, %2 : vector<32x128xf32>
    %c0_3 = arith.constant 0 : index
    %c0_4 = arith.constant 0 : index
    %4 = vector.load %arg4[%c0_3, %c0_4] : memref<1x128xf32, #tpu.memory_space<vmem>>, vector<1x128xf32>
    %5 = vector.broadcast %4 : vector<1x128xf32> to vector<32x128xf32>
    %6 = arith.addf %3, %5 : vector<32x128xf32>
    %cst = arith.constant 0.000000e+00 : f32
    %7 = vector.broadcast %cst : f32 to vector<32x128xf32>
    %8 = arith.maximumf %6, %7 : vector<32x128xf32>
    %c0_5 = arith.constant 0 : index
    %c0_6 = arith.constant 0 : index
    %9 = vector.load %arg2[%c0_5, %c0_6] : memref<32x128xf32, #tpu.memory_space<vmem>>, vector<32x128xf32>
    %10 = arith.mulf %8, %9 : vector<32x128xf32>
    %c0_7 = arith.constant 0 : index
    %c0_8 = arith.constant 0 : index
    %11 = vector.load %arg5[%c0_7, %c0_8] : memref<32x128xf32, #tpu.memory_space<vmem>>, vector<32x128xf32>
    tpu.vector_store %arg5[%c0_7, %c0_8], %10 {strides = array<i32>} : memref<32x128xf32, #tpu.memory_space<vmem>>, vector<32x128xf32>,
    return
  }
  func.func @transform_0(%arg0: i32) -> (i32, i32) {
    %c0_i32 = arith.constant 0 : i32
    %c0_i32_0 = arith.constant 0 : i32
    return %arg0, %c0_i32 : i32, i32
  }
  func.func @transform_1(%arg0: i32) -> (i32, i32) {
    %c0_i32 = arith.constant 0 : i32
    %c0_i32_0 = arith.constant 0 : i32
    return %arg0, %c0_i32 : i32, i32
  }
  func.func @transform_2(%arg0: i32) -> (i32, i32) {
    %c0_i32 = arith.constant 0 : i32
    %c0_i32_0 = arith.constant 0 : i32
    %c0_i32_1 = arith.constant 0 : i32
    return %c0_i32, %c0_i32_0 : i32, i32
  }
  func.func @transform_3(%arg0: i32) -> (i32, i32) {
    %c0_i32 = arith.constant 0 : i32
    %c0_i32_0 = arith.constant 0 : i32
    %c0_i32_1 = arith.constant 0 : i32
    return %c0_i32, %c0_i32_0 : i32, i32
  }
  func.func @transform_4(%arg0: i32) -> (i32, i32) {
    %c0_i32 = arith.constant 0 : i32
    %c0_i32_0 = arith.constant 0 : i32
    return %arg0, %c0_i32 : i32, i32
  }
}

module attributes {stable_mosaic.version = 11 : i64} {
  func.func @_bn_relu_kernel(%arg0: i32, %arg1: memref<32x128xf32, #tpu.memory_space<vmem>>, %arg2: memref<1x128xf32, #tpu.memory_space<vmem>>, %arg3: memref<1x128xf32, #tpu.memory_space<vmem>>, %arg4: memref<32x128xf32, #tpu.memory_space<vmem>>) attributes {dimension_semantics = [#tpu.dimension_semantics<parallel>], iteration_bounds = array<i64: 1>, scalar_prefetch = 0 : i64, scratch_operands = 0 : i64, tpu.core_type = #tpu.core_type<tc>, window_params = [{transform_indices = @transform_0, window_bounds = array<i64: 32, 128>}, {pipeline_mode = #tpu.pipeline_mode<synchronous>, transform_indices = @transform_1, window_bounds = array<i64: 1, 128>}, {pipeline_mode = #tpu.pipeline_mode<synchronous>, transform_indices = @transform_2, window_bounds = array<i64: 1, 128>}, {transform_indices = @transform_3, window_bounds = array<i64: 32, 128>}]} {
    %c0 = arith.constant 0 : index
    %c0_0 = arith.constant 0 : index
    %0 = vector.load %arg1[%c0, %c0_0] : memref<32x128xf32, #tpu.memory_space<vmem>>, vector<32x128xf32>
    %c0_1 = arith.constant 0 : index
    %c0_2 = arith.constant 0 : index
    %1 = vector.load %arg2[%c0_1, %c0_2] : memref<1x128xf32, #tpu.memory_space<vmem>>, vector<1x128xf32>
    %2 = vector.broadcast %1 : vector<1x128xf32> to vector<32x128xf32>
    %3 = arith.mulf %0, %2 : vector<32x128xf32>
    %c0_3 = arith.constant 0 : index
    %c0_4 = arith.constant 0 : index
    %4 = vector.load %arg3[%c0_3, %c0_4] : memref<1x128xf32, #tpu.memory_space<vmem>>, vector<1x128xf32>
    %5 = vector.broadcast %4 : vector<1x128xf32> to vector<32x128xf32>
    %6 = arith.addf %3, %5 : vector<32x128xf32>
    %cst = arith.constant 0.000000e+00 : f32
    %7 = vector.broadcast %cst : f32 to vector<32x128xf32>
    %8 = arith.maximumf %6, %7 : vector<32x128xf32>
    %c0_5 = arith.constant 0 : index
    %c0_6 = arith.constant 0 : index
    %9 = vector.load %arg4[%c0_5, %c0_6] : memref<32x128xf32, #tpu.memory_space<vmem>>, vector<32x128xf32>
    tpu.vector_store %arg4[%c0_5, %c0_6], %8 {strides = array<i32>} : memref<32x128xf32, #tpu.memory_space<vmem>>, vector<32x128xf32>,
    return
  }
  func.func @transform_0(%arg0: i32) -> (i32, i32) {
    %c0_i32 = arith.constant 0 : i32
    %c0_i32_0 = arith.constant 0 : i32
    return %arg0, %c0_i32 : i32, i32
  }
  func.func @transform_1(%arg0: i32) -> (i32, i32) {
    %c0_i32 = arith.constant 0 : i32
    %c0_i32_0 = arith.constant 0 : i32
    %c0_i32_1 = arith.constant 0 : i32
    return %c0_i32, %c0_i32_0 : i32, i32
  }
  func.func @transform_2(%arg0: i32) -> (i32, i32) {
    %c0_i32 = arith.constant 0 : i32
    %c0_i32_0 = arith.constant 0 : i32
    %c0_i32_1 = arith.constant 0 : i32
    return %c0_i32, %c0_i32_0 : i32, i32
  }
  func.func @transform_3(%arg0: i32) -> (i32, i32) {
    %c0_i32 = arith.constant 0 : i32
    %c0_i32_0 = arith.constant 0 : i32
    return %arg0, %c0_i32 : i32, i32
  }
}

module attributes {stable_mosaic.version = 11 : i64} {
  func.func @_conv3x3_stats_kernel(%arg0: i32, %arg1: memref<1x18x18x8xf32, #tpu.memory_space<vmem>>, %arg2: memref<9x8x8xf32, #tpu.memory_space<vmem>>, %arg3: memref<1x8xf32, #tpu.memory_space<vmem>>, %arg4: memref<1x256x8xf32, #tpu.memory_space<vmem>>, %arg5: memref<1x1x8xf32, #tpu.memory_space<vmem>>, %arg6: memref<1x1x8xf32, #tpu.memory_space<vmem>>) attributes {dimension_semantics = [#tpu.dimension_semantics<parallel>], iteration_bounds = array<i64: 2>, scalar_prefetch = 0 : i64, scratch_operands = 0 : i64, tpu.core_type = #tpu.core_type<tc>, window_params = [{transform_indices = @transform_0, window_bounds = array<i64: 1, 18, 18, 8>}, {pipeline_mode = #tpu.pipeline_mode<synchronous>, transform_indices = @transform_1, window_bounds = array<i64: 9, 8, 8>}, {pipeline_mode = #tpu.pipeline_mode<synchronous>, transform_indices = @transform_2, window_bounds = array<i64: 1, 8>}, {transform_indices = @transform_3, window_bounds = array<i64: 1, 256, 8>}, {transform_indices = @transform_4, window_bounds = array<i64: 1, 1, 8>}, {transform_indices = @transform_5, window_bounds = array<i64: 1, 1, 8>}]} {
    %cst = arith.constant 0.000000e+00 : f32
    %0 = vector.broadcast %cst : f32 to vector<256x8xf32>
    %c0 = arith.constant 0 : index
    %c0_0 = arith.constant 0 : index
    %c0_1 = arith.constant 0 : index
    %c0_2 = arith.constant 0 : index
    %1 = vector.load %arg1[%c0, %c0_0, %c0_1, %c0_2] : memref<1x18x18x8xf32, #tpu.memory_space<vmem>>, vector<1x16x16x8xf32>
    %2 = vector.shape_cast %1 : vector<1x16x16x8xf32> to vector<16x16x8xf32>
    %3 = vector.shape_cast %2 : vector<16x16x8xf32> to vector<256x8xf32>
    %c0_3 = arith.constant 0 : index
    %c0_4 = arith.constant 0 : index
    %c0_5 = arith.constant 0 : index
    %4 = vector.load %arg2[%c0_3, %c0_4, %c0_5] : memref<9x8x8xf32, #tpu.memory_space<vmem>>, vector<1x8x8xf32>
    %5 = vector.shape_cast %4 : vector<1x8x8xf32> to vector<8x8xf32>
    %cst_6 = arith.constant dense<0.000000e+00> : vector<256x8xf32>
    %6 = tpu.matmul %3, %5, %cst_6 {dimension_numbers = #tpu.dot_dimension_numbers<[1], [0], [0], [1], [0, 0, 1, 1], [], []>} : vector<256x8xf32>, vector<8x8xf32>, vector<256x8xf32> -> vector<256x8xf32>
    %7 = arith.addf %0, %6 : vector<256x8xf32>
    %c0_7 = arith.constant 0 : index
    %c0_8 = arith.constant 0 : index
    %c1 = arith.constant 1 : index
    %c0_9 = arith.constant 0 : index
    %8 = vector.load %arg1[%c0_7, %c0_8, %c1, %c0_9] : memref<1x18x18x8xf32, #tpu.memory_space<vmem>>, vector<1x16x16x8xf32>
    %9 = vector.shape_cast %8 : vector<1x16x16x8xf32> to vector<16x16x8xf32>
    %10 = vector.shape_cast %9 : vector<16x16x8xf32> to vector<256x8xf32>
    %c1_10 = arith.constant 1 : index
    %c0_11 = arith.constant 0 : index
    %c0_12 = arith.constant 0 : index
    %11 = vector.load %arg2[%c1_10, %c0_11, %c0_12] : memref<9x8x8xf32, #tpu.memory_space<vmem>>, vector<1x8x8xf32>
    %12 = vector.shape_cast %11 : vector<1x8x8xf32> to vector<8x8xf32>
    %cst_13 = arith.constant dense<0.000000e+00> : vector<256x8xf32>
    %13 = tpu.matmul %10, %12, %cst_13 {dimension_numbers = #tpu.dot_dimension_numbers<[1], [0], [0], [1], [0, 0, 1, 1], [], []>} : vector<256x8xf32>, vector<8x8xf32>, vector<256x8xf32> -> vector<256x8xf32>
    %14 = arith.addf %7, %13 : vector<256x8xf32>
    %c0_14 = arith.constant 0 : index
    %c0_15 = arith.constant 0 : index
    %c2 = arith.constant 2 : index
    %c0_16 = arith.constant 0 : index
    %15 = vector.load %arg1[%c0_14, %c0_15, %c2, %c0_16] : memref<1x18x18x8xf32, #tpu.memory_space<vmem>>, vector<1x16x16x8xf32>
    %16 = vector.shape_cast %15 : vector<1x16x16x8xf32> to vector<16x16x8xf32>
    %17 = vector.shape_cast %16 : vector<16x16x8xf32> to vector<256x8xf32>
    %c2_17 = arith.constant 2 : index
    %c0_18 = arith.constant 0 : index
    %c0_19 = arith.constant 0 : index
    %18 = vector.load %arg2[%c2_17, %c0_18, %c0_19] : memref<9x8x8xf32, #tpu.memory_space<vmem>>, vector<1x8x8xf32>
    %19 = vector.shape_cast %18 : vector<1x8x8xf32> to vector<8x8xf32>
    %cst_20 = arith.constant dense<0.000000e+00> : vector<256x8xf32>
    %20 = tpu.matmul %17, %19, %cst_20 {dimension_numbers = #tpu.dot_dimension_numbers<[1], [0], [0], [1], [0, 0, 1, 1], [], []>} : vector<256x8xf32>, vector<8x8xf32>, vector<256x8xf32> -> vector<256x8xf32>
    %21 = arith.addf %14, %20 : vector<256x8xf32>
    %c0_21 = arith.constant 0 : index
    %c1_22 = arith.constant 1 : index
    %c0_23 = arith.constant 0 : index
    %c0_24 = arith.constant 0 : index
    %22 = vector.load %arg1[%c0_21, %c1_22, %c0_23, %c0_24] : memref<1x18x18x8xf32, #tpu.memory_space<vmem>>, vector<1x16x16x8xf32>
    %23 = vector.shape_cast %22 : vector<1x16x16x8xf32> to vector<16x16x8xf32>
    %24 = vector.shape_cast %23 : vector<16x16x8xf32> to vector<256x8xf32>
    %c3 = arith.constant 3 : index
    %c0_25 = arith.constant 0 : index
    %c0_26 = arith.constant 0 : index
    %25 = vector.load %arg2[%c3, %c0_25, %c0_26] : memref<9x8x8xf32, #tpu.memory_space<vmem>>, vector<1x8x8xf32>
    %26 = vector.shape_cast %25 : vector<1x8x8xf32> to vector<8x8xf32>
    %cst_27 = arith.constant dense<0.000000e+00> : vector<256x8xf32>
    %27 = tpu.matmul %24, %26, %cst_27 {dimension_numbers = #tpu.dot_dimension_numbers<[1], [0], [0], [1], [0, 0, 1, 1], [], []>} : vector<256x8xf32>, vector<8x8xf32>, vector<256x8xf32> -> vector<256x8xf32>
    %28 = arith.addf %21, %27 : vector<256x8xf32>
    %c0_28 = arith.constant 0 : index
    %c1_29 = arith.constant 1 : index
    %c1_30 = arith.constant 1 : index
    %c0_31 = arith.constant 0 : index
    %29 = vector.load %arg1[%c0_28, %c1_29, %c1_30, %c0_31] : memref<1x18x18x8xf32, #tpu.memory_space<vmem>>, vector<1x16x16x8xf32>
    %30 = vector.shape_cast %29 : vector<1x16x16x8xf32> to vector<16x16x8xf32>
    %31 = vector.shape_cast %30 : vector<16x16x8xf32> to vector<256x8xf32>
    %c4 = arith.constant 4 : index
    %c0_32 = arith.constant 0 : index
    %c0_33 = arith.constant 0 : index
    %32 = vector.load %arg2[%c4, %c0_32, %c0_33] : memref<9x8x8xf32, #tpu.memory_space<vmem>>, vector<1x8x8xf32>
    %33 = vector.shape_cast %32 : vector<1x8x8xf32> to vector<8x8xf32>
    %cst_34 = arith.constant dense<0.000000e+00> : vector<256x8xf32>
    %34 = tpu.matmul %31, %33, %cst_34 {dimension_numbers = #tpu.dot_dimension_numbers<[1], [0], [0], [1], [0, 0, 1, 1], [], []>} : vector<256x8xf32>, vector<8x8xf32>, vector<256x8xf32> -> vector<256x8xf32>
    %35 = arith.addf %28, %34 : vector<256x8xf32>
    %c0_35 = arith.constant 0 : index
    %c1_36 = arith.constant 1 : index
    %c2_37 = arith.constant 2 : index
    %c0_38 = arith.constant 0 : index
    %36 = vector.load %arg1[%c0_35, %c1_36, %c2_37, %c0_38] : memref<1x18x18x8xf32, #tpu.memory_space<vmem>>, vector<1x16x16x8xf32>
    %37 = vector.shape_cast %36 : vector<1x16x16x8xf32> to vector<16x16x8xf32>
    %38 = vector.shape_cast %37 : vector<16x16x8xf32> to vector<256x8xf32>
    %c5 = arith.constant 5 : index
    %c0_39 = arith.constant 0 : index
    %c0_40 = arith.constant 0 : index
    %39 = vector.load %arg2[%c5, %c0_39, %c0_40] : memref<9x8x8xf32, #tpu.memory_space<vmem>>, vector<1x8x8xf32>
    %40 = vector.shape_cast %39 : vector<1x8x8xf32> to vector<8x8xf32>
    %cst_41 = arith.constant dense<0.000000e+00> : vector<256x8xf32>
    %41 = tpu.matmul %38, %40, %cst_41 {dimension_numbers = #tpu.dot_dimension_numbers<[1], [0], [0], [1], [0, 0, 1, 1], [], []>} : vector<256x8xf32>, vector<8x8xf32>, vector<256x8xf32> -> vector<256x8xf32>
    %42 = arith.addf %35, %41 : vector<256x8xf32>
    %c0_42 = arith.constant 0 : index
    %c2_43 = arith.constant 2 : index
    %c0_44 = arith.constant 0 : index
    %c0_45 = arith.constant 0 : index
    %43 = vector.load %arg1[%c0_42, %c2_43, %c0_44, %c0_45] : memref<1x18x18x8xf32, #tpu.memory_space<vmem>>, vector<1x16x16x8xf32>
    %44 = vector.shape_cast %43 : vector<1x16x16x8xf32> to vector<16x16x8xf32>
    %45 = vector.shape_cast %44 : vector<16x16x8xf32> to vector<256x8xf32>
    %c6 = arith.constant 6 : index
    %c0_46 = arith.constant 0 : index
    %c0_47 = arith.constant 0 : index
    %46 = vector.load %arg2[%c6, %c0_46, %c0_47] : memref<9x8x8xf32, #tpu.memory_space<vmem>>, vector<1x8x8xf32>
    %47 = vector.shape_cast %46 : vector<1x8x8xf32> to vector<8x8xf32>
    %cst_48 = arith.constant dense<0.000000e+00> : vector<256x8xf32>
    %48 = tpu.matmul %45, %47, %cst_48 {dimension_numbers = #tpu.dot_dimension_numbers<[1], [0], [0], [1], [0, 0, 1, 1], [], []>} : vector<256x8xf32>, vector<8x8xf32>, vector<256x8xf32> -> vector<256x8xf32>
    %49 = arith.addf %42, %48 : vector<256x8xf32>
    %c0_49 = arith.constant 0 : index
    %c2_50 = arith.constant 2 : index
    %c1_51 = arith.constant 1 : index
    %c0_52 = arith.constant 0 : index
    %50 = vector.load %arg1[%c0_49, %c2_50, %c1_51, %c0_52] : memref<1x18x18x8xf32, #tpu.memory_space<vmem>>, vector<1x16x16x8xf32>
    %51 = vector.shape_cast %50 : vector<1x16x16x8xf32> to vector<16x16x8xf32>
    %52 = vector.shape_cast %51 : vector<16x16x8xf32> to vector<256x8xf32>
    %c7 = arith.constant 7 : index
    %c0_53 = arith.constant 0 : index
    %c0_54 = arith.constant 0 : index
    %53 = vector.load %arg2[%c7, %c0_53, %c0_54] : memref<9x8x8xf32, #tpu.memory_space<vmem>>, vector<1x8x8xf32>
    %54 = vector.shape_cast %53 : vector<1x8x8xf32> to vector<8x8xf32>
    %cst_55 = arith.constant dense<0.000000e+00> : vector<256x8xf32>
    %55 = tpu.matmul %52, %54, %cst_55 {dimension_numbers = #tpu.dot_dimension_numbers<[1], [0], [0], [1], [0, 0, 1, 1], [], []>} : vector<256x8xf32>, vector<8x8xf32>, vector<256x8xf32> -> vector<256x8xf32>
    %56 = arith.addf %49, %55 : vector<256x8xf32>
    %c0_56 = arith.constant 0 : index
    %c2_57 = arith.constant 2 : index
    %c2_58 = arith.constant 2 : index
    %c0_59 = arith.constant 0 : index
    %57 = vector.load %arg1[%c0_56, %c2_57, %c2_58, %c0_59] : memref<1x18x18x8xf32, #tpu.memory_space<vmem>>, vector<1x16x16x8xf32>
    %58 = vector.shape_cast %57 : vector<1x16x16x8xf32> to vector<16x16x8xf32>
    %59 = vector.shape_cast %58 : vector<16x16x8xf32> to vector<256x8xf32>
    %c8 = arith.constant 8 : index
    %c0_60 = arith.constant 0 : index
    %c0_61 = arith.constant 0 : index
    %60 = vector.load %arg2[%c8, %c0_60, %c0_61] : memref<9x8x8xf32, #tpu.memory_space<vmem>>, vector<1x8x8xf32>
    %61 = vector.shape_cast %60 : vector<1x8x8xf32> to vector<8x8xf32>
    %cst_62 = arith.constant dense<0.000000e+00> : vector<256x8xf32>
    %62 = tpu.matmul %59, %61, %cst_62 {dimension_numbers = #tpu.dot_dimension_numbers<[1], [0], [0], [1], [0, 0, 1, 1], [], []>} : vector<256x8xf32>, vector<8x8xf32>, vector<256x8xf32> -> vector<256x8xf32>
    %63 = arith.addf %56, %62 : vector<256x8xf32>
    %c0_63 = arith.constant 0 : index
    %c0_64 = arith.constant 0 : index
    %64 = vector.load %arg3[%c0_63, %c0_64] : memref<1x8xf32, #tpu.memory_space<vmem>>, vector<1x8xf32>
    %65 = vector.broadcast %64 : vector<1x8xf32> to vector<256x8xf32>
    %66 = arith.addf %63, %65 : vector<256x8xf32>
    %c0_65 = arith.constant 0 : index
    %c0_66 = arith.constant 0 : index
    %c0_67 = arith.constant 0 : index
    %67 = vector.load %arg4[%c0_65, %c0_66, %c0_67] : memref<1x256x8xf32, #tpu.memory_space<vmem>>, vector<1x256x8xf32>
    %68 = vector.shape_cast %67 : vector<1x256x8xf32> to vector<256x8xf32>
    %69 = vector.shape_cast %66 : vector<256x8xf32> to vector<1x256x8xf32>
    tpu.vector_store %arg4[%c0_65, %c0_66, %c0_67], %69 {strides = array<i32>} : memref<1x256x8xf32, #tpu.memory_space<vmem>>, vector<1x256x8xf32>,
    %cst_68 = arith.constant dense<0.000000e+00> : vector<8xf32>
    %70 = vector.multi_reduction <add>, %66, %cst_68 [0] : vector<256x8xf32> to vector<8xf32>
    %71 = vector.shape_cast %70 : vector<8xf32> to vector<1x8xf32>
    %c0_69 = arith.constant 0 : index
    %c0_70 = arith.constant 0 : index
    %c0_71 = arith.constant 0 : index
    %72 = vector.load %arg5[%c0_69, %c0_70, %c0_71] : memref<1x1x8xf32, #tpu.memory_space<vmem>>, vector<1x1x8xf32>
    %73 = vector.shape_cast %72 : vector<1x1x8xf32> to vector<1x8xf32>
    %74 = vector.shape_cast %71 : vector<1x8xf32> to vector<1x1x8xf32>
    tpu.vector_store %arg5[%c0_69, %c0_70, %c0_71], %74 {strides = array<i32>} : memref<1x1x8xf32, #tpu.memory_space<vmem>>, vector<1x1x8xf32>,
    %75 = arith.mulf %66, %66 : vector<256x8xf32>
    %cst_72 = arith.constant dense<0.000000e+00> : vector<8xf32>
    %76 = vector.multi_reduction <add>, %75, %cst_72 [0] : vector<256x8xf32> to vector<8xf32>
    %77 = vector.shape_cast %76 : vector<8xf32> to vector<1x8xf32>
    %c0_73 = arith.constant 0 : index
    %c0_74 = arith.constant 0 : index
    %c0_75 = arith.constant 0 : index
    %78 = vector.load %arg6[%c0_73, %c0_74, %c0_75] : memref<1x1x8xf32, #tpu.memory_space<vmem>>, vector<1x1x8xf32>
    %79 = vector.shape_cast %78 : vector<1x1x8xf32> to vector<1x8xf32>
    %80 = vector.shape_cast %77 : vector<1x8xf32> to vector<1x1x8xf32>
    tpu.vector_store %arg6[%c0_73, %c0_74, %c0_75], %80 {strides = array<i32>} : memref<1x1x8xf32, #tpu.memory_space<vmem>>, vector<1x1x8xf32>,
    return
  }
  func.func @transform_0(%arg0: i32) -> (i32, i32, i32, i32) {
    %c0_i32 = arith.constant 0 : i32
    %c0_i32_0 = arith.constant 0 : i32
    %c0_i32_1 = arith.constant 0 : i32
    %c0_i32_2 = arith.constant 0 : i32
    return %arg0, %c0_i32, %c0_i32_0, %c0_i32_1 : i32, i32, i32, i32
  }
  func.func @transform_1(%arg0: i32) -> (i32, i32, i32) {
    %c0_i32 = arith.constant 0 : i32
    %c0_i32_0 = arith.constant 0 : i32
    %c0_i32_1 = arith.constant 0 : i32
    %c0_i32_2 = arith.constant 0 : i32
    return %c0_i32, %c0_i32_0, %c0_i32_1 : i32, i32, i32
  }
  func.func @transform_2(%arg0: i32) -> (i32, i32) {
    %c0_i32 = arith.constant 0 : i32
    %c0_i32_0 = arith.constant 0 : i32
    %c0_i32_1 = arith.constant 0 : i32
    return %c0_i32, %c0_i32_0 : i32, i32
  }
  func.func @transform_3(%arg0: i32) -> (i32, i32, i32) {
    %c0_i32 = arith.constant 0 : i32
    %c0_i32_0 = arith.constant 0 : i32
    %c0_i32_1 = arith.constant 0 : i32
    return %arg0, %c0_i32, %c0_i32_0 : i32, i32, i32
  }
  func.func @transform_4(%arg0: i32) -> (i32, i32, i32) {
    %c0_i32 = arith.constant 0 : i32
    %c0_i32_0 = arith.constant 0 : i32
    %c0_i32_1 = arith.constant 0 : i32
    return %arg0, %c0_i32, %c0_i32_0 : i32, i32, i32
  }
  func.func @transform_5(%arg0: i32) -> (i32, i32, i32) {
    %c0_i32 = arith.constant 0 : i32
    %c0_i32_0 = arith.constant 0 : i32
    %c0_i32_1 = arith.constant 0 : i32
    return %arg0, %c0_i32, %c0_i32_0 : i32, i32, i32
  }
}

</mosaic_0001>

<llo_original>
// kernel: conv_block_forward.5
$region0: #{conv_block_forward.5}
  #allocation0 [shape = 'u32[]', space=smem, size = 0x4, offset = 0x4, fixed_abs, tag = 'smem constant byte address 0x4 - core index']
  #allocation1 [shape = 'u32[144,128]{1,0:T(1,128)}', space=vmem, size = 0x12000, scoped, tag = 'internal scratch']
  %s0 = inlined_call_operand.vmem [shape: f32[32,128], index: 0, kind: input, shape index: {}]
  %s1 = inlined_call_operand.vmem [shape: f32[32,128], index: 1, kind: input, shape index: {}]
  %s2 = inlined_call_operand.vmem [shape: f32[1,128], index: 2, kind: input, shape index: {}]
  %s3 = inlined_call_operand.vmem [shape: f32[1,128], index: 3, kind: input, shape index: {}]
  %s4 = inlined_call_operand.vmem [shape: f32[32,128], index: 4, kind: output, shape index: {}]
  %s5 = sld [smem:[#allocation0]]
  $region26: #{conv_block_forward.5} parent=0
    _
  %s7 = ssub.s32 1, %s5
  %s8 = scalar_select 0, %s7, %s5
  // Predicated region
  $region2: #{conv_block_forward.5} parent=0 // pred_check
    _
  $region3: #{conv_block_forward.5} parent=0 // pred_check_branch
    %10 = sbr.rel (0) target = $region5
  $region4: #{conv_block_forward.5} parent=0 // pred_region
    _
  $region5: #{conv_block_forward.5} parent=0 // pred_fallthru
    _
  // Predicated region
  $region6: #{conv_block_forward.5} parent=0 // pred_check
    _
  $region7: #{conv_block_forward.5} parent=0 // pred_check_branch
    %12 = sbr.rel (0) target = $region9
  $region8: #{conv_block_forward.5} parent=0 // pred_region
    _
  $region9: #{conv_block_forward.5} parent=0 // pred_fallthru
    _
  // Predicated region
  $region10: #{conv_block_forward.5} parent=0 // pred_check
    _
  $region11: #{conv_block_forward.5} parent=0 // pred_check_branch
    %14 = sbr.rel (0) target = $region13
  $region12: #{conv_block_forward.5} parent=0 // pred_region
    _
  $region13: #{conv_block_forward.5} parent=0 // pred_fallthru
    _
  // Predicated region
  $region14: #{conv_block_forward.5} parent=0 // pred_check
    _
  $region15: #{conv_block_forward.5} parent=0 // pred_check_branch
    %16 = sbr.rel (0) target = $region17
  $region16: #{conv_block_forward.5} parent=0 // pred_region
    _
  $region17: #{conv_block_forward.5} parent=0 // pred_fallthru
    _
  %v17 = vld [vmem:[%s0] sm:$0xff]
  %v18 = vld [vmem:[%s0 + $0x8] sm:$0xff]
  %v19 = vld [vmem:[%s0 + $0x10] sm:$0xff]
  %v20 = vld [vmem:[%s0 + $0x18] sm:$0xff]
  %v21 = vld [vmem:[%s2] sm:$0x1]
  %v23 = vlaneseq
  %v24 = vshrl.u32 %v23, 7
  %v25 = vsub.s32 0, %v24
  %v26 = vrot.slane %v21, %v25
  %v28 = vmul.f32 %v17, %v26
  %v29 = vmul.f32 %v18, %v26
  %v30 = vmul.f32 %v19, %v26
  %v31 = vmul.f32 %v20, %v26
  %v32 = vld [vmem:[%s3] sm:$0x1]
  %v34 = vlaneseq
  %v35 = vshrl.u32 %v34, 7
  %v36 = vsub.s32 0, %v35
  %v37 = vrot.slane %v32, %v36
  %v39 = vadd.f32 %v28, %v37
  %v40 = vadd.f32 %v29, %v37
  %v41 = vadd.f32 %v30, %v37
  %v42 = vadd.f32 %v31, %v37
  %v43 = vmax.f32 %v39, 0.0
  %v44 = vmax.f32 %v40, 0.0
  %v45 = vmax.f32 %v41, 0.0
  %v46 = vmax.f32 %v42, 0.0
  %v47 = vld [vmem:[%s1] sm:$0xff]
  %v48 = vld [vmem:[%s1 + $0x8] sm:$0xff]
  %v49 = vld [vmem:[%s1 + $0x10] sm:$0xff]
  %v50 = vld [vmem:[%s1 + $0x18] sm:$0xff]
  %v51 = vmul.f32 %v43, %v47
  %v52 = vmul.f32 %v44, %v48
  %v53 = vmul.f32 %v45, %v49
  %v54 = vmul.f32 %v46, %v50
  %55 = vst [vmem:[%s4] sm:$0xff] %v51
  %56 = vst [vmem:[%s4 + $0x8] sm:$0xff] %v52
  %57 = vst [vmem:[%s4 + $0x10] sm:$0xff] %v53
  %58 = vst [vmem:[%s4 + $0x18] sm:$0xff] %v54
  // Predicated region
  $region18: #{conv_block_forward.5} parent=0 // pred_check
    _
  $region19: #{conv_block_forward.5} parent=0 // pred_check_branch
    %60 = sbr.rel (0) target = $region21
  $region20: #{conv_block_forward.5} parent=0 // pred_region
    _
  $region21: #{conv_block_forward.5} parent=0 // pred_fallthru
    _
  // Predicated region
  $region22: #{conv_block_forward.5} parent=0 // pred_check
    _
  $region23: #{conv_block_forward.5} parent=0 // pred_check_branch
    %62 = sbr.rel (0) target = $region25
  $region24: #{conv_block_forward.5} parent=0 // pred_region
    _
  $region25: #{conv_block_forward.5} parent=0 // pred_fallthru
    _

// kernel: conv_block_forward.7
$region0: #{conv_block_forward.7}
  #allocation0 [shape = 'u32[]', space=smem, size = 0x4, offset = 0x4, fixed_abs, tag = 'smem constant byte address 0x4 - core index']
  #allocation1 [shape = 'u32[144,128]{1,0:T(1,128)}', space=vmem, size = 0x12000, scoped, tag = 'internal scratch']
  %s0 = inlined_call_operand.vmem [shape: f32[32,128], index: 0, kind: input, shape index: {}]
  %s1 = inlined_call_operand.vmem [shape: f32[1,128], index: 1, kind: input, shape index: {}]
  %s2 = inlined_call_operand.vmem [shape: f32[1,128], index: 2, kind: input, shape index: {}]
  %s3 = inlined_call_operand.vmem [shape: f32[32,128], index: 3, kind: output, shape index: {}]
  %s4 = sld [smem:[#allocation0]]
  $region22: #{conv_block_forward.7} parent=0
    _
  %s6 = ssub.s32 1, %s4
  %s7 = scalar_select 0, %s6, %s4
  // Predicated region
  $region2: #{conv_block_forward.7} parent=0 // pred_check
    _
  $region3: #{conv_block_forward.7} parent=0 // pred_check_branch
    %9 = sbr.rel (0) target = $region5
  $region4: #{conv_block_forward.7} parent=0 // pred_region
    _
  $region5: #{conv_block_forward.7} parent=0 // pred_fallthru
    _
  // Predicated region
  $region6: #{conv_block_forward.7} parent=0 // pred_check
    _
  $region7: #{conv_block_forward.7} parent=0 // pred_check_branch
    %11 = sbr.rel (0) target = $region9
  $region8: #{conv_block_forward.7} parent=0 // pred_region
    _
  $region9: #{conv_block_forward.7} parent=0 // pred_fallthru
    _
  // Predicated region
  $region10: #{conv_block_forward.7} parent=0 // pred_check
    _
  $region11: #{conv_block_forward.7} parent=0 // pred_check_branch
    %13 = sbr.rel (0) target = $region13
  $region12: #{conv_block_forward.7} parent=0 // pred_region
    _
  $region13: #{conv_block_forward.7} parent=0 // pred_fallthru
    _
  %v14 = vld [vmem:[%s0] sm:$0xff]
  %v15 = vld [vmem:[%s0 + $0x8] sm:$0xff]
  %v16 = vld [vmem:[%s0 + $0x10] sm:$0xff]
  %v17 = vld [vmem:[%s0 + $0x18] sm:$0xff]
  %v18 = vld [vmem:[%s1] sm:$0x1]
  %v20 = vlaneseq
  %v21 = vshrl.u32 %v20, 7
  %v22 = vsub.s32 0, %v21
  %v23 = vrot.slane %v18, %v22
  %v25 = vmul.f32 %v14, %v23
  %v26 = vmul.f32 %v15, %v23
  %v27 = vmul.f32 %v16, %v23
  %v28 = vmul.f32 %v17, %v23
  %v29 = vld [vmem:[%s2] sm:$0x1]
  %v31 = vlaneseq
  %v32 = vshrl.u32 %v31, 7
  %v33 = vsub.s32 0, %v32
  %v34 = vrot.slane %v29, %v33
  %v36 = vadd.f32 %v25, %v34
  %v37 = vadd.f32 %v26, %v34
  %v38 = vadd.f32 %v27, %v34
  %v39 = vadd.f32 %v28, %v34
  %v40 = vmax.f32 %v36, 0.0
  %v41 = vmax.f32 %v37, 0.0
  %v42 = vmax.f32 %v38, 0.0
  %v43 = vmax.f32 %v39, 0.0
  %44 = vst [vmem:[%s3] sm:$0xff] %v40
  %45 = vst [vmem:[%s3 + $0x8] sm:$0xff] %v41
  %46 = vst [vmem:[%s3 + $0x10] sm:$0xff] %v42
  %47 = vst [vmem:[%s3 + $0x18] sm:$0xff] %v43
  // Predicated region
  $region14: #{conv_block_forward.7} parent=0 // pred_check
    _
  $region15: #{conv_block_forward.7} parent=0 // pred_check_branch
    %49 = sbr.rel (0) target = $region17
  $region16: #{conv_block_forward.7} parent=0 // pred_region
    _
  $region17: #{conv_block_forward.7} parent=0 // pred_fallthru
    _
  // Predicated region
  $region18: #{conv_block_forward.7} parent=0 // pred_check
    _
  $region19: #{conv_block_forward.7} parent=0 // pred_check_branch
    %51 = sbr.rel (0) target = $region21
  $region20: #{conv_block_forward.7} parent=0 // pred_region
    _
  $region21: #{conv_block_forward.7} parent=0 // pred_fallthru
    _

// kernel: conv_block_forward.4
$region0: #{conv_block_forward.4}
  #allocation0 [shape = 'u32[]', space=smem, size = 0x4, offset = 0x4, fixed_abs, tag = 'smem constant byte address 0x4 - core index']
  #allocation1 [shape = 'u32[144,128]{1,0:T(1,128)}', space=vmem, size = 0x12000, scoped, tag = 'internal scratch']
  %s0 = inlined_call_operand.vmem [shape: f32[2,18,18,4], index: 0, kind: input, shape index: {}]
  %s1 = inlined_call_operand.vmem [shape: f32[9,4,8], index: 1, kind: input, shape index: {}]
  %s2 = inlined_call_operand.vmem [shape: f32[1,8], index: 2, kind: input, shape index: {}]
  %s3 = inlined_call_operand.vmem [shape: f32[2,256,8], index: 3, kind: output, shape index: {0}]
  %s4 = inlined_call_operand.vmem [shape: f32[2,1,8], index: 4, kind: output, shape index: {1}]
  %s5 = inlined_call_operand.vmem [shape: f32[2,1,8], index: 5, kind: output, shape index: {2}]
  %6 = xla_tuple %s3, %s4, %s5
  %s7 = sld [smem:[#allocation0]]
  $region61: #{conv_block_forward.4} parent=0
    _
  %s9 = ssub.s32 1, %s7
  %s10 = scalar_select 0, %s9, %s7
  loop: start=0, step=1, limit=4
  $region2: #{conv_block_forward.4} parent=0 // loop_pre_header
    _
  $region3: #{conv_block_forward.4} parent=0 // loop_header
    %s12 = sphi 0, %s16
    %p13 = scmp.ge.s32.totalorder %s12, 4
    %s22 = sphi 0, %s24
    %s25 = sphi 0, %s22
    %s26 = sphi 0, %s25
    %s42 = sphi 0, %s26
    %s46 = sphi 0, %s46
    %s48 = sphi 0, %s46
    %s49 = sphi 0, %s48
    %s63 = sphi 0, %s49
    %s67 = sphi 0, %s67
    %s69 = sphi 0, %s67
    %s70 = sphi 0, %s69
    %s84 = sphi 0, %s70
    %s90 = sphi 0, %s92
    %s93 = sphi 0, %s90
    %s94 = sphi 0, %s93
    %s110 = sphi 0, %s94
    %s116 = sphi 0, %s118
    %s119 = sphi 0, %s116
    %s120 = sphi 0, %s119
    %s136 = sphi 0, %s120
    %s142 = sphi 0, %s144
    %s145 = sphi 0, %s142
    %s146 = sphi 0, %s145
    %s162 = sphi 0, %s146
  $region4: #{conv_block_forward.4} parent=0 // loop_header_branch
    %15 = sbr.rel (%p13) target = $region8
  $region5: #{conv_block_forward.4} parent=0 // loop_body
    %s17 = ssub.s32 %s12, 1
    %s18 = ssub.s32 %s12, 2
    %s19 = sadd.s32 %s12, 1
    %s20 = ssub.s32 %s12, %s19
    %p21 = scmp.eq.s32.totalorder %s20, 0
    %s23 = sadd.s32 %s22, 1
    %s24 = scalar_select %p21, %s22, %s23
    %p27 = pneg %p21
    %p28 = scmp.eq.s32.totalorder %s12, 1
    %p29 = por %p27, %p28
    %p30 = scmp.ne.s32.totalorder %s22, %s25
    %p31 = scmp.eq.s32.totalorder %s12, 0
    %p32 = por %p30, %p31
    %p33 = scmp.ne.s32.totalorder %s22, %s25
    %p34 = scmp.eq.s32.totalorder %s17, 1
    %p35 = por %p33, %p34
    %p36 = scmp.ne.s32.totalorder %s25, %s26
    %p37 = scmp.eq.s32.totalorder %s17, 0
    %p38 = por %p36, %p37
    %p39 = scmp.ne.s32.totalorder %s25, %s26
    %p40 = scmp.eq.s32.totalorder %s18, 1
    %p41 = por %p39, %p40
    %p43 = scmp.ne.s32.totalorder %s26, %s42
    %p44 = scmp.eq.s32.totalorder %s18, 0
    %p45 = por %p43, %p44
    %s47 = sadd.s32 %s46, 1
    %p50 = scmp.eq.s32.totalorder %s12, 1
    %p51 = scmp.ne.s32.totalorder %s46, %s48
    %p52 = scmp.eq.s32.totalorder %s12, 0
    %p53 = por %p51, %p52
    %p54 = scmp.ne.s32.totalorder %s46, %s48
    %p55 = scmp.eq.s32.totalorder %s17, 1
    %p56 = por %p54, %p55
    %p57 = scmp.ne.s32.totalorder %s48, %s49
    %p58 = scmp.eq.s32.totalorder %s17, 0
    %p59 = por %p57, %p58
    %p60 = scmp.ne.s32.totalorder %s48, %s49
    %p61 = scmp.eq.s32.totalorder %s18, 1
    %p62 = por %p60, %p61
    %p64 = scmp.ne.s32.totalorder %s49, %s63
    %p65 = scmp.eq.s32.totalorder %s18, 0
    %p66 = por %p64, %p65
    %s68 = sadd.s32 %s67, 1
    %p71 = scmp.eq.s32.totalorder %s12, 1
    %p72 = scmp.ne.s32.totalorder %s67, %s69
    %p73 = scmp.eq.s32.totalorder %s12, 0
    %p74 = por %p72, %p73
    %p75 = scmp.ne.s32.totalorder %s67, %s69
    %p76 = scmp.eq.s32.totalorder %s17, 1
    %p77 = por %p75, %p76
    %p78 = scmp.ne.s32.totalorder %s69, %s70
    %p79 = scmp.eq.s32.totalorder %s17, 0
    %p80 = por %p78, %p79
    %p81 = scmp.ne.s32.totalorder %s69, %s70
    %p82 = scmp.eq.s32.totalorder %s18, 1
    %p83 = por %p81, %p82
    %p85 = scmp.ne.s32.totalorder %s70, %s84
    %p86 = scmp.eq.s32.totalorder %s18, 0
    %p87 = por %p85, %p86
    %s88 = ssub.s32 %s12, %s19
    %p89 = scmp.eq.s32.totalorder %s88, 0
    %s91 = sadd.s32 %s90, 1
    %s92 = scalar_select %p89, %s90, %s91
    %p95 = pneg %p89
    %p96 = scmp.eq.s32.totalorder %s12, 1
    %p97 = por %p95, %p96
    %p98 = scmp.ne.s32.totalorder %s90, %s93
    %p99 = scmp.eq.s32.totalorder %s12, 0
    %p100 = por %p98, %p99
    %p101 = scmp.ne.s32.totalorder %s90, %s93
    %p102 = scmp.eq.s32.totalorder %s17, 1
    %p103 = por %p101, %p102
    %p104 = scmp.ne.s32.totalorder %s93, %s94
    %p105 = scmp.eq.s32.totalorder %s17, 0
    %p106 = por %p104, %p105
    %p107 = scmp.ne.s32.totalorder %s93, %s94
    %p108 = scmp.eq.s32.totalorder %s18, 1
    %p109 = por %p107, %p108
    %p111 = scmp.ne.s32.totalorder %s94, %s110
    %p112 = scmp.eq.s32.totalorder %s18, 0
    %p113 = por %p111, %p112
    %s114 = ssub.s32 %s12, %s19
    %p115 = scmp.eq.s32.totalorder %s114, 0
    %s117 = sadd.s32 %s116, 1
    %s118 = scalar_select %p115, %s116, %s117
    %p121 = pneg %p115
    %p122 = scmp.eq.s32.totalorder %s12, 1
    %p123 = por %p121, %p122
    %p124 = scmp.ne.s32.totalorder %s116, %s119
    %p125 = scmp.eq.s32.totalorder %s12, 0
    %p126 = por %p124, %p125
    %p127 = scmp.ne.s32.totalorder %s116, %s119
    %p128 = scmp.eq.s32.totalorder %s17, 1
    %p129 = por %p127, %p128
    %p130 = scmp.ne.s32.totalorder %s119, %s120
    %p131 = scmp.eq.s32.totalorder %s17, 0
    %p132 = por %p130, %p131
    %p133 = scmp.ne.s32.totalorder %s119, %s120
    %p134 = scmp.eq.s32.totalorder %s18, 1
    %p135 = por %p133, %p134
    %p137 = scmp.ne.s32.totalorder %s120, %s136
    %p138 = scmp.eq.s32.totalorder %s18, 0
    %p139 = por %p137, %p138
    %s140 = ssub.s32 %s12, %s19
    %p141 = scmp.eq.s32.totalorder %s140, 0
    %s143 = sadd.s32 %s142, 1
    %s144 = scalar_select %p141, %s142, %s143
    %p147 = pneg %p141
    %p148 = scmp.eq.s32.totalorder %s12, 1
    %p149 = por %p147, %p148
    %p150 = scmp.ne.s32.totalorder %s142, %s145
    %p151 = scmp.eq.s32.totalorder %s12, 0
    %p152 = por %p150, %p151
    %p153 = scmp.ne.s32.totalorder %s142, %s145
    %p154 = scmp.eq.s32.totalorder %s17, 1
    %p155 = por %p153, %p154
    %p156 = scmp.ne.s32.totalorder %s145, %s146
    %p157 = scmp.eq.s32.totalorder %s17, 0
    %p158 = por %p156, %p157
    %p159 = scmp.ne.s32.totalorder %s145, %s146
    %p160 = scmp.eq.s32.totalorder %s18, 1
    %p161 = por %p159, %p160
    %p163 = scmp.ne.s32.totalorder %s146, %s162
    %p164 = scmp.eq.s32.totalorder %s18, 0
    %p165 = por %p163, %p164
    %p166 = scmp.le.s32.totalorder 1, %s12
    %p167 = scmp.lt.s32.totalorder %s12, 3
    %p168 = pnand %p166, %p167
    %p169 = pneg %p168
    // Predicated region
    $region9: #{conv_block_forward.4} parent=5 // pred_check
      _
    $region10: #{conv_block_forward.4} parent=5 // pred_check_branch
      %171 = sbr.rel (%p168) target = $region12
    $region11: #{conv_block_forward.4} parent=5 // pred_region
      %s172 = ssub.s32 %s12, 1
      // Predicated region
      $region13: #{conv_block_forward.4} parent=11 // pred_check
        %p173 = pneg %p59
      $region14: #{conv_block_forward.4} parent=11 // pred_check_branch
        %175 = sbr.rel (%p173) target = $region16
      $region15: #{conv_block_forward.4} parent=11 // pred_region
        _
      $region16: #{conv_block_forward.4} parent=11 // pred_fallthru
        _
      // Predicated region
      $region17: #{conv_block_forward.4} parent=11 // pred_check
        %p176 = pneg %p80
      $region18: #{conv_block_forward.4} parent=11 // pred_check_branch
        %178 = sbr.rel (%p176) target = $region20
      $region19: #{conv_block_forward.4} parent=11 // pred_region
        _
      $region20: #{conv_block_forward.4} parent=11 // pred_fallthru
        _
    $region12: #{conv_block_forward.4} parent=5 // pred_fallthru
      _
    %p179 = scmp.lt.s32.totalorder %s12, 2
    // Predicated region
    $region21: #{conv_block_forward.4} parent=5 // pred_check
      %p180 = pneg %p179
    $region22: #{conv_block_forward.4} parent=5 // pred_check_branch
      %182 = sbr.rel (%p180) target = $region24
    $region23: #{conv_block_forward.4} parent=5 // pred_region
      // Predicated region
      $region25: #{conv_block_forward.4} parent=23 // pred_check
        %p183 = pneg %p32
      $region26: #{conv_block_forward.4} parent=23 // pred_check_branch
        %185 = sbr.rel (%p183) target = $region28
      $region27: #{conv_block_forward.4} parent=23 // pred_region
        %p186 = scmp.lt.s32.totalorder %s12, 1
        %s187 = scalar_select %p186, %s12, 1
        %s188 = smul.addr %s187, 54
        %s189 = smul.addr %s188, 8
        %s190 = scalar_lea.vmem %s0, %s189
      $region28: #{conv_block_forward.4} parent=23 // pred_fallthru
        _
    $region24: #{conv_block_forward.4} parent=5 // pred_fallthru
      _
    %p191 = scmp.le.s32.totalorder 1, %s12
    %p192 = scmp.lt.s32.totalorder %s12, 3
    %p193 = pnand %p191, %p192
    %p194 = pneg %p193
    // Predicated region
    $region29: #{conv_block_forward.4} parent=5 // pred_check
      _
    $region30: #{conv_block_forward.4} parent=5 // pred_check_branch
      %196 = sbr.rel (%p193) target = $region32
    $region31: #{conv_block_forward.4} parent=5 // pred_region
      %s197 = ssub.s32 %s12, 1
      %p198 = scmp.lt.s32.totalorder %s17, 1
      %s199 = scalar_select %p198, %s17, 1
      %s200 = smul.addr %s199, 54
      %s201 = smul.addr %s200, 8
      %s202 = scalar_lea.vmem %s0, %s201
      %p203 = pneg %p38
      %p204 = pneg %p35
      %p205 = pneg %p59
      %p206 = pneg %p56
      %p207 = pneg %p80
      %p208 = pneg %p77
      %p209 = pneg %p106
      %p210 = pneg %p103
      %p211 = scmp.lt.s32.totalorder %s17, 1
      %s212 = scalar_select %p211, %s17, 1
      %s213 = smul.addr %s212, 32
      %s214 = smul.addr %s213, 8
      %s215 = scalar_lea.vmem %s3, %s214
      %p216 = pneg %p132
      %p217 = pneg %p129
      %p218 = scmp.lt.s32.totalorder %s17, 1
      %s219 = scalar_select %p218, %s17, 1
      %s220 = scalar_lea.vmem %s4, %s219
      %p221 = pneg %p158
      %p222 = pneg %p155
      %p223 = scmp.lt.s32.totalorder %s17, 1
      %s224 = scalar_select %p223, %s17, 1
      %s225 = scalar_lea.vmem %s5, %s224
      %p226 = scmp.lt.s32.totalorder %s17, 1
      %s227 = scalar_select %p226, %s17, 1
      %s228 = smul.addr %s227, 54
      %s229 = smul.addr %s228, 8
      %s230 = scalar_lea.vmem %s0, %s229
      %p231 = scmp.lt.s32.totalorder %s17, 1
      %s232 = scalar_select %p231, %s17, 1
      %s233 = smul.addr %s232, 32
      %s234 = smul.addr %s233, 8
      %s235 = scalar_lea.vmem %s3, %s234
      %p236 = scmp.lt.s32.totalorder %s17, 1
      %s237 = scalar_select %p236, %s17, 1
      %s238 = scalar_lea.vmem %s4, %s237
      %p239 = scmp.lt.s32.totalorder %s17, 1
      %s240 = scalar_select %p239, %s17, 1
      %s241 = scalar_lea.vmem %s5, %s240
      %v242 = vld [vmem:[%s230] sm:$0xff]
      %v243 = vld [vmem:[%s230 + $0x8] sm:$0xff]
      %v244 = vld [vmem:[%s230 + $0x18] sm:$0xff]
      %v245 = vld [vmem:[%s230 + $0x20] sm:$0xff]
      %v246 = vld [vmem:[%s230 + $0x30] sm:$0xff]
      %v247 = vld [vmem:[%s230 + $0x38] sm:$0xff]
      %v248 = vld [vmem:[%s230 + $0x48] sm:$0xff]
      %v249 = vld [vmem:[%s230 + $0x50] sm:$0xff]
      %v250 = vld [vmem:[%s230 + $0x60] sm:$0xff]
      %v251 = vld [vmem:[%s230 + $0x68] sm:$0xff]
      %v252 = vld [vmem:[%s230 + $0x78] sm:$0xff]
      %v253 = vld [vmem:[%s230 + $0x80] sm:$0xff]
      %v254 = vld [vmem:[%s230 + $0x90] sm:$0xff]
      %v255 = vld [vmem:[%s230 + $0x98] sm:$0xff]
      %v256 = vld [vmem:[%s230 + $0xa8] sm:$0xff]
      %v257 = vld [vmem:[%s230 + $0xb0] sm:$0xff]
      %v258 = vld [vmem:[%s230 + $0xc0] sm:$0xff]
      %v259 = vld [vmem:[%s230 + $0xc8] sm:$0xff]
      %v260 = vld [vmem:[%s230 + $0xd8] sm:$0xff]
      %v261 = vld [vmem:[%s230 + $0xe0] sm:$0xff]
      %v262 = vld [vmem:[%s230 + $0xf0] sm:$0xff]
      %v263 = vld [vmem:[%s230 + $0xf8] sm:$0xff]
      %v264 = vld [vmem:[%s230 + $0x108] sm:$0xff]
      %v265 = vld [vmem:[%s230 + $0x110] sm:$0xff]
      %v266 = vld [vmem:[%s230 + $0x120] sm:$0xff]
      %v267 = vld [vmem:[%s230 + $0x128] sm:$0xff]
      %v268 = vld [vmem:[%s230 + $0x138] sm:$0xff]
      %v269 = vld [vmem:[%s230 + $0x140] sm:$0xff]
      %v270 = vld [vmem:[%s230 + $0x150] sm:$0xff]
      %v271 = vld [vmem:[%s230 + $0x158] sm:$0xff]
      %v272 = vld [vmem:[%s230 + $0x168] sm:$0xff]
      %v273 = vld [vmem:[%s230 + $0x170] sm:$0xff]
      %v274 = vld [vmem:[%s1] sm:$0xf]
      %v275 = vld [vmem:[%s230 + $0x1] sm:$0xff]
      %v276 = vld [vmem:[%s230 + $0x9] sm:$0xff]
      %v277 = vld [vmem:[%s230 + $0x19] sm:$0xff]
      %v278 = vld [vmem:[%s230 + $0x21] sm:$0xff]
      %v279 = vld [vmem:[%s230 + $0x31] sm:$0xff]
      %v280 = vld [vmem:[%s230 + $0x39] sm:$0xff]
      %v281 = vld [vmem:[%s230 + $0x49] sm:$0xff]
      %v282 = vld [vmem:[%s230 + $0x51] sm:$0xff]
      %v283 = vld [vmem:[%s230 + $0x61] sm:$0xff]
      %v284 = vld [vmem:[%s230 + $0x69] sm:$0xff]
      %v285 = vld [vmem:[%s230 + $0x79] sm:$0xff]
      %v286 = vld [vmem:[%s230 + $0x81] sm:$0xff]
      %v287 = vld [vmem:[%s230 + $0x91] sm:$0xff]
      %v288 = vld [vmem:[%s230 + $0x99] sm:$0xff]
      %v289 = vld [vmem:[%s230 + $0xa9] sm:$0xff]
      %v290 = vld [vmem:[%s230 + $0xb1] sm:$0xff]
      %v291 = vld [vmem:[%s230 + $0xc1] sm:$0xff]
      %v292 = vld [vmem:[%s230 + $0xc9] sm:$0xff]
      %v293 = vld [vmem:[%s230 + $0xd9] sm:$0xff]
      %v294 = vld [vmem:[%s230 + $0xe1] sm:$0xff]
      %v295 = vld [vmem:[%s230 + $0xf1] sm:$0xff]
      %v296 = vld [vmem:[%s230 + $0xf9] sm:$0xff]
      %v297 = vld [vmem:[%s230 + $0x109] sm:$0xff]
      %v298 = vld [vmem:[%s230 + $0x111] sm:$0xff]
      %v299 = vld [vmem:[%s230 + $0x121] sm:$0xff]
      %v300 = vld [vmem:[%s230 + $0x129] sm:$0xff]
      %v301 = vld [vmem:[%s230 + $0x139] sm:$0xff]
      %v302 = vld [vmem:[%s230 + $0x141] sm:$0xff]
      %v303 = vld [vmem:[%s230 + $0x151] sm:$0xff]
      %v304 = vld [vmem:[%s230 + $0x159] sm:$0xff]
      %v305 = vld [vmem:[%s230 + $0x169] sm:$0xff]
      %v306 = vld [vmem:[%s230 + $0x171] sm:$0xff]
      %s307 = scalar_lea.vmem %s1, 4
      %v308 = vld [vmem:[%s307] sm:$0xf]
      %vm309 = vcmask 31744
      %v311 = vsel %vm309, %v275, 0
      %v314 = vsel %vm309, %v276, 0
      %v317 = vsel %vm309, %v277, 0
      %v320 = vsel %vm309, %v278, 0
      %v323 = vsel %vm309, %v279, 0
      %v326 = vsel %vm309, %v280, 0
      %v329 = vsel %vm309, %v281, 0
      %v332 = vsel %vm309, %v282, 0
      %v335 = vsel %vm309, %v283, 0
      %v338 = vsel %vm309, %v284, 0
      %v341 = vsel %vm309, %v285, 0
      %v344 = vsel %vm309, %v286, 0
      %v347 = vsel %vm309, %v287, 0
      %v350 = vsel %vm309, %v288, 0
      %v353 = vsel %vm309, %v289, 0
      %v356 = vsel %vm309, %v290, 0
      %v359 = vsel %vm309, %v291, 0
      %v362 = vsel %vm309, %v292, 0
      %v365 = vsel %vm309, %v293, 0
      %v368 = vsel %vm309, %v294, 0
      %v371 = vsel %vm309, %v295, 0
      %v374 = vsel %vm309, %v296, 0
      %v377 = vsel %vm309, %v297, 0
      %v380 = vsel %vm309, %v298, 0
      %v383 = vsel %vm309, %v299, 0
      %v386 = vsel %vm309, %v300, 0
      %v389 = vsel %vm309, %v301, 0
      %v392 = vsel %vm309, %v302, 0
      %v395 = vsel %vm309, %v303, 0
      %v398 = vsel %vm309, %v304, 0
      %v401 = vsel %vm309, %v305, 0
      %v404 = vsel %vm309, %v306, 0
      %vm406 = vcmask 1043456
      %v408 = vsel %vm406, %v308, 0
      %410 = vmatprep.subr.mxu0 0.0
      %411 = vmatpush1.msra.mxu0 %v408
      %412 = vmatprep.subr.mxu0 0.0
      %413 = vmatpush1.msra.mxu0 0.0
      %414 = vmatprep.subr.mxu0 0.0
      %415 = vmatpush1.msra.mxu0 0.0
      %416 = vmatprep.subr.mxu0 0.0
      %417 = vmatpush1.msra.mxu0 0.0
      %418 = vmatprep.subr.mxu0 0.0
      %419 = vmatpush1.msra.mxu0 0.0
      %420 = vmatprep.subr.mxu0 0.0
      %421 = vmatpush1.msra.mxu0 0.0
      %422 = vmatprep.subr.mxu0 0.0
      %423 = vmatpush1.msra.mxu0 0.0
      %424 = vmatprep.subr.mxu0 0.0
      %425 = vmatpush1.msra.mxu0 0.0
      %426 = vmatprep.subr.mxu0 0.0
      %427 = vmatpush1.msra.mxu0 0.0
      %428 = vmatprep.subr.mxu0 0.0
      %429 = vmatpush1.msra.mxu0 0.0
      %430 = vmatprep.subr.mxu0 0.0
      %431 = vmatpush1.msra.mxu0 0.0
      %432 = vmatprep.subr.mxu0 0.0
      %433 = vmatpush1.msra.mxu0 0.0
      %434 = vmatprep.subr.mxu0 0.0
      %435 = vmatpush1.msra.mxu0 0.0
      %436 = vmatprep.subr.mxu0 0.0
      %437 = vmatpush1.msra.mxu0 0.0
      %438 = vmatprep.subr.mxu0 0.0
      %439 = vmatpush1.msra.mxu0 0.0
      %440 = vmatprep.subr.mxu0 0.0
      %441 = vmatpush1.msra.mxu0 0.0
      %442 = vmatprep.subr.mxu0 0.0
      %443 = vmatpush1.msra.mxu0 0.0
      %444 = vmatprep.subr.mxu0 0.0
      %445 = vmatpush1.msra.mxu0 0.0
      %446 = vmatprep.subr.mxu0 0.0
      %447 = vmatpush1.msra.mxu0 0.0
      %448 = vmatprep.subr.mxu0 0.0
      %449 = vmatpush1.msra.mxu0 0.0
      %450 = vmatprep.subr.mxu0 0.0
      %451 = vmatpush1.msra.mxu0 0.0
      %452 = vmatprep.subr.mxu0 0.0
      %453 = vmatpush1.msra.mxu0 0.0
      %454 = vmatprep.subr.mxu0 0.0
      %455 = vmatpush1.msra.mxu0 0.0
      %456 = vmatprep.subr.mxu0 0.0
      %457 = vmatpush1.msra.mxu0 0.0
      %458 = vmatprep.subr.mxu0 0.0
      %459 = vmatpush1.msra.mxu0 0.0
      %460 = vmatprep.subr.mxu0 0.0
      %461 = vmatpush1.msra.mxu0 0.0
      %462 = vmatprep.subr.mxu0 0.0
      %463 = vmatpush1.msra.mxu0 0.0
      %464 = vmatprep.subr.mxu0 0.0
      %465 = vmatpush1.msra.mxu0 0.0
      %466 = vmatprep.subr.mxu0 0.0
      %467 = vmatpush1.msra.mxu0 0.0
      %468 = vmatprep.subr.mxu0 0.0
      %469 = vmatpush1.msra.mxu0 0.0
      %470 = vmatprep.subr.mxu0 0.0
      %471 = vmatpush1.msra.mxu0 0.0
      %472 = vmatprep.subr.mxu0 0.0
      %473 = vmatpush1.msra.mxu0 0.0
      %474 = vmatprep.mubr.f32.mxu0 0.0
      %475 = vmatmul.mubr.f32.gmra.mrb[0].mxu0 %v311
      %v476 = vpop.f32.mrb[0].mxu0
      %v477 = vadd.f32 0.0, %v476
      %v478 = vpop.f32.mrb[0].mxu0
      %479 = vmatprep.mubr.f32.mxu0 0.0
      %480 = vmatmul.mubr.f32.gmra.mrb[0].mxu0 %v314
      %v481 = vpop.f32.mrb[0].mxu0
      %v482 = vadd.f32 0.0, %v481
      %v483 = vpop.f32.mrb[0].mxu0
      %484 = vmatprep.mubr.f32.mxu0 0.0
      %485 = vmatmul.mubr.f32.gmra.mrb[0].mxu0 %v317
      %v486 = vpop.f32.mrb[0].mxu0
      %v487 = vadd.f32 0.0, %v486
      %v488 = vpop.f32.mrb[0].mxu0
      %489 = vmatprep.mubr.f32.mxu0 0.0
      %490 = vmatmul.mubr.f32.gmra.mrb[0].mxu0 %v320
      %v491 = vpop.f32.mrb[0].mxu0
      %v492 = vadd.f32 0.0, %v491
      %v493 = vpop.f32.mrb[0].mxu0
      %494 = vmatprep.mubr.f32.mxu0 0.0
      %495 = vmatmul.mubr.f32.gmra.mrb[0].mxu0 %v323
      %v496 = vpop.f32.mrb[0].mxu0
      %v497 = vadd.f32 0.0, %v496
      %v498 = vpop.f32.mrb[0].mxu0
      %499 = vmatprep.mubr.f32.mxu0 0.0
      %500 = vmatmul.mubr.f32.gmra.mrb[0].mxu0 %v326
      %v501 = vpop.f32.mrb[0].mxu0
      %v502 = vadd.f32 0.0, %v501
      %v503 = vpop.f32.mrb[0].mxu0
      %504 = vmatprep.mubr.f32.mxu0 0.0
      %505 = vmatmul.mubr.f32.gmra.mrb[0].mxu0 %v329
      %v506 = vpop.f32.mrb[0].mxu0
      %v507 = vadd.f32 0.0, %v506
      %v508 = vpop.f32.mrb[0].mxu0
      %509 = vmatprep.mubr.f32.mxu0 0.0
      %510 = vmatmul.mubr.f32.gmra.mrb[0].mxu0 %v332
      %v511 = vpop.f32.mrb[0].mxu0
      %v512 = vadd.f32 0.0, %v511
      %v513 = vpop.f32.mrb[0].mxu0
      %514 = vmatprep.mubr.f32.mxu0 0.0
      %515 = vmatmul.mubr.f32.gmra.mrb[0].mxu0 %v335
      %v516 = vpop.f32.mrb[0].mxu0
      %v517 = vadd.f32 0.0, %v516
      %v518 = vpop.f32.mrb[0].mxu0
      %519 = vmatprep.mubr.f32.mxu0 0.0
      %520 = vmatmul.mubr.f32.gmra.mrb[0].mxu0 %v338
      %v521 = vpop.f32.mrb[0].mxu0
      %v522 = vadd.f32 0.0, %v521
      %v523 = vpop.f32.mrb[0].mxu0
      %524 = vmatprep.mubr.f32.mxu0 0.0
      %525 = vmatmul.mubr.f32.gmra.mrb[0].mxu0 %v341
      %v526 = vpop.f32.mrb[0].mxu0
      %v527 = vadd.f32 0.0, %v526
      %v528 = vpop.f32.mrb[0].mxu0
      %529 = vmatprep.mubr.f32.mxu0 0.0
      %530 = vmatmul.mubr.f32.gmra.mrb[0].mxu0 %v344
      %v531 = vpop.f32.mrb[0].mxu0
      %v532 = vadd.f32 0.0, %v531
      %v533 = vpop.f32.mrb[0].mxu0
      %534 = vmatprep.mubr.f32.mxu0 0.0
      %535 = vmatmul.mubr.f32.gmra.mrb[0].mxu0 %v347
      %v536 = vpop.f32.mrb[0].mxu0
      %v537 = vadd.f32 0.0, %v536
      %v538 = vpop.f32.mrb[0].mxu0
      %539 = vmatprep.mubr.f32.mxu0 0.0
      %540 = vmatmul.mubr.f32.gmra.mrb[0].mxu0 %v350
      %v541 = vpop.f32.mrb[0].mxu0
      %v542 = vadd.f32 0.0, %v541
      %v543 = vpop.f32.mrb[0].mxu0
      %544 = vmatprep.mubr.f32.mxu0 0.0
      %545 = vmatmul.mubr.f32.gmra.mrb[0].mxu0 %v353
      %v546 = vpop.f32.mrb[0].mxu0
      %v547 = vadd.f32 0.0, %v546
      %v548 = vpop.f32.mrb[0].mxu0
      %549 = vmatprep.mubr.f32.mxu0 0.0
      %550 = vmatmul.mubr.f32.gmra.mrb[0].mxu0 %v356
      %v551 = vpop.f32.mrb[0].mxu0
      %v552 = vadd.f32 0.0, %v551
      %v553 = vpop.f32.mrb[0].mxu0
      %554 = vmatprep.mubr.f32.mxu0 0.0
      %555 = vmatmul.mubr.f32.gmra.mrb[0].mxu0 %v359
      %v556 = vpop.f32.mrb[0].mxu0
      %v557 = vadd.f32 0.0, %v556
      %v558 = vpop.f32.mrb[0].mxu0
      %559 = vmatprep.mubr.f32.mxu0 0.0
      %560 = vmatmul.mubr.f32.gmra.mrb[0].mxu0 %v362
      %v561 = vpop.f32.mrb[0].mxu0
      %v562 = vadd.f32 0.0, %v561
      %v563 = vpop.f32.mrb[0].mxu0
      %564 = vmatprep.mubr.f32.mxu0 0.0
      %565 = vmatmul.mubr.f32.gmra.mrb[0].mxu0 %v365
      %v566 = vpop.f32.mrb[0].mxu0
      %v567 = vadd.f32 0.0, %v566
      %v568 = vpop.f32.mrb[0].mxu0
      %569 = vmatprep.mubr.f32.mxu0 0.0
      %570 = vmatmul.mubr.f32.gmra.mrb[0].mxu0 %v368
      %v571 = vpop.f32.mrb[0].mxu0
      %v572 = vadd.f32 0.0, %v571
      %v573 = vpop.f32.mrb[0].mxu0
      %574 = vmatprep.mubr.f32.mxu0 0.0
      %575 = vmatmul.mubr.f32.gmra.mrb[0].mxu0 %v371
      %v576 = vpop.f32.mrb[0].mxu0
      %v577 = vadd.f32 0.0, %v576
      %v578 = vpop.f32.mrb[0].mxu0
      %579 = vmatprep.mubr.f32.mxu0 0.0
      %580 = vmatmul.mubr.f32.gmra.mrb[0].mxu0 %v374
      %v581 = vpop.f32.mrb[0].mxu0
      %v582 = vadd.f32 0.0, %v581
      %v583 = vpop.f32.mrb[0].mxu0
      %584 = vmatprep.mubr.f32.mxu0 0.0
      %585 = vmatmul.mubr.f32.gmra.mrb[0].mxu0 %v377
      %v586 = vpop.f32.mrb[0].mxu0
      %v587 = vadd.f32 0.0, %v586
      %v588 = vpop.f32.mrb[0].mxu0
      %589 = vmatprep.mubr.f32.mxu0 0.0
      %590 = vmatmul.mubr.f32.gmra.mrb[0].mxu0 %v380
      %v591 = vpop.f32.mrb[0].mxu0
      %v592 = vadd.f32 0.0, %v591
      %v593 = vpop.f32.mrb[0].mxu0
      %594 = vmatprep.mubr.f32.mxu0 0.0
      %595 = vmatmul.mubr.f32.gmra.mrb[0].mxu0 %v383
      %v596 = vpop.f32.mrb[0].mxu0
      %v597 = vadd.f32 0.0, %v596
      %v598 = vpop.f32.mrb[0].mxu0
      %599 = vmatprep.mubr.f32.mxu0 0.0
      %600 = vmatmul.mubr.f32.gmra.mrb[0].mxu0 %v386
      %v601 = vpop.f32.mrb[0].mxu0
      %v602 = vadd.f32 0.0, %v601
      %v603 = vpop.f32.mrb[0].mxu0
      %604 = vmatprep.mubr.f32.mxu0 0.0
      %605 = vmatmul.mubr.f32.gmra.mrb[0].mxu0 %v389
      %v606 = vpop.f32.mrb[0].mxu0
      %v607 = vadd.f32 0.0, %v606
      %v608 = vpop.f32.mrb[0].mxu0
      %609 = vmatprep.mubr.f32.mxu0 0.0
      %610 = vmatmul.mubr.f32.gmra.mrb[0].mxu0 %v392
      %v611 = vpop.f32.mrb[0].mxu0
      %v612 = vadd.f32 0.0, %v611
      %v613 = vpop.f32.mrb[0].mxu0
      %614 = vmatprep.mubr.f32.mxu0 0.0
      %615 = vmatmul.mubr.f32.gmra.mrb[0].mxu0 %v395
      %v616 = vpop.f32.mrb[0].mxu0
      %v617 = vadd.f32 0.0, %v616
      %v618 = vpop.f32.mrb[0].mxu0
      %619 = vmatprep.mubr.f32.mxu0 0.0
      %620 = vmatmul.mubr.f32.gmra.mrb[0].mxu0 %v398
      %v621 = vpop.f32.mrb[0].mxu0
      %v622 = vadd.f32 0.0, %v621
      %v623 = vpop.f32.mrb[0].mxu0
      %624 = vmatprep.mubr.f32.mxu0 0.0
      %625 = vmatmul.mubr.f32.gmra.mrb[0].mxu0 %v401
      %v626 = vpop.f32.mrb[0].mxu0
      %v627 = vadd.f32 0.0, %v626
      %v628 = vpop.f32.mrb[0].mxu0
      %629 = vmatprep.mubr.f32.mxu0 0.0
      %630 = vmatmul.mubr.f32.gmra.mrb[0].mxu0 %v404
      %v631 = vpop.f32.mrb[0].mxu0
      %v632 = vadd.f32 0.0, %v631
      %v633 = vpop.f32.mrb[0].mxu0
      %634 = vdwg.mxu0
      %v636 = vsel %vm309, %v242, 0
      %v639 = vsel %vm309, %v243, 0
      %v642 = vsel %vm309, %v244, 0
      %v645 = vsel %vm309, %v245, 0
      %v648 = vsel %vm309, %v246, 0
      %v651 = vsel %vm309, %v247, 0
      %v654 = vsel %vm309, %v248, 0
      %v657 = vsel %vm309, %v249, 0
      %v660 = vsel %vm309, %v250, 0
      %v663 = vsel %vm309, %v251, 0
      %v666 = vsel %vm309, %v252, 0
      %v669 = vsel %vm309, %v253, 0
      %v672 = vsel %vm309, %v254, 0
      %v675 = vsel %vm309, %v255, 0
      %v678 = vsel %vm309, %v256, 0
      %v681 = vsel %vm309, %v257, 0
      %v684 = vsel %vm309, %v258, 0
      %v687 = vsel %vm309, %v259, 0
      %v690 = vsel %vm309, %v260, 0
      %v693 = vsel %vm309, %v261, 0
      %v696 = vsel %vm309, %v262, 0
      %v699 = vsel %vm309, %v263, 0
      %v702 = vsel %vm309, %v264, 0
      %v705 = vsel %vm309, %v265, 0
      %v708 = vsel %vm309, %v266, 0
      %v711 = vsel %vm309, %v267, 0
      %v714 = vsel %vm309, %v268, 0
      %v717 = vsel %vm309, %v269, 0
      %v720 = vsel %vm309, %v270, 0
      %v723 = vsel %vm309, %v271, 0
      %v726 = vsel %vm309, %v272, 0
      %v729 = vsel %vm309, %v273, 0
      %v732 = vsel %vm406, %v274, 0
      %734 = vmatprep.subr.mxu0 0.0
      %735 = vmatpush1.msra.mxu0 %v732
      %736 = vmatprep.subr.mxu0 0.0
      %737 = vmatpush1.msra.mxu0 0.0
      %738 = vmatprep.subr.mxu0 0.0
      %739 = vmatpush1.msra.mxu0 0.0
      %740 = vmatprep.subr.mxu0 0.0
      %741 = vmatpush1.msra.mxu0 0.0
      %742 = vmatprep.subr.mxu0 0.0
      %743 = vmatpush1.msra.mxu0 0.0
      %744 = vmatprep.subr.mxu0 0.0
      %745 = vmatpush1.msra.mxu0 0.0
      %746 = vmatprep.subr.mxu0 0.0
      %747 = vmatpush1.msra.mxu0 0.0
      %748 = vmatprep.subr.mxu0 0.0
      %749 = vmatpush1.msra.mxu0 0.0
      %750 = vmatprep.subr.mxu0 0.0
      %751 = vmatpush1.msra.mxu0 0.0
      %752 = vmatprep.subr.mxu0 0.0
      %753 = vmatpush1.msra.mxu0 0.0
      %754 = vmatprep.subr.mxu0 0.0
      %755 = vmatpush1.msra.mxu0 0.0
      %756 = vmatprep.subr.mxu0 0.0
      %757 = vmatpush1.msra.mxu0 0.0
      %758 = vmatprep.subr.mxu0 0.0
      %759 = vmatpush1.msra.mxu0 0.0
      %760 = vmatprep.subr.mxu0 0.0
      %761 = vmatpush1.msra.mxu0 0.0
      %762 = vmatprep.subr.mxu0 0.0
      %763 = vmatpush1.msra.mxu0 0.0
      %764 = vmatprep.subr.mxu0 0.0
      %765 = vmatpush1.msra.mxu0 0.0
      %766 = vmatprep.subr.mxu0 0.0
      %767 = vmatpush1.msra.mxu0 0.0
      %768 = vmatprep.subr.mxu0 0.0
      %769 = vmatpush1.msra.mxu0 0.0
      %770 = vmatprep.subr.mxu0 0.0
      %771 = vmatpush1.msra.mxu0 0.0
      %772 = vmatprep.subr.mxu0 0.0
      %773 = vmatpush1.msra.mxu0 0.0
      %774 = vmatprep.subr.mxu0 0.0
      %775 = vmatpush1.msra.mxu0 0.0
      %776 = vmatprep.subr.mxu0 0.0
      %777 = vmatpush1.msra.mxu0 0.0
      %778 = vmatprep.subr.mxu0 0.0
      %779 = vmatpush1.msra.mxu0 0.0
      %780 = vmatprep.subr.mxu0 0.0
      %781 = vmatpush1.msra.mxu0 0.0
      %782 = vmatprep.subr.mxu0 0.0
      %783 = vmatpush1.msra.mxu0 0.0
      %784 = vmatprep.subr.mxu0 0.0
      %785 = vmatpush1.msra.mxu0 0.0
      %786 = vmatprep.subr.mxu0 0.0
      %787 = vmatpush1.msra.mxu0 0.0
      %788 = vmatprep.subr.mxu0 0.0
      %789 = vmatpush1.msra.mxu0 0.0
      %790 = vmatprep.subr.mxu0 0.0
      %791 = vmatpush1.msra.mxu0 0.0
      %792 = vmatprep.subr.mxu0 0.0
      %793 = vmatpush1.msra.mxu0 0.0
      %794 = vmatprep.subr.mxu0 0.0
      %795 = vmatpush1.msra.mxu0 0.0
      %796 = vmatprep.subr.mxu0 0.0
      %797 = vmatpush1.msra.mxu0 0.0
      %798 = vmatprep.mubr.f32.mxu0 0.0
      %799 = vmatmul.mubr.f32.gmra.mrb[0].mxu0 %v636
      %v800 = vpop.f32.mrb[0].mxu0
      %v801 = vadd.f32 %v477, %v800
      %v802 = vpop.f32.mrb[0].mxu0
      %803 = vmatprep.mubr.f32.mxu0 0.0
      %804 = vmatmul.mubr.f32.gmra.mrb[0].mxu0 %v639
      %v805 = vpop.f32.mrb[0].mxu0
      %v806 = vadd.f32 %v482, %v805
      %v807 = vpop.f32.mrb[0].mxu0
      %808 = vmatprep.mubr.f32.mxu0 0.0
      %809 = vmatmul.mubr.f32.gmra.mrb[0].mxu0 %v642
      %v810 = vpop.f32.mrb[0].mxu0
      %v811 = vadd.f32 %v487, %v810
      %v812 = vpop.f32.mrb[0].mxu0
      %813 = vmatprep.mubr.f32.mxu0 0.0
      %814 = vmatmul.mubr.f32.gmra.mrb[0].mxu0 %v645
      %v815 = vpop.f32.mrb[0].mxu0
      %v816 = vadd.f32 %v492, %v815
      %v817 = vpop.f32.mrb[0].mxu0
      %818 = vmatprep.mubr.f32.mxu0 0.0
      %819 = vmatmul.mubr.f32.gmra.mrb[0].mxu0 %v648
      %v820 = vpop.f32.mrb[0].mxu0
      %v821 = vadd.f32 %v497, %v820
      %v822 = vpop.f32.mrb[0].mxu0
      %823 = vmatprep.mubr.f32.mxu0 0.0
      %824 = vmatmul.mubr.f32.gmra.mrb[0].mxu0 %v651
      %v825 = vpop.f32.mrb[0].mxu0
      %v826 = vadd.f32 %v502, %v825
      %v827 = vpop.f32.mrb[0].mxu0
      %828 = vmatprep.mubr.f32.mxu0 0.0
      %829 = vmatmul.mubr.f32.gmra.mrb[0].mxu0 %v654
      %v830 = vpop.f32.mrb[0].mxu0
      %v831 = vadd.f32 %v507, %v830
      %v832 = vpop.f32.mrb[0].mxu0
      %833 = vmatprep.mubr.f32.mxu0 0.0
      %834 = vmatmul.mubr.f32.gmra.mrb[0].mxu0 %v657
      %v835 = vpop.f32.mrb[0].mxu0
      %v836 = vadd.f32 %v512, %v835
      %v837 = vpop.f32.mrb[0].mxu0
      %838 = vmatprep.mubr.f32.mxu0 0.0
      %839 = vmatmul.mubr.f32.gmra.mrb[0].mxu0 %v660
      %v840 = vpop.f32.mrb[0].mxu0
      %v841 = vadd.f32 %v517, %v840
      %v842 = vpop.f32.mrb[0].mxu0
      %843 = vmatprep.mubr.f32.mxu0 0.0
      %844 = vmatmul.mubr.f32.gmra.mrb[0].mxu0 %v663
      %v845 = vpop.f32.mrb[0].mxu0
      %v846 = vadd.f32 %v522, %v845
      %v847 = vpop.f32.mrb[0].mxu0
      %848 = vmatprep.mubr.f32.mxu0 0.0
      %849 = vmatmul.mubr.f32.gmra.mrb[0].mxu0 %v666
      %v850 = vpop.f32.mrb[0].mxu0
      %v851 = vadd.f32 %v527, %v850
      %v852 = vpop.f32.mrb[0].mxu0
      %853 = vmatprep.mubr.f32.mxu0 0.0
      %854 = vmatmul.mubr.f32.gmra.mrb[0].mxu0 %v669
      %v855 = vpop.f32.mrb[0].mxu0
      %v856 = vadd.f32 %v532, %v855
      %v857 = vpop.f32.mrb[0].mxu0
      %858 = vmatprep.mubr.f32.mxu0 0.0
      %859 = vmatmul.mubr.f32.gmra.mrb[0].mxu0 %v672
      %v860 = vpop.f32.mrb[0].mxu0
      %v861 = vadd.f32 %v537, %v860
      %v862 = vpop.f32.mrb[0].mxu0
      %863 = vmatprep.mubr.f32.mxu0 0.0
      %864 = vmatmul.mubr.f32.gmra.mrb[0].mxu0 %v675
      %v865 = vpop.f32.mrb[0].mxu0
      %v866 = vadd.f32 %v542, %v865
      %v867 = vpop.f32.mrb[0].mxu0
      %868 = vmatprep.mubr.f32.mxu0 0.0
      %869 = vmatmul.mubr.f32.gmra.mrb[0].mxu0 %v678
      %v870 = vpop.f32.mrb[0].mxu0
      %v871 = vadd.f32 %v547, %v870
      %v872 = vpop.f32.mrb[0].mxu0
      %873 = vmatprep.mubr.f32.mxu0 0.0
      %874 = vmatmul.mubr.f32.gmra.mrb[0].mxu0 %v681
      %v875 = vpop.f32.mrb[0].mxu0
      %v876 = vadd.f32 %v552, %v875
      %v877 = vpop.f32.mrb[0].mxu0
      %878 = vmatprep.mubr.f32.mxu0 0.0
      %879 = vmatmul.mubr.f32.gmra.mrb[0].mxu0 %v684
      %v880 = vpop.f32.mrb[0].mxu0
      %v881 = vadd.f32 %v557, %v880
      %v882 = vpop.f32.mrb[0].mxu0
      %883 = vmatprep.mubr.f32.mxu0 0.0
      %884 = vmatmul.mubr.f32.gmra.mrb[0].mxu0 %v687
      %v885 = vpop.f32.mrb[0].mxu0
      %v886 = vadd.f32 %v562, %v885
      %v887 = vpop.f32.mrb[0].mxu0
      %888 = vmatprep.mubr.f32.mxu0 0.0
      %889 = vmatmul.mubr.f32.gmra.mrb[0].mxu0 %v690
      %v890 = vpop.f32.mrb[0].mxu0
      %v891 = vadd.f32 %v567, %v890
      %v892 = vpop.f32.mrb[0].mxu0
      %893 = vmatprep.mubr.f32.mxu0 0.0
      %894 = vmatmul.mubr.f32.gmra.mrb[0].mxu0 %v693
      %v895 = vpop.f32.mrb[0].mxu0
      %v896 = vadd.f32 %v572, %v895
      %v897 = vpop.f32.mrb[0].mxu0
      %898 = vmatprep.mubr.f32.mxu0 0.0
      %899 = vmatmul.mubr.f32.gmra.mrb[0].mxu0 %v696
      %v900 = vpop.f32.mrb[0].mxu0
      %v901 = vadd.f32 %v577, %v900
      %v902 = vpop.f32.mrb[0].mxu0
      %903 = vmatprep.mubr.f32.mxu0 0.0
      %904 = vmatmul.mubr.f32.gmra.mrb[0].mxu0 %v699
      %v905 = vpop.f32.mrb[0].mxu0
      %v906 = vadd.f32 %v582, %v905
      %v907 = vpop.f32.mrb[0].mxu0
      %908 = vmatprep.mubr.f32.mxu0 0.0
      %909 = vmatmul.mubr.f32.gmra.mrb[0].mxu0 %v702
      %v910 = vpop.f32.mrb[0].mxu0
      %v911 = vadd.f32 %v587, %v910
      %v912 = vpop.f32.mrb[0].mxu0
      %913 = vmatprep.mubr.f32.mxu0 0.0
      %914 = vmatmul.mubr.f32.gmra.mrb[0].mxu0 %v705
      %v915 = vpop.f32.mrb[0].mxu0
      %v916 = vadd.f32 %v592, %v915
      %v917 = vpop.f32.mrb[0].mxu0
      %918 = vmatprep.mubr.f32.mxu0 0.0
      %919 = vmatmul.mubr.f32.gmra.mrb[0].mxu0 %v708
      %v920 = vpop.f32.mrb[0].mxu0
      %v921 = vadd.f32 %v597, %v920
      %v922 = vpop.f32.mrb[0].mxu0
      %923 = vmatprep.mubr.f32.mxu0 0.0
      %924 = vmatmul.mubr.f32.gmra.mrb[0].mxu0 %v711
      %v925 = vpop.f32.mrb[0].mxu0
      %v926 = vadd.f32 %v602, %v925
      %v927 = vpop.f32.mrb[0].mxu0
      %928 = vmatprep.mubr.f32.mxu0 0.0
      %929 = vmatmul.mubr.f32.gmra.mrb[0].mxu0 %v714
      %v930 = vpop.f32.mrb[0].mxu0
      %v931 = vadd.f32 %v607, %v930
      %v932 = vpop.f32.mrb[0].mxu0
      %933 = vmatprep.mubr.f32.mxu0 0.0
      %934 = vmatmul.mubr.f32.gmra.mrb[0].mxu0 %v717
      %v935 = vpop.f32.mrb[0].mxu0
      %v936 = vadd.f32 %v612, %v935
      %v937 = vpop.f32.mrb[0].mxu0
      %938 = vmatprep.mubr.f32.mxu0 0.0
      %939 = vmatmul.mubr.f32.gmra.mrb[0].mxu0 %v720
      %v940 = vpop.f32.mrb[0].mxu0
      %v941 = vadd.f32 %v617, %v940
      %v942 = vpop.f32.mrb[0].mxu0
      %943 = vmatprep.mubr.f32.mxu0 0.0
      %944 = vmatmul.mubr.f32.gmra.mrb[0].mxu0 %v723
      %v945 = vpop.f32.mrb[0].mxu0
      %v946 = vadd.f32 %v622, %v945
      %v947 = vpop.f32.mrb[0].mxu0
      %948 = vmatprep.mubr.f32.mxu0 0.0
      %949 = vmatmul.mubr.f32.gmra.mrb[0].mxu0 %v726
      %v950 = vpop.f32.mrb[0].mxu0
      %v951 = vadd.f32 %v627, %v950
      %v952 = vpop.f32.mrb[0].mxu0
      %953 = vmatprep.mubr.f32.mxu0 0.0
      %954 = vmatmul.mubr.f32.gmra.mrb[0].mxu0 %v729
      %v955 = vpop.f32.mrb[0].mxu0
      %v956 = vadd.f32 %v632, %v955
      %v957 = vpop.f32.mrb[0].mxu0
      %958 = vdwg.mxu0
      %v959 = vld [vmem:[%s230 + $0x2] sm:$0xff]
      %v960 = vld [vmem:[%s230 + $0xa] sm:$0xff]
      %v961 = vld [vmem:[%s230 + $0x1a] sm:$0xff]
      %v962 = vld [vmem:[%s230 + $0x22] sm:$0xff]
      %v963 = vld [vmem:[%s230 + $0x32] sm:$0xff]
      %v964 = vld [vmem:[%s230 + $0x3a] sm:$0xff]
      %v965 = vld [vmem:[%s230 + $0x4a] sm:$0xff]
      %v966 = vld [vmem:[%s230 + $0x52] sm:$0xff]
      %v967 = vld [vmem:[%s230 + $0x62] sm:$0xff]
      %v968 = vld [vmem:[%s230 + $0x6a] sm:$0xff]
      %v969 = vld [vmem:[%s230 + $0x7a] sm:$0xff]
      %v970 = vld [vmem:[%s230 + $0x82] sm:$0xff]
      %v971 = vld [vmem:[%s230 + $0x92] sm:$0xff]
      %v972 = vld [vmem:[%s230 + $0x9a] sm:$0xff]
      %v973 = vld [vmem:[%s230 + $0xaa] sm:$0xff]
      %v974 = vld [vmem:[%s230 + $0xb2] sm:$0xff]
      %v975 = vld [vmem:[%s230 + $0xc2] sm:$0xff]
      %v976 = vld [vmem:[%s230 + $0xca] sm:$0xff]
      %v977 = vld [vmem:[%s230 + $0xda] sm:$0xff]
      %v978 = vld [vmem:[%s230 + $0xe2] sm:$0xff]
      %v979 = vld [vmem:[%s230 + $0xf2] sm:$0xff]
      %v980 = vld [vmem:[%s230 + $0xfa] sm:$0xff]
      %v981 = vld [vmem:[%s230 + $0x10a] sm:$0xff]
      %v982 = vld [vmem:[%s230 + $0x112] sm:$0xff]
      %v983 = vld [vmem:[%s230 + $0x122] sm:$0xff]
      %v984 = vld [vmem:[%s230 + $0x12a] sm:$0xff]
      %v985 = vld [vmem:[%s230 + $0x13a] sm:$0xff]
      %v986 = vld [vmem:[%s230 + $0x142] sm:$0xff]
      %v987 = vld [vmem:[%s230 + $0x152] sm:$0xff]
      %v988 = vld [vmem:[%s230 + $0x15a] sm:$0xff]
      %v989 = vld [vmem:[%s230 + $0x16a] sm:$0xff]
      %v990 = vld [vmem:[%s230 + $0x172] sm:$0xff]
      %s991 = scalar_lea.vmem %s1, 8
      %v992 = vld [vmem:[%s991] sm:$0xf]
      %v994 = vsel %vm309, %v959, 0
      %v997 = vsel %vm309, %v960, 0
      %v1000 = vsel %vm309, %v961, 0
      %v1003 = vsel %vm309, %v962, 0
      %v1006 = vsel %vm309, %v963, 0
      %v1009 = vsel %vm309, %v964, 0
      %v1012 = vsel %vm309, %v965, 0
      %v1015 = vsel %vm309, %v966, 0
      %v1018 = vsel %vm309, %v967, 0
      %v1021 = vsel %vm309, %v968, 0
      %v1024 = vsel %vm309, %v969, 0
      %v1027 = vsel %vm309, %v970, 0
      %v1030 = vsel %vm309, %v971, 0
      %v1033 = vsel %vm309, %v972, 0
      %v1036 = vsel %vm309, %v973, 0
      %v1039 = vsel %vm309, %v974, 0
      %v1042 = vsel %vm309, %v975, 0
      %v1045 = vsel %vm309, %v976, 0
      %v1048 = vsel %vm309, %v977, 0
      %v1051 = vsel %vm309, %v978, 0
      %v1054 = vsel %vm309, %v979, 0
      %v1057 = vsel %vm309, %v980, 0
      %v1060 = vsel %vm309, %v981, 0
      %v1063 = vsel %vm309, %v982, 0
      %v1066 = vsel %vm309, %v983, 0
      %v1069 = vsel %vm309, %v984, 0
      %v1072 = vsel %vm309, %v985, 0
      %v1075 = vsel %vm309, %v986, 0
      %v1078 = vsel %vm309, %v987, 0
      %v1081 = vsel %vm309, %v988, 0
      %v1084 = vsel %vm309, %v989, 0
      %v1087 = vsel %vm309, %v990, 0
      %v1090 = vsel %vm406, %v992, 0
      %1092 = vmatprep.subr.mxu0 0.0
      %1093 = vmatpush1.msra.mxu0 %v1090
      %1094 = vmatprep.subr.mxu0 0.0
      %1095 = vmatpush1.msra.mxu0 0.0
      %1096 = vmatprep.subr.mxu0 0.0
      %1097 = vmatpush1.msra.mxu0 0.0
      %1098 = vmatprep.subr.mxu0 0.0
      %1099 = vmatpush1.msra.mxu0 0.0
      %1100 = vmatprep.subr.mxu0 0.0
      %1101 = vmatpush1.msra.mxu0 0.0
      %1102 = vmatprep.subr.mxu0 0.0
      %1103 = vmatpush1.msra.mxu0 0.0
      %1104 = vmatprep.subr.mxu0 0.0
      %1105 = vmatpush1.msra.mxu0 0.0
      %1106 = vmatprep.subr.mxu0 0.0
      %1107 = vmatpush1.msra.mxu0 0.0
      %1108 = vmatprep.subr.mxu0 0.0
      %1109 = vmatpush1.msra.mxu0 0.0
      %1110 = vmatprep.subr.mxu0 0.0
      %1111 = vmatpush1.msra.mxu0 0.0
      %1112 = vmatprep.subr.mxu0 0.0
      %1113 = vmatpush1.msra.mxu0 0.0
      %1114 = vmatprep.subr.mxu0 0.0
      %1115 = vmatpush1.msra.mxu0 0.0
      %1116 = vmatprep.subr.mxu0 0.0
      %1117 = vmatpush1.msra.mxu0 0.0
      %1118 = vmatprep.subr.mxu0 0.0
      %1119 = vmatpush1.msra.mxu0 0.0
      %1120 = vmatprep.subr.mxu0 0.0
      %1121 = vmatpush1.msra.mxu0 0.0
      %1122 = vmatprep.subr.mxu0 0.0
      %1123 = vmatpush1.msra.mxu0 0.0
      %1124 = vmatprep.subr.mxu0 0.0
      %1125 = vmatpush1.msra.mxu0 0.0
      %1126 = vmatprep.subr.mxu0 0.0
      %1127 = vmatpush1.msra.mxu0 0.0
      %1128 = vmatprep.subr.mxu0 0.0
      %1129 = vmatpush1.msra.mxu0 0.0
      %1130 = vmatprep.subr.mxu0 0.0
      %1131 = vmatpush1.msra.mxu0 0.0
      %1132 = vmatprep.subr.mxu0 0.0
      %1133 = vmatpush1.msra.mxu0 0.0
      %1134 = vmatprep.subr.mxu0 0.0
      %1135 = vmatpush1.msra.mxu0 0.0
      %1136 = vmatprep.subr.mxu0 0.0
      %1137 = vmatpush1.msra.mxu0 0.0
      %1138 = vmatprep.subr.mxu0 0.0
      %1139 = vmatpush1.msra.mxu0 0.0
      %1140 = vmatprep.subr.mxu0 0.0
      %1141 = vmatpush1.msra.mxu0 0.0
      %1142 = vmatprep.subr.mxu0 0.0
      %1143 = vmatpush1.msra.mxu0 0.0
      %1144 = vmatprep.subr.mxu0 0.0
      %1145 = vmatpush1.msra.mxu0 0.0
      %1146 = vmatprep.subr.mxu0 0.0
      %1147 = vmatpush1.msra.mxu0 0.0
      %1148 = vmatprep.subr.mxu0 0.0
      %1149 = vmatpush1.msra.mxu0 0.0
      %1150 = vmatprep.subr.mxu0 0.0
      %1151 = vmatpush1.msra.mxu0 0.0
      %1152 = vmatprep.subr.mxu0 0.0
      %1153 = vmatpush1.msra.mxu0 0.0
      %1154 = vmatprep.subr.mxu0 0.0
      %1155 = vmatpush1.msra.mxu0 0.0
      %1156 = vmatprep.mubr.f32.mxu0 0.0
      %1157 = vmatmul.mubr.f32.gmra.mrb[0].mxu0 %v994
      %v1158 = vpop.f32.mrb[0].mxu0
      %v1159 = vadd.f32 0.0, %v1158
      %v1160 = vpop.f32.mrb[0].mxu0
      %1161 = vmatprep.mubr.f32.mxu0 0.0
      %1162 = vmatmul.mubr.f32.gmra.mrb[0].mxu0 %v997
      %v1163 = vpop.f32.mrb[0].mxu0
      %v1164 = vadd.f32 0.0, %v1163
      %v1165 = vpop.f32.mrb[0].mxu0
      %1166 = vmatprep.mubr.f32.mxu0 0.0
      %1167 = vmatmul.mubr.f32.gmra.mrb[0].mxu0 %v1000
      %v1168 = vpop.f32.mrb[0].mxu0
      %v1169 = vadd.f32 0.0, %v1168
      %v1170 = vpop.f32.mrb[0].mxu0
      %1171 = vmatprep.mubr.f32.mxu0 0.0
      %1172 = vmatmul.mubr.f32.gmra.mrb[0].mxu0 %v1003
      %v1173 = vpop.f32.mrb[0].mxu0
      %v1174 = vadd.f32 0.0, %v1173
      %v1175 = vpop.f32.mrb[0].mxu0
      %1176 = vmatprep.mubr.f32.mxu0 0.0
      %1177 = vmatmul.mubr.f32.gmra.mrb[0].mxu0 %v1006
      %v1178 = vpop.f32.mrb[0].mxu0
      %v1179 = vadd.f32 0.0, %v1178
      %v1180 = vpop.f32.mrb[0].mxu0
      %1181 = vmatprep.mubr.f32.mxu0 0.0
      %1182 = vmatmul.mubr.f32.gmra.mrb[0].mxu0 %v1009
      %v1183 = vpop.f32.mrb[0].mxu0
      %v1184 = vadd.f32 0.0, %v1183
      %v1185 = vpop.f32.mrb[0].mxu0
      %1186 = vmatprep.mubr.f32.mxu0 0.0
      %1187 = vmatmul.mubr.f32.gmra.mrb[0].mxu0 %v1012
      %v1188 = vpop.f32.mrb[0].mxu0
      %v1189 = vadd.f32 0.0, %v1188
      %v1190 = vpop.f32.mrb[0].mxu0
      %1191 = vmatprep.mubr.f32.mxu0 0.0
      %1192 = vmatmul.mubr.f32.gmra.mrb[0].mxu0 %v1015
      %v1193 = vpop.f32.mrb[0].mxu0
      %v1194 = vadd.f32 0.0, %v1193
      %v1195 = vpop.f32.mrb[0].mxu0
      %1196 = vmatprep.mubr.f32.mxu0 0.0
      %1197 = vmatmul.mubr.f32.gmra.mrb[0].mxu0 %v1018
      %v1198 = vpop.f32.mrb[0].mxu0
      %v1199 = vadd.f32 0.0, %v1198
      %v1200 = vpop.f32.mrb[0].mxu0
      %1201 = vmatprep.mubr.f32.mxu0 0.0
      %1202 = vmatmul.mubr.f32.gmra.mrb[0].mxu0 %v1021
      %v1203 = vpop.f32.mrb[0].mxu0
      %v1204 = vadd.f32 0.0, %v1203
      %v1205 = vpop.f32.mrb[0].mxu0
      %1206 = vmatprep.mubr.f32.mxu0 0.0
      %1207 = vmatmul.mubr.f32.gmra.mrb[0].mxu0 %v1024
      %v1208 = vpop.f32.mrb[0].mxu0
      %v1209 = vadd.f32 0.0, %v1208
      %v1210 = vpop.f32.mrb[0].mxu0
      %1211 = vmatprep.mubr.f32.mxu0 0.0
      %1212 = vmatmul.mubr.f32.gmra.mrb[0].mxu0 %v1027
      %v1213 = vpop.f32.mrb[0].mxu0
      %v1214 = vadd.f32 0.0, %v1213
      %v1215 = vpop.f32.mrb[0].mxu0
      %1216 = vmatprep.mubr.f32.mxu0 0.0
      %1217 = vmatmul.mubr.f32.gmra.mrb[0].mxu0 %v1030
      %v1218 = vpop.f32.mrb[0].mxu0
      %v1219 = vadd.f32 0.0, %v1218
      %v1220 = vpop.f32.mrb[0].mxu0
      %1221 = vmatprep.mubr.f32.mxu0 0.0
      %1222 = vmatmul.mubr.f32.gmra.mrb[0].mxu0 %v1033
      %v1223 = vpop.f32.mrb[0].mxu0
      %v1224 = vadd.f32 0.0, %v1223
      %v1225 = vpop.f32.mrb[0].mxu0
      %1226 = vmatprep.mubr.f32.mxu0 0.0
      %1227 = vmatmul.mubr.f32.gmra.mrb[0].mxu0 %v1036
      %v1228 = vpop.f32.mrb[0].mxu0
      %v1229 = vadd.f32 0.0, %v1228
      %v1230 = vpop.f32.mrb[0].mxu0
      %1231 = vmatprep.mubr.f32.mxu0 0.0
      %1232 = vmatmul.mubr.f32.gmra.mrb[0].mxu0 %v1039
      %v1233 = vpop.f32.mrb[0].mxu0
      %v1234 = vadd.f32 0.0, %v1233
      %v1235 = vpop.f32.mrb[0].mxu0
      %1236 = vmatprep.mubr.f32.mxu0 0.0
      %1237 = vmatmul.mubr.f32.gmra.mrb[0].mxu0 %v1042
      %v1238 = vpop.f32.mrb[0].mxu0
      %v1239 = vadd.f32 0.0, %v1238
      %v1240 = vpop.f32.mrb[0].mxu0
      %1241 = vmatprep.mubr.f32.mxu0 0.0
      %1242 = vmatmul.mubr.f32.gmra.mrb[0].mxu0 %v1045
      %v1243 = vpop.f32.mrb[0].mxu0
      %v1244 = vadd.f32 0.0, %v1243
      %v1245 = vpop.f32.mrb[0].mxu0
      %1246 = vmatprep.mubr.f32.mxu0 0.0
      %1247 = vmatmul.mubr.f32.gmra.mrb[0].mxu0 %v1048
      %v1248 = vpop.f32.mrb[0].mxu0
      %v1249 = vadd.f32 0.0, %v1248
      %v1250 = vpop.f32.mrb[0].mxu0
      %1251 = vmatprep.mubr.f32.mxu0 0.0
      %1252 = vmatmul.mubr.f32.gmra.mrb[0].mxu0 %v1051
      %v1253 = vpop.f32.mrb[0].mxu0
      %v1254 = vadd.f32 0.0, %v1253
      %v1255 = vpop.f32.mrb[0].mxu0
      %1256 = vmatprep.mubr.f32.mxu0 0.0
      %1257 = vmatmul.mubr.f32.gmra.mrb[0].mxu0 %v1054
      %v1258 = vpop.f32.mrb[0].mxu0
      %v1259 = vadd.f32 0.0, %v1258
      %v1260 = vpop.f32.mrb[0].mxu0
      %1261 = vmatprep.mubr.f32.mxu0 0.0
      %1262 = vmatmul.mubr.f32.gmra.mrb[0].mxu0 %v1057
      %v1263 = vpop.f32.mrb[0].mxu0
      %v1264 = vadd.f32 0.0, %v1263
      %v1265 = vpop.f32.mrb[0].mxu0
      %1266 = vmatprep.mubr.f32.mxu0 0.0
      %1267 = vmatmul.mubr.f32.gmra.mrb[0].mxu0 %v1060
      %v1268 = vpop.f32.mrb[0].mxu0
      %v1269 = vadd.f32 0.0, %v1268
      %v1270 = vpop.f32.mrb[0].mxu0
      %1271 = vmatprep.mubr.f32.mxu0 0.0
      %1272 = vmatmul.mubr.f32.gmra.mrb[0].mxu0 %v1063
      %v1273 = vpop.f32.mrb[0].mxu0
      %v1274 = vadd.f32 0.0, %v1273
      %v1275 = vpop.f32.mrb[0].mxu0
      %1276 = vmatprep.mubr.f32.mxu0 0.0
      %1277 = vmatmul.mubr.f32.gmra.mrb[0].mxu0 %v1066
      %v1278 = vpop.f32.mrb[0].mxu0
      %v1279 = vadd.f32 0.0, %v1278
      %v1280 = vpop.f32.mrb[0].mxu0
      %1281 = vmatprep.mubr.f32.mxu0 0.0
      %1282 = vmatmul.mubr.f32.gmra.mrb[0].mxu0 %v1069
      %v1283 = vpop.f32.mrb[0].mxu0
      %v1284 = vadd.f32 0.0, %v1283
      %v1285 = vpop.f32.mrb[0].mxu0
      %1286 = vmatprep.mubr.f32.mxu0 0.0
      %1287 = vmatmul.mubr.f32.gmra.mrb[0].mxu0 %v1072
      %v1288 = vpop.f32.mrb[0].mxu0
      %v1289 = vadd.f32 0.0, %v1288
      %v1290 = vpop.f32.mrb[0].mxu0
      %1291 = vmatprep.mubr.f32.mxu0 0.0
      %1292 = vmatmul.mubr.f32.gmra.mrb[0].mxu0 %v1075
      %v1293 = vpop.f32.mrb[0].mxu0
      %v1294 = vadd.f32 0.0, %v1293
      %v1295 = vpop.f32.mrb[0].mxu0
      %1296 = vmatprep.mubr.f32.mxu0 0.0
      %1297 = vmatmul.mubr.f32.gmra.mrb[0].mxu0 %v1078
      %v1298 = vpop.f32.mrb[0].mxu0
      %v1299 = vadd.f32 0.0, %v1298
      %v1300 = vpop.f32.mrb[0].mxu0
      %1301 = vmatprep.mubr.f32.mxu0 0.0
      %1302 = vmatmul.mubr.f32.gmra.mrb[0].mxu0 %v1081
      %v1303 = vpop.f32.mrb[0].mxu0
      %v1304 = vadd.f32 0.0, %v1303
      %v1305 = vpop.f32.mrb[0].mxu0
      %1306 = vmatprep.mubr.f32.mxu0 0.0
      %1307 = vmatmul.mubr.f32.gmra.mrb[0].mxu0 %v1084
      %v1308 = vpop.f32.mrb[0].mxu0
      %v1309 = vadd.f32 0.0, %v1308
      %v1310 = vpop.f32.mrb[0].mxu0
      %1311 = vmatprep.mubr.f32.mxu0 0.0
      %1312 = vmatmul.mubr.f32.gmra.mrb[0].mxu0 %v1087
      %v1313 = vpop.f32.mrb[0].mxu0
      %v1314 = vadd.f32 0.0, %v1313
      %v1315 = vpop.f32.mrb[0].mxu0
      %1316 = vdwg.mxu0
      %v1317 = vadd.f32 %v801, %v1159
      %v1318 = vadd.f32 %v806, %v1164
      %v1319 = vadd.f32 %v811, %v1169
      %v1320 = vadd.f32 %v816, %v1174
      %v1321 = vadd.f32 %v821, %v1179
      %v1322 = vadd.f32 %v826, %v1184
      %v1323 = vadd.f32 %v831, %v1189
      %v1324 = vadd.f32 %v836, %v1194
      %v1325 = vadd.f32 %v841, %v1199
      %v1326 = vadd.f32 %v846, %v1204
      %v1327 = vadd.f32 %v851, %v1209
      %v1328 = vadd.f32 %v856, %v1214
      %v1329 = vadd.f32 %v861, %v1219
      %v1330 = vadd.f32 %v866, %v1224
      %v1331 = vadd.f32 %v871, %v1229
      %v1332 = vadd.f32 %v876, %v1234
      %v1333 = vadd.f32 %v881, %v1239
      %v1334 = vadd.f32 %v886, %v1244
      %v1335 = vadd.f32 %v891, %v1249
      %v1336 = vadd.f32 %v896, %v1254
      %v1337 = vadd.f32 %v901, %v1259
      %v1338 = vadd.f32 %v906, %v1264
      %v1339 = vadd.f32 %v911, %v1269
      %v1340 = vadd.f32 %v916, %v1274
      %v1341 = vadd.f32 %v921, %v1279
      %v1342 = vadd.f32 %v926, %v1284
      %v1343 = vadd.f32 %v931, %v1289
      %v1344 = vadd.f32 %v936, %v1294
      %v1345 = vadd.f32 %v941, %v1299
      %v1346 = vadd.f32 %v946, %v1304
      %v1347 = vadd.f32 %v951, %v1309
      %v1348 = vadd.f32 %v956, %v1314
      %s1349 = scalar_lea.vmem %s230, 24
      %v1350 = vld [vmem:[%s1349] sm:$0xff]
      %v1351 = vld [vmem:[%s1349 + $0x8] sm:$0xff]
      %v1352 = vld [vmem:[%s1349 + $0x18] sm:$0xff]
      %v1353 = vld [vmem:[%s1349 + $0x20] sm:$0xff]
      %v1354 = vld [vmem:[%s1349 + $0x30] sm:$0xff]
      %v1355 = vld [vmem:[%s1349 + $0x38] sm:$0xff]
      %v1356 = vld [vmem:[%s1349 + $0x48] sm:$0xff]
      %v1357 = vld [vmem:[%s1349 + $0x50] sm:$0xff]
      %v1358 = vld [vmem:[%s1349 + $0x60] sm:$0xff]
      %v1359 = vld [vmem:[%s1349 + $0x68] sm:$0xff]
      %v1360 = vld [vmem:[%s1349 + $0x78] sm:$0xff]
      %v1361 = vld [vmem:[%s1349 + $0x80] sm:$0xff]
      %v1362 = vld [vmem:[%s1349 + $0x90] sm:$0xff]
      %v1363 = vld [vmem:[%s1349 + $0x98] sm:$0xff]
      %v1364 = vld [vmem:[%s1349 + $0xa8] sm:$0xff]
      %v1365 = vld [vmem:[%s1349 + $0xb0] sm:$0xff]
      %v1366 = vld [vmem:[%s1349 + $0xc0] sm:$0xff]
      %v1367 = vld [vmem:[%s1349 + $0xc8] sm:$0xff]
      %v1368 = vld [vmem:[%s1349 + $0xd8] sm:$0xff]
      %v1369 = vld [vmem:[%s1349 + $0xe0] sm:$0xff]
      %v1370 = vld [vmem:[%s1349 + $0xf0] sm:$0xff]
      %v1371 = vld [vmem:[%s1349 + $0xf8] sm:$0xff]
      %v1372 = vld [vmem:[%s1349 + $0x108] sm:$0xff]
      %v1373 = vld [vmem:[%s1349 + $0x110] sm:$0xff]
      %v1374 = vld [vmem:[%s1349 + $0x120] sm:$0xff]
      %v1375 = vld [vmem:[%s1349 + $0x128] sm:$0xff]
      %v1376 = vld [vmem:[%s1349 + $0x138] sm:$0xff]
      %v1377 = vld [vmem:[%s1349 + $0x140] sm:$0xff]
      %v1378 = vld [vmem:[%s1349 + $0x150] sm:$0xff]
      %v1379 = vld [vmem:[%s1349 + $0x158] sm:$0xff]
      %v1380 = vld [vmem:[%s1349 + $0x168] sm:$0xff]
      %v1381 = vld [vmem:[%s1349 + $0x170] sm:$0xff]
      %s1382 = scalar_lea.vmem %s1, 12
      %v1383 = vld [vmem:[%s1382] sm:$0xf]
      %v1385 = vsel %vm309, %v1350, 0
      %v1388 = vsel %vm309, %v1351, 0
      %v1391 = vsel %vm309, %v1352, 0
      %v1394 = vsel %vm309, %v1353, 0
      %v1397 = vsel %vm309, %v1354, 0
      %v1400 = vsel %vm309, %v1355, 0
      %v1403 = vsel %vm309, %v1356, 0
      %v1406 = vsel %vm309, %v1357, 0
      %v1409 = vsel %vm309, %v1358, 0
      %v1412 = vsel %vm309, %v1359, 0
      %v1415 = vsel %vm309, %v1360, 0
      %v1418 = vsel %vm309, %v1361, 0
      %v1421 = vsel %vm309, %v1362, 0
      %v1424 = vsel %vm309, %v1363, 0
      %v1427 = vsel %vm309, %v1364, 0
      %v1430 = vsel %vm309, %v1365, 0
      %v1433 = vsel %vm309, %v1366, 0
      %v1436 = vsel %vm309, %v1367, 0
      %v1439 = vsel %vm309, %v1368, 0
      %v1442 = vsel %vm309, %v1369, 0
      %v1445 = vsel %vm309, %v1370, 0
      %v1448 = vsel %vm309, %v1371, 0
      %v1451 = vsel %vm309, %v1372, 0
      %v1454 = vsel %vm309, %v1373, 0
      %v1457 = vsel %vm309, %v1374, 0
      %v1460 = vsel %vm309, %v1375, 0
      %v1463 = vsel %vm309, %v1376, 0
      %v1466 = vsel %vm309, %v1377, 0
      %v1469 = vsel %vm309, %v1378, 0
      %v1472 = vsel %vm309, %v1379, 0
      %v1475 = vsel %vm309, %v1380, 0
      %v1478 = vsel %vm309, %v1381, 0
      %v1481 = vsel %vm406, %v1383, 0
      %1483 = vmatprep.subr.mxu0 0.0
      %1484 = vmatpush1.msra.mxu0 %v1481
      %1485 = vmatprep.subr.mxu0 0.0
      %1486 = vmatpush1.msra.mxu0 0.0
      %1487 = vmatprep.subr.mxu0 0.0
      %1488 = vmatpush1.msra.mxu0 0.0
      %1489 = vmatprep.subr.mxu0 0.0
      %1490 = vmatpush1.msra.mxu0 0.0
      %1491 = vmatprep.subr.mxu0 0.0
      %1492 = vmatpush1.msra.mxu0 0.0
      %1493 = vmatprep.subr.mxu0 0.0
      %1494 = vmatpush1.msra.mxu0 0.0
      %1495 = vmatprep.subr.mxu0 0.0
      %1496 = vmatpush1.msra.mxu0 0.0
      %1497 = vmatprep.subr.mxu0 0.0
      %1498 = vmatpush1.msra.mxu0 0.0
      %1499 = vmatprep.subr.mxu0 0.0
      %1500 = vmatpush1.msra.mxu0 0.0
      %1501 = vmatprep.subr.mxu0 0.0
      %1502 = vmatpush1.msra.mxu0 0.0
      %1503 = vmatprep.subr.mxu0 0.0
      %1504 = vmatpush1.msra.mxu0 0.0
      %1505 = vmatprep.subr.mxu0 0.0
      %1506 = vmatpush1.msra.mxu0 0.0
      %1507 = vmatprep.subr.mxu0 0.0
      %1508 = vmatpush1.msra.mxu0 0.0
      %1509 = vmatprep.subr.mxu0 0.0
      %1510 = vmatpush1.msra.mxu0 0.0
      %1511 = vmatprep.subr.mxu0 0.0
      %1512 = vmatpush1.msra.mxu0 0.0
      %1513 = vmatprep.subr.mxu0 0.0
      %1514 = vmatpush1.msra.mxu0 0.0
      %1515 = vmatprep.subr.mxu0 0.0
      %1516 = vmatpush1.msra.mxu0 0.0
      %1517 = vmatprep.subr.mxu0 0.0
      %1518 = vmatpush1.msra.mxu0 0.0
      %1519 = vmatprep.subr.mxu0 0.0
      %1520 = vmatpush1.msra.mxu0 0.0
      %1521 = vmatprep.subr.mxu0 0.0
      %1522 = vmatpush1.msra.mxu0 0.0
      %1523 = vmatprep.subr.mxu0 0.0
      %1524 = vmatpush1.msra.mxu0 0.0
      %1525 = vmatprep.subr.mxu0 0.0
      %1526 = vmatpush1.msra.mxu0 0.0
      %1527 = vmatprep.subr.mxu0 0.0
      %1528 = vmatpush1.msra.mxu0 0.0
      %1529 = vmatprep.subr.mxu0 0.0
      %1530 = vmatpush1.msra.mxu0 0.0
      %1531 = vmatprep.subr.mxu0 0.0
      %1532 = vmatpush1.msra.mxu0 0.0
      %1533 = vmatprep.subr.mxu0 0.0
      %1534 = vmatpush1.msra.mxu0 0.0
      %1535 = vmatprep.subr.mxu0 0.0
      %1536 = vmatpush1.msra.mxu0 0.0
      %1537 = vmatprep.subr.mxu0 0.0
      %1538 = vmatpush1.msra.mxu0 0.0
      %1539 = vmatprep.subr.mxu0 0.0
      %1540 = vmatpush1.msra.mxu0 0.0
      %1541 = vmatprep.subr.mxu0 0.0
      %1542 = vmatpush1.msra.mxu0 0.0
      %1543 = vmatprep.subr.mxu0 0.0
      %1544 = vmatpush1.msra.mxu0 0.0
      %1545 = vmatprep.subr.mxu0 0.0
      %1546 = vmatpush1.msra.mxu0 0.0
      %1547 = vmatprep.mubr.f32.mxu0 0.0
      %1548 = vmatmul.mubr.f32.gmra.mrb[0].mxu0 %v1385
      %v1549 = vpop.f32.mrb[0].mxu0
      %v1550 = vadd.f32 0.0, %v1549
      %v1551 = vpop.f32.mrb[0].mxu0
      %1552 = vmatprep.mubr.f32.mxu0 0.0
      %1553 = vmatmul.mubr.f32.gmra.mrb[0].mxu0 %v1388
      %v1554 = vpop.f32.mrb[0].mxu0
      %v1555 = vadd.f32 0.0, %v1554
      %v1556 = vpop.f32.mrb[0].mxu0
      %1557 = vmatprep.mubr.f32.mxu0 0.0
      %1558 = vmatmul.mubr.f32.gmra.mrb[0].mxu0 %v1391
      %v1559 = vpop.f32.mrb[0].mxu0
      %v1560 = vadd.f32 0.0, %v1559
      %v1561 = vpop.f32.mrb[0].mxu0
      %1562 = vmatprep.mubr.f32.mxu0 0.0
      %1563 = vmatmul.mubr.f32.gmra.mrb[0].mxu0 %v1394
      %v1564 = vpop.f32.mrb[0].mxu0
      %v1565 = vadd.f32 0.0, %v1564
      %v1566 = vpop.f32.mrb[0].mxu0
      %1567 = vmatprep.mubr.f32.mxu0 0.0
      %1568 = vmatmul.mubr.f32.gmra.mrb[0].mxu0 %v1397
      %v1569 = vpop.f32.mrb[0].mxu0
      %v1570 = vadd.f32 0.0, %v1569
      %v1571 = vpop.f32.mrb[0].mxu0
      %1572 = vmatprep.mubr.f32.mxu0 0.0
      %1573 = vmatmul.mubr.f32.gmra.mrb[0].mxu0 %v1400
      %v1574 = vpop.f32.mrb[0].mxu0
      %v1575 = vadd.f32 0.0, %v1574
      %v1576 = vpop.f32.mrb[0].mxu0
      %1577 = vmatprep.mubr.f32.mxu0 0.0
      %1578 = vmatmul.mubr.f32.gmra.mrb[0].mxu0 %v1403
      %v1579 = vpop.f32.mrb[0].mxu0
      %v1580 = vadd.f32 0.0, %v1579
      %v1581 = vpop.f32.mrb[0].mxu0
      %1582 = vmatprep.mubr.f32.mxu0 0.0
      %1583 = vmatmul.mubr.f32.gmra.mrb[0].mxu0 %v1406
      %v1584 = vpop.f32.mrb[0].mxu0
      %v1585 = vadd.f32 0.0, %v1584
      %v1586 = vpop.f32.mrb[0].mxu0
      %1587 = vmatprep.mubr.f32.mxu0 0.0
      %1588 = vmatmul.mubr.f32.gmra.mrb[0].mxu0 %v1409
      %v1589 = vpop.f32.mrb[0].mxu0
      %v1590 = vadd.f32 0.0, %v1589
      %v1591 = vpop.f32.mrb[0].mxu0
      %1592 = vmatprep.mubr.f32.mxu0 0.0
      %1593 = vmatmul.mubr.f32.gmra.mrb[0].mxu0 %v1412
      %v1594 = vpop.f32.mrb[0].mxu0
      %v1595 = vadd.f32 0.0, %v1594
      %v1596 = vpop.f32.mrb[0].mxu0
      %1597 = vmatprep.mubr.f32.mxu0 0.0
      %1598 = vmatmul.mubr.f32.gmra.mrb[0].mxu0 %v1415
      %v1599 = vpop.f32.mrb[0].mxu0
      %v1600 = vadd.f32 0.0, %v1599
      %v1601 = vpop.f32.mrb[0].mxu0
      %1602 = vmatprep.mubr.f32.mxu0 0.0
      %1603 = vmatmul.mubr.f32.gmra.mrb[0].mxu0 %v1418
      %v1604 = vpop.f32.mrb[0].mxu0
      %v1605 = vadd.f32 0.0, %v1604
      %v1606 = vpop.f32.mrb[0].mxu0
      %1607 = vmatprep.mubr.f32.mxu0 0.0
      %1608 = vmatmul.mubr.f32.gmra.mrb[0].mxu0 %v1421
      %v1609 = vpop.f32.mrb[0].mxu0
      %v1610 = vadd.f32 0.0, %v1609
      %v1611 = vpop.f32.mrb[0].mxu0
      %1612 = vmatprep.mubr.f32.mxu0 0.0
      %1613 = vmatmul.mubr.f32.gmra.mrb[0].mxu0 %v1424
      %v1614 = vpop.f32.mrb[0].mxu0
      %v1615 = vadd.f32 0.0, %v1614
      %v1616 = vpop.f32.mrb[0].mxu0
      %1617 = vmatprep.mubr.f32.mxu0 0.0
      %1618 = vmatmul.mubr.f32.gmra.mrb[0].mxu0 %v1427
      %v1619 = vpop.f32.mrb[0].mxu0
      %v1620 = vadd.f32 0.0, %v1619
      %v1621 = vpop.f32.mrb[0].mxu0
      %1622 = vmatprep.mubr.f32.mxu0 0.0
      %1623 = vmatmul.mubr.f32.gmra.mrb[0].mxu0 %v1430
      %v1624 = vpop.f32.mrb[0].mxu0
      %v1625 = vadd.f32 0.0, %v1624
      %v1626 = vpop.f32.mrb[0].mxu0
      %1627 = vmatprep.mubr.f32.mxu0 0.0
      %1628 = vmatmul.mubr.f32.gmra.mrb[0].mxu0 %v1433
      %v1629 = vpop.f32.mrb[0].mxu0
      %v1630 = vadd.f32 0.0, %v1629
      %v1631 = vpop.f32.mrb[0].mxu0
      %1632 = vmatprep.mubr.f32.mxu0 0.0
      %1633 = vmatmul.mubr.f32.gmra.mrb[0].mxu0 %v1436
      %v1634 = vpop.f32.mrb[0].mxu0
      %v1635 = vadd.f32 0.0, %v1634
      %v1636 = vpop.f32.mrb[0].mxu0
      %1637 = vmatprep.mubr.f32.mxu0 0.0
      %1638 = vmatmul.mubr.f32.gmra.mrb[0].mxu0 %v1439
      %v1639 = vpop.f32.mrb[0].mxu0
      %v1640 = vadd.f32 0.0, %v1639
      %v1641 = vpop.f32.mrb[0].mxu0
      %1642 = vmatprep.mubr.f32.mxu0 0.0
      %1643 = vmatmul.mubr.f32.gmra.mrb[0].mxu0 %v1442
      %v1644 = vpop.f32.mrb[0].mxu0
      %v1645 = vadd.f32 0.0, %v1644
      %v1646 = vpop.f32.mrb[0].mxu0
      %1647 = vmatprep.mubr.f32.mxu0 0.0
      %1648 = vmatmul.mubr.f32.gmra.mrb[0].mxu0 %v1445
      %v1649 = vpop.f32.mrb[0].mxu0
      %v1650 = vadd.f32 0.0, %v1649
      %v1651 = vpop.f32.mrb[0].mxu0
      %1652 = vmatprep.mubr.f32.mxu0 0.0
      %1653 = vmatmul.mubr.f32.gmra.mrb[0].mxu0 %v1448
      %v1654 = vpop.f32.mrb[0].mxu0
      %v1655 = vadd.f32 0.0, %v1654
      %v1656 = vpop.f32.mrb[0].mxu0
      %1657 = vmatprep.mubr.f32.mxu0 0.0
      %1658 = vmatmul.mubr.f32.gmra.mrb[0].mxu0 %v1451
      %v1659 = vpop.f32.mrb[0].mxu0
      %v1660 = vadd.f32 0.0, %v1659
      %v1661 = vpop.f32.mrb[0].mxu0
      %1662 = vmatprep.mubr.f32.mxu0 0.0
      %1663 = vmatmul.mubr.f32.gmra.mrb[0].mxu0 %v1454
      %v1664 = vpop.f32.mrb[0].mxu0
      %v1665 = vadd.f32 0.0, %v1664
      %v1666 = vpop.f32.mrb[0].mxu0
      %1667 = vmatprep.mubr.f32.mxu0 0.0
      %1668 = vmatmul.mubr.f32.gmra.mrb[0].mxu0 %v1457
      %v1669 = vpop.f32.mrb[0].mxu0
      %v1670 = vadd.f32 0.0, %v1669
      %v1671 = vpop.f32.mrb[0].mxu0
      %1672 = vmatprep.mubr.f32.mxu0 0.0
      %1673 = vmatmul.mubr.f32.gmra.mrb[0].mxu0 %v1460
      %v1674 = vpop.f32.mrb[0].mxu0
      %v1675 = vadd.f32 0.0, %v1674
      %v1676 = vpop.f32.mrb[0].mxu0
      %1677 = vmatprep.mubr.f32.mxu0 0.0
      %1678 = vmatmul.mubr.f32.gmra.mrb[0].mxu0 %v1463
      %v1679 = vpop.f32.mrb[0].mxu0
      %v1680 = vadd.f32 0.0, %v1679
      %v1681 = vpop.f32.mrb[0].mxu0
      %1682 = vmatprep.mubr.f32.mxu0 0.0
      %1683 = vmatmul.mubr.f32.gmra.mrb[0].mxu0 %v1466
      %v1684 = vpop.f32.mrb[0].mxu0
      %v1685 = vadd.f32 0.0, %v1684
      %v1686 = vpop.f32.mrb[0].mxu0
      %1687 = vmatprep.mubr.f32.mxu0 0.0
      %1688 = vmatmul.mubr.f32.gmra.mrb[0].mxu0 %v1469
      %v1689 = vpop.f32.mrb[0].mxu0
      %v1690 = vadd.f32 0.0, %v1689
      %v1691 = vpop.f32.mrb[0].mxu0
      %1692 = vmatprep.mubr.f32.mxu0 0.0
      %1693 = vmatmul.mubr.f32.gmra.mrb[0].mxu0 %v1472
      %v1694 = vpop.f32.mrb[0].mxu0
      %v1695 = vadd.f32 0.0, %v1694
      %v1696 = vpop.f32.mrb[0].mxu0
      %1697 = vmatprep.mubr.f32.mxu0 0.0
      %1698 = vmatmul.mubr.f32.gmra.mrb[0].mxu0 %v1475
      %v1699 = vpop.f32.mrb[0].mxu0
      %v1700 = vadd.f32 0.0, %v1699
      %v1701 = vpop.f32.mrb[0].mxu0
      %1702 = vmatprep.mubr.f32.mxu0 0.0
      %1703 = vmatmul.mubr.f32.gmra.mrb[0].mxu0 %v1478
      %v1704 = vpop.f32.mrb[0].mxu0
      %v1705 = vadd.f32 0.0, %v1704
      %v1706 = vpop.f32.mrb[0].mxu0
      %1707 = vdwg.mxu0
      %v1708 = vadd.f32 %v1317, %v1550
      %v1709 = vadd.f32 %v1318, %v1555
      %v1710 = vadd.f32 %v1319, %v1560
      %v1711 = vadd.f32 %v1320, %v1565
      %v1712 = vadd.f32 %v1321, %v1570
      %v1713 = vadd.f32 %v1322, %v1575
      %v1714 = vadd.f32 %v1323, %v1580
      %v1715 = vadd.f32 %v1324, %v1585
      %v1716 = vadd.f32 %v1325, %v1590
      %v1717 = vadd.f32 %v1326, %v1595
      %v1718 = vadd.f32 %v1327, %v1600
      %v1719 = vadd.f32 %v1328, %v1605
      %v1720 = vadd.f32 %v1329, %v1610
      %v1721 = vadd.f32 %v1330, %v1615
      %v1722 = vadd.f32 %v1331, %v1620
      %v1723 = vadd.f32 %v1332, %v1625
      %v1724 = vadd.f32 %v1333, %v1630
      %v1725 = vadd.f32 %v1334, %v1635
      %v1726 = vadd.f32 %v1335, %v1640
      %v1727 = vadd.f32 %v1336, %v1645
      %v1728 = vadd.f32 %v1337, %v1650
      %v1729 = vadd.f32 %v1338, %v1655
      %v1730 = vadd.f32 %v1339, %v1660
      %v1731 = vadd.f32 %v1340, %v1665
      %v1732 = vadd.f32 %v1341, %v1670
      %v1733 = vadd.f32 %v1342, %v1675
      %v1734 = vadd.f32 %v1343, %v1680
      %v1735 = vadd.f32 %v1344, %v1685
      %v1736 = vadd.f32 %v1345, %v1690
      %v1737 = vadd.f32 %v1346, %v1695
      %v1738 = vadd.f32 %v1347, %v1700
      %v1739 = vadd.f32 %v1348, %v1705
      %v1740 = vld [vmem:[%s1349 + $0x1] sm:$0xff]
      %v1741 = vld [vmem:[%s1349 + $0x9] sm:$0xff]
      %v1742 = vld [vmem:[%s1349 + $0x19] sm:$0xff]
      %v1743 = vld [vmem:[%s1349 + $0x21] sm:$0xff]
      %v1744 = vld [vmem:[%s1349 + $0x31] sm:$0xff]
      %v1745 = vld [vmem:[%s1349 + $0x39] sm:$0xff]
      %v1746 = vld [vmem:[%s1349 + $0x49] sm:$0xff]
      %v1747 = vld [vmem:[%s1349 + $0x51] sm:$0xff]
      %v1748 = vld [vmem:[%s1349 + $0x61] sm:$0xff]
      %v1749 = vld [vmem:[%s1349 + $0x69] sm:$0xff]
      %v1750 = vld [vmem:[%s1349 + $0x79] sm:$0xff]
      %v1751 = vld [vmem:[%s1349 + $0x81] sm:$0xff]
      %v1752 = vld [vmem:[%s1349 + $0x91] sm:$0xff]
      %v1753 = vld [vmem:[%s1349 + $0x99] sm:$0xff]
      %v1754 = vld [vmem:[%s1349 + $0xa9] sm:$0xff]
      %v1755 = vld [vmem:[%s1349 + $0xb1] sm:$0xff]
      %v1756 = vld [vmem:[%s1349 + $0xc1] sm:$0xff]
      %v1757 = vld [vmem:[%s1349 + $0xc9] sm:$0xff]
      %v1758 = vld [vmem:[%s1349 + $0xd9] sm:$0xff]
      %v1759 = vld [vmem:[%s1349 + $0xe1] sm:$0xff]
      %v1760 = vld [vmem:[%s1349 + $0xf1] sm:$0xff]
      %v1761 = vld [vmem:[%s1349 + $0xf9] sm:$0xff]
      %v1762 = vld [vmem:[%s1349 + $0x109] sm:$0xff]
      %v1763 = vld [vmem:[%s1349 + $0x111] sm:$0xff]
      %v1764 = vld [vmem:[%s1349 + $0x121] sm:$0xff]
      %v1765 = vld [vmem:[%s1349 + $0x129] sm:$0xff]
      %v1766 = vld [vmem:[%s1349 + $0x139] sm:$0xff]
      %v1767 = vld [vmem:[%s1349 + $0x141] sm:$0xff]
      %v1768 = vld [vmem:[%s1349 + $0x151] sm:$0xff]
      %v1769 = vld [vmem:[%s1349 + $0x159] sm:$0xff]
      %v1770 = vld [vmem:[%s1349 + $0x169] sm:$0xff]
      %v1771 = vld [vmem:[%s1349 + $0x171] sm:$0xff]
      %s1772 = scalar_lea.vmem %s1, 16
      %v1773 = vld [vmem:[%s1772] sm:$0xf]
      %v1775 = vsel %vm309, %v1740, 0
      %v1778 = vsel %vm309, %v1741, 0
      %v1781 = vsel %vm309, %v1742, 0
      %v1784 = vsel %vm309, %v1743, 0
      %v1787 = vsel %vm309, %v1744, 0
      %v1790 = vsel %vm309, %v1745, 0
      %v1793 = vsel %vm309, %v1746, 0
      %v1796 = vsel %vm309, %v1747, 0
      %v1799 = vsel %vm309, %v1748, 0
      %v1802 = vsel %vm309, %v1749, 0
      %v1805 = vsel %vm309, %v1750, 0
      %v1808 = vsel %vm309, %v1751, 0
      %v1811 = vsel %vm309, %v1752, 0
      %v1814 = vsel %vm309, %v1753, 0
      %v1817 = vsel %vm309, %v1754, 0
      %v1820 = vsel %vm309, %v1755, 0
      %v1823 = vsel %vm309, %v1756, 0
      %v1826 = vsel %vm309, %v1757, 0
      %v1829 = vsel %vm309, %v1758, 0
      %v1832 = vsel %vm309, %v1759, 0
      %v1835 = vsel %vm309, %v1760, 0
      %v1838 = vsel %vm309, %v1761, 0
      %v1841 = vsel %vm309, %v1762, 0
      %v1844 = vsel %vm309, %v1763, 0
      %v1847 = vsel %vm309, %v1764, 0
      %v1850 = vsel %vm309, %v1765, 0
      %v1853 = vsel %vm309, %v1766, 0
      %v1856 = vsel %vm309, %v1767, 0
      %v1859 = vsel %vm309, %v1768, 0
      %v1862 = vsel %vm309, %v1769, 0
      %v1865 = vsel %vm309, %v1770, 0
      %v1868 = vsel %vm309, %v1771, 0
      %v1871 = vsel %vm406, %v1773, 0
      %1873 = vmatprep.subr.mxu0 0.0
      %1874 = vmatpush1.msra.mxu0 %v1871
      %1875 = vmatprep.subr.mxu0 0.0
      %1876 = vmatpush1.msra.mxu0 0.0
      %1877 = vmatprep.subr.mxu0 0.0
      %1878 = vmatpush1.msra.mxu0 0.0
      %1879 = vmatprep.subr.mxu0 0.0
      %1880 = vmatpush1.msra.mxu0 0.0
      %1881 = vmatprep.subr.mxu0 0.0
      %1882 = vmatpush1.msra.mxu0 0.0
      %1883 = vmatprep.subr.mxu0 0.0
      %1884 = vmatpush1.msra.mxu0 0.0
      %1885 = vmatprep.subr.mxu0 0.0
      %1886 = vmatpush1.msra.mxu0 0.0
      %1887 = vmatprep.subr.mxu0 0.0
      %1888 = vmatpush1.msra.mxu0 0.0
      %1889 = vmatprep.subr.mxu0 0.0
      %1890 = vmatpush1.msra.mxu0 0.0
      %1891 = vmatprep.subr.mxu0 0.0
      %1892 = vmatpush1.msra.mxu0 0.0
      %1893 = vmatprep.subr.mxu0 0.0
      %1894 = vmatpush1.msra.mxu0 0.0
      %1895 = vmatprep.subr.mxu0 0.0
      %1896 = vmatpush1.msra.mxu0 0.0
      %1897 = vmatprep.subr.mxu0 0.0
      %1898 = vmatpush1.msra.mxu0 0.0
      %1899 = vmatprep.subr.mxu0 0.0
      %1900 = vmatpush1.msra.mxu0 0.0
      %1901 = vmatprep.subr.mxu0 0.0
      %1902 = vmatpush1.msra.mxu0 0.0
      %1903 = vmatprep.subr.mxu0 0.0
      %1904 = vmatpush1.msra.mxu0 0.0
      %1905 = vmatprep.subr.mxu0 0.0
      %1906 = vmatpush1.msra.mxu0 0.0
      %1907 = vmatprep.subr.mxu0 0.0
      %1908 = vmatpush1.msra.mxu0 0.0
      %1909 = vmatprep.subr.mxu0 0.0
      %1910 = vmatpush1.msra.mxu0 0.0
      %1911 = vmatprep.subr.mxu0 0.0
      %1912 = vmatpush1.msra.mxu0 0.0
      %1913 = vmatprep.subr.mxu0 0.0
      %1914 = vmatpush1.msra.mxu0 0.0
      %1915 = vmatprep.subr.mxu0 0.0
      %1916 = vmatpush1.msra.mxu0 0.0
      %1917 = vmatprep.subr.mxu0 0.0
      %1918 = vmatpush1.msra.mxu0 0.0
      %1919 = vmatprep.subr.mxu0 0.0
      %1920 = vmatpush1.msra.mxu0 0.0
      %1921 = vmatprep.subr.mxu0 0.0
      %1922 = vmatpush1.msra.mxu0 0.0
      %1923 = vmatprep.subr.mxu0 0.0
      %1924 = vmatpush1.msra.mxu0 0.0
      %1925 = vmatprep.subr.mxu0 0.0
      %1926 = vmatpush1.msra.mxu0 0.0
      %1927 = vmatprep.subr.mxu0 0.0
      %1928 = vmatpush1.msra.mxu0 0.0
      %1929 = vmatprep.subr.mxu0 0.0
      %1930 = vmatpush1.msra.mxu0 0.0
      %1931 = vmatprep.subr.mxu0 0.0
      %1932 = vmatpush1.msra.mxu0 0.0
      %1933 = vmatprep.subr.mxu0 0.0
      %1934 = vmatpush1.msra.mxu0 0.0
      %1935 = vmatprep.subr.mxu0 0.0
      %1936 = vmatpush1.msra.mxu0 0.0
      %1937 = vmatprep.mubr.f32.mxu0 0.0
      %1938 = vmatmul.mubr.f32.gmra.mrb[0].mxu0 %v1775
      %v1939 = vpop.f32.mrb[0].mxu0
      %v1940 = vadd.f32 0.0, %v1939
      %v1941 = vpop.f32.mrb[0].mxu0
      %1942 = vmatprep.mubr.f32.mxu0 0.0
      %1943 = vmatmul.mubr.f32.gmra.mrb[0].mxu0 %v1778
      %v1944 = vpop.f32.mrb[0].mxu0
      %v1945 = vadd.f32 0.0, %v1944
      %v1946 = vpop.f32.mrb[0].mxu0
      %1947 = vmatprep.mubr.f32.mxu0 0.0
      %1948 = vmatmul.mubr.f32.gmra.mrb[0].mxu0 %v1781
      %v1949 = vpop.f32.mrb[0].mxu0
      %v1950 = vadd.f32 0.0, %v1949
      %v1951 = vpop.f32.mrb[0].mxu0
      %1952 = vmatprep.mubr.f32.mxu0 0.0
      %1953 = vmatmul.mubr.f32.gmra.mrb[0].mxu0 %v1784
      %v1954 = vpop.f32.mrb[0].mxu0
      %v1955 = vadd.f32 0.0, %v1954
      %v1956 = vpop.f32.mrb[0].mxu0
      %1957 = vmatprep.mubr.f32.mxu0 0.0
      %1958 = vmatmul.mubr.f32.gmra.mrb[0].mxu0 %v1787
      %v1959 = vpop.f32.mrb[0].mxu0
      %v1960 = vadd.f32 0.0, %v1959
      %v1961 = vpop.f32.mrb[0].mxu0
      %1962 = vmatprep.mubr.f32.mxu0 0.0
      %1963 = vmatmul.mubr.f32.gmra.mrb[0].mxu0 %v1790
      %v1964 = vpop.f32.mrb[0].mxu0
      %v1965 = vadd.f32 0.0, %v1964
      %v1966 = vpop.f32.mrb[0].mxu0
      %1967 = vmatprep.mubr.f32.mxu0 0.0
      %1968 = vmatmul.mubr.f32.gmra.mrb[0].mxu0 %v1793
      %v1969 = vpop.f32.mrb[0].mxu0
      %v1970 = vadd.f32 0.0, %v1969
      %v1971 = vpop.f32.mrb[0].mxu0
      %1972 = vmatprep.mubr.f32.mxu0 0.0
      %1973 = vmatmul.mubr.f32.gmra.mrb[0].mxu0 %v1796
      %v1974 = vpop.f32.mrb[0].mxu0
      %v1975 = vadd.f32 0.0, %v1974
      %v1976 = vpop.f32.mrb[0].mxu0
      %1977 = vmatprep.mubr.f32.mxu0 0.0
      %1978 = vmatmul.mubr.f32.gmra.mrb[0].mxu0 %v1799
      %v1979 = vpop.f32.mrb[0].mxu0
      %v1980 = vadd.f32 0.0, %v1979
      %v1981 = vpop.f32.mrb[0].mxu0
      %1982 = vmatprep.mubr.f32.mxu0 0.0
      %1983 = vmatmul.mubr.f32.gmra.mrb[0].mxu0 %v1802
      %v1984 = vpop.f32.mrb[0].mxu0
      %v1985 = vadd.f32 0.0, %v1984
      %v1986 = vpop.f32.mrb[0].mxu0
      %1987 = vmatprep.mubr.f32.mxu0 0.0
      %1988 = vmatmul.mubr.f32.gmra.mrb[0].mxu0 %v1805
      %v1989 = vpop.f32.mrb[0].mxu0
      %v1990 = vadd.f32 0.0, %v1989
      %v1991 = vpop.f32.mrb[0].mxu0
      %1992 = vmatprep.mubr.f32.mxu0 0.0
      %1993 = vmatmul.mubr.f32.gmra.mrb[0].mxu0 %v1808
      %v1994 = vpop.f32.mrb[0].mxu0
      %v1995 = vadd.f32 0.0, %v1994
      %v1996 = vpop.f32.mrb[0].mxu0
      %1997 = vmatprep.mubr.f32.mxu0 0.0
      %1998 = vmatmul.mubr.f32.gmra.mrb[0].mxu0 %v1811
      %v1999 = vpop.f32.mrb[0].mxu0
      %v2000 = vadd.f32 0.0, %v1999
      %v2001 = vpop.f32.mrb[0].mxu0
      %2002 = vmatprep.mubr.f32.mxu0 0.0
      %2003 = vmatmul.mubr.f32.gmra.mrb[0].mxu0 %v1814
      %v2004 = vpop.f32.mrb[0].mxu0
      %v2005 = vadd.f32 0.0, %v2004
      %v2006 = vpop.f32.mrb[0].mxu0
      %2007 = vmatprep.mubr.f32.mxu0 0.0
      %2008 = vmatmul.mubr.f32.gmra.mrb[0].mxu0 %v1817
      %v2009 = vpop.f32.mrb[0].mxu0
      %v2010 = vadd.f32 0.0, %v2009
      %v2011 = vpop.f32.mrb[0].mxu0
      %2012 = vmatprep.mubr.f32.mxu0 0.0
      %2013 = vmatmul.mubr.f32.gmra.mrb[0].mxu0 %v1820
      %v2014 = vpop.f32.mrb[0].mxu0
      %v2015 = vadd.f32 0.0, %v2014
      %v2016 = vpop.f32.mrb[0].mxu0
      %2017 = vmatprep.mubr.f32.mxu0 0.0
      %2018 = vmatmul.mubr.f32.gmra.mrb[0].mxu0 %v1823
      %v2019 = vpop.f32.mrb[0].mxu0
      %v2020 = vadd.f32 0.0, %v2019
      %v2021 = vpop.f32.mrb[0].mxu0
      %2022 = vmatprep.mubr.f32.mxu0 0.0
      %2023 = vmatmul.mubr.f32.gmra.mrb[0].mxu0 %v1826
      %v2024 = vpop.f32.mrb[0].mxu0
      %v2025 = vadd.f32 0.0, %v2024
      %v2026 = vpop.f32.mrb[0].mxu0
      %2027 = vmatprep.mubr.f32.mxu0 0.0
      %2028 = vmatmul.mubr.f32.gmra.mrb[0].mxu0 %v1829
      %v2029 = vpop.f32.mrb[0].mxu0
      %v2030 = vadd.f32 0.0, %v2029
      %v2031 = vpop.f32.mrb[0].mxu0
      %2032 = vmatprep.mubr.f32.mxu0 0.0
      %2033 = vmatmul.mubr.f32.gmra.mrb[0].mxu0 %v1832
      %v2034 = vpop.f32.mrb[0].mxu0
      %v2035 = vadd.f32 0.0, %v2034
      %v2036 = vpop.f32.mrb[0].mxu0
      %2037 = vmatprep.mubr.f32.mxu0 0.0
      %2038 = vmatmul.mubr.f32.gmra.mrb[0].mxu0 %v1835
      %v2039 = vpop.f32.mrb[0].mxu0
      %v2040 = vadd.f32 0.0, %v2039
      %v2041 = vpop.f32.mrb[0].mxu0
      %2042 = vmatprep.mubr.f32.mxu0 0.0
      %2043 = vmatmul.mubr.f32.gmra.mrb[0].mxu0 %v1838
      %v2044 = vpop.f32.mrb[0].mxu0
      %v2045 = vadd.f32 0.0, %v2044
      %v2046 = vpop.f32.mrb[0].mxu0
      %2047 = vmatprep.mubr.f32.mxu0 0.0
      %2048 = vmatmul.mubr.f32.gmra.mrb[0].mxu0 %v1841
      %v2049 = vpop.f32.mrb[0].mxu0
      %v2050 = vadd.f32 0.0, %v2049
      %v2051 = vpop.f32.mrb[0].mxu0
      %2052 = vmatprep.mubr.f32.mxu0 0.0
      %2053 = vmatmul.mubr.f32.gmra.mrb[0].mxu0 %v1844
      %v2054 = vpop.f32.mrb[0].mxu0
      %v2055 = vadd.f32 0.0, %v2054
      %v2056 = vpop.f32.mrb[0].mxu0
      %2057 = vmatprep.mubr.f32.mxu0 0.0
      %2058 = vmatmul.mubr.f32.gmra.mrb[0].mxu0 %v1847
      %v2059 = vpop.f32.mrb[0].mxu0
      %v2060 = vadd.f32 0.0, %v2059
      %v2061 = vpop.f32.mrb[0].mxu0
      %2062 = vmatprep.mubr.f32.mxu0 0.0
      %2063 = vmatmul.mubr.f32.gmra.mrb[0].mxu0 %v1850
      %v2064 = vpop.f32.mrb[0].mxu0
      %v2065 = vadd.f32 0.0, %v2064
      %v2066 = vpop.f32.mrb[0].mxu0
      %2067 = vmatprep.mubr.f32.mxu0 0.0
      %2068 = vmatmul.mubr.f32.gmra.mrb[0].mxu0 %v1853
      %v2069 = vpop.f32.mrb[0].mxu0
      %v2070 = vadd.f32 0.0, %v2069
      %v2071 = vpop.f32.mrb[0].mxu0
      %2072 = vmatprep.mubr.f32.mxu0 0.0
      %2073 = vmatmul.mubr.f32.gmra.mrb[0].mxu0 %v1856
      %v2074 = vpop.f32.mrb[0].mxu0
      %v2075 = vadd.f32 0.0, %v2074
      %v2076 = vpop.f32.mrb[0].mxu0
      %2077 = vmatprep.mubr.f32.mxu0 0.0
      %2078 = vmatmul.mubr.f32.gmra.mrb[0].mxu0 %v1859
      %v2079 = vpop.f32.mrb[0].mxu0
      %v2080 = vadd.f32 0.0, %v2079
      %v2081 = vpop.f32.mrb[0].mxu0
      %2082 = vmatprep.mubr.f32.mxu0 0.0
      %2083 = vmatmul.mubr.f32.gmra.mrb[0].mxu0 %v1862
      %v2084 = vpop.f32.mrb[0].mxu0
      %v2085 = vadd.f32 0.0, %v2084
      %v2086 = vpop.f32.mrb[0].mxu0
      %2087 = vmatprep.mubr.f32.mxu0 0.0
      %2088 = vmatmul.mubr.f32.gmra.mrb[0].mxu0 %v1865
      %v2089 = vpop.f32.mrb[0].mxu0
      %v2090 = vadd.f32 0.0, %v2089
      %v2091 = vpop.f32.mrb[0].mxu0
      %2092 = vmatprep.mubr.f32.mxu0 0.0
      %2093 = vmatmul.mubr.f32.gmra.mrb[0].mxu0 %v1868
      %v2094 = vpop.f32.mrb[0].mxu0
      %v2095 = vadd.f32 0.0, %v2094
      %v2096 = vpop.f32.mrb[0].mxu0
      %2097 = vdwg.mxu0
      %v2098 = vadd.f32 %v1708, %v1940
      %v2099 = vadd.f32 %v1709, %v1945
      %v2100 = vadd.f32 %v1710, %v1950
      %v2101 = vadd.f32 %v1711, %v1955
      %v2102 = vadd.f32 %v1712, %v1960
      %v2103 = vadd.f32 %v1713, %v1965
      %v2104 = vadd.f32 %v1714, %v1970
      %v2105 = vadd.f32 %v1715, %v1975
      %v2106 = vadd.f32 %v1716, %v1980
      %v2107 = vadd.f32 %v1717, %v1985
      %v2108 = vadd.f32 %v1718, %v1990
      %v2109 = vadd.f32 %v1719, %v1995
      %v2110 = vadd.f32 %v1720, %v2000
      %v2111 = vadd.f32 %v1721, %v2005
      %v2112 = vadd.f32 %v1722, %v2010
      %v2113 = vadd.f32 %v1723, %v2015
      %v2114 = vadd.f32 %v1724, %v2020
      %v2115 = vadd.f32 %v1725, %v2025
      %v2116 = vadd.f32 %v1726, %v2030
      %v2117 = vadd.f32 %v1727, %v2035
      %v2118 = vadd.f32 %v1728, %v2040
      %v2119 = vadd.f32 %v1729, %v2045
      %v2120 = vadd.f32 %v1730, %v2050
      %v2121 = vadd.f32 %v1731, %v2055
      %v2122 = vadd.f32 %v1732, %v2060
      %v2123 = vadd.f32 %v1733, %v2065
      %v2124 = vadd.f32 %v1734, %v2070
      %v2125 = vadd.f32 %v1735, %v2075
      %v2126 = vadd.f32 %v1736, %v2080
      %v2127 = vadd.f32 %v1737, %v2085
      %v2128 = vadd.f32 %v1738, %v2090
      %v2129 = vadd.f32 %v1739, %v2095
      %v2130 = vld [vmem:[%s1349 + $0x2] sm:$0xff]
      %v2131 = vld [vmem:[%s1349 + $0xa] sm:$0xff]
      %v2132 = vld [vmem:[%s1349 + $0x1a] sm:$0xff]
      %v2133 = vld [vmem:[%s1349 + $0x22] sm:$0xff]
      %v2134 = vld [vmem:[%s1349 + $0x32] sm:$0xff]
      %v2135 = vld [vmem:[%s1349 + $0x3a] sm:$0xff]
      %v2136 = vld [vmem:[%s1349 + $0x4a] sm:$0xff]
      %v2137 = vld [vmem:[%s1349 + $0x52] sm:$0xff]
      %v2138 = vld [vmem:[%s1349 + $0x62] sm:$0xff]
      %v2139 = vld [vmem:[%s1349 + $0x6a] sm:$0xff]
      %v2140 = vld [vmem:[%s1349 + $0x7a] sm:$0xff]
      %v2141 = vld [vmem:[%s1349 + $0x82] sm:$0xff]
      %v2142 = vld [vmem:[%s1349 + $0x92] sm:$0xff]
      %v2143 = vld [vmem:[%s1349 + $0x9a] sm:$0xff]
      %v2144 = vld [vmem:[%s1349 + $0xaa] sm:$0xff]
      %v2145 = vld [vmem:[%s1349 + $0xb2] sm:$0xff]
      %v2146 = vld [vmem:[%s1349 + $0xc2] sm:$0xff]
      %v2147 = vld [vmem:[%s1349 + $0xca] sm:$0xff]
      %v2148 = vld [vmem:[%s1349 + $0xda] sm:$0xff]
      %v2149 = vld [vmem:[%s1349 + $0xe2] sm:$0xff]
      %v2150 = vld [vmem:[%s1349 + $0xf2] sm:$0xff]
      %v2151 = vld [vmem:[%s1349 + $0xfa] sm:$0xff]
      %v2152 = vld [vmem:[%s1349 + $0x10a] sm:$0xff]
      %v2153 = vld [vmem:[%s1349 + $0x112] sm:$0xff]
      %v2154 = vld [vmem:[%s1349 + $0x122] sm:$0xff]
      %v2155 = vld [vmem:[%s1349 + $0x12a] sm:$0xff]
      %v2156 = vld [vmem:[%s1349 + $0x13a] sm:$0xff]
      %v2157 = vld [vmem:[%s1349 + $0x142] sm:$0xff]
      %v2158 = vld [vmem:[%s1349 + $0x152] sm:$0xff]
      %v2159 = vld [vmem:[%s1349 + $0x15a] sm:$0xff]
      %v2160 = vld [vmem:[%s1349 + $0x16a] sm:$0xff]
      %v2161 = vld [vmem:[%s1349 + $0x172] sm:$0xff]
      %s2162 = scalar_lea.vmem %s1, 20
      %v2163 = vld [vmem:[%s2162] sm:$0xf]
      %v2165 = vsel %vm309, %v2130, 0
      %v2168 = vsel %vm309, %v2131, 0
      %v2171 = vsel %vm309, %v2132, 0
      %v2174 = vsel %vm309, %v2133, 0
      %v2177 = vsel %vm309, %v2134, 0
      %v2180 = vsel %vm309, %v2135, 0
      %v2183 = vsel %vm309, %v2136, 0
      %v2186 = vsel %vm309, %v2137, 0
      %v2189 = vsel %vm309, %v2138, 0
      %v2192 = vsel %vm309, %v2139, 0
      %v2195 = vsel %vm309, %v2140, 0
      %v2198 = vsel %vm309, %v2141, 0
      %v2201 = vsel %vm309, %v2142, 0
      %v2204 = vsel %vm309, %v2143, 0
      %v2207 = vsel %vm309, %v2144, 0
      %v2210 = vsel %vm309, %v2145, 0
      %v2213 = vsel %vm309, %v2146, 0
      %v2216 = vsel %vm309, %v2147, 0
      %v2219 = vsel %vm309, %v2148, 0
      %v2222 = vsel %vm309, %v2149, 0
      %v2225 = vsel %vm309, %v2150, 0
      %v2228 = vsel %vm309, %v2151, 0
      %v2231 = vsel %vm309, %v2152, 0
      %v2234 = vsel %vm309, %v2153, 0
      %v2237 = vsel %vm309, %v2154, 0
      %v2240 = vsel %vm309, %v2155, 0
      %v2243 = vsel %vm309, %v2156, 0
      %v2246 = vsel %vm309, %v2157, 0
      %v2249 = vsel %vm309, %v2158, 0
      %v2252 = vsel %vm309, %v2159, 0
      %v2255 = vsel %vm309, %v2160, 0
      %v2258 = vsel %vm309, %v2161, 0
      %v2261 = vsel %vm406, %v2163, 0
      %2263 = vmatprep.subr.mxu0 0.0
      %2264 = vmatpush1.msra.mxu0 %v2261
      %2265 = vmatprep.subr.mxu0 0.0
      %2266 = vmatpush1.msra.mxu0 0.0
      %2267 = vmatprep.subr.mxu0 0.0
      %2268 = vmatpush1.msra.mxu0 0.0
      %2269 = vmatprep.subr.mxu0 0.0
      %2270 = vmatpush1.msra.mxu0 0.0
      %2271 = vmatprep.subr.mxu0 0.0
      %2272 = vmatpush1.msra.mxu0 0.0
      %2273 = vmatprep.subr.mxu0 0.0
      %2274 = vmatpush1.msra.mxu0 0.0
      %2275 = vmatprep.subr.mxu0 0.0
      %2276 = vmatpush1.msra.mxu0 0.0
      %2277 = vmatprep.subr.mxu0 0.0
      %2278 = vmatpush1.msra.mxu0 0.0
      %2279 = vmatprep.subr.mxu0 0.0
      %2280 = vmatpush1.msra.mxu0 0.0
      %2281 = vmatprep.subr.mxu0 0.0
      %2282 = vmatpush1.msra.mxu0 0.0
      %2283 = vmatprep.subr.mxu0 0.0
      %2284 = vmatpush1.msra.mxu0 0.0
      %2285 = vmatprep.subr.mxu0 0.0
      %2286 = vmatpush1.msra.mxu0 0.0
      %2287 = vmatprep.subr.mxu0 0.0
      %2288 = vmatpush1.msra.mxu0 0.0
      %2289 = vmatprep.subr.mxu0 0.0
      %2290 = vmatpush1.msra.mxu0 0.0
      %2291 = vmatprep.subr.mxu0 0.0
      %2292 = vmatpush1.msra.mxu0 0.0
      %2293 = vmatprep.subr.mxu0 0.0
      %2294 = vmatpush1.msra.mxu0 0.0
      %2295 = vmatprep.subr.mxu0 0.0
      %2296 = vmatpush1.msra.mxu0 0.0
      %2297 = vmatprep.subr.mxu0 0.0
      %2298 = vmatpush1.msra.mxu0 0.0
      %2299 = vmatprep.subr.mxu0 0.0
      %2300 = vmatpush1.msra.mxu0 0.0
      %2301 = vmatprep.subr.mxu0 0.0
      %2302 = vmatpush1.msra.mxu0 0.0
      %2303 = vmatprep.subr.mxu0 0.0
      %2304 = vmatpush1.msra.mxu0 0.0
      %2305 = vmatprep.subr.mxu0 0.0
      %2306 = vmatpush1.msra.mxu0 0.0
      %2307 = vmatprep.subr.mxu0 0.0
      %2308 = vmatpush1.msra.mxu0 0.0
      %2309 = vmatprep.subr.mxu0 0.0
      %2310 = vmatpush1.msra.mxu0 0.0
      %2311 = vmatprep.subr.mxu0 0.0
      %2312 = vmatpush1.msra.mxu0 0.0
      %2313 = vmatprep.subr.mxu0 0.0
      %2314 = vmatpush1.msra.mxu0 0.0
      %2315 = vmatprep.subr.mxu0 0.0
      %2316 = vmatpush1.msra.mxu0 0.0
      %2317 = vmatprep.subr.mxu0 0.0
      %2318 = vmatpush1.msra.mxu0 0.0
      %2319 = vmatprep.subr.mxu0 0.0
      %2320 = vmatpush1.msra.mxu0 0.0
      %2321 = vmatprep.subr.mxu0 0.0
      %2322 = vmatpush1.msra.mxu0 0.0
      %2323 = vmatprep.subr.mxu0 0.0
      %2324 = vmatpush1.msra.mxu0 0.0
      %2325 = vmatprep.subr.mxu0 0.0
      %2326 = vmatpush1.msra.mxu0 0.0
      %2327 = vmatprep.mubr.f32.mxu0 0.0
      %2328 = vmatmul.mubr.f32.gmra.mrb[0].mxu0 %v2165
      %v2329 = vpop.f32.mrb[0].mxu0
      %v2330 = vadd.f32 0.0, %v2329
      %v2331 = vpop.f32.mrb[0].mxu0
      %2332 = vmatprep.mubr.f32.mxu0 0.0
      %2333 = vmatmul.mubr.f32.gmra.mrb[0].mxu0 %v2168
      %v2334 = vpop.f32.mrb[0].mxu0
      %v2335 = vadd.f32 0.0, %v2334
      %v2336 = vpop.f32.mrb[0].mxu0
      %2337 = vmatprep.mubr.f32.mxu0 0.0
      %2338 = vmatmul.mubr.f32.gmra.mrb[0].mxu0 %v2171
      %v2339 = vpop.f32.mrb[0].mxu0
      %v2340 = vadd.f32 0.0, %v2339
      %v2341 = vpop.f32.mrb[0].mxu0
      %2342 = vmatprep.mubr.f32.mxu0 0.0
      %2343 = vmatmul.mubr.f32.gmra.mrb[0].mxu0 %v2174
      %v2344 = vpop.f32.mrb[0].mxu0
      %v2345 = vadd.f32 0.0, %v2344
      %v2346 = vpop.f32.mrb[0].mxu0
      %2347 = vmatprep.mubr.f32.mxu0 0.0
      %2348 = vmatmul.mubr.f32.gmra.mrb[0].mxu0 %v2177
      %v2349 = vpop.f32.mrb[0].mxu0
      %v2350 = vadd.f32 0.0, %v2349
      %v2351 = vpop.f32.mrb[0].mxu0
      %2352 = vmatprep.mubr.f32.mxu0 0.0
      %2353 = vmatmul.mubr.f32.gmra.mrb[0].mxu0 %v2180
      %v2354 = vpop.f32.mrb[0].mxu0
      %v2355 = vadd.f32 0.0, %v2354
      %v2356 = vpop.f32.mrb[0].mxu0
      %2357 = vmatprep.mubr.f32.mxu0 0.0
      %2358 = vmatmul.mubr.f32.gmra.mrb[0].mxu0 %v2183
      %v2359 = vpop.f32.mrb[0].mxu0
      %v2360 = vadd.f32 0.0, %v2359
      %v2361 = vpop.f32.mrb[0].mxu0
      %2362 = vmatprep.mubr.f32.mxu0 0.0
      %2363 = vmatmul.mubr.f32.gmra.mrb[0].mxu0 %v2186
      %v2364 = vpop.f32.mrb[0].mxu0
      %v2365 = vadd.f32 0.0, %v2364
      %v2366 = vpop.f32.mrb[0].mxu0
      %2367 = vmatprep.mubr.f32.mxu0 0.0
      %2368 = vmatmul.mubr.f32.gmra.mrb[0].mxu0 %v2189
      %v2369 = vpop.f32.mrb[0].mxu0
      %v2370 = vadd.f32 0.0, %v2369
      %v2371 = vpop.f32.mrb[0].mxu0
      %2372 = vmatprep.mubr.f32.mxu0 0.0
      %2373 = vmatmul.mubr.f32.gmra.mrb[0].mxu0 %v2192
      %v2374 = vpop.f32.mrb[0].mxu0
      %v2375 = vadd.f32 0.0, %v2374
      %v2376 = vpop.f32.mrb[0].mxu0
      %2377 = vmatprep.mubr.f32.mxu0 0.0
      %2378 = vmatmul.mubr.f32.gmra.mrb[0].mxu0 %v2195
      %v2379 = vpop.f32.mrb[0].mxu0
      %v2380 = vadd.f32 0.0, %v2379
      %v2381 = vpop.f32.mrb[0].mxu0
      %2382 = vmatprep.mubr.f32.mxu0 0.0
      %2383 = vmatmul.mubr.f32.gmra.mrb[0].mxu0 %v2198
      %v2384 = vpop.f32.mrb[0].mxu0
      %v2385 = vadd.f32 0.0, %v2384
      %v2386 = vpop.f32.mrb[0].mxu0
      %2387 = vmatprep.mubr.f32.mxu0 0.0
      %2388 = vmatmul.mubr.f32.gmra.mrb[0].mxu0 %v2201
      %v2389 = vpop.f32.mrb[0].mxu0
      %v2390 = vadd.f32 0.0, %v2389
      %v2391 = vpop.f32.mrb[0].mxu0
      %2392 = vmatprep.mubr.f32.mxu0 0.0
      %2393 = vmatmul.mubr.f32.gmra.mrb[0].mxu0 %v2204
      %v2394 = vpop.f32.mrb[0].mxu0
      %v2395 = vadd.f32 0.0, %v2394
      %v2396 = vpop.f32.mrb[0].mxu0
      %2397 = vmatprep.mubr.f32.mxu0 0.0
      %2398 = vmatmul.mubr.f32.gmra.mrb[0].mxu0 %v2207
      %v2399 = vpop.f32.mrb[0].mxu0
      %v2400 = vadd.f32 0.0, %v2399
      %v2401 = vpop.f32.mrb[0].mxu0
      %2402 = vmatprep.mubr.f32.mxu0 0.0
      %2403 = vmatmul.mubr.f32.gmra.mrb[0].mxu0 %v2210
      %v2404 = vpop.f32.mrb[0].mxu0
      %v2405 = vadd.f32 0.0, %v2404
      %v2406 = vpop.f32.mrb[0].mxu0
      %2407 = vmatprep.mubr.f32.mxu0 0.0
      %2408 = vmatmul.mubr.f32.gmra.mrb[0].mxu0 %v2213
      %v2409 = vpop.f32.mrb[0].mxu0
      %v2410 = vadd.f32 0.0, %v2409
      %v2411 = vpop.f32.mrb[0].mxu0
      %2412 = vmatprep.mubr.f32.mxu0 0.0
      %2413 = vmatmul.mubr.f32.gmra.mrb[0].mxu0 %v2216
      %v2414 = vpop.f32.mrb[0].mxu0
      %v2415 = vadd.f32 0.0, %v2414
      %v2416 = vpop.f32.mrb[0].mxu0
      %2417 = vmatprep.mubr.f32.mxu0 0.0
      %2418 = vmatmul.mubr.f32.gmra.mrb[0].mxu0 %v2219
      %v2419 = vpop.f32.mrb[0].mxu0
      %v2420 = vadd.f32 0.0, %v2419
      %v2421 = vpop.f32.mrb[0].mxu0
      %2422 = vmatprep.mubr.f32.mxu0 0.0
      %2423 = vmatmul.mubr.f32.gmra.mrb[0].mxu0 %v2222
      %v2424 = vpop.f32.mrb[0].mxu0
      %v2425 = vadd.f32 0.0, %v2424
      %v2426 = vpop.f32.mrb[0].mxu0
      %2427 = vmatprep.mubr.f32.mxu0 0.0
      %2428 = vmatmul.mubr.f32.gmra.mrb[0].mxu0 %v2225
      %v2429 = vpop.f32.mrb[0].mxu0
      %v2430 = vadd.f32 0.0, %v2429
      %v2431 = vpop.f32.mrb[0].mxu0
      %2432 = vmatprep.mubr.f32.mxu0 0.0
      %2433 = vmatmul.mubr.f32.gmra.mrb[0].mxu0 %v2228
      %v2434 = vpop.f32.mrb[0].mxu0
      %v2435 = vadd.f32 0.0, %v2434
      %v2436 = vpop.f32.mrb[0].mxu0
      %2437 = vmatprep.mubr.f32.mxu0 0.0
      %2438 = vmatmul.mubr.f32.gmra.mrb[0].mxu0 %v2231
      %v2439 = vpop.f32.mrb[0].mxu0
      %v2440 = vadd.f32 0.0, %v2439
      %v2441 = vpop.f32.mrb[0].mxu0
      %2442 = vmatprep.mubr.f32.mxu0 0.0
      %2443 = vmatmul.mubr.f32.gmra.mrb[0].mxu0 %v2234
      %v2444 = vpop.f32.mrb[0].mxu0
      %v2445 = vadd.f32 0.0, %v2444
      %v2446 = vpop.f32.mrb[0].mxu0
      %2447 = vmatprep.mubr.f32.mxu0 0.0
      %2448 = vmatmul.mubr.f32.gmra.mrb[0].mxu0 %v2237
      %v2449 = vpop.f32.mrb[0].mxu0
      %v2450 = vadd.f32 0.0, %v2449
      %v2451 = vpop.f32.mrb[0].mxu0
      %2452 = vmatprep.mubr.f32.mxu0 0.0
      %2453 = vmatmul.mubr.f32.gmra.mrb[0].mxu0 %v2240
      %v2454 = vpop.f32.mrb[0].mxu0
      %v2455 = vadd.f32 0.0, %v2454
      %v2456 = vpop.f32.mrb[0].mxu0
      %2457 = vmatprep.mubr.f32.mxu0 0.0
      %2458 = vmatmul.mubr.f32.gmra.mrb[0].mxu0 %v2243
      %v2459 = vpop.f32.mrb[0].mxu0
      %v2460 = vadd.f32 0.0, %v2459
      %v2461 = vpop.f32.mrb[0].mxu0
      %2462 = vmatprep.mubr.f32.mxu0 0.0
      %2463 = vmatmul.mubr.f32.gmra.mrb[0].mxu0 %v2246
      %v2464 = vpop.f32.mrb[0].mxu0
      %v2465 = vadd.f32 0.0, %v2464
      %v2466 = vpop.f32.mrb[0].mxu0
      %2467 = vmatprep.mubr.f32.mxu0 0.0
      %2468 = vmatmul.mubr.f32.gmra.mrb[0].mxu0 %v2249
      %v2469 = vpop.f32.mrb[0].mxu0
      %v2470 = vadd.f32 0.0, %v2469
      %v2471 = vpop.f32.mrb[0].mxu0
      %2472 = vmatprep.mubr.f32.mxu0 0.0
      %2473 = vmatmul.mubr.f32.gmra.mrb[0].mxu0 %v2252
      %v2474 = vpop.f32.mrb[0].mxu0
      %v2475 = vadd.f32 0.0, %v2474
      %v2476 = vpop.f32.mrb[0].mxu0
      %2477 = vmatprep.mubr.f32.mxu0 0.0
      %2478 = vmatmul.mubr.f32.gmra.mrb[0].mxu0 %v2255
      %v2479 = vpop.f32.mrb[0].mxu0
      %v2480 = vadd.f32 0.0, %v2479
      %v2481 = vpop.f32.mrb[0].mxu0
      %2482 = vmatprep.mubr.f32.mxu0 0.0
      %2483 = vmatmul.mubr.f32.gmra.mrb[0].mxu0 %v2258
      %v2484 = vpop.f32.mrb[0].mxu0
      %v2485 = vadd.f32 0.0, %v2484
      %v2486 = vpop.f32.mrb[0].mxu0
      %2487 = vdwg.mxu0
      %v2488 = vadd.f32 %v2098, %v2330
      %v2489 = vadd.f32 %v2099, %v2335
      %v2490 = vadd.f32 %v2100, %v2340
      %v2491 = vadd.f32 %v2101, %v2345
      %v2492 = vadd.f32 %v2102, %v2350
      %v2493 = vadd.f32 %v2103, %v2355
      %v2494 = vadd.f32 %v2104, %v2360
      %v2495 = vadd.f32 %v2105, %v2365
      %v2496 = vadd.f32 %v2106, %v2370
      %v2497 = vadd.f32 %v2107, %v2375
      %v2498 = vadd.f32 %v2108, %v2380
      %v2499 = vadd.f32 %v2109, %v2385
      %v2500 = vadd.f32 %v2110, %v2390
      %v2501 = vadd.f32 %v2111, %v2395
      %v2502 = vadd.f32 %v2112, %v2400
      %v2503 = vadd.f32 %v2113, %v2405
      %v2504 = vadd.f32 %v2114, %v2410
      %v2505 = vadd.f32 %v2115, %v2415
      %v2506 = vadd.f32 %v2116, %v2420
      %v2507 = vadd.f32 %v2117, %v2425
      %v2508 = vadd.f32 %v2118, %v2430
      %v2509 = vadd.f32 %v2119, %v2435
      %v2510 = vadd.f32 %v2120, %v2440
      %v2511 = vadd.f32 %v2121, %v2445
      %v2512 = vadd.f32 %v2122, %v2450
      %v2513 = vadd.f32 %v2123, %v2455
      %v2514 = vadd.f32 %v2124, %v2460
      %v2515 = vadd.f32 %v2125, %v2465
      %v2516 = vadd.f32 %v2126, %v2470
      %v2517 = vadd.f32 %v2127, %v2475
      %v2518 = vadd.f32 %v2128, %v2480
      %v2519 = vadd.f32 %v2129, %v2485
      %s2520 = scalar_lea.vmem %s230, 48
      %v2521 = vld [vmem:[%s2520] sm:$0xff]
      %v2522 = vld [vmem:[%s2520 + $0x8] sm:$0xff]
      %v2523 = vld [vmem:[%s2520 + $0x18] sm:$0xff]
      %v2524 = vld [vmem:[%s2520 + $0x20] sm:$0xff]
      %v2525 = vld [vmem:[%s2520 + $0x30] sm:$0xff]
      %v2526 = vld [vmem:[%s2520 + $0x38] sm:$0xff]
      %v2527 = vld [vmem:[%s2520 + $0x48] sm:$0xff]
      %v2528 = vld [vmem:[%s2520 + $0x50] sm:$0xff]
      %v2529 = vld [vmem:[%s2520 + $0x60] sm:$0xff]
      %v2530 = vld [vmem:[%s2520 + $0x68] sm:$0xff]
      %v2531 = vld [vmem:[%s2520 + $0x78] sm:$0xff]
      %v2532 = vld [vmem:[%s2520 + $0x80] sm:$0xff]
      %v2533 = vld [vmem:[%s2520 + $0x90] sm:$0xff]
      %v2534 = vld [vmem:[%s2520 + $0x98] sm:$0xff]
      %v2535 = vld [vmem:[%s2520 + $0xa8] sm:$0xff]
      %v2536 = vld [vmem:[%s2520 + $0xb0] sm:$0xff]
      %v2537 = vld [vmem:[%s2520 + $0xc0] sm:$0xff]
      %v2538 = vld [vmem:[%s2520 + $0xc8] sm:$0xff]
      %v2539 = vld [vmem:[%s2520 + $0xd8] sm:$0xff]
      %v2540 = vld [vmem:[%s2520 + $0xe0] sm:$0xff]
      %v2541 = vld [vmem:[%s2520 + $0xf0] sm:$0xff]
      %v2542 = vld [vmem:[%s2520 + $0xf8] sm:$0xff]
      %v2543 = vld [vmem:[%s2520 + $0x108] sm:$0xff]
      %v2544 = vld [vmem:[%s2520 + $0x110] sm:$0xff]
      %v2545 = vld [vmem:[%s2520 + $0x120] sm:$0xff]
      %v2546 = vld [vmem:[%s2520 + $0x128] sm:$0xff]
      %v2547 = vld [vmem:[%s2520 + $0x138] sm:$0xff]
      %v2548 = vld [vmem:[%s2520 + $0x140] sm:$0xff]
      %v2549 = vld [vmem:[%s2520 + $0x150] sm:$0xff]
      %v2550 = vld [vmem:[%s2520 + $0x158] sm:$0xff]
      %v2551 = vld [vmem:[%s2520 + $0x168] sm:$0xff]
      %v2552 = vld [vmem:[%s2520 + $0x170] sm:$0xff]
      %s2553 = scalar_lea.vmem %s1, 24
      %v2554 = vld [vmem:[%s2553] sm:$0xf]
      %v2556 = vsel %vm309, %v2521, 0
      %v2559 = vsel %vm309, %v2522, 0
      %v2562 = vsel %vm309, %v2523, 0
      %v2565 = vsel %vm309, %v2524, 0
      %v2568 = vsel %vm309, %v2525, 0
      %v2571 = vsel %vm309, %v2526, 0
      %v2574 = vsel %vm309, %v2527, 0
      %v2577 = vsel %vm309, %v2528, 0
      %v2580 = vsel %vm309, %v2529, 0
      %v2583 = vsel %vm309, %v2530, 0
      %v2586 = vsel %vm309, %v2531, 0
      %v2589 = vsel %vm309, %v2532, 0
      %v2592 = vsel %vm309, %v2533, 0
      %v2595 = vsel %vm309, %v2534, 0
      %v2598 = vsel %vm309, %v2535, 0
      %v2601 = vsel %vm309, %v2536, 0
      %v2604 = vsel %vm309, %v2537, 0
      %v2607 = vsel %vm309, %v2538, 0
      %v2610 = vsel %vm309, %v2539, 0
      %v2613 = vsel %vm309, %v2540, 0
      %v2616 = vsel %vm309, %v2541, 0
      %v2619 = vsel %vm309, %v2542, 0
      %v2622 = vsel %vm309, %v2543, 0
      %v2625 = vsel %vm309, %v2544, 0
      %v2628 = vsel %vm309, %v2545, 0
      %v2631 = vsel %vm309, %v2546, 0
      %v2634 = vsel %vm309, %v2547, 0
      %v2637 = vsel %vm309, %v2548, 0
      %v2640 = vsel %vm309, %v2549, 0
      %v2643 = vsel %vm309, %v2550, 0
      %v2646 = vsel %vm309, %v2551, 0
      %v2649 = vsel %vm309, %v2552, 0
      %v2652 = vsel %vm406, %v2554, 0
      %2654 = vmatprep.subr.mxu0 0.0
      %2655 = vmatpush1.msra.mxu0 %v2652
      %2656 = vmatprep.subr.mxu0 0.0
      %2657 = vmatpush1.msra.mxu0 0.0
      %2658 = vmatprep.subr.mxu0 0.0
      %2659 = vmatpush1.msra.mxu0 0.0
      %2660 = vmatprep.subr.mxu0 0.0
      %2661 = vmatpush1.msra.mxu0 0.0
      %2662 = vmatprep.subr.mxu0 0.0
      %2663 = vmatpush1.msra.mxu0 0.0
      %2664 = vmatprep.subr.mxu0 0.0
      %2665 = vmatpush1.msra.mxu0 0.0
      %2666 = vmatprep.subr.mxu0 0.0
      %2667 = vmatpush1.msra.mxu0 0.0
      %2668 = vmatprep.subr.mxu0 0.0
      %2669 = vmatpush1.msra.mxu0 0.0
      %2670 = vmatprep.subr.mxu0 0.0
      %2671 = vmatpush1.msra.mxu0 0.0
      %2672 = vmatprep.subr.mxu0 0.0
      %2673 = vmatpush1.msra.mxu0 0.0
      %2674 = vmatprep.subr.mxu0 0.0
      %2675 = vmatpush1.msra.mxu0 0.0
      %2676 = vmatprep.subr.mxu0 0.0
      %2677 = vmatpush1.msra.mxu0 0.0
      %2678 = vmatprep.subr.mxu0 0.0
      %2679 = vmatpush1.msra.mxu0 0.0
      %2680 = vmatprep.subr.mxu0 0.0
      %2681 = vmatpush1.msra.mxu0 0.0
      %2682 = vmatprep.subr.mxu0 0.0
      %2683 = vmatpush1.msra.mxu0 0.0
      %2684 = vmatprep.subr.mxu0 0.0
      %2685 = vmatpush1.msra.mxu0 0.0
      %2686 = vmatprep.subr.mxu0 0.0
      %2687 = vmatpush1.msra.mxu0 0.0
      %2688 = vmatprep.subr.mxu0 0.0
      %2689 = vmatpush1.msra.mxu0 0.0
      %2690 = vmatprep.subr.mxu0 0.0
      %2691 = vmatpush1.msra.mxu0 0.0
      %2692 = vmatprep.subr.mxu0 0.0
      %2693 = vmatpush1.msra.mxu0 0.0
      %2694 = vmatprep.subr.mxu0 0.0
      %2695 = vmatpush1.msra.mxu0 0.0
      %2696 = vmatprep.subr.mxu0 0.0
      %2697 = vmatpush1.msra.mxu0 0.0
      %2698 = vmatprep.subr.mxu0 0.0
      %2699 = vmatpush1.msra.mxu0 0.0
      %2700 = vmatprep.subr.mxu0 0.0
      %2701 = vmatpush1.msra.mxu0 0.0
      %2702 = vmatprep.subr.mxu0 0.0
      %2703 = vmatpush1.msra.mxu0 0.0
      %2704 = vmatprep.subr.mxu0 0.0
      %2705 = vmatpush1.msra.mxu0 0.0
      %2706 = vmatprep.subr.mxu0 0.0
      %2707 = vmatpush1.msra.mxu0 0.0
      %2708 = vmatprep.subr.mxu0 0.0
      %2709 = vmatpush1.msra.mxu0 0.0
      %2710 = vmatprep.subr.mxu0 0.0
      %2711 = vmatpush1.msra.mxu0 0.0
      %2712 = vmatprep.subr.mxu0 0.0
      %2713 = vmatpush1.msra.mxu0 0.0
      %2714 = vmatprep.subr.mxu0 0.0
      %2715 = vmatpush1.msra.mxu0 0.0
      %2716 = vmatprep.subr.mxu0 0.0
      %2717 = vmatpush1.msra.mxu0 0.0
      %2718 = vmatprep.mubr.f32.mxu0 0.0
      %2719 = vmatmul.mubr.f32.gmra.mrb[0].mxu0 %v2556
      %v2720 = vpop.f32.mrb[0].mxu0
      %v2721 = vadd.f32 0.0, %v2720
      %v2722 = vpop.f32.mrb[0].mxu0
      %2723 = vmatprep.mubr.f32.mxu0 0.0
      %2724 = vmatmul.mubr.f32.gmra.mrb[0].mxu0 %v2559
      %v2725 = vpop.f32.mrb[0].mxu0
      %v2726 = vadd.f32 0.0, %v2725
      %v2727 = vpop.f32.mrb[0].mxu0
      %2728 = vmatprep.mubr.f32.mxu0 0.0
      %2729 = vmatmul.mubr.f32.gmra.mrb[0].mxu0 %v2562
      %v2730 = vpop.f32.mrb[0].mxu0
      %v2731 = vadd.f32 0.0, %v2730
      %v2732 = vpop.f32.mrb[0].mxu0
      %2733 = vmatprep.mubr.f32.mxu0 0.0
      %2734 = vmatmul.mubr.f32.gmra.mrb[0].mxu0 %v2565
      %v2735 = vpop.f32.mrb[0].mxu0
      %v2736 = vadd.f32 0.0, %v2735
      %v2737 = vpop.f32.mrb[0].mxu0
      %2738 = vmatprep.mubr.f32.mxu0 0.0
      %2739 = vmatmul.mubr.f32.gmra.mrb[0].mxu0 %v2568
      %v2740 = vpop.f32.mrb[0].mxu0
      %v2741 = vadd.f32 0.0, %v2740
      %v2742 = vpop.f32.mrb[0].mxu0
      %2743 = vmatprep.mubr.f32.mxu0 0.0
      %2744 = vmatmul.mubr.f32.gmra.mrb[0].mxu0 %v2571
      %v2745 = vpop.f32.mrb[0].mxu0
      %v2746 = vadd.f32 0.0, %v2745
      %v2747 = vpop.f32.mrb[0].mxu0
      %2748 = vmatprep.mubr.f32.mxu0 0.0
      %2749 = vmatmul.mubr.f32.gmra.mrb[0].mxu0 %v2574
      %v2750 = vpop.f32.mrb[0].mxu0
      %v2751 = vadd.f32 0.0, %v2750
      %v2752 = vpop.f32.mrb[0].mxu0
      %2753 = vmatprep.mubr.f32.mxu0 0.0
      %2754 = vmatmul.mubr.f32.gmra.mrb[0].mxu0 %v2577
      %v2755 = vpop.f32.mrb[0].mxu0
      %v2756 = vadd.f32 0.0, %v2755
      %v2757 = vpop.f32.mrb[0].mxu0
      %2758 = vmatprep.mubr.f32.mxu0 0.0
      %2759 = vmatmul.mubr.f32.gmra.mrb[0].mxu0 %v2580
      %v2760 = vpop.f32.mrb[0].mxu0
      %v2761 = vadd.f32 0.0, %v2760
      %v2762 = vpop.f32.mrb[0].mxu0
      %2763 = vmatprep.mubr.f32.mxu0 0.0
      %2764 = vmatmul.mubr.f32.gmra.mrb[0].mxu0 %v2583
      %v2765 = vpop.f32.mrb[0].mxu0
      %v2766 = vadd.f32 0.0, %v2765
      %v2767 = vpop.f32.mrb[0].mxu0
      %2768 = vmatprep.mubr.f32.mxu0 0.0
      %2769 = vmatmul.mubr.f32.gmra.mrb[0].mxu0 %v2586
      %v2770 = vpop.f32.mrb[0].mxu0
      %v2771 = vadd.f32 0.0, %v2770
      %v2772 = vpop.f32.mrb[0].mxu0
      %2773 = vmatprep.mubr.f32.mxu0 0.0
      %2774 = vmatmul.mubr.f32.gmra.mrb[0].mxu0 %v2589
      %v2775 = vpop.f32.mrb[0].mxu0
      %v2776 = vadd.f32 0.0, %v2775
      %v2777 = vpop.f32.mrb[0].mxu0
      %2778 = vmatprep.mubr.f32.mxu0 0.0
      %2779 = vmatmul.mubr.f32.gmra.mrb[0].mxu0 %v2592
      %v2780 = vpop.f32.mrb[0].mxu0
      %v2781 = vadd.f32 0.0, %v2780
      %v2782 = vpop.f32.mrb[0].mxu0
      %2783 = vmatprep.mubr.f32.mxu0 0.0
      %2784 = vmatmul.mubr.f32.gmra.mrb[0].mxu0 %v2595
      %v2785 = vpop.f32.mrb[0].mxu0
      %v2786 = vadd.f32 0.0, %v2785
      %v2787 = vpop.f32.mrb[0].mxu0
      %2788 = vmatprep.mubr.f32.mxu0 0.0
      %2789 = vmatmul.mubr.f32.gmra.mrb[0].mxu0 %v2598
      %v2790 = vpop.f32.mrb[0].mxu0
      %v2791 = vadd.f32 0.0, %v2790
      %v2792 = vpop.f32.mrb[0].mxu0
      %2793 = vmatprep.mubr.f32.mxu0 0.0
      %2794 = vmatmul.mubr.f32.gmra.mrb[0].mxu0 %v2601
      %v2795 = vpop.f32.mrb[0].mxu0
      %v2796 = vadd.f32 0.0, %v2795
      %v2797 = vpop.f32.mrb[0].mxu0
      %2798 = vmatprep.mubr.f32.mxu0 0.0
      %2799 = vmatmul.mubr.f32.gmra.mrb[0].mxu0 %v2604
      %v2800 = vpop.f32.mrb[0].mxu0
      %v2801 = vadd.f32 0.0, %v2800
      %v2802 = vpop.f32.mrb[0].mxu0
      %2803 = vmatprep.mubr.f32.mxu0 0.0
      %2804 = vmatmul.mubr.f32.gmra.mrb[0].mxu0 %v2607
      %v2805 = vpop.f32.mrb[0].mxu0
      %v2806 = vadd.f32 0.0, %v2805
      %v2807 = vpop.f32.mrb[0].mxu0
      %2808 = vmatprep.mubr.f32.mxu0 0.0
      %2809 = vmatmul.mubr.f32.gmra.mrb[0].mxu0 %v2610
      %v2810 = vpop.f32.mrb[0].mxu0
      %v2811 = vadd.f32 0.0, %v2810
      %v2812 = vpop.f32.mrb[0].mxu0
      %2813 = vmatprep.mubr.f32.mxu0 0.0
      %2814 = vmatmul.mubr.f32.gmra.mrb[0].mxu0 %v2613
      %v2815 = vpop.f32.mrb[0].mxu0
      %v2816 = vadd.f32 0.0, %v2815
      %v2817 = vpop.f32.mrb[0].mxu0
      %2818 = vmatprep.mubr.f32.mxu0 0.0
      %2819 = vmatmul.mubr.f32.gmra.mrb[0].mxu0 %v2616
      %v2820 = vpop.f32.mrb[0].mxu0
      %v2821 = vadd.f32 0.0, %v2820
      %v2822 = vpop.f32.mrb[0].mxu0
      %2823 = vmatprep.mubr.f32.mxu0 0.0
      %2824 = vmatmul.mubr.f32.gmra.mrb[0].mxu0 %v2619
      %v2825 = vpop.f32.mrb[0].mxu0
      %v2826 = vadd.f32 0.0, %v2825
      %v2827 = vpop.f32.mrb[0].mxu0
      %2828 = vmatprep.mubr.f32.mxu0 0.0
      %2829 = vmatmul.mubr.f32.gmra.mrb[0].mxu0 %v2622
      %v2830 = vpop.f32.mrb[0].mxu0
      %v2831 = vadd.f32 0.0, %v2830
      %v2832 = vpop.f32.mrb[0].mxu0
      %2833 = vmatprep.mubr.f32.mxu0 0.0
      %2834 = vmatmul.mubr.f32.gmra.mrb[0].mxu0 %v2625
      %v2835 = vpop.f32.mrb[0].mxu0
      %v2836 = vadd.f32 0.0, %v2835
      %v2837 = vpop.f32.mrb[0].mxu0
      %2838 = vmatprep.mubr.f32.mxu0 0.0
      %2839 = vmatmul.mubr.f32.gmra.mrb[0].mxu0 %v2628
      %v2840 = vpop.f32.mrb[0].mxu0
      %v2841 = vadd.f32 0.0, %v2840
      %v2842 = vpop.f32.mrb[0].mxu0
      %2843 = vmatprep.mubr.f32.mxu0 0.0
      %2844 = vmatmul.mubr.f32.gmra.mrb[0].mxu0 %v2631
      %v2845 = vpop.f32.mrb[0].mxu0
      %v2846 = vadd.f32 0.0, %v2845
      %v2847 = vpop.f32.mrb[0].mxu0
      %2848 = vmatprep.mubr.f32.mxu0 0.0
      %2849 = vmatmul.mubr.f32.gmra.mrb[0].mxu0 %v2634
      %v2850 = vpop.f32.mrb[0].mxu0
      %v2851 = vadd.f32 0.0, %v2850
      %v2852 = vpop.f32.mrb[0].mxu0
      %2853 = vmatprep.mubr.f32.mxu0 0.0
      %2854 = vmatmul.mubr.f32.gmra.mrb[0].mxu0 %v2637
      %v2855 = vpop.f32.mrb[0].mxu0
      %v2856 = vadd.f32 0.0, %v2855
      %v2857 = vpop.f32.mrb[0].mxu0
      %2858 = vmatprep.mubr.f32.mxu0 0.0
      %2859 = vmatmul.mubr.f32.gmra.mrb[0].mxu0 %v2640
      %v2860 = vpop.f32.mrb[0].mxu0
      %v2861 = vadd.f32 0.0, %v2860
      %v2862 = vpop.f32.mrb[0].mxu0
      %2863 = vmatprep.mubr.f32.mxu0 0.0
      %2864 = vmatmul.mubr.f32.gmra.mrb[0].mxu0 %v2643
      %v2865 = vpop.f32.mrb[0].mxu0
      %v2866 = vadd.f32 0.0, %v2865
      %v2867 = vpop.f32.mrb[0].mxu0
      %2868 = vmatprep.mubr.f32.mxu0 0.0
      %2869 = vmatmul.mubr.f32.gmra.mrb[0].mxu0 %v2646
      %v2870 = vpop.f32.mrb[0].mxu0
      %v2871 = vadd.f32 0.0, %v2870
      %v2872 = vpop.f32.mrb[0].mxu0
      %2873 = vmatprep.mubr.f32.mxu0 0.0
      %2874 = vmatmul.mubr.f32.gmra.mrb[0].mxu0 %v2649
      %v2875 = vpop.f32.mrb[0].mxu0
      %v2876 = vadd.f32 0.0, %v2875
      %v2877 = vpop.f32.mrb[0].mxu0
      %2878 = vdwg.mxu0
      %v2879 = vadd.f32 %v2488, %v2721
      %v2880 = vadd.f32 %v2489, %v2726
      %v2881 = vadd.f32 %v2490, %v2731
      %v2882 = vadd.f32 %v2491, %v2736
      %v2883 = vadd.f32 %v2492, %v2741
      %v2884 = vadd.f32 %v2493, %v2746
      %v2885 = vadd.f32 %v2494, %v2751
      %v2886 = vadd.f32 %v2495, %v2756
      %v2887 = vadd.f32 %v2496, %v2761
      %v2888 = vadd.f32 %v2497, %v2766
      %v2889 = vadd.f32 %v2498, %v2771
      %v2890 = vadd.f32 %v2499, %v2776
      %v2891 = vadd.f32 %v2500, %v2781
      %v2892 = vadd.f32 %v2501, %v2786
      %v2893 = vadd.f32 %v2502, %v2791
      %v2894 = vadd.f32 %v2503, %v2796
      %v2895 = vadd.f32 %v2504, %v2801
      %v2896 = vadd.f32 %v2505, %v2806
      %v2897 = vadd.f32 %v2506, %v2811
      %v2898 = vadd.f32 %v2507, %v2816
      %v2899 = vadd.f32 %v2508, %v2821
      %v2900 = vadd.f32 %v2509, %v2826
      %v2901 = vadd.f32 %v2510, %v2831
      %v2902 = vadd.f32 %v2511, %v2836
      %v2903 = vadd.f32 %v2512, %v2841
      %v2904 = vadd.f32 %v2513, %v2846
      %v2905 = vadd.f32 %v2514, %v2851
      %v2906 = vadd.f32 %v2515, %v2856
      %v2907 = vadd.f32 %v2516, %v2861
      %v2908 = vadd.f32 %v2517, %v2866
      %v2909 = vadd.f32 %v2518, %v2871
      %v2910 = vadd.f32 %v2519, %v2876
      %v2911 = vld [vmem:[%s2520 + $0x1] sm:$0xff]
      %v2912 = vld [vmem:[%s2520 + $0x9] sm:$0xff]
      %v2913 = vld [vmem:[%s2520 + $0x19] sm:$0xff]
      %v2914 = vld [vmem:[%s2520 + $0x21] sm:$0xff]
      %v2915 = vld [vmem:[%s2520 + $0x31] sm:$0xff]
      %v2916 = vld [vmem:[%s2520 + $0x39] sm:$0xff]
      %v2917 = vld [vmem:[%s2520 + $0x49] sm:$0xff]
      %v2918 = vld [vmem:[%s2520 + $0x51] sm:$0xff]
      %v2919 = vld [vmem:[%s2520 + $0x61] sm:$0xff]
      %v2920 = vld [vmem:[%s2520 + $0x69] sm:$0xff]
      %v2921 = vld [vmem:[%s2520 + $0x79] sm:$0xff]
      %v2922 = vld [vmem:[%s2520 + $0x81] sm:$0xff]
      %v2923 = vld [vmem:[%s2520 + $0x91] sm:$0xff]
      %v2924 = vld [vmem:[%s2520 + $0x99] sm:$0xff]
      %v2925 = vld [vmem:[%s2520 + $0xa9] sm:$0xff]
      %v2926 = vld [vmem:[%s2520 + $0xb1] sm:$0xff]
      %v2927 = vld [vmem:[%s2520 + $0xc1] sm:$0xff]
      %v2928 = vld [vmem:[%s2520 + $0xc9] sm:$0xff]
      %v2929 = vld [vmem:[%s2520 + $0xd9] sm:$0xff]
      %v2930 = vld [vmem:[%s2520 + $0xe1] sm:$0xff]
      %v2931 = vld [vmem:[%s2520 + $0xf1] sm:$0xff]
      %v2932 = vld [vmem:[%s2520 + $0xf9] sm:$0xff]
      %v2933 = vld [vmem:[%s2520 + $0x109] sm:$0xff]
      %v2934 = vld [vmem:[%s2520 + $0x111] sm:$0xff]
      %v2935 = vld [vmem:[%s2520 + $0x121] sm:$0xff]
      %v2936 = vld [vmem:[%s2520 + $0x129] sm:$0xff]
      %v2937 = vld [vmem:[%s2520 + $0x139] sm:$0xff]
      %v2938 = vld [vmem:[%s2520 + $0x141] sm:$0xff]
      %v2939 = vld [vmem:[%s2520 + $0x151] sm:$0xff]
      %v2940 = vld [vmem:[%s2520 + $0x159] sm:$0xff]
      %v2941 = vld [vmem:[%s2520 + $0x169] sm:$0xff]
      %v2942 = vld [vmem:[%s2520 + $0x171] sm:$0xff]
      %s2943 = scalar_lea.vmem %s1, 28
      %v2944 = vld [vmem:[%s2943] sm:$0xf]
      %v2946 = vsel %vm309, %v2911, 0
      %v2949 = vsel %vm309, %v2912, 0
      %v2952 = vsel %vm309, %v2913, 0
      %v2955 = vsel %vm309, %v2914, 0
      %v2958 = vsel %vm309, %v2915, 0
      %v2961 = vsel %vm309, %v2916, 0
      %v2964 = vsel %vm309, %v2917, 0
      %v2967 = vsel %vm309, %v2918, 0
      %v2970 = vsel %vm309, %v2919, 0
      %v2973 = vsel %vm309, %v2920, 0
      %v2976 = vsel %vm309, %v2921, 0
      %v2979 = vsel %vm309, %v2922, 0
      %v2982 = vsel %vm309, %v2923, 0
      %v2985 = vsel %vm309, %v2924, 0
      %v2988 = vsel %vm309, %v2925, 0
      %v2991 = vsel %vm309, %v2926, 0
      %v2994 = vsel %vm309, %v2927, 0
      %v2997 = vsel %vm309, %v2928, 0
      %v3000 = vsel %vm309, %v2929, 0
      %v3003 = vsel %vm309, %v2930, 0
      %v3006 = vsel %vm309, %v2931, 0
      %v3009 = vsel %vm309, %v2932, 0
      %v3012 = vsel %vm309, %v2933, 0
      %v3015 = vsel %vm309, %v2934, 0
      %v3018 = vsel %vm309, %v2935, 0
      %v3021 = vsel %vm309, %v2936, 0
      %v3024 = vsel %vm309, %v2937, 0
      %v3027 = vsel %vm309, %v2938, 0
      %v3030 = vsel %vm309, %v2939, 0
      %v3033 = vsel %vm309, %v2940, 0
      %v3036 = vsel %vm309, %v2941, 0
      %v3039 = vsel %vm309, %v2942, 0
      %v3042 = vsel %vm406, %v2944, 0
      %3044 = vmatprep.subr.mxu0 0.0
      %3045 = vmatpush1.msra.mxu0 %v3042
      %3046 = vmatprep.subr.mxu0 0.0
      %3047 = vmatpush1.msra.mxu0 0.0
      %3048 = vmatprep.subr.mxu0 0.0
      %3049 = vmatpush1.msra.mxu0 0.0
      %3050 = vmatprep.subr.mxu0 0.0
      %3051 = vmatpush1.msra.mxu0 0.0
      %3052 = vmatprep.subr.mxu0 0.0
      %3053 = vmatpush1.msra.mxu0 0.0
      %3054 = vmatprep.subr.mxu0 0.0
      %3055 = vmatpush1.msra.mxu0 0.0
      %3056 = vmatprep.subr.mxu0 0.0
      %3057 = vmatpush1.msra.mxu0 0.0
      %3058 = vmatprep.subr.mxu0 0.0
      %3059 = vmatpush1.msra.mxu0 0.0
      %3060 = vmatprep.subr.mxu0 0.0
      %3061 = vmatpush1.msra.mxu0 0.0
      %3062 = vmatprep.subr.mxu0 0.0
      %3063 = vmatpush1.msra.mxu0 0.0
      %3064 = vmatprep.subr.mxu0 0.0
      %3065 = vmatpush1.msra.mxu0 0.0
      %3066 = vmatprep.subr.mxu0 0.0
      %3067 = vmatpush1.msra.mxu0 0.0
      %3068 = vmatprep.subr.mxu0 0.0
      %3069 = vmatpush1.msra.mxu0 0.0
      %3070 = vmatprep.subr.mxu0 0.0
      %3071 = vmatpush1.msra.mxu0 0.0
      %3072 = vmatprep.subr.mxu0 0.0
      %3073 = vmatpush1.msra.mxu0 0.0
      %3074 = vmatprep.subr.mxu0 0.0
      %3075 = vmatpush1.msra.mxu0 0.0
      %3076 = vmatprep.subr.mxu0 0.0
      %3077 = vmatpush1.msra.mxu0 0.0
      %3078 = vmatprep.subr.mxu0 0.0
      %3079 = vmatpush1.msra.mxu0 0.0
      %3080 = vmatprep.subr.mxu0 0.0
      %3081 = vmatpush1.msra.mxu0 0.0
      %3082 = vmatprep.subr.mxu0 0.0
      %3083 = vmatpush1.msra.mxu0 0.0
      %3084 = vmatprep.subr.mxu0 0.0
      %3085 = vmatpush1.msra.mxu0 0.0
      %3086 = vmatprep.subr.mxu0 0.0
      %3087 = vmatpush1.msra.mxu0 0.0
      %3088 = vmatprep.subr.mxu0 0.0
      %3089 = vmatpush1.msra.mxu0 0.0
      %3090 = vmatprep.subr.mxu0 0.0
      %3091 = vmatpush1.msra.mxu0 0.0
      %3092 = vmatprep.subr.mxu0 0.0
      %3093 = vmatpush1.msra.mxu0 0.0
      %3094 = vmatprep.subr.mxu0 0.0
      %3095 = vmatpush1.msra.mxu0 0.0
      %3096 = vmatprep.subr.mxu0 0.0
      %3097 = vmatpush1.msra.mxu0 0.0
      %3098 = vmatprep.subr.mxu0 0.0
      %3099 = vmatpush1.msra.mxu0 0.0
      %3100 = vmatprep.subr.mxu0 0.0
      %3101 = vmatpush1.msra.mxu0 0.0
      %3102 = vmatprep.subr.mxu0 0.0
      %3103 = vmatpush1.msra.mxu0 0.0
      %3104 = vmatprep.subr.mxu0 0.0
      %3105 = vmatpush1.msra.mxu0 0.0
      %3106 = vmatprep.subr.mxu0 0.0
      %3107 = vmatpush1.msra.mxu0 0.0
      %3108 = vmatprep.mubr.f32.mxu0 0.0
      %3109 = vmatmul.mubr.f32.gmra.mrb[0].mxu0 %v2946
      %v3110 = vpop.f32.mrb[0].mxu0
      %v3111 = vadd.f32 0.0, %v3110
      %v3112 = vpop.f32.mrb[0].mxu0
      %3113 = vmatprep.mubr.f32.mxu0 0.0
      %3114 = vmatmul.mubr.f32.gmra.mrb[0].mxu0 %v2949
      %v3115 = vpop.f32.mrb[0].mxu0
      %v3116 = vadd.f32 0.0, %v3115
      %v3117 = vpop.f32.mrb[0].mxu0
      %3118 = vmatprep.mubr.f32.mxu0 0.0
      %3119 = vmatmul.mubr.f32.gmra.mrb[0].mxu0 %v2952
      %v3120 = vpop.f32.mrb[0].mxu0
      %v3121 = vadd.f32 0.0, %v3120
      %v3122 = vpop.f32.mrb[0].mxu0
      %3123 = vmatprep.mubr.f32.mxu0 0.0
      %3124 = vmatmul.mubr.f32.gmra.mrb[0].mxu0 %v2955
      %v3125 = vpop.f32.mrb[0].mxu0
      %v3126 = vadd.f32 0.0, %v3125
      %v3127 = vpop.f32.mrb[0].mxu0
      %3128 = vmatprep.mubr.f32.mxu0 0.0
      %3129 = vmatmul.mubr.f32.gmra.mrb[0].mxu0 %v2958
      %v3130 = vpop.f32.mrb[0].mxu0
      %v3131 = vadd.f32 0.0, %v3130
      %v3132 = vpop.f32.mrb[0].mxu0
      %3133 = vmatprep.mubr.f32.mxu0 0.0
      %3134 = vmatmul.mubr.f32.gmra.mrb[0].mxu0 %v2961
      %v3135 = vpop.f32.mrb[0].mxu0
      %v3136 = vadd.f32 0.0, %v3135
      %v3137 = vpop.f32.mrb[0].mxu0
      %3138 = vmatprep.mubr.f32.mxu0 0.0
      %3139 = vmatmul.mubr.f32.gmra.mrb[0].mxu0 %v2964
      %v3140 = vpop.f32.mrb[0].mxu0
      %v3141 = vadd.f32 0.0, %v3140
      %v3142 = vpop.f32.mrb[0].mxu0
      %3143 = vmatprep.mubr.f32.mxu0 0.0
      %3144 = vmatmul.mubr.f32.gmra.mrb[0].mxu0 %v2967
      %v3145 = vpop.f32.mrb[0].mxu0
      %v3146 = vadd.f32 0.0, %v3145
      %v3147 = vpop.f32.mrb[0].mxu0
      %3148 = vmatprep.mubr.f32.mxu0 0.0
      %3149 = vmatmul.mubr.f32.gmra.mrb[0].mxu0 %v2970
      %v3150 = vpop.f32.mrb[0].mxu0
      %v3151 = vadd.f32 0.0, %v3150
      %v3152 = vpop.f32.mrb[0].mxu0
      %3153 = vmatprep.mubr.f32.mxu0 0.0
      %3154 = vmatmul.mubr.f32.gmra.mrb[0].mxu0 %v2973
      %v3155 = vpop.f32.mrb[0].mxu0
      %v3156 = vadd.f32 0.0, %v3155
      %v3157 = vpop.f32.mrb[0].mxu0
      %3158 = vmatprep.mubr.f32.mxu0 0.0
      %3159 = vmatmul.mubr.f32.gmra.mrb[0].mxu0 %v2976
      %v3160 = vpop.f32.mrb[0].mxu0
      %v3161 = vadd.f32 0.0, %v3160
      %v3162 = vpop.f32.mrb[0].mxu0
      %3163 = vmatprep.mubr.f32.mxu0 0.0
      %3164 = vmatmul.mubr.f32.gmra.mrb[0].mxu0 %v2979
      %v3165 = vpop.f32.mrb[0].mxu0
      %v3166 = vadd.f32 0.0, %v3165
      %v3167 = vpop.f32.mrb[0].mxu0
      %3168 = vmatprep.mubr.f32.mxu0 0.0
      %3169 = vmatmul.mubr.f32.gmra.mrb[0].mxu0 %v2982
      %v3170 = vpop.f32.mrb[0].mxu0
      %v3171 = vadd.f32 0.0, %v3170
      %v3172 = vpop.f32.mrb[0].mxu0
      %3173 = vmatprep.mubr.f32.mxu0 0.0
      %3174 = vmatmul.mubr.f32.gmra.mrb[0].mxu0 %v2985
      %v3175 = vpop.f32.mrb[0].mxu0
      %v3176 = vadd.f32 0.0, %v3175
      %v3177 = vpop.f32.mrb[0].mxu0
      %3178 = vmatprep.mubr.f32.mxu0 0.0
      %3179 = vmatmul.mubr.f32.gmra.mrb[0].mxu0 %v2988
      %v3180 = vpop.f32.mrb[0].mxu0
      %v3181 = vadd.f32 0.0, %v3180
      %v3182 = vpop.f32.mrb[0].mxu0
      %3183 = vmatprep.mubr.f32.mxu0 0.0
      %3184 = vmatmul.mubr.f32.gmra.mrb[0].mxu0 %v2991
      %v3185 = vpop.f32.mrb[0].mxu0
      %v3186 = vadd.f32 0.0, %v3185
      %v3187 = vpop.f32.mrb[0].mxu0
      %3188 = vmatprep.mubr.f32.mxu0 0.0
      %3189 = vmatmul.mubr.f32.gmra.mrb[0].mxu0 %v2994
      %v3190 = vpop.f32.mrb[0].mxu0
      %v3191 = vadd.f32 0.0, %v3190
      %v3192 = vpop.f32.mrb[0].mxu0
      %3193 = vmatprep.mubr.f32.mxu0 0.0
      %3194 = vmatmul.mubr.f32.gmra.mrb[0].mxu0 %v2997
      %v3195 = vpop.f32.mrb[0].mxu0
      %v3196 = vadd.f32 0.0, %v3195
      %v3197 = vpop.f32.mrb[0].mxu0
      %3198 = vmatprep.mubr.f32.mxu0 0.0
      %3199 = vmatmul.mubr.f32.gmra.mrb[0].mxu0 %v3000
      %v3200 = vpop.f32.mrb[0].mxu0
      %v3201 = vadd.f32 0.0, %v3200
      %v3202 = vpop.f32.mrb[0].mxu0
      %3203 = vmatprep.mubr.f32.mxu0 0.0
      %3204 = vmatmul.mubr.f32.gmra.mrb[0].mxu0 %v3003
      %v3205 = vpop.f32.mrb[0].mxu0
      %v3206 = vadd.f32 0.0, %v3205
      %v3207 = vpop.f32.mrb[0].mxu0
      %3208 = vmatprep.mubr.f32.mxu0 0.0
      %3209 = vmatmul.mubr.f32.gmra.mrb[0].mxu0 %v3006
      %v3210 = vpop.f32.mrb[0].mxu0
      %v3211 = vadd.f32 0.0, %v3210
      %v3212 = vpop.f32.mrb[0].mxu0
      %3213 = vmatprep.mubr.f32.mxu0 0.0
      %3214 = vmatmul.mubr.f32.gmra.mrb[0].mxu0 %v3009
      %v3215 = vpop.f32.mrb[0].mxu0
      %v3216 = vadd.f32 0.0, %v3215
      %v3217 = vpop.f32.mrb[0].mxu0
      %3218 = vmatprep.mubr.f32.mxu0 0.0
      %3219 = vmatmul.mubr.f32.gmra.mrb[0].mxu0 %v3012
      %v3220 = vpop.f32.mrb[0].mxu0
      %v3221 = vadd.f32 0.0, %v3220
      %v3222 = vpop.f32.mrb[0].mxu0
      %3223 = vmatprep.mubr.f32.mxu0 0.0
      %3224 = vmatmul.mubr.f32.gmra.mrb[0].mxu0 %v3015
      %v3225 = vpop.f32.mrb[0].mxu0
      %v3226 = vadd.f32 0.0, %v3225
      %v3227 = vpop.f32.mrb[0].mxu0
      %3228 = vmatprep.mubr.f32.mxu0 0.0
      %3229 = vmatmul.mubr.f32.gmra.mrb[0].mxu0 %v3018
      %v3230 = vpop.f32.mrb[0].mxu0
      %v3231 = vadd.f32 0.0, %v3230
      %v3232 = vpop.f32.mrb[0].mxu0
      %3233 = vmatprep.mubr.f32.mxu0 0.0
      %3234 = vmatmul.mubr.f32.gmra.mrb[0].mxu0 %v3021
      %v3235 = vpop.f32.mrb[0].mxu0
      %v3236 = vadd.f32 0.0, %v3235
      %v3237 = vpop.f32.mrb[0].mxu0
      %3238 = vmatprep.mubr.f32.mxu0 0.0
      %3239 = vmatmul.mubr.f32.gmra.mrb[0].mxu0 %v3024
      %v3240 = vpop.f32.mrb[0].mxu0
      %v3241 = vadd.f32 0.0, %v3240
      %v3242 = vpop.f32.mrb[0].mxu0
      %3243 = vmatprep.mubr.f32.mxu0 0.0
      %3244 = vmatmul.mubr.f32.gmra.mrb[0].mxu0 %v3027
      %v3245 = vpop.f32.mrb[0].mxu0
      %v3246 = vadd.f32 0.0, %v3245
      %v3247 = vpop.f32.mrb[0].mxu0
      %3248 = vmatprep.mubr.f32.mxu0 0.0
      %3249 = vmatmul.mubr.f32.gmra.mrb[0].mxu0 %v3030
      %v3250 = vpop.f32.mrb[0].mxu0
      %v3251 = vadd.f32 0.0, %v3250
      %v3252 = vpop.f32.mrb[0].mxu0
      %3253 = vmatprep.mubr.f32.mxu0 0.0
      %3254 = vmatmul.mubr.f32.gmra.mrb[0].mxu0 %v3033
      %v3255 = vpop.f32.mrb[0].mxu0
      %v3256 = vadd.f32 0.0, %v3255
      %v3257 = vpop.f32.mrb[0].mxu0
      %3258 = vmatprep.mubr.f32.mxu0 0.0
      %3259 = vmatmul.mubr.f32.gmra.mrb[0].mxu0 %v3036
      %v3260 = vpop.f32.mrb[0].mxu0
      %v3261 = vadd.f32 0.0, %v3260
      %v3262 = vpop.f32.mrb[0].mxu0
      %3263 = vmatprep.mubr.f32.mxu0 0.0
      %3264 = vmatmul.mubr.f32.gmra.mrb[0].mxu0 %v3039
      %v3265 = vpop.f32.mrb[0].mxu0
      %v3266 = vadd.f32 0.0, %v3265
      %v3267 = vpop.f32.mrb[0].mxu0
      %3268 = vdwg.mxu0
      %v3269 = vadd.f32 %v2879, %v3111
      %v3270 = vadd.f32 %v2880, %v3116
      %v3271 = vadd.f32 %v2881, %v3121
      %v3272 = vadd.f32 %v2882, %v3126
      %v3273 = vadd.f32 %v2883, %v3131
      %v3274 = vadd.f32 %v2884, %v3136
      %v3275 = vadd.f32 %v2885, %v3141
      %v3276 = vadd.f32 %v2886, %v3146
      %v3277 = vadd.f32 %v2887, %v3151
      %v3278 = vadd.f32 %v2888, %v3156
      %v3279 = vadd.f32 %v2889, %v3161
      %v3280 = vadd.f32 %v2890, %v3166
      %v3281 = vadd.f32 %v2891, %v3171
      %v3282 = vadd.f32 %v2892, %v3176
      %v3283 = vadd.f32 %v2893, %v3181
      %v3284 = vadd.f32 %v2894, %v3186
      %v3285 = vadd.f32 %v2895, %v3191
      %v3286 = vadd.f32 %v2896, %v3196
      %v3287 = vadd.f32 %v2897, %v3201
      %v3288 = vadd.f32 %v2898, %v3206
      %v3289 = vadd.f32 %v2899, %v3211
      %v3290 = vadd.f32 %v2900, %v3216
      %v3291 = vadd.f32 %v2901, %v3221
      %v3292 = vadd.f32 %v2902, %v3226
      %v3293 = vadd.f32 %v2903, %v3231
      %v3294 = vadd.f32 %v2904, %v3236
      %v3295 = vadd.f32 %v2905, %v3241
      %v3296 = vadd.f32 %v2906, %v3246
      %v3297 = vadd.f32 %v2907, %v3251
      %v3298 = vadd.f32 %v2908, %v3256
      %v3299 = vadd.f32 %v2909, %v3261
      %v3300 = vadd.f32 %v2910, %v3266
      %v3301 = vld [vmem:[%s2520 + $0x2] sm:$0xff]
      %v3302 = vld [vmem:[%s2520 + $0xa] sm:$0xff]
      %v3303 = vld [vmem:[%s2520 + $0x1a] sm:$0xff]
      %v3304 = vld [vmem:[%s2520 + $0x22] sm:$0xff]
      %v3305 = vld [vmem:[%s2520 + $0x32] sm:$0xff]
      %v3306 = vld [vmem:[%s2520 + $0x3a] sm:$0xff]
      %v3307 = vld [vmem:[%s2520 + $0x4a] sm:$0xff]
      %v3308 = vld [vmem:[%s2520 + $0x52] sm:$0xff]
      %v3309 = vld [vmem:[%s2520 + $0x62] sm:$0xff]
      %v3310 = vld [vmem:[%s2520 + $0x6a] sm:$0xff]
      %v3311 = vld [vmem:[%s2520 + $0x7a] sm:$0xff]
      %v3312 = vld [vmem:[%s2520 + $0x82] sm:$0xff]
      %v3313 = vld [vmem:[%s2520 + $0x92] sm:$0xff]
      %v3314 = vld [vmem:[%s2520 + $0x9a] sm:$0xff]
      %v3315 = vld [vmem:[%s2520 + $0xaa] sm:$0xff]
      %v3316 = vld [vmem:[%s2520 + $0xb2] sm:$0xff]
      %v3317 = vld [vmem:[%s2520 + $0xc2] sm:$0xff]
      %v3318 = vld [vmem:[%s2520 + $0xca] sm:$0xff]
      %v3319 = vld [vmem:[%s2520 + $0xda] sm:$0xff]
      %v3320 = vld [vmem:[%s2520 + $0xe2] sm:$0xff]
      %v3321 = vld [vmem:[%s2520 + $0xf2] sm:$0xff]
      %v3322 = vld [vmem:[%s2520 + $0xfa] sm:$0xff]
      %v3323 = vld [vmem:[%s2520 + $0x10a] sm:$0xff]
      %v3324 = vld [vmem:[%s2520 + $0x112] sm:$0xff]
      %v3325 = vld [vmem:[%s2520 + $0x122] sm:$0xff]
      %v3326 = vld [vmem:[%s2520 + $0x12a] sm:$0xff]
      %v3327 = vld [vmem:[%s2520 + $0x13a] sm:$0xff]
      %v3328 = vld [vmem:[%s2520 + $0x142] sm:$0xff]
      %v3329 = vld [vmem:[%s2520 + $0x152] sm:$0xff]
      %v3330 = vld [vmem:[%s2520 + $0x15a] sm:$0xff]
      %v3331 = vld [vmem:[%s2520 + $0x16a] sm:$0xff]
      %v3332 = vld [vmem:[%s2520 + $0x172] sm:$0xff]
      %s3333 = scalar_lea.vmem %s1, 32
      %v3334 = vld [vmem:[%s3333] sm:$0xf]
      %v3336 = vsel %vm309, %v3301, 0
      %v3339 = vsel %vm309, %v3302, 0
      %v3342 = vsel %vm309, %v3303, 0
      %v3345 = vsel %vm309, %v3304, 0
      %v3348 = vsel %vm309, %v3305, 0
      %v3351 = vsel %vm309, %v3306, 0
      %v3354 = vsel %vm309, %v3307, 0
      %v3357 = vsel %vm309, %v3308, 0
      %v3360 = vsel %vm309, %v3309, 0
      %v3363 = vsel %vm309, %v3310, 0
      %v3366 = vsel %vm309, %v3311, 0
      %v3369 = vsel %vm309, %v3312, 0
      %v3372 = vsel %vm309, %v3313, 0
      %v3375 = vsel %vm309, %v3314, 0
      %v3378 = vsel %vm309, %v3315, 0
      %v3381 = vsel %vm309, %v3316, 0
      %v3384 = vsel %vm309, %v3317, 0
      %v3387 = vsel %vm309, %v3318, 0
      %v3390 = vsel %vm309, %v3319, 0
      %v3393 = vsel %vm309, %v3320, 0
      %v3396 = vsel %vm309, %v3321, 0
      %v3399 = vsel %vm309, %v3322, 0
      %v3402 = vsel %vm309, %v3323, 0
      %v3405 = vsel %vm309, %v3324, 0
      %v3408 = vsel %vm309, %v3325, 0
      %v3411 = vsel %vm309, %v3326, 0
      %v3414 = vsel %vm309, %v3327, 0
      %v3417 = vsel %vm309, %v3328, 0
      %v3420 = vsel %vm309, %v3329, 0
      %v3423 = vsel %vm309, %v3330, 0
      %v3426 = vsel %vm309, %v3331, 0
      %v3429 = vsel %vm309, %v3332, 0
      %v3432 = vsel %vm406, %v3334, 0
      %3434 = vmatprep.subr.mxu0 0.0
      %3435 = vmatpush1.msra.mxu0 %v3432
      %3436 = vmatprep.subr.mxu0 0.0
      %3437 = vmatpush1.msra.mxu0 0.0
      %3438 = vmatprep.subr.mxu0 0.0
      %3439 = vmatpush1.msra.mxu0 0.0
      %3440 = vmatprep.subr.mxu0 0.0
      %3441 = vmatpush1.msra.mxu0 0.0
      %3442 = vmatprep.subr.mxu0 0.0
      %3443 = vmatpush1.msra.mxu0 0.0
      %3444 = vmatprep.subr.mxu0 0.0
      %3445 = vmatpush1.msra.mxu0 0.0
      %3446 = vmatprep.subr.mxu0 0.0
      %3447 = vmatpush1.msra.mxu0 0.0
      %3448 = vmatprep.subr.mxu0 0.0
      %3449 = vmatpush1.msra.mxu0 0.0
      %3450 = vmatprep.subr.mxu0 0.0
      %3451 = vmatpush1.msra.mxu0 0.0
      %3452 = vmatprep.subr.mxu0 0.0
      %3453 = vmatpush1.msra.mxu0 0.0
      %3454 = vmatprep.subr.mxu0 0.0
      %3455 = vmatpush1.msra.mxu0 0.0
      %3456 = vmatprep.subr.mxu0 0.0
      %3457 = vmatpush1.msra.mxu0 0.0
      %3458 = vmatprep.subr.mxu0 0.0
      %3459 = vmatpush1.msra.mxu0 0.0
      %3460 = vmatprep.subr.mxu0 0.0
      %3461 = vmatpush1.msra.mxu0 0.0
      %3462 = vmatprep.subr.mxu0 0.0
      %3463 = vmatpush1.msra.mxu0 0.0
      %3464 = vmatprep.subr.mxu0 0.0
      %3465 = vmatpush1.msra.mxu0 0.0
      %3466 = vmatprep.subr.mxu0 0.0
      %3467 = vmatpush1.msra.mxu0 0.0
      %3468 = vmatprep.subr.mxu0 0.0
      %3469 = vmatpush1.msra.mxu0 0.0
      %3470 = vmatprep.subr.mxu0 0.0
      %3471 = vmatpush1.msra.mxu0 0.0
      %3472 = vmatprep.subr.mxu0 0.0
      %3473 = vmatpush1.msra.mxu0 0.0
      %3474 = vmatprep.subr.mxu0 0.0
      %3475 = vmatpush1.msra.mxu0 0.0
      %3476 = vmatprep.subr.mxu0 0.0
      %3477 = vmatpush1.msra.mxu0 0.0
      %3478 = vmatprep.subr.mxu0 0.0
      %3479 = vmatpush1.msra.mxu0 0.0
      %3480 = vmatprep.subr.mxu0 0.0
      %3481 = vmatpush1.msra.mxu0 0.0
      %3482 = vmatprep.subr.mxu0 0.0
      %3483 = vmatpush1.msra.mxu0 0.0
      %3484 = vmatprep.subr.mxu0 0.0
      %3485 = vmatpush1.msra.mxu0 0.0
      %3486 = vmatprep.subr.mxu0 0.0
      %3487 = vmatpush1.msra.mxu0 0.0
      %3488 = vmatprep.subr.mxu0 0.0
      %3489 = vmatpush1.msra.mxu0 0.0
      %3490 = vmatprep.subr.mxu0 0.0
      %3491 = vmatpush1.msra.mxu0 0.0
      %3492 = vmatprep.subr.mxu0 0.0
      %3493 = vmatpush1.msra.mxu0 0.0
      %3494 = vmatprep.subr.mxu0 0.0
      %3495 = vmatpush1.msra.mxu0 0.0
      %3496 = vmatprep.subr.mxu0 0.0
      %3497 = vmatpush1.msra.mxu0 0.0
      %3498 = vmatprep.mubr.f32.mxu0 0.0
      %3499 = vmatmul.mubr.f32.gmra.mrb[0].mxu0 %v3336
      %v3500 = vpop.f32.mrb[0].mxu0
      %v3501 = vadd.f32 0.0, %v3500
      %v3502 = vpop.f32.mrb[0].mxu0
      %3503 = vmatprep.mubr.f32.mxu0 0.0
      %3504 = vmatmul.mubr.f32.gmra.mrb[0].mxu0 %v3339
      %v3505 = vpop.f32.mrb[0].mxu0
      %v3506 = vadd.f32 0.0, %v3505
      %v3507 = vpop.f32.mrb[0].mxu0
      %3508 = vmatprep.mubr.f32.mxu0 0.0
      %3509 = vmatmul.mubr.f32.gmra.mrb[0].mxu0 %v3342
      %v3510 = vpop.f32.mrb[0].mxu0
      %v3511 = vadd.f32 0.0, %v3510
      %v3512 = vpop.f32.mrb[0].mxu0
      %3513 = vmatprep.mubr.f32.mxu0 0.0
      %3514 = vmatmul.mubr.f32.gmra.mrb[0].mxu0 %v3345
      %v3515 = vpop.f32.mrb[0].mxu0
      %v3516 = vadd.f32 0.0, %v3515
      %v3517 = vpop.f32.mrb[0].mxu0
      %3518 = vmatprep.mubr.f32.mxu0 0.0
      %3519 = vmatmul.mubr.f32.gmra.mrb[0].mxu0 %v3348
      %v3520 = vpop.f32.mrb[0].mxu0
      %v3521 = vadd.f32 0.0, %v3520
      %v3522 = vpop.f32.mrb[0].mxu0
      %3523 = vmatprep.mubr.f32.mxu0 0.0
      %3524 = vmatmul.mubr.f32.gmra.mrb[0].mxu0 %v3351
      %v3525 = vpop.f32.mrb[0].mxu0
      %v3526 = vadd.f32 0.0, %v3525
      %v3527 = vpop.f32.mrb[0].mxu0
      %3528 = vmatprep.mubr.f32.mxu0 0.0
      %3529 = vmatmul.mubr.f32.gmra.mrb[0].mxu0 %v3354
      %v3530 = vpop.f32.mrb[0].mxu0
      %v3531 = vadd.f32 0.0, %v3530
      %v3532 = vpop.f32.mrb[0].mxu0
      %3533 = vmatprep.mubr.f32.mxu0 0.0
      %3534 = vmatmul.mubr.f32.gmra.mrb[0].mxu0 %v3357
      %v3535 = vpop.f32.mrb[0].mxu0
      %v3536 = vadd.f32 0.0, %v3535
      %v3537 = vpop.f32.mrb[0].mxu0
      %3538 = vmatprep.mubr.f32.mxu0 0.0
      %3539 = vmatmul.mubr.f32.gmra.mrb[0].mxu0 %v3360
      %v3540 = vpop.f32.mrb[0].mxu0
      %v3541 = vadd.f32 0.0, %v3540
      %v3542 = vpop.f32.mrb[0].mxu0
      %3543 = vmatprep.mubr.f32.mxu0 0.0
      %3544 = vmatmul.mubr.f32.gmra.mrb[0].mxu0 %v3363
      %v3545 = vpop.f32.mrb[0].mxu0
      %v3546 = vadd.f32 0.0, %v3545
      %v3547 = vpop.f32.mrb[0].mxu0
      %3548 = vmatprep.mubr.f32.mxu0 0.0
      %3549 = vmatmul.mubr.f32.gmra.mrb[0].mxu0 %v3366
      %v3550 = vpop.f32.mrb[0].mxu0
      %v3551 = vadd.f32 0.0, %v3550
      %v3552 = vpop.f32.mrb[0].mxu0
      %3553 = vmatprep.mubr.f32.mxu0 0.0
      %3554 = vmatmul.mubr.f32.gmra.mrb[0].mxu0 %v3369
      %v3555 = vpop.f32.mrb[0].mxu0
      %v3556 = vadd.f32 0.0, %v3555
      %v3557 = vpop.f32.mrb[0].mxu0
      %3558 = vmatprep.mubr.f32.mxu0 0.0
      %3559 = vmatmul.mubr.f32.gmra.mrb[0].mxu0 %v3372
      %v3560 = vpop.f32.mrb[0].mxu0
      %v3561 = vadd.f32 0.0, %v3560
      %v3562 = vpop.f32.mrb[0].mxu0
      %3563 = vmatprep.mubr.f32.mxu0 0.0
      %3564 = vmatmul.mubr.f32.gmra.mrb[0].mxu0 %v3375
      %v3565 = vpop.f32.mrb[0].mxu0
      %v3566 = vadd.f32 0.0, %v3565
      %v3567 = vpop.f32.mrb[0].mxu0
      %3568 = vmatprep.mubr.f32.mxu0 0.0
      %3569 = vmatmul.mubr.f32.gmra.mrb[0].mxu0 %v3378
      %v3570 = vpop.f32.mrb[0].mxu0
      %v3571 = vadd.f32 0.0, %v3570
      %v3572 = vpop.f32.mrb[0].mxu0
      %3573 = vmatprep.mubr.f32.mxu0 0.0
      %3574 = vmatmul.mubr.f32.gmra.mrb[0].mxu0 %v3381
      %v3575 = vpop.f32.mrb[0].mxu0
      %v3576 = vadd.f32 0.0, %v3575
      %v3577 = vpop.f32.mrb[0].mxu0
      %3578 = vmatprep.mubr.f32.mxu0 0.0
      %3579 = vmatmul.mubr.f32.gmra.mrb[0].mxu0 %v3384
      %v3580 = vpop.f32.mrb[0].mxu0
      %v3581 = vadd.f32 0.0, %v3580
      %v3582 = vpop.f32.mrb[0].mxu0
      %3583 = vmatprep.mubr.f32.mxu0 0.0
      %3584 = vmatmul.mubr.f32.gmra.mrb[0].mxu0 %v3387
      %v3585 = vpop.f32.mrb[0].mxu0
      %v3586 = vadd.f32 0.0, %v3585
      %v3587 = vpop.f32.mrb[0].mxu0
      %3588 = vmatprep.mubr.f32.mxu0 0.0
      %3589 = vmatmul.mubr.f32.gmra.mrb[0].mxu0 %v3390
      %v3590 = vpop.f32.mrb[0].mxu0
      %v3591 = vadd.f32 0.0, %v3590
      %v3592 = vpop.f32.mrb[0].mxu0
      %3593 = vmatprep.mubr.f32.mxu0 0.0
      %3594 = vmatmul.mubr.f32.gmra.mrb[0].mxu0 %v3393
      %v3595 = vpop.f32.mrb[0].mxu0
      %v3596 = vadd.f32 0.0, %v3595
      %v3597 = vpop.f32.mrb[0].mxu0
      %3598 = vmatprep.mubr.f32.mxu0 0.0
      %3599 = vmatmul.mubr.f32.gmra.mrb[0].mxu0 %v3396
      %v3600 = vpop.f32.mrb[0].mxu0
      %v3601 = vadd.f32 0.0, %v3600
      %v3602 = vpop.f32.mrb[0].mxu0
      %3603 = vmatprep.mubr.f32.mxu0 0.0
      %3604 = vmatmul.mubr.f32.gmra.mrb[0].mxu0 %v3399
      %v3605 = vpop.f32.mrb[0].mxu0
      %v3606 = vadd.f32 0.0, %v3605
      %v3607 = vpop.f32.mrb[0].mxu0
      %3608 = vmatprep.mubr.f32.mxu0 0.0
      %3609 = vmatmul.mubr.f32.gmra.mrb[0].mxu0 %v3402
      %v3610 = vpop.f32.mrb[0].mxu0
      %v3611 = vadd.f32 0.0, %v3610
      %v3612 = vpop.f32.mrb[0].mxu0
      %3613 = vmatprep.mubr.f32.mxu0 0.0
      %3614 = vmatmul.mubr.f32.gmra.mrb[0].mxu0 %v3405
      %v3615 = vpop.f32.mrb[0].mxu0
      %v3616 = vadd.f32 0.0, %v3615
      %v3617 = vpop.f32.mrb[0].mxu0
      %3618 = vmatprep.mubr.f32.mxu0 0.0
      %3619 = vmatmul.mubr.f32.gmra.mrb[0].mxu0 %v3408
      %v3620 = vpop.f32.mrb[0].mxu0
      %v3621 = vadd.f32 0.0, %v3620
      %v3622 = vpop.f32.mrb[0].mxu0
      %3623 = vmatprep.mubr.f32.mxu0 0.0
      %3624 = vmatmul.mubr.f32.gmra.mrb[0].mxu0 %v3411
      %v3625 = vpop.f32.mrb[0].mxu0
      %v3626 = vadd.f32 0.0, %v3625
      %v3627 = vpop.f32.mrb[0].mxu0
      %3628 = vmatprep.mubr.f32.mxu0 0.0
      %3629 = vmatmul.mubr.f32.gmra.mrb[0].mxu0 %v3414
      %v3630 = vpop.f32.mrb[0].mxu0
      %v3631 = vadd.f32 0.0, %v3630
      %v3632 = vpop.f32.mrb[0].mxu0
      %3633 = vmatprep.mubr.f32.mxu0 0.0
      %3634 = vmatmul.mubr.f32.gmra.mrb[0].mxu0 %v3417
      %v3635 = vpop.f32.mrb[0].mxu0
      %v3636 = vadd.f32 0.0, %v3635
      %v3637 = vpop.f32.mrb[0].mxu0
      %3638 = vmatprep.mubr.f32.mxu0 0.0
      %3639 = vmatmul.mubr.f32.gmra.mrb[0].mxu0 %v3420
      %v3640 = vpop.f32.mrb[0].mxu0
      %v3641 = vadd.f32 0.0, %v3640
      %v3642 = vpop.f32.mrb[0].mxu0
      %3643 = vmatprep.mubr.f32.mxu0 0.0
      %3644 = vmatmul.mubr.f32.gmra.mrb[0].mxu0 %v3423
      %v3645 = vpop.f32.mrb[0].mxu0
      %v3646 = vadd.f32 0.0, %v3645
      %v3647 = vpop.f32.mrb[0].mxu0
      %3648 = vmatprep.mubr.f32.mxu0 0.0
      %3649 = vmatmul.mubr.f32.gmra.mrb[0].mxu0 %v3426
      %v3650 = vpop.f32.mrb[0].mxu0
      %v3651 = vadd.f32 0.0, %v3650
      %v3652 = vpop.f32.mrb[0].mxu0
      %3653 = vmatprep.mubr.f32.mxu0 0.0
      %3654 = vmatmul.mubr.f32.gmra.mrb[0].mxu0 %v3429
      %v3655 = vpop.f32.mrb[0].mxu0
      %v3656 = vadd.f32 0.0, %v3655
      %v3657 = vpop.f32.mrb[0].mxu0
      %3658 = vdwg.mxu0
      %v3659 = vadd.f32 %v3269, %v3501
      %v3660 = vadd.f32 %v3270, %v3506
      %v3661 = vadd.f32 %v3271, %v3511
      %v3662 = vadd.f32 %v3272, %v3516
      %v3663 = vadd.f32 %v3273, %v3521
      %v3664 = vadd.f32 %v3274, %v3526
      %v3665 = vadd.f32 %v3275, %v3531
      %v3666 = vadd.f32 %v3276, %v3536
      %v3667 = vadd.f32 %v3277, %v3541
      %v3668 = vadd.f32 %v3278, %v3546
      %v3669 = vadd.f32 %v3279, %v3551
      %v3670 = vadd.f32 %v3280, %v3556
      %v3671 = vadd.f32 %v3281, %v3561
      %v3672 = vadd.f32 %v3282, %v3566
      %v3673 = vadd.f32 %v3283, %v3571
      %v3674 = vadd.f32 %v3284, %v3576
      %v3675 = vadd.f32 %v3285, %v3581
      %v3676 = vadd.f32 %v3286, %v3586
      %v3677 = vadd.f32 %v3287, %v3591
      %v3678 = vadd.f32 %v3288, %v3596
      %v3679 = vadd.f32 %v3289, %v3601
      %v3680 = vadd.f32 %v3290, %v3606
      %v3681 = vadd.f32 %v3291, %v3611
      %v3682 = vadd.f32 %v3292, %v3616
      %v3683 = vadd.f32 %v3293, %v3621
      %v3684 = vadd.f32 %v3294, %v3626
      %v3685 = vadd.f32 %v3295, %v3631
      %v3686 = vadd.f32 %v3296, %v3636
      %v3687 = vadd.f32 %v3297, %v3641
      %v3688 = vadd.f32 %v3298, %v3646
      %v3689 = vadd.f32 %v3299, %v3651
      %v3690 = vadd.f32 %v3300, %v3656
      %v3691 = vld [vmem:[%s2] sm:$0x1]
      %v3693 = vlaneseq
      %v3694 = vshrl.u32 %v3693, 7
      %v3695 = vsub.s32 0, %v3694
      %v3696 = vrot.slane %v3691, %v3695
      %v3698 = vadd.f32 %v3659, %v3696
      %v3699 = vadd.f32 %v3660, %v3696
      %v3700 = vadd.f32 %v3661, %v3696
      %v3701 = vadd.f32 %v3662, %v3696
      %v3702 = vadd.f32 %v3663, %v3696
      %v3703 = vadd.f32 %v3664, %v3696
      %v3704 = vadd.f32 %v3665, %v3696
      %v3705 = vadd.f32 %v3666, %v3696
      %v3706 = vadd.f32 %v3667, %v3696
      %v3707 = vadd.f32 %v3668, %v3696
      %v3708 = vadd.f32 %v3669, %v3696
      %v3709 = vadd.f32 %v3670, %v3696
      %v3710 = vadd.f32 %v3671, %v3696
      %v3711 = vadd.f32 %v3672, %v3696
      %v3712 = vadd.f32 %v3673, %v3696
      %v3713 = vadd.f32 %v3674, %v3696
      %v3714 = vadd.f32 %v3675, %v3696
      %v3715 = vadd.f32 %v3676, %v3696
      %v3716 = vadd.f32 %v3677, %v3696
      %v3717 = vadd.f32 %v3678, %v3696
      %v3718 = vadd.f32 %v3679, %v3696
      %v3719 = vadd.f32 %v3680, %v3696
      %v3720 = vadd.f32 %v3681, %v3696
      %v3721 = vadd.f32 %v3682, %v3696
      %v3722 = vadd.f32 %v3683, %v3696
      %v3723 = vadd.f32 %v3684, %v3696
      %v3724 = vadd.f32 %v3685, %v3696
      %v3725 = vadd.f32 %v3686, %v3696
      %v3726 = vadd.f32 %v3687, %v3696
      %v3727 = vadd.f32 %v3688, %v3696
      %v3728 = vadd.f32 %v3689, %v3696
      %v3729 = vadd.f32 %v3690, %v3696
      %vm3730 = vcmask 64512
      %3731 = vst.msk [vmem:[%s235] sm:$0xff] %vm3730, %v3698
      %3732 = vst.msk [vmem:[%s235 + $0x8] sm:$0xff] %vm3730, %v3699
      %3733 = vst.msk [vmem:[%s235 + $0x10] sm:$0xff] %vm3730, %v3700
      %3734 = vst.msk [vmem:[%s235 + $0x18] sm:$0xff] %vm3730, %v3701
      %3735 = vst.msk [vmem:[%s235 + $0x20] sm:$0xff] %vm3730, %v3702
      %3736 = vst.msk [vmem:[%s235 + $0x28] sm:$0xff] %vm3730, %v3703
      %3737 = vst.msk [vmem:[%s235 + $0x30] sm:$0xff] %vm3730, %v3704
      %3738 = vst.msk [vmem:[%s235 + $0x38] sm:$0xff] %vm3730, %v3705
      %3739 = vst.msk [vmem:[%s235 + $0x40] sm:$0xff] %vm3730, %v3706
      %3740 = vst.msk [vmem:[%s235 + $0x48] sm:$0xff] %vm3730, %v3707
      %3741 = vst.msk [vmem:[%s235 + $0x50] sm:$0xff] %vm3730, %v3708
      %3742 = vst.msk [vmem:[%s235 + $0x58] sm:$0xff] %vm3730, %v3709
      %3743 = vst.msk [vmem:[%s235 + $0x60] sm:$0xff] %vm3730, %v3710
      %3744 = vst.msk [vmem:[%s235 + $0x68] sm:$0xff] %vm3730, %v3711
      %3745 = vst.msk [vmem:[%s235 + $0x70] sm:$0xff] %vm3730, %v3712
      %3746 = vst.msk [vmem:[%s235 + $0x78] sm:$0xff] %vm3730, %v3713
      %3747 = vst.msk [vmem:[%s235 + $0x80] sm:$0xff] %vm3730, %v3714
      %3748 = vst.msk [vmem:[%s235 + $0x88] sm:$0xff] %vm3730, %v3715
      %3749 = vst.msk [vmem:[%s235 + $0x90] sm:$0xff] %vm3730, %v3716
      %3750 = vst.msk [vmem:[%s235 + $0x98] sm:$0xff] %vm3730, %v3717
      %3751 = vst.msk [vmem:[%s235 + $0xa0] sm:$0xff] %vm3730, %v3718
      %3752 = vst.msk [vmem:[%s235 + $0xa8] sm:$0xff] %vm3730, %v3719
      %3753 = vst.msk [vmem:[%s235 + $0xb0] sm:$0xff] %vm3730, %v3720
      %3754 = vst.msk [vmem:[%s235 + $0xb8] sm:$0xff] %vm3730, %v3721
      %3755 = vst.msk [vmem:[%s235 + $0xc0] sm:$0xff] %vm3730, %v3722
      %3756 = vst.msk [vmem:[%s235 + $0xc8] sm:$0xff] %vm3730, %v3723
      %3757 = vst.msk [vmem:[%s235 + $0xd0] sm:$0xff] %vm3730, %v3724
      %3758 = vst.msk [vmem:[%s235 + $0xd8] sm:$0xff] %vm3730, %v3725
      %3759 = vst.msk [vmem:[%s235 + $0xe0] sm:$0xff] %vm3730, %v3726
      %3760 = vst.msk [vmem:[%s235 + $0xe8] sm:$0xff] %vm3730, %v3727
      %3761 = vst.msk [vmem:[%s235 + $0xf0] sm:$0xff] %vm3730, %v3728
      %3762 = vst.msk [vmem:[%s235 + $0xf8] sm:$0xff] %vm3730, %v3729
      %v3763 = vsel %vm3730, %v3698, 0.0
      %v3764 = vsel %vm3730, %v3699, 0.0
      %v3765 = vadd.f32 %v3763, %v3764
      %v3766 = vsel %vm3730, %v3700, 0.0
      %v3767 = vadd.f32 %v3765, %v3766
      %v3768 = vsel %vm3730, %v3701, 0.0
      %v3769 = vadd.f32 %v3767, %v3768
      %v3770 = vsel %vm3730, %v3702, 0.0
      %v3771 = vadd.f32 %v3769, %v3770
      %v3772 = vsel %vm3730, %v3703, 0.0
      %v3773 = vadd.f32 %v3771, %v3772
      %v3774 = vsel %vm3730, %v3704, 0.0
      %v3775 = vadd.f32 %v3773, %v3774
      %v3776 = vsel %vm3730, %v3705, 0.0
      %v3777 = vadd.f32 %v3775, %v3776
      %v3778 = vsel %vm3730, %v3706, 0.0
      %v3779 = vadd.f32 %v3777, %v3778
      %v3780 = vsel %vm3730, %v3707, 0.0
      %v3781 = vadd.f32 %v3779, %v3780
      %v3782 = vsel %vm3730, %v3708, 0.0
      %v3783 = vadd.f32 %v3781, %v3782
      %v3784 = vsel %vm3730, %v3709, 0.0
      %v3785 = vadd.f32 %v3783, %v3784
      %v3786 = vsel %vm3730, %v3710, 0.0
      %v3787 = vadd.f32 %v3785, %v3786
      %v3788 = vsel %vm3730, %v3711, 0.0
      %v3789 = vadd.f32 %v3787, %v3788
      %v3790 = vsel %vm3730, %v3712, 0.0
      %v3791 = vadd.f32 %v3789, %v3790
      %v3792 = vsel %vm3730, %v3713, 0.0
      %v3793 = vadd.f32 %v3791, %v3792
      %v3794 = vsel %vm3730, %v3714, 0.0
      %v3795 = vadd.f32 %v3793, %v3794
      %v3796 = vsel %vm3730, %v3715, 0.0
      %v3797 = vadd.f32 %v3795, %v3796
      %v3798 = vsel %vm3730, %v3716, 0.0
      %v3799 = vadd.f32 %v3797, %v3798
      %v3800 = vsel %vm3730, %v3717, 0.0
      %v3801 = vadd.f32 %v3799, %v3800
      %v3802 = vsel %vm3730, %v3718, 0.0
      %v3803 = vadd.f32 %v3801, %v3802
      %v3804 = vsel %vm3730, %v3719, 0.0
      %v3805 = vadd.f32 %v3803, %v3804
      %v3806 = vsel %vm3730, %v3720, 0.0
      %v3807 = vadd.f32 %v3805, %v3806
      %v3808 = vsel %vm3730, %v3721, 0.0
      %v3809 = vadd.f32 %v3807, %v3808
      %v3810 = vsel %vm3730, %v3722, 0.0
      %v3811 = vadd.f32 %v3809, %v3810
      %v3812 = vsel %vm3730, %v3723, 0.0
      %v3813 = vadd.f32 %v3811, %v3812
      %v3814 = vsel %vm3730, %v3724, 0.0
      %v3815 = vadd.f32 %v3813, %v3814
      %v3816 = vsel %vm3730, %v3725, 0.0
      %v3817 = vadd.f32 %v3815, %v3816
      %v3818 = vsel %vm3730, %v3726, 0.0
      %v3819 = vadd.f32 %v3817, %v3818
      %v3820 = vsel %vm3730, %v3727, 0.0
      %v3821 = vadd.f32 %v3819, %v3820
      %v3822 = vsel %vm3730, %v3728, 0.0
      %v3823 = vadd.f32 %v3821, %v3822
      %v3824 = vsel %vm3730, %v3729, 0.0
      %v3825 = vadd.f32 %v3823, %v3824
      %v3826 = vrot.slane %v3825, 4
      %v3827 = vadd.f32 %v3825, %v3826
      %v3828 = vrot.slane %v3827, 2
      %v3829 = vadd.f32 %v3827, %v3828
      %v3830 = vrot.slane %v3829, 1
      %v3831 = vadd.f32 %v3829, %v3830
      %vm3832 = vcmask 57344
      %3833 = vst.msk [vmem:[%s238] sm:$0x1] %vm3832, %v3831
      %v3834 = vmul.f32 %v3698, %v3698
      %v3835 = vmul.f32 %v3699, %v3699
      %v3836 = vmul.f32 %v3700, %v3700
      %v3837 = vmul.f32 %v3701, %v3701
      %v3838 = vmul.f32 %v3702, %v3702
      %v3839 = vmul.f32 %v3703, %v3703
      %v3840 = vmul.f32 %v3704, %v3704
      %v3841 = vmul.f32 %v3705, %v3705
      %v3842 = vmul.f32 %v3706, %v3706
      %v3843 = vmul.f32 %v3707, %v3707
      %v3844 = vmul.f32 %v3708, %v3708
      %v3845 = vmul.f32 %v3709, %v3709
      %v3846 = vmul.f32 %v3710, %v3710
      %v3847 = vmul.f32 %v3711, %v3711
      %v3848 = vmul.f32 %v3712, %v3712
      %v3849 = vmul.f32 %v3713, %v3713
      %v3850 = vmul.f32 %v3714, %v3714
      %v3851 = vmul.f32 %v3715, %v3715
      %v3852 = vmul.f32 %v3716, %v3716
      %v3853 = vmul.f32 %v3717, %v3717
      %v3854 = vmul.f32 %v3718, %v3718
      %v3855 = vmul.f32 %v3719, %v3719
      %v3856 = vmul.f32 %v3720, %v3720
      %v3857 = vmul.f32 %v3721, %v3721
      %v3858 = vmul.f32 %v3722, %v3722
      %v3859 = vmul.f32 %v3723, %v3723
      %v3860 = vmul.f32 %v3724, %v3724
      %v3861 = vmul.f32 %v3725, %v3725
      %v3862 = vmul.f32 %v3726, %v3726
      %v3863 = vmul.f32 %v3727, %v3727
      %v3864 = vmul.f32 %v3728, %v3728
      %v3865 = vmul.f32 %v3729, %v3729
      %v3866 = vsel %vm3730, %v3834, 0.0
      %v3867 = vsel %vm3730, %v3835, 0.0
      %v3868 = vadd.f32 %v3866, %v3867
      %v3869 = vsel %vm3730, %v3836, 0.0
      %v3870 = vadd.f32 %v3868, %v3869
      %v3871 = vsel %vm3730, %v3837, 0.0
      %v3872 = vadd.f32 %v3870, %v3871
      %v3873 = vsel %vm3730, %v3838, 0.0
      %v3874 = vadd.f32 %v3872, %v3873
      %v3875 = vsel %vm3730, %v3839, 0.0
      %v3876 = vadd.f32 %v3874, %v3875
      %v3877 = vsel %vm3730, %v3840, 0.0
      %v3878 = vadd.f32 %v3876, %v3877
      %v3879 = vsel %vm3730, %v3841, 0.0
      %v3880 = vadd.f32 %v3878, %v3879
      %v3881 = vsel %vm3730, %v3842, 0.0
      %v3882 = vadd.f32 %v3880, %v3881
      %v3883 = vsel %vm3730, %v3843, 0.0
      %v3884 = vadd.f32 %v3882, %v3883
      %v3885 = vsel %vm3730, %v3844, 0.0
      %v3886 = vadd.f32 %v3884, %v3885
      %v3887 = vsel %vm3730, %v3845, 0.0
      %v3888 = vadd.f32 %v3886, %v3887
      %v3889 = vsel %vm3730, %v3846, 0.0
      %v3890 = vadd.f32 %v3888, %v3889
      %v3891 = vsel %vm3730, %v3847, 0.0
      %v3892 = vadd.f32 %v3890, %v3891
      %v3893 = vsel %vm3730, %v3848, 0.0
      %v3894 = vadd.f32 %v3892, %v3893
      %v3895 = vsel %vm3730, %v3849, 0.0
      %v3896 = vadd.f32 %v3894, %v3895
      %v3897 = vsel %vm3730, %v3850, 0.0
      %v3898 = vadd.f32 %v3896, %v3897
      %v3899 = vsel %vm3730, %v3851, 0.0
      %v3900 = vadd.f32 %v3898, %v3899
      %v3901 = vsel %vm3730, %v3852, 0.0
      %v3902 = vadd.f32 %v3900, %v3901
      %v3903 = vsel %vm3730, %v3853, 0.0
      %v3904 = vadd.f32 %v3902, %v3903
      %v3905 = vsel %vm3730, %v3854, 0.0
      %v3906 = vadd.f32 %v3904, %v3905
      %v3907 = vsel %vm3730, %v3855, 0.0
      %v3908 = vadd.f32 %v3906, %v3907
      %v3909 = vsel %vm3730, %v3856, 0.0
      %v3910 = vadd.f32 %v3908, %v3909
      %v3911 = vsel %vm3730, %v3857, 0.0
      %v3912 = vadd.f32 %v3910, %v3911
      %v3913 = vsel %vm3730, %v3858, 0.0
      %v3914 = vadd.f32 %v3912, %v3913
      %v3915 = vsel %vm3730, %v3859, 0.0
      %v3916 = vadd.f32 %v3914, %v3915
      %v3917 = vsel %vm3730, %v3860, 0.0
      %v3918 = vadd.f32 %v3916, %v3917
      %v3919 = vsel %vm3730, %v3861, 0.0
      %v3920 = vadd.f32 %v3918, %v3919
      %v3921 = vsel %vm3730, %v3862, 0.0
      %v3922 = vadd.f32 %v3920, %v3921
      %v3923 = vsel %vm3730, %v3863, 0.0
      %v3924 = vadd.f32 %v3922, %v3923
      %v3925 = vsel %vm3730, %v3864, 0.0
      %v3926 = vadd.f32 %v3924, %v3925
      %v3927 = vsel %vm3730, %v3865, 0.0
      %v3928 = vadd.f32 %v3926, %v3927
      %v3929 = vrot.slane %v3928, 4
      %v3930 = vadd.f32 %v3928, %v3929
      %v3931 = vrot.slane %v3930, 2
      %v3932 = vadd.f32 %v3930, %v3931
      %v3933 = vrot.slane %v3932, 1
      %v3934 = vadd.f32 %v3932, %v3933
      %3935 = vst.msk [vmem:[%s241] sm:$0x1] %vm3832, %v3934
      %p3936 = scmp.lt.s32.totalorder %s17, 1
      %s3937 = scalar_select %p3936, %s17, 1
      %s3938 = smul.addr %s3937, 32
      %s3939 = smul.addr %s3938, 8
      %s3940 = scalar_lea.vmem %s3, %s3939
      %p3941 = scmp.lt.s32.totalorder %s17, 1
      %s3942 = scalar_select %p3941, %s17, 1
      %s3943 = scalar_lea.vmem %s4, %s3942
      %p3944 = scmp.lt.s32.totalorder %s17, 1
      %s3945 = scalar_select %p3944, %s17, 1
      %s3946 = scalar_lea.vmem %s5, %s3945
      // Predicated region
      $region33: #{conv_block_forward.4} parent=31 // pred_check
        %p3947 = pneg %p103
      $region34: #{conv_block_forward.4} parent=31 // pred_check_branch
        %3949 = sbr.rel (%p3947) target = $region36
      $region35: #{conv_block_forward.4} parent=31 // pred_region
        _
      $region36: #{conv_block_forward.4} parent=31 // pred_fallthru
        _
      // Predicated region
      $region37: #{conv_block_forward.4} parent=31 // pred_check
        %p3950 = pneg %p129
      $region38: #{conv_block_forward.4} parent=31 // pred_check_branch
        %3952 = sbr.rel (%p3950) target = $region40
      $region39: #{conv_block_forward.4} parent=31 // pred_region
        _
      $region40: #{conv_block_forward.4} parent=31 // pred_fallthru
        _
      // Predicated region
      $region41: #{conv_block_forward.4} parent=31 // pred_check
        %p3953 = pneg %p155
      $region42: #{conv_block_forward.4} parent=31 // pred_check_branch
        %3955 = sbr.rel (%p3953) target = $region44
      $region43: #{conv_block_forward.4} parent=31 // pred_region
        _
      $region44: #{conv_block_forward.4} parent=31 // pred_fallthru
        _
    $region32: #{conv_block_forward.4} parent=5 // pred_fallthru
      _
    %p3956 = scmp.le.s32.totalorder 2, %s12
    // Predicated region
    $region45: #{conv_block_forward.4} parent=5 // pred_check
      %p3957 = pneg %p3956
    $region46: #{conv_block_forward.4} parent=5 // pred_check_branch
      %3959 = sbr.rel (%p3957) target = $region48
    $region47: #{conv_block_forward.4} parent=5 // pred_region
      %s3960 = ssub.s32 %s12, 2
      // Predicated region
      $region49: #{conv_block_forward.4} parent=47 // pred_check
        %p3961 = pneg %p109
      $region50: #{conv_block_forward.4} parent=47 // pred_check_branch
        %3963 = sbr.rel (%p3961) target = $region52
      $region51: #{conv_block_forward.4} parent=47 // pred_region
        %p3964 = scmp.lt.s32.totalorder %s18, 1
        %s3965 = scalar_select %p3964, %s18, 1
        %s3966 = smul.addr %s3965, 32
        %s3967 = smul.addr %s3966, 8
        %s3968 = scalar_lea.vmem %s3, %s3967
      $region52: #{conv_block_forward.4} parent=47 // pred_fallthru
        _
      // Predicated region
      $region53: #{conv_block_forward.4} parent=47 // pred_check
        %p3969 = pneg %p135
      $region54: #{conv_block_forward.4} parent=47 // pred_check_branch
        %3971 = sbr.rel (%p3969) target = $region56
      $region55: #{conv_block_forward.4} parent=47 // pred_region
        %p3972 = scmp.lt.s32.totalorder %s18, 1
        %s3973 = scalar_select %p3972, %s18, 1
        %s3974 = scalar_lea.vmem %s4, %s3973
      $region56: #{conv_block_forward.4} parent=47 // pred_fallthru
        _
      // Predicated region
      $region57: #{conv_block_forward.4} parent=47 // pred_check
        %p3975 = pneg %p161
      $region58: #{conv_block_forward.4} parent=47 // pred_check_branch
        %3977 = sbr.rel (%p3975) target = $region60
      $region59: #{conv_block_forward.4} parent=47 // pred_region
        %p3978 = scmp.lt.s32.totalorder %s18, 1
        %s3979 = scalar_select %p3978, %s18, 1
        %s3980 = scalar_lea.vmem %s5, %s3979
      $region60: #{conv_block_forward.4} parent=47 // pred_fallthru
        _
    $region48: #{conv_block_forward.4} parent=5 // pred_fallthru
      _
  $region6: #{conv_block_forward.4} parent=0 // loop_footer
    %s16 = sadd.s32 1, %s12
  $region7: #{conv_block_forward.4} parent=0 // loop_footer_branch
    %11 = sbr.rel target = $region3
  $region8: #{conv_block_forward.4} parent=0 // loop_exit
    _

// kernel: conv_block_forward.6
$region0: #{conv_block_forward.6}
  #allocation0 [shape = 'u32[]', space=smem, size = 0x4, offset = 0x4, fixed_abs, tag = 'smem constant byte address 0x4 - core index']
  #allocation1 [shape = 'u32[144,128]{1,0:T(1,128)}', space=vmem, size = 0x12000, scoped, tag = 'internal scratch']
  %s0 = inlined_call_operand.vmem [shape: f32[2,18,18,8], index: 0, kind: input, shape index: {}]
  %s1 = inlined_call_operand.vmem [shape: f32[9,8,8], index: 1, kind: input, shape index: {}]
  %s2 = inlined_call_operand.vmem [shape: f32[1,8], index: 2, kind: input, shape index: {}]
  %s3 = inlined_call_operand.vmem [shape: f32[2,256,8], index: 3, kind: output, shape index: {0}]
  %s4 = inlined_call_operand.vmem [shape: f32[2,1,8], index: 4, kind: output, shape index: {1}]
  %s5 = inlined_call_operand.vmem [shape: f32[2,1,8], index: 5, kind: output, shape index: {2}]
  %6 = xla_tuple %s3, %s4, %s5
  %s7 = sld [smem:[#allocation0]]
  $region61: #{conv_block_forward.6} parent=0
    _
  %s9 = ssub.s32 1, %s7
  %s10 = scalar_select 0, %s9, %s7
  loop: start=0, step=1, limit=4
  $region2: #{conv_block_forward.6} parent=0 // loop_pre_header
    _
  $region3: #{conv_block_forward.6} parent=0 // loop_header
    %s12 = sphi 0, %s16
    %p13 = scmp.ge.s32.totalorder %s12, 4
    %s22 = sphi 0, %s24
    %s25 = sphi 0, %s22
    %s26 = sphi 0, %s25
    %s42 = sphi 0, %s26
    %s46 = sphi 0, %s46
    %s48 = sphi 0, %s46
    %s49 = sphi 0, %s48
    %s63 = sphi 0, %s49
    %s67 = sphi 0, %s67
    %s69 = sphi 0, %s67
    %s70 = sphi 0, %s69
    %s84 = sphi 0, %s70
    %s90 = sphi 0, %s92
    %s93 = sphi 0, %s90
    %s94 = sphi 0, %s93
    %s110 = sphi 0, %s94
    %s116 = sphi 0, %s118
    %s119 = sphi 0, %s116
    %s120 = sphi 0, %s119
    %s136 = sphi 0, %s120
    %s142 = sphi 0, %s144
    %s145 = sphi 0, %s142
    %s146 = sphi 0, %s145
    %s162 = sphi 0, %s146
  $region4: #{conv_block_forward.6} parent=0 // loop_header_branch
    %15 = sbr.rel (%p13) target = $region8
  $region5: #{conv_block_forward.6} parent=0 // loop_body
    %s17 = ssub.s32 %s12, 1
    %s18 = ssub.s32 %s12, 2
    %s19 = sadd.s32 %s12, 1
    %s20 = ssub.s32 %s12, %s19
    %p21 = scmp.eq.s32.totalorder %s20, 0
    %s23 = sadd.s32 %s22, 1
    %s24 = scalar_select %p21, %s22, %s23
    %p27 = pneg %p21
    %p28 = scmp.eq.s32.totalorder %s12, 1
    %p29 = por %p27, %p28
    %p30 = scmp.ne.s32.totalorder %s22, %s25
    %p31 = scmp.eq.s32.totalorder %s12, 0
    %p32 = por %p30, %p31
    %p33 = scmp.ne.s32.totalorder %s22, %s25
    %p34 = scmp.eq.s32.totalorder %s17, 1
    %p35 = por %p33, %p34
    %p36 = scmp.ne.s32.totalorder %s25, %s26
    %p37 = scmp.eq.s32.totalorder %s17, 0
    %p38 = por %p36, %p37
    %p39 = scmp.ne.s32.totalorder %s25, %s26
    %p40 = scmp.eq.s32.totalorder %s18, 1
    %p41 = por %p39, %p40
    %p43 = scmp.ne.s32.totalorder %s26, %s42
    %p44 = scmp.eq.s32.totalorder %s18, 0
    %p45 = por %p43, %p44
    %s47 = sadd.s32 %s46, 1
    %p50 = scmp.eq.s32.totalorder %s12, 1
    %p51 = scmp.ne.s32.totalorder %s46, %s48
    %p52 = scmp.eq.s32.totalorder %s12, 0
    %p53 = por %p51, %p52
    %p54 = scmp.ne.s32.totalorder %s46, %s48
    %p55 = scmp.eq.s32.totalorder %s17, 1
    %p56 = por %p54, %p55
    %p57 = scmp.ne.s32.totalorder %s48, %s49
    %p58 = scmp.eq.s32.totalorder %s17, 0
    %p59 = por %p57, %p58
    %p60 = scmp.ne.s32.totalorder %s48, %s49
    %p61 = scmp.eq.s32.totalorder %s18, 1
    %p62 = por %p60, %p61
    %p64 = scmp.ne.s32.totalorder %s49, %s63
    %p65 = scmp.eq.s32.totalorder %s18, 0
    %p66 = por %p64, %p65
    %s68 = sadd.s32 %s67, 1
    %p71 = scmp.eq.s32.totalorder %s12, 1
    %p72 = scmp.ne.s32.totalorder %s67, %s69
    %p73 = scmp.eq.s32.totalorder %s12, 0
    %p74 = por %p72, %p73
    %p75 = scmp.ne.s32.totalorder %s67, %s69
    %p76 = scmp.eq.s32.totalorder %s17, 1
    %p77 = por %p75, %p76
    %p78 = scmp.ne.s32.totalorder %s69, %s70
    %p79 = scmp.eq.s32.totalorder %s17, 0
    %p80 = por %p78, %p79
    %p81 = scmp.ne.s32.totalorder %s69, %s70
    %p82 = scmp.eq.s32.totalorder %s18, 1
    %p83 = por %p81, %p82
    %p85 = scmp.ne.s32.totalorder %s70, %s84
    %p86 = scmp.eq.s32.totalorder %s18, 0
    %p87 = por %p85, %p86
    %s88 = ssub.s32 %s12, %s19
    %p89 = scmp.eq.s32.totalorder %s88, 0
    %s91 = sadd.s32 %s90, 1
    %s92 = scalar_select %p89, %s90, %s91
    %p95 = pneg %p89
    %p96 = scmp.eq.s32.totalorder %s12, 1
    %p97 = por %p95, %p96
    %p98 = scmp.ne.s32.totalorder %s90, %s93
    %p99 = scmp.eq.s32.totalorder %s12, 0
    %p100 = por %p98, %p99
    %p101 = scmp.ne.s32.totalorder %s90, %s93
    %p102 = scmp.eq.s32.totalorder %s17, 1
    %p103 = por %p101, %p102
    %p104 = scmp.ne.s32.totalorder %s93, %s94
    %p105 = scmp.eq.s32.totalorder %s17, 0
    %p106 = por %p104, %p105
    %p107 = scmp.ne.s32.totalorder %s93, %s94
    %p108 = scmp.eq.s32.totalorder %s18, 1
    %p109 = por %p107, %p108
    %p111 = scmp.ne.s32.totalorder %s94, %s110
    %p112 = scmp.eq.s32.totalorder %s18, 0
    %p113 = por %p111, %p112
    %s114 = ssub.s32 %s12, %s19
    %p115 = scmp.eq.s32.totalorder %s114, 0
    %s117 = sadd.s32 %s116, 1
    %s118 = scalar_select %p115, %s116, %s117
    %p121 = pneg %p115
    %p122 = scmp.eq.s32.totalorder %s12, 1
    %p123 = por %p121, %p122
    %p124 = scmp.ne.s32.totalorder %s116, %s119
    %p125 = scmp.eq.s32.totalorder %s12, 0
    %p126 = por %p124, %p125
    %p127 = scmp.ne.s32.totalorder %s116, %s119
    %p128 = scmp.eq.s32.totalorder %s17, 1
    %p129 = por %p127, %p128
    %p130 = scmp.ne.s32.totalorder %s119, %s120
    %p131 = scmp.eq.s32.totalorder %s17, 0
    %p132 = por %p130, %p131
    %p133 = scmp.ne.s32.totalorder %s119, %s120
    %p134 = scmp.eq.s32.totalorder %s18, 1
    %p135 = por %p133, %p134
    %p137 = scmp.ne.s32.totalorder %s120, %s136
    %p138 = scmp.eq.s32.totalorder %s18, 0
    %p139 = por %p137, %p138
    %s140 = ssub.s32 %s12, %s19
    %p141 = scmp.eq.s32.totalorder %s140, 0
    %s143 = sadd.s32 %s142, 1
    %s144 = scalar_select %p141, %s142, %s143
    %p147 = pneg %p141
    %p148 = scmp.eq.s32.totalorder %s12, 1
    %p149 = por %p147, %p148
    %p150 = scmp.ne.s32.totalorder %s142, %s145
    %p151 = scmp.eq.s32.totalorder %s12, 0
    %p152 = por %p150, %p151
    %p153 = scmp.ne.s32.totalorder %s142, %s145
    %p154 = scmp.eq.s32.totalorder %s17, 1
    %p155 = por %p153, %p154
    %p156 = scmp.ne.s32.totalorder %s145, %s146
    %p157 = scmp.eq.s32.totalorder %s17, 0
    %p158 = por %p156, %p157
    %p159 = scmp.ne.s32.totalorder %s145, %s146
    %p160 = scmp.eq.s32.totalorder %s18, 1
    %p161 = por %p159, %p160
    %p163 = scmp.ne.s32.totalorder %s146, %s162
    %p164 = scmp.eq.s32.totalorder %s18, 0
    %p165 = por %p163, %p164
    %p166 = scmp.le.s32.totalorder 1, %s12
    %p167 = scmp.lt.s32.totalorder %s12, 3
    %p168 = pnand %p166, %p167
    %p169 = pneg %p168
    // Predicated region
    $region9: #{conv_block_forward.6} parent=5 // pred_check
      _
    $region10: #{conv_block_forward.6} parent=5 // pred_check_branch
      %171 = sbr.rel (%p168) target = $region12
    $region11: #{conv_block_forward.6} parent=5 // pred_region
      %s172 = ssub.s32 %s12, 1
      // Predicated region
      $region13: #{conv_block_forward.6} parent=11 // pred_check
        %p173 = pneg %p59
      $region14: #{conv_block_forward.6} parent=11 // pred_check_branch
        %175 = sbr.rel (%p173) target = $region16
      $region15: #{conv_block_forward.6} parent=11 // pred_region
        _
      $region16: #{conv_block_forward.6} parent=11 // pred_fallthru
        _
      // Predicated region
      $region17: #{conv_block_forward.6} parent=11 // pred_check
        %p176 = pneg %p80
      $region18: #{conv_block_forward.6} parent=11 // pred_check_branch
        %178 = sbr.rel (%p176) target = $region20
      $region19: #{conv_block_forward.6} parent=11 // pred_region
        _
      $region20: #{conv_block_forward.6} parent=11 // pred_fallthru
        _
    $region12: #{conv_block_forward.6} parent=5 // pred_fallthru
      _
    %p179 = scmp.lt.s32.totalorder %s12, 2
    // Predicated region
    $region21: #{conv_block_forward.6} parent=5 // pred_check
      %p180 = pneg %p179
    $region22: #{conv_block_forward.6} parent=5 // pred_check_branch
      %182 = sbr.rel (%p180) target = $region24
    $region23: #{conv_block_forward.6} parent=5 // pred_region
      // Predicated region
      $region25: #{conv_block_forward.6} parent=23 // pred_check
        %p183 = pneg %p32
      $region26: #{conv_block_forward.6} parent=23 // pred_check_branch
        %185 = sbr.rel (%p183) target = $region28
      $region27: #{conv_block_forward.6} parent=23 // pred_region
        %p186 = scmp.lt.s32.totalorder %s12, 1
        %s187 = scalar_select %p186, %s12, 1
        %s188 = smul.addr %s187, 54
        %s189 = smul.addr %s188, 8
        %s190 = scalar_lea.vmem %s0, %s189
      $region28: #{conv_block_forward.6} parent=23 // pred_fallthru
        _
    $region24: #{conv_block_forward.6} parent=5 // pred_fallthru
      _
    %p191 = scmp.le.s32.totalorder 1, %s12
    %p192 = scmp.lt.s32.totalorder %s12, 3
    %p193 = pnand %p191, %p192
    %p194 = pneg %p193
    // Predicated region
    $region29: #{conv_block_forward.6} parent=5 // pred_check
      _
    $region30: #{conv_block_forward.6} parent=5 // pred_check_branch
      %196 = sbr.rel (%p193) target = $region32
    $region31: #{conv_block_forward.6} parent=5 // pred_region
      %s197 = ssub.s32 %s12, 1
      %p198 = scmp.lt.s32.totalorder %s17, 1
      %s199 = scalar_select %p198, %s17, 1
      %s200 = smul.addr %s199, 54
      %s201 = smul.addr %s200, 8
      %s202 = scalar_lea.vmem %s0, %s201
      %p203 = pneg %p38
      %p204 = pneg %p35
      %p205 = pneg %p59
      %p206 = pneg %p56
      %p207 = pneg %p80
      %p208 = pneg %p77
      %p209 = pneg %p106
      %p210 = pneg %p103
      %p211 = scmp.lt.s32.totalorder %s17, 1
      %s212 = scalar_select %p211, %s17, 1
      %s213 = smul.addr %s212, 32
      %s214 = smul.addr %s213, 8
      %s215 = scalar_lea.vmem %s3, %s214
      %p216 = pneg %p132
      %p217 = pneg %p129
      %p218 = scmp.lt.s32.totalorder %s17, 1
      %s219 = scalar_select %p218, %s17, 1
      %s220 = scalar_lea.vmem %s4, %s219
      %p221 = pneg %p158
      %p222 = pneg %p155
      %p223 = scmp.lt.s32.totalorder %s17, 1
      %s224 = scalar_select %p223, %s17, 1
      %s225 = scalar_lea.vmem %s5, %s224
      %p226 = scmp.lt.s32.totalorder %s17, 1
      %s227 = scalar_select %p226, %s17, 1
      %s228 = smul.addr %s227, 54
      %s229 = smul.addr %s228, 8
      %s230 = scalar_lea.vmem %s0, %s229
      %p231 = scmp.lt.s32.totalorder %s17, 1
      %s232 = scalar_select %p231, %s17, 1
      %s233 = smul.addr %s232, 32
      %s234 = smul.addr %s233, 8
      %s235 = scalar_lea.vmem %s3, %s234
      %p236 = scmp.lt.s32.totalorder %s17, 1
      %s237 = scalar_select %p236, %s17, 1
      %s238 = scalar_lea.vmem %s4, %s237
      %p239 = scmp.lt.s32.totalorder %s17, 1
      %s240 = scalar_select %p239, %s17, 1
      %s241 = scalar_lea.vmem %s5, %s240
      %v242 = vld [vmem:[%s230] sm:$0xff]
      %v243 = vld [vmem:[%s230 + $0x8] sm:$0xff]
      %v244 = vld [vmem:[%s230 + $0x18] sm:$0xff]
      %v245 = vld [vmem:[%s230 + $0x20] sm:$0xff]
      %v246 = vld [vmem:[%s230 + $0x30] sm:$0xff]
      %v247 = vld [vmem:[%s230 + $0x38] sm:$0xff]
      %v248 = vld [vmem:[%s230 + $0x48] sm:$0xff]
      %v249 = vld [vmem:[%s230 + $0x50] sm:$0xff]
      %v250 = vld [vmem:[%s230 + $0x60] sm:$0xff]
      %v251 = vld [vmem:[%s230 + $0x68] sm:$0xff]
      %v252 = vld [vmem:[%s230 + $0x78] sm:$0xff]
      %v253 = vld [vmem:[%s230 + $0x80] sm:$0xff]
      %v254 = vld [vmem:[%s230 + $0x90] sm:$0xff]
      %v255 = vld [vmem:[%s230 + $0x98] sm:$0xff]
      %v256 = vld [vmem:[%s230 + $0xa8] sm:$0xff]
      %v257 = vld [vmem:[%s230 + $0xb0] sm:$0xff]
      %v258 = vld [vmem:[%s230 + $0xc0] sm:$0xff]
      %v259 = vld [vmem:[%s230 + $0xc8] sm:$0xff]
      %v260 = vld [vmem:[%s230 + $0xd8] sm:$0xff]
      %v261 = vld [vmem:[%s230 + $0xe0] sm:$0xff]
      %v262 = vld [vmem:[%s230 + $0xf0] sm:$0xff]
      %v263 = vld [vmem:[%s230 + $0xf8] sm:$0xff]
      %v264 = vld [vmem:[%s230 + $0x108] sm:$0xff]
      %v265 = vld [vmem:[%s230 + $0x110] sm:$0xff]
      %v266 = vld [vmem:[%s230 + $0x120] sm:$0xff]
      %v267 = vld [vmem:[%s230 + $0x128] sm:$0xff]
      %v268 = vld [vmem:[%s230 + $0x138] sm:$0xff]
      %v269 = vld [vmem:[%s230 + $0x140] sm:$0xff]
      %v270 = vld [vmem:[%s230 + $0x150] sm:$0xff]
      %v271 = vld [vmem:[%s230 + $0x158] sm:$0xff]
      %v272 = vld [vmem:[%s230 + $0x168] sm:$0xff]
      %v273 = vld [vmem:[%s230 + $0x170] sm:$0xff]
      %v274 = vld [vmem:[%s1] sm:$0xff]
      %v275 = vld [vmem:[%s230 + $0x1] sm:$0xff]
      %v276 = vld [vmem:[%s230 + $0x9] sm:$0xff]
      %v277 = vld [vmem:[%s230 + $0x19] sm:$0xff]
      %v278 = vld [vmem:[%s230 + $0x21] sm:$0xff]
      %v279 = vld [vmem:[%s230 + $0x31] sm:$0xff]
      %v280 = vld [vmem:[%s230 + $0x39] sm:$0xff]
      %v281 = vld [vmem:[%s230 + $0x49] sm:$0xff]
      %v282 = vld [vmem:[%s230 + $0x51] sm:$0xff]
      %v283 = vld [vmem:[%s230 + $0x61] sm:$0xff]
      %v284 = vld [vmem:[%s230 + $0x69] sm:$0xff]
      %v285 = vld [vmem:[%s230 + $0x79] sm:$0xff]
      %v286 = vld [vmem:[%s230 + $0x81] sm:$0xff]
      %v287 = vld [vmem:[%s230 + $0x91] sm:$0xff]
      %v288 = vld [vmem:[%s230 + $0x99] sm:$0xff]
      %v289 = vld [vmem:[%s230 + $0xa9] sm:$0xff]
      %v290 = vld [vmem:[%s230 + $0xb1] sm:$0xff]
      %v291 = vld [vmem:[%s230 + $0xc1] sm:$0xff]
      %v292 = vld [vmem:[%s230 + $0xc9] sm:$0xff]
      %v293 = vld [vmem:[%s230 + $0xd9] sm:$0xff]
      %v294 = vld [vmem:[%s230 + $0xe1] sm:$0xff]
      %v295 = vld [vmem:[%s230 + $0xf1] sm:$0xff]
      %v296 = vld [vmem:[%s230 + $0xf9] sm:$0xff]
      %v297 = vld [vmem:[%s230 + $0x109] sm:$0xff]
      %v298 = vld [vmem:[%s230 + $0x111] sm:$0xff]
      %v299 = vld [vmem:[%s230 + $0x121] sm:$0xff]
      %v300 = vld [vmem:[%s230 + $0x129] sm:$0xff]
      %v301 = vld [vmem:[%s230 + $0x139] sm:$0xff]
      %v302 = vld [vmem:[%s230 + $0x141] sm:$0xff]
      %v303 = vld [vmem:[%s230 + $0x151] sm:$0xff]
      %v304 = vld [vmem:[%s230 + $0x159] sm:$0xff]
      %v305 = vld [vmem:[%s230 + $0x169] sm:$0xff]
      %v306 = vld [vmem:[%s230 + $0x171] sm:$0xff]
      %s307 = scalar_lea.vmem %s1, 8
      %v308 = vld [vmem:[%s307] sm:$0xff]
      %vm309 = vcmask 64512
      %v311 = vsel %vm309, %v275, 0
      %v314 = vsel %vm309, %v276, 0
      %v317 = vsel %vm309, %v277, 0
      %v320 = vsel %vm309, %v278, 0
      %v323 = vsel %vm309, %v279, 0
      %v326 = vsel %vm309, %v280, 0
      %v329 = vsel %vm309, %v281, 0
      %v332 = vsel %vm309, %v282, 0
      %v335 = vsel %vm309, %v283, 0
      %v338 = vsel %vm309, %v284, 0
      %v341 = vsel %vm309, %v285, 0
      %v344 = vsel %vm309, %v286, 0
      %v347 = vsel %vm309, %v287, 0
      %v350 = vsel %vm309, %v288, 0
      %v353 = vsel %vm309, %v289, 0
      %v356 = vsel %vm309, %v290, 0
      %v359 = vsel %vm309, %v291, 0
      %v362 = vsel %vm309, %v292, 0
      %v365 = vsel %vm309, %v293, 0
      %v368 = vsel %vm309, %v294, 0
      %v371 = vsel %vm309, %v295, 0
      %v374 = vsel %vm309, %v296, 0
      %v377 = vsel %vm309, %v297, 0
      %v380 = vsel %vm309, %v298, 0
      %v383 = vsel %vm309, %v299, 0
      %v386 = vsel %vm309, %v300, 0
      %v389 = vsel %vm309, %v301, 0
      %v392 = vsel %vm309, %v302, 0
      %v395 = vsel %vm309, %v303, 0
      %v398 = vsel %vm309, %v304, 0
      %v401 = vsel %vm309, %v305, 0
      %v404 = vsel %vm309, %v306, 0
      %406 = vmatprep.subr.mxu0 0.0
      %407 = vmatpush1.msra.mxu0 %v308
      %408 = vmatprep.subr.mxu0 0.0
      %409 = vmatpush1.msra.mxu0 0.0
      %410 = vmatprep.subr.mxu0 0.0
      %411 = vmatpush1.msra.mxu0 0.0
      %412 = vmatprep.subr.mxu0 0.0
      %413 = vmatpush1.msra.mxu0 0.0
      %414 = vmatprep.subr.mxu0 0.0
      %415 = vmatpush1.msra.mxu0 0.0
      %416 = vmatprep.subr.mxu0 0.0
      %417 = vmatpush1.msra.mxu0 0.0
      %418 = vmatprep.subr.mxu0 0.0
      %419 = vmatpush1.msra.mxu0 0.0
      %420 = vmatprep.subr.mxu0 0.0
      %421 = vmatpush1.msra.mxu0 0.0
      %422 = vmatprep.subr.mxu0 0.0
      %423 = vmatpush1.msra.mxu0 0.0
      %424 = vmatprep.subr.mxu0 0.0
      %425 = vmatpush1.msra.mxu0 0.0
      %426 = vmatprep.subr.mxu0 0.0
      %427 = vmatpush1.msra.mxu0 0.0
      %428 = vmatprep.subr.mxu0 0.0
      %429 = vmatpush1.msra.mxu0 0.0
      %430 = vmatprep.subr.mxu0 0.0
      %431 = vmatpush1.msra.mxu0 0.0
      %432 = vmatprep.subr.mxu0 0.0
      %433 = vmatpush1.msra.mxu0 0.0
      %434 = vmatprep.subr.mxu0 0.0
      %435 = vmatpush1.msra.mxu0 0.0
      %436 = vmatprep.subr.mxu0 0.0
      %437 = vmatpush1.msra.mxu0 0.0
      %438 = vmatprep.subr.mxu0 0.0
      %439 = vmatpush1.msra.mxu0 0.0
      %440 = vmatprep.subr.mxu0 0.0
      %441 = vmatpush1.msra.mxu0 0.0
      %442 = vmatprep.subr.mxu0 0.0
      %443 = vmatpush1.msra.mxu0 0.0
      %444 = vmatprep.subr.mxu0 0.0
      %445 = vmatpush1.msra.mxu0 0.0
      %446 = vmatprep.subr.mxu0 0.0
      %447 = vmatpush1.msra.mxu0 0.0
      %448 = vmatprep.subr.mxu0 0.0
      %449 = vmatpush1.msra.mxu0 0.0
      %450 = vmatprep.subr.mxu0 0.0
      %451 = vmatpush1.msra.mxu0 0.0
      %452 = vmatprep.subr.mxu0 0.0
      %453 = vmatpush1.msra.mxu0 0.0
      %454 = vmatprep.subr.mxu0 0.0
      %455 = vmatpush1.msra.mxu0 0.0
      %456 = vmatprep.subr.mxu0 0.0
      %457 = vmatpush1.msra.mxu0 0.0
      %458 = vmatprep.subr.mxu0 0.0
      %459 = vmatpush1.msra.mxu0 0.0
      %460 = vmatprep.subr.mxu0 0.0
      %461 = vmatpush1.msra.mxu0 0.0
      %462 = vmatprep.subr.mxu0 0.0
      %463 = vmatpush1.msra.mxu0 0.0
      %464 = vmatprep.subr.mxu0 0.0
      %465 = vmatpush1.msra.mxu0 0.0
      %466 = vmatprep.subr.mxu0 0.0
      %467 = vmatpush1.msra.mxu0 0.0
      %468 = vmatprep.subr.mxu0 0.0
      %469 = vmatpush1.msra.mxu0 0.0
      %470 = vmatprep.mubr.f32.mxu0 0.0
      %471 = vmatmul.mubr.f32.gmra.mrb[0].mxu0 %v311
      %v472 = vpop.f32.mrb[0].mxu0
      %v473 = vadd.f32 0.0, %v472
      %v474 = vpop.f32.mrb[0].mxu0
      %475 = vmatprep.mubr.f32.mxu0 0.0
      %476 = vmatmul.mubr.f32.gmra.mrb[0].mxu0 %v314
      %v477 = vpop.f32.mrb[0].mxu0
      %v478 = vadd.f32 0.0, %v477
      %v479 = vpop.f32.mrb[0].mxu0
      %480 = vmatprep.mubr.f32.mxu0 0.0
      %481 = vmatmul.mubr.f32.gmra.mrb[0].mxu0 %v317
      %v482 = vpop.f32.mrb[0].mxu0
      %v483 = vadd.f32 0.0, %v482
      %v484 = vpop.f32.mrb[0].mxu0
      %485 = vmatprep.mubr.f32.mxu0 0.0
      %486 = vmatmul.mubr.f32.gmra.mrb[0].mxu0 %v320
      %v487 = vpop.f32.mrb[0].mxu0
      %v488 = vadd.f32 0.0, %v487
      %v489 = vpop.f32.mrb[0].mxu0
      %490 = vmatprep.mubr.f32.mxu0 0.0
      %491 = vmatmul.mubr.f32.gmra.mrb[0].mxu0 %v323
      %v492 = vpop.f32.mrb[0].mxu0
      %v493 = vadd.f32 0.0, %v492
      %v494 = vpop.f32.mrb[0].mxu0
      %495 = vmatprep.mubr.f32.mxu0 0.0
      %496 = vmatmul.mubr.f32.gmra.mrb[0].mxu0 %v326
      %v497 = vpop.f32.mrb[0].mxu0
      %v498 = vadd.f32 0.0, %v497
      %v499 = vpop.f32.mrb[0].mxu0
      %500 = vmatprep.mubr.f32.mxu0 0.0
      %501 = vmatmul.mubr.f32.gmra.mrb[0].mxu0 %v329
      %v502 = vpop.f32.mrb[0].mxu0
      %v503 = vadd.f32 0.0, %v502
      %v504 = vpop.f32.mrb[0].mxu0
      %505 = vmatprep.mubr.f32.mxu0 0.0
      %506 = vmatmul.mubr.f32.gmra.mrb[0].mxu0 %v332
      %v507 = vpop.f32.mrb[0].mxu0
      %v508 = vadd.f32 0.0, %v507
      %v509 = vpop.f32.mrb[0].mxu0
      %510 = vmatprep.mubr.f32.mxu0 0.0
      %511 = vmatmul.mubr.f32.gmra.mrb[0].mxu0 %v335
      %v512 = vpop.f32.mrb[0].mxu0
      %v513 = vadd.f32 0.0, %v512
      %v514 = vpop.f32.mrb[0].mxu0
      %515 = vmatprep.mubr.f32.mxu0 0.0
      %516 = vmatmul.mubr.f32.gmra.mrb[0].mxu0 %v338
      %v517 = vpop.f32.mrb[0].mxu0
      %v518 = vadd.f32 0.0, %v517
      %v519 = vpop.f32.mrb[0].mxu0
      %520 = vmatprep.mubr.f32.mxu0 0.0
      %521 = vmatmul.mubr.f32.gmra.mrb[0].mxu0 %v341
      %v522 = vpop.f32.mrb[0].mxu0
      %v523 = vadd.f32 0.0, %v522
      %v524 = vpop.f32.mrb[0].mxu0
      %525 = vmatprep.mubr.f32.mxu0 0.0
      %526 = vmatmul.mubr.f32.gmra.mrb[0].mxu0 %v344
      %v527 = vpop.f32.mrb[0].mxu0
      %v528 = vadd.f32 0.0, %v527
      %v529 = vpop.f32.mrb[0].mxu0
      %530 = vmatprep.mubr.f32.mxu0 0.0
      %531 = vmatmul.mubr.f32.gmra.mrb[0].mxu0 %v347
      %v532 = vpop.f32.mrb[0].mxu0
      %v533 = vadd.f32 0.0, %v532
      %v534 = vpop.f32.mrb[0].mxu0
      %535 = vmatprep.mubr.f32.mxu0 0.0
      %536 = vmatmul.mubr.f32.gmra.mrb[0].mxu0 %v350
      %v537 = vpop.f32.mrb[0].mxu0
      %v538 = vadd.f32 0.0, %v537
      %v539 = vpop.f32.mrb[0].mxu0
      %540 = vmatprep.mubr.f32.mxu0 0.0
      %541 = vmatmul.mubr.f32.gmra.mrb[0].mxu0 %v353
      %v542 = vpop.f32.mrb[0].mxu0
      %v543 = vadd.f32 0.0, %v542
      %v544 = vpop.f32.mrb[0].mxu0
      %545 = vmatprep.mubr.f32.mxu0 0.0
      %546 = vmatmul.mubr.f32.gmra.mrb[0].mxu0 %v356
      %v547 = vpop.f32.mrb[0].mxu0
      %v548 = vadd.f32 0.0, %v547
      %v549 = vpop.f32.mrb[0].mxu0
      %550 = vmatprep.mubr.f32.mxu0 0.0
      %551 = vmatmul.mubr.f32.gmra.mrb[0].mxu0 %v359
      %v552 = vpop.f32.mrb[0].mxu0
      %v553 = vadd.f32 0.0, %v552
      %v554 = vpop.f32.mrb[0].mxu0
      %555 = vmatprep.mubr.f32.mxu0 0.0
      %556 = vmatmul.mubr.f32.gmra.mrb[0].mxu0 %v362
      %v557 = vpop.f32.mrb[0].mxu0
      %v558 = vadd.f32 0.0, %v557
      %v559 = vpop.f32.mrb[0].mxu0
      %560 = vmatprep.mubr.f32.mxu0 0.0
      %561 = vmatmul.mubr.f32.gmra.mrb[0].mxu0 %v365
      %v562 = vpop.f32.mrb[0].mxu0
      %v563 = vadd.f32 0.0, %v562
      %v564 = vpop.f32.mrb[0].mxu0
      %565 = vmatprep.mubr.f32.mxu0 0.0
      %566 = vmatmul.mubr.f32.gmra.mrb[0].mxu0 %v368
      %v567 = vpop.f32.mrb[0].mxu0
      %v568 = vadd.f32 0.0, %v567
      %v569 = vpop.f32.mrb[0].mxu0
      %570 = vmatprep.mubr.f32.mxu0 0.0
      %571 = vmatmul.mubr.f32.gmra.mrb[0].mxu0 %v371
      %v572 = vpop.f32.mrb[0].mxu0
      %v573 = vadd.f32 0.0, %v572
      %v574 = vpop.f32.mrb[0].mxu0
      %575 = vmatprep.mubr.f32.mxu0 0.0
      %576 = vmatmul.mubr.f32.gmra.mrb[0].mxu0 %v374
      %v577 = vpop.f32.mrb[0].mxu0
      %v578 = vadd.f32 0.0, %v577
      %v579 = vpop.f32.mrb[0].mxu0
      %580 = vmatprep.mubr.f32.mxu0 0.0
      %581 = vmatmul.mubr.f32.gmra.mrb[0].mxu0 %v377
      %v582 = vpop.f32.mrb[0].mxu0
      %v583 = vadd.f32 0.0, %v582
      %v584 = vpop.f32.mrb[0].mxu0
      %585 = vmatprep.mubr.f32.mxu0 0.0
      %586 = vmatmul.mubr.f32.gmra.mrb[0].mxu0 %v380
      %v587 = vpop.f32.mrb[0].mxu0
      %v588 = vadd.f32 0.0, %v587
      %v589 = vpop.f32.mrb[0].mxu0
      %590 = vmatprep.mubr.f32.mxu0 0.0
      %591 = vmatmul.mubr.f32.gmra.mrb[0].mxu0 %v383
      %v592 = vpop.f32.mrb[0].mxu0
      %v593 = vadd.f32 0.0, %v592
      %v594 = vpop.f32.mrb[0].mxu0
      %595 = vmatprep.mubr.f32.mxu0 0.0
      %596 = vmatmul.mubr.f32.gmra.mrb[0].mxu0 %v386
      %v597 = vpop.f32.mrb[0].mxu0
      %v598 = vadd.f32 0.0, %v597
      %v599 = vpop.f32.mrb[0].mxu0
      %600 = vmatprep.mubr.f32.mxu0 0.0
      %601 = vmatmul.mubr.f32.gmra.mrb[0].mxu0 %v389
      %v602 = vpop.f32.mrb[0].mxu0
      %v603 = vadd.f32 0.0, %v602
      %v604 = vpop.f32.mrb[0].mxu0
      %605 = vmatprep.mubr.f32.mxu0 0.0
      %606 = vmatmul.mubr.f32.gmra.mrb[0].mxu0 %v392
      %v607 = vpop.f32.mrb[0].mxu0
      %v608 = vadd.f32 0.0, %v607
      %v609 = vpop.f32.mrb[0].mxu0
      %610 = vmatprep.mubr.f32.mxu0 0.0
      %611 = vmatmul.mubr.f32.gmra.mrb[0].mxu0 %v395
      %v612 = vpop.f32.mrb[0].mxu0
      %v613 = vadd.f32 0.0, %v612
      %v614 = vpop.f32.mrb[0].mxu0
      %615 = vmatprep.mubr.f32.mxu0 0.0
      %616 = vmatmul.mubr.f32.gmra.mrb[0].mxu0 %v398
      %v617 = vpop.f32.mrb[0].mxu0
      %v618 = vadd.f32 0.0, %v617
      %v619 = vpop.f32.mrb[0].mxu0
      %620 = vmatprep.mubr.f32.mxu0 0.0
      %621 = vmatmul.mubr.f32.gmra.mrb[0].mxu0 %v401
      %v622 = vpop.f32.mrb[0].mxu0
      %v623 = vadd.f32 0.0, %v622
      %v624 = vpop.f32.mrb[0].mxu0
      %625 = vmatprep.mubr.f32.mxu0 0.0
      %626 = vmatmul.mubr.f32.gmra.mrb[0].mxu0 %v404
      %v627 = vpop.f32.mrb[0].mxu0
      %v628 = vadd.f32 0.0, %v627
      %v629 = vpop.f32.mrb[0].mxu0
      %630 = vdwg.mxu0
      %v632 = vsel %vm309, %v242, 0
      %v635 = vsel %vm309, %v243, 0
      %v638 = vsel %vm309, %v244, 0
      %v641 = vsel %vm309, %v245, 0
      %v644 = vsel %vm309, %v246, 0
      %v647 = vsel %vm309, %v247, 0
      %v650 = vsel %vm309, %v248, 0
      %v653 = vsel %vm309, %v249, 0
      %v656 = vsel %vm309, %v250, 0
      %v659 = vsel %vm309, %v251, 0
      %v662 = vsel %vm309, %v252, 0
      %v665 = vsel %vm309, %v253, 0
      %v668 = vsel %vm309, %v254, 0
      %v671 = vsel %vm309, %v255, 0
      %v674 = vsel %vm309, %v256, 0
      %v677 = vsel %vm309, %v257, 0
      %v680 = vsel %vm309, %v258, 0
      %v683 = vsel %vm309, %v259, 0
      %v686 = vsel %vm309, %v260, 0
      %v689 = vsel %vm309, %v261, 0
      %v692 = vsel %vm309, %v262, 0
      %v695 = vsel %vm309, %v263, 0
      %v698 = vsel %vm309, %v264, 0
      %v701 = vsel %vm309, %v265, 0
      %v704 = vsel %vm309, %v266, 0
      %v707 = vsel %vm309, %v267, 0
      %v710 = vsel %vm309, %v268, 0
      %v713 = vsel %vm309, %v269, 0
      %v716 = vsel %vm309, %v270, 0
      %v719 = vsel %vm309, %v271, 0
      %v722 = vsel %vm309, %v272, 0
      %v725 = vsel %vm309, %v273, 0
      %727 = vmatprep.subr.mxu0 0.0
      %728 = vmatpush1.msra.mxu0 %v274
      %729 = vmatprep.subr.mxu0 0.0
      %730 = vmatpush1.msra.mxu0 0.0
      %731 = vmatprep.subr.mxu0 0.0
      %732 = vmatpush1.msra.mxu0 0.0
      %733 = vmatprep.subr.mxu0 0.0
      %734 = vmatpush1.msra.mxu0 0.0
      %735 = vmatprep.subr.mxu0 0.0
      %736 = vmatpush1.msra.mxu0 0.0
      %737 = vmatprep.subr.mxu0 0.0
      %738 = vmatpush1.msra.mxu0 0.0
      %739 = vmatprep.subr.mxu0 0.0
      %740 = vmatpush1.msra.mxu0 0.0
      %741 = vmatprep.subr.mxu0 0.0
      %742 = vmatpush1.msra.mxu0 0.0
      %743 = vmatprep.subr.mxu0 0.0
      %744 = vmatpush1.msra.mxu0 0.0
      %745 = vmatprep.subr.mxu0 0.0
      %746 = vmatpush1.msra.mxu0 0.0
      %747 = vmatprep.subr.mxu0 0.0
      %748 = vmatpush1.msra.mxu0 0.0
      %749 = vmatprep.subr.mxu0 0.0
      %750 = vmatpush1.msra.mxu0 0.0
      %751 = vmatprep.subr.mxu0 0.0
      %752 = vmatpush1.msra.mxu0 0.0
      %753 = vmatprep.subr.mxu0 0.0
      %754 = vmatpush1.msra.mxu0 0.0
      %755 = vmatprep.subr.mxu0 0.0
      %756 = vmatpush1.msra.mxu0 0.0
      %757 = vmatprep.subr.mxu0 0.0
      %758 = vmatpush1.msra.mxu0 0.0
      %759 = vmatprep.subr.mxu0 0.0
      %760 = vmatpush1.msra.mxu0 0.0
      %761 = vmatprep.subr.mxu0 0.0
      %762 = vmatpush1.msra.mxu0 0.0
      %763 = vmatprep.subr.mxu0 0.0
      %764 = vmatpush1.msra.mxu0 0.0
      %765 = vmatprep.subr.mxu0 0.0
      %766 = vmatpush1.msra.mxu0 0.0
      %767 = vmatprep.subr.mxu0 0.0
      %768 = vmatpush1.msra.mxu0 0.0
      %769 = vmatprep.subr.mxu0 0.0
      %770 = vmatpush1.msra.mxu0 0.0
      %771 = vmatprep.subr.mxu0 0.0
      %772 = vmatpush1.msra.mxu0 0.0
      %773 = vmatprep.subr.mxu0 0.0
      %774 = vmatpush1.msra.mxu0 0.0
      %775 = vmatprep.subr.mxu0 0.0
      %776 = vmatpush1.msra.mxu0 0.0
      %777 = vmatprep.subr.mxu0 0.0
      %778 = vmatpush1.msra.mxu0 0.0
      %779 = vmatprep.subr.mxu0 0.0
      %780 = vmatpush1.msra.mxu0 0.0
      %781 = vmatprep.subr.mxu0 0.0
      %782 = vmatpush1.msra.mxu0 0.0
      %783 = vmatprep.subr.mxu0 0.0
      %784 = vmatpush1.msra.mxu0 0.0
      %785 = vmatprep.subr.mxu0 0.0
      %786 = vmatpush1.msra.mxu0 0.0
      %787 = vmatprep.subr.mxu0 0.0
      %788 = vmatpush1.msra.mxu0 0.0
      %789 = vmatprep.subr.mxu0 0.0
      %790 = vmatpush1.msra.mxu0 0.0
      %791 = vmatprep.mubr.f32.mxu0 0.0
      %792 = vmatmul.mubr.f32.gmra.mrb[0].mxu0 %v632
      %v793 = vpop.f32.mrb[0].mxu0
      %v794 = vadd.f32 %v473, %v793
      %v795 = vpop.f32.mrb[0].mxu0
      %796 = vmatprep.mubr.f32.mxu0 0.0
      %797 = vmatmul.mubr.f32.gmra.mrb[0].mxu0 %v635
      %v798 = vpop.f32.mrb[0].mxu0
      %v799 = vadd.f32 %v478, %v798
      %v800 = vpop.f32.mrb[0].mxu0
      %801 = vmatprep.mubr.f32.mxu0 0.0
      %802 = vmatmul.mubr.f32.gmra.mrb[0].mxu0 %v638
      %v803 = vpop.f32.mrb[0].mxu0
      %v804 = vadd.f32 %v483, %v803
      %v805 = vpop.f32.mrb[0].mxu0
      %806 = vmatprep.mubr.f32.mxu0 0.0
      %807 = vmatmul.mubr.f32.gmra.mrb[0].mxu0 %v641
      %v808 = vpop.f32.mrb[0].mxu0
      %v809 = vadd.f32 %v488, %v808
      %v810 = vpop.f32.mrb[0].mxu0
      %811 = vmatprep.mubr.f32.mxu0 0.0
      %812 = vmatmul.mubr.f32.gmra.mrb[0].mxu0 %v644
      %v813 = vpop.f32.mrb[0].mxu0
      %v814 = vadd.f32 %v493, %v813
      %v815 = vpop.f32.mrb[0].mxu0
      %816 = vmatprep.mubr.f32.mxu0 0.0
      %817 = vmatmul.mubr.f32.gmra.mrb[0].mxu0 %v647
      %v818 = vpop.f32.mrb[0].mxu0
      %v819 = vadd.f32 %v498, %v818
      %v820 = vpop.f32.mrb[0].mxu0
      %821 = vmatprep.mubr.f32.mxu0 0.0
      %822 = vmatmul.mubr.f32.gmra.mrb[0].mxu0 %v650
      %v823 = vpop.f32.mrb[0].mxu0
      %v824 = vadd.f32 %v503, %v823
      %v825 = vpop.f32.mrb[0].mxu0
      %826 = vmatprep.mubr.f32.mxu0 0.0
      %827 = vmatmul.mubr.f32.gmra.mrb[0].mxu0 %v653
      %v828 = vpop.f32.mrb[0].mxu0
      %v829 = vadd.f32 %v508, %v828
      %v830 = vpop.f32.mrb[0].mxu0
      %831 = vmatprep.mubr.f32.mxu0 0.0
      %832 = vmatmul.mubr.f32.gmra.mrb[0].mxu0 %v656
      %v833 = vpop.f32.mrb[0].mxu0
      %v834 = vadd.f32 %v513, %v833
      %v835 = vpop.f32.mrb[0].mxu0
      %836 = vmatprep.mubr.f32.mxu0 0.0
      %837 = vmatmul.mubr.f32.gmra.mrb[0].mxu0 %v659
      %v838 = vpop.f32.mrb[0].mxu0
      %v839 = vadd.f32 %v518, %v838
      %v840 = vpop.f32.mrb[0].mxu0
      %841 = vmatprep.mubr.f32.mxu0 0.0
      %842 = vmatmul.mubr.f32.gmra.mrb[0].mxu0 %v662
      %v843 = vpop.f32.mrb[0].mxu0
      %v844 = vadd.f32 %v523, %v843
      %v845 = vpop.f32.mrb[0].mxu0
      %846 = vmatprep.mubr.f32.mxu0 0.0
      %847 = vmatmul.mubr.f32.gmra.mrb[0].mxu0 %v665
      %v848 = vpop.f32.mrb[0].mxu0
      %v849 = vadd.f32 %v528, %v848
      %v850 = vpop.f32.mrb[0].mxu0
      %851 = vmatprep.mubr.f32.mxu0 0.0
      %852 = vmatmul.mubr.f32.gmra.mrb[0].mxu0 %v668
      %v853 = vpop.f32.mrb[0].mxu0
      %v854 = vadd.f32 %v533, %v853
      %v855 = vpop.f32.mrb[0].mxu0
      %856 = vmatprep.mubr.f32.mxu0 0.0
      %857 = vmatmul.mubr.f32.gmra.mrb[0].mxu0 %v671
      %v858 = vpop.f32.mrb[0].mxu0
      %v859 = vadd.f32 %v538, %v858
      %v860 = vpop.f32.mrb[0].mxu0
      %861 = vmatprep.mubr.f32.mxu0 0.0
      %862 = vmatmul.mubr.f32.gmra.mrb[0].mxu0 %v674
      %v863 = vpop.f32.mrb[0].mxu0
      %v864 = vadd.f32 %v543, %v863
      %v865 = vpop.f32.mrb[0].mxu0
      %866 = vmatprep.mubr.f32.mxu0 0.0
      %867 = vmatmul.mubr.f32.gmra.mrb[0].mxu0 %v677
      %v868 = vpop.f32.mrb[0].mxu0
      %v869 = vadd.f32 %v548, %v868
      %v870 = vpop.f32.mrb[0].mxu0
      %871 = vmatprep.mubr.f32.mxu0 0.0
      %872 = vmatmul.mubr.f32.gmra.mrb[0].mxu0 %v680
      %v873 = vpop.f32.mrb[0].mxu0
      %v874 = vadd.f32 %v553, %v873
      %v875 = vpop.f32.mrb[0].mxu0
      %876 = vmatprep.mubr.f32.mxu0 0.0
      %877 = vmatmul.mubr.f32.gmra.mrb[0].mxu0 %v683
      %v878 = vpop.f32.mrb[0].mxu0
      %v879 = vadd.f32 %v558, %v878
      %v880 = vpop.f32.mrb[0].mxu0
      %881 = vmatprep.mubr.f32.mxu0 0.0
      %882 = vmatmul.mubr.f32.gmra.mrb[0].mxu0 %v686
      %v883 = vpop.f32.mrb[0].mxu0
      %v884 = vadd.f32 %v563, %v883
      %v885 = vpop.f32.mrb[0].mxu0
      %886 = vmatprep.mubr.f32.mxu0 0.0
      %887 = vmatmul.mubr.f32.gmra.mrb[0].mxu0 %v689
      %v888 = vpop.f32.mrb[0].mxu0
      %v889 = vadd.f32 %v568, %v888
      %v890 = vpop.f32.mrb[0].mxu0
      %891 = vmatprep.mubr.f32.mxu0 0.0
      %892 = vmatmul.mubr.f32.gmra.mrb[0].mxu0 %v692
      %v893 = vpop.f32.mrb[0].mxu0
      %v894 = vadd.f32 %v573, %v893
      %v895 = vpop.f32.mrb[0].mxu0
      %896 = vmatprep.mubr.f32.mxu0 0.0
      %897 = vmatmul.mubr.f32.gmra.mrb[0].mxu0 %v695
      %v898 = vpop.f32.mrb[0].mxu0
      %v899 = vadd.f32 %v578, %v898
      %v900 = vpop.f32.mrb[0].mxu0
      %901 = vmatprep.mubr.f32.mxu0 0.0
      %902 = vmatmul.mubr.f32.gmra.mrb[0].mxu0 %v698
      %v903 = vpop.f32.mrb[0].mxu0
      %v904 = vadd.f32 %v583, %v903
      %v905 = vpop.f32.mrb[0].mxu0
      %906 = vmatprep.mubr.f32.mxu0 0.0
      %907 = vmatmul.mubr.f32.gmra.mrb[0].mxu0 %v701
      %v908 = vpop.f32.mrb[0].mxu0
      %v909 = vadd.f32 %v588, %v908
      %v910 = vpop.f32.mrb[0].mxu0
      %911 = vmatprep.mubr.f32.mxu0 0.0
      %912 = vmatmul.mubr.f32.gmra.mrb[0].mxu0 %v704
      %v913 = vpop.f32.mrb[0].mxu0
      %v914 = vadd.f32 %v593, %v913
      %v915 = vpop.f32.mrb[0].mxu0
      %916 = vmatprep.mubr.f32.mxu0 0.0
      %917 = vmatmul.mubr.f32.gmra.mrb[0].mxu0 %v707
      %v918 = vpop.f32.mrb[0].mxu0
      %v919 = vadd.f32 %v598, %v918
      %v920 = vpop.f32.mrb[0].mxu0
      %921 = vmatprep.mubr.f32.mxu0 0.0
      %922 = vmatmul.mubr.f32.gmra.mrb[0].mxu0 %v710
      %v923 = vpop.f32.mrb[0].mxu0
      %v924 = vadd.f32 %v603, %v923
      %v925 = vpop.f32.mrb[0].mxu0
      %926 = vmatprep.mubr.f32.mxu0 0.0
      %927 = vmatmul.mubr.f32.gmra.mrb[0].mxu0 %v713
      %v928 = vpop.f32.mrb[0].mxu0
      %v929 = vadd.f32 %v608, %v928
      %v930 = vpop.f32.mrb[0].mxu0
      %931 = vmatprep.mubr.f32.mxu0 0.0
      %932 = vmatmul.mubr.f32.gmra.mrb[0].mxu0 %v716
      %v933 = vpop.f32.mrb[0].mxu0
      %v934 = vadd.f32 %v613, %v933
      %v935 = vpop.f32.mrb[0].mxu0
      %936 = vmatprep.mubr.f32.mxu0 0.0
      %937 = vmatmul.mubr.f32.gmra.mrb[0].mxu0 %v719
      %v938 = vpop.f32.mrb[0].mxu0
      %v939 = vadd.f32 %v618, %v938
      %v940 = vpop.f32.mrb[0].mxu0
      %941 = vmatprep.mubr.f32.mxu0 0.0
      %942 = vmatmul.mubr.f32.gmra.mrb[0].mxu0 %v722
      %v943 = vpop.f32.mrb[0].mxu0
      %v944 = vadd.f32 %v623, %v943
      %v945 = vpop.f32.mrb[0].mxu0
      %946 = vmatprep.mubr.f32.mxu0 0.0
      %947 = vmatmul.mubr.f32.gmra.mrb[0].mxu0 %v725
      %v948 = vpop.f32.mrb[0].mxu0
      %v949 = vadd.f32 %v628, %v948
      %v950 = vpop.f32.mrb[0].mxu0
      %951 = vdwg.mxu0
      %v952 = vld [vmem:[%s230 + $0x2] sm:$0xff]
      %v953 = vld [vmem:[%s230 + $0xa] sm:$0xff]
      %v954 = vld [vmem:[%s230 + $0x1a] sm:$0xff]
      %v955 = vld [vmem:[%s230 + $0x22] sm:$0xff]
      %v956 = vld [vmem:[%s230 + $0x32] sm:$0xff]
      %v957 = vld [vmem:[%s230 + $0x3a] sm:$0xff]
      %v958 = vld [vmem:[%s230 + $0x4a] sm:$0xff]
      %v959 = vld [vmem:[%s230 + $0x52] sm:$0xff]
      %v960 = vld [vmem:[%s230 + $0x62] sm:$0xff]
      %v961 = vld [vmem:[%s230 + $0x6a] sm:$0xff]
      %v962 = vld [vmem:[%s230 + $0x7a] sm:$0xff]
      %v963 = vld [vmem:[%s230 + $0x82] sm:$0xff]
      %v964 = vld [vmem:[%s230 + $0x92] sm:$0xff]
      %v965 = vld [vmem:[%s230 + $0x9a] sm:$0xff]
      %v966 = vld [vmem:[%s230 + $0xaa] sm:$0xff]
      %v967 = vld [vmem:[%s230 + $0xb2] sm:$0xff]
      %v968 = vld [vmem:[%s230 + $0xc2] sm:$0xff]
      %v969 = vld [vmem:[%s230 + $0xca] sm:$0xff]
      %v970 = vld [vmem:[%s230 + $0xda] sm:$0xff]
      %v971 = vld [vmem:[%s230 + $0xe2] sm:$0xff]
      %v972 = vld [vmem:[%s230 + $0xf2] sm:$0xff]
      %v973 = vld [vmem:[%s230 + $0xfa] sm:$0xff]
      %v974 = vld [vmem:[%s230 + $0x10a] sm:$0xff]
      %v975 = vld [vmem:[%s230 + $0x112] sm:$0xff]
      %v976 = vld [vmem:[%s230 + $0x122] sm:$0xff]
      %v977 = vld [vmem:[%s230 + $0x12a] sm:$0xff]
      %v978 = vld [vmem:[%s230 + $0x13a] sm:$0xff]
      %v979 = vld [vmem:[%s230 + $0x142] sm:$0xff]
      %v980 = vld [vmem:[%s230 + $0x152] sm:$0xff]
      %v981 = vld [vmem:[%s230 + $0x15a] sm:$0xff]
      %v982 = vld [vmem:[%s230 + $0x16a] sm:$0xff]
      %v983 = vld [vmem:[%s230 + $0x172] sm:$0xff]
      %s984 = scalar_lea.vmem %s1, 16
      %v985 = vld [vmem:[%s984] sm:$0xff]
      %v987 = vsel %vm309, %v952, 0
      %v990 = vsel %vm309, %v953, 0
      %v993 = vsel %vm309, %v954, 0
      %v996 = vsel %vm309, %v955, 0
      %v999 = vsel %vm309, %v956, 0
      %v1002 = vsel %vm309, %v957, 0
      %v1005 = vsel %vm309, %v958, 0
      %v1008 = vsel %vm309, %v959, 0
      %v1011 = vsel %vm309, %v960, 0
      %v1014 = vsel %vm309, %v961, 0
      %v1017 = vsel %vm309, %v962, 0
      %v1020 = vsel %vm309, %v963, 0
      %v1023 = vsel %vm309, %v964, 0
      %v1026 = vsel %vm309, %v965, 0
      %v1029 = vsel %vm309, %v966, 0
      %v1032 = vsel %vm309, %v967, 0
      %v1035 = vsel %vm309, %v968, 0
      %v1038 = vsel %vm309, %v969, 0
      %v1041 = vsel %vm309, %v970, 0
      %v1044 = vsel %vm309, %v971, 0
      %v1047 = vsel %vm309, %v972, 0
      %v1050 = vsel %vm309, %v973, 0
      %v1053 = vsel %vm309, %v974, 0
      %v1056 = vsel %vm309, %v975, 0
      %v1059 = vsel %vm309, %v976, 0
      %v1062 = vsel %vm309, %v977, 0
      %v1065 = vsel %vm309, %v978, 0
      %v1068 = vsel %vm309, %v979, 0
      %v1071 = vsel %vm309, %v980, 0
      %v1074 = vsel %vm309, %v981, 0
      %v1077 = vsel %vm309, %v982, 0
      %v1080 = vsel %vm309, %v983, 0
      %1082 = vmatprep.subr.mxu0 0.0
      %1083 = vmatpush1.msra.mxu0 %v985
      %1084 = vmatprep.subr.mxu0 0.0
      %1085 = vmatpush1.msra.mxu0 0.0
      %1086 = vmatprep.subr.mxu0 0.0
      %1087 = vmatpush1.msra.mxu0 0.0
      %1088 = vmatprep.subr.mxu0 0.0
      %1089 = vmatpush1.msra.mxu0 0.0
      %1090 = vmatprep.subr.mxu0 0.0
      %1091 = vmatpush1.msra.mxu0 0.0
      %1092 = vmatprep.subr.mxu0 0.0
      %1093 = vmatpush1.msra.mxu0 0.0
      %1094 = vmatprep.subr.mxu0 0.0
      %1095 = vmatpush1.msra.mxu0 0.0
      %1096 = vmatprep.subr.mxu0 0.0
      %1097 = vmatpush1.msra.mxu0 0.0
      %1098 = vmatprep.subr.mxu0 0.0
      %1099 = vmatpush1.msra.mxu0 0.0
      %1100 = vmatprep.subr.mxu0 0.0
      %1101 = vmatpush1.msra.mxu0 0.0
      %1102 = vmatprep.subr.mxu0 0.0
      %1103 = vmatpush1.msra.mxu0 0.0
      %1104 = vmatprep.subr.mxu0 0.0
      %1105 = vmatpush1.msra.mxu0 0.0
      %1106 = vmatprep.subr.mxu0 0.0
      %1107 = vmatpush1.msra.mxu0 0.0
      %1108 = vmatprep.subr.mxu0 0.0
      %1109 = vmatpush1.msra.mxu0 0.0
      %1110 = vmatprep.subr.mxu0 0.0
      %1111 = vmatpush1.msra.mxu0 0.0
      %1112 = vmatprep.subr.mxu0 0.0
      %1113 = vmatpush1.msra.mxu0 0.0
      %1114 = vmatprep.subr.mxu0 0.0
      %1115 = vmatpush1.msra.mxu0 0.0
      %1116 = vmatprep.subr.mxu0 0.0
      %1117 = vmatpush1.msra.mxu0 0.0
      %1118 = vmatprep.subr.mxu0 0.0
      %1119 = vmatpush1.msra.mxu0 0.0
      %1120 = vmatprep.subr.mxu0 0.0
      %1121 = vmatpush1.msra.mxu0 0.0
      %1122 = vmatprep.subr.mxu0 0.0
      %1123 = vmatpush1.msra.mxu0 0.0
      %1124 = vmatprep.subr.mxu0 0.0
      %1125 = vmatpush1.msra.mxu0 0.0
      %1126 = vmatprep.subr.mxu0 0.0
      %1127 = vmatpush1.msra.mxu0 0.0
      %1128 = vmatprep.subr.mxu0 0.0
      %1129 = vmatpush1.msra.mxu0 0.0
      %1130 = vmatprep.subr.mxu0 0.0
      %1131 = vmatpush1.msra.mxu0 0.0
      %1132 = vmatprep.subr.mxu0 0.0
      %1133 = vmatpush1.msra.mxu0 0.0
      %1134 = vmatprep.subr.mxu0 0.0
      %1135 = vmatpush1.msra.mxu0 0.0
      %1136 = vmatprep.subr.mxu0 0.0
      %1137 = vmatpush1.msra.mxu0 0.0
      %1138 = vmatprep.subr.mxu0 0.0
      %1139 = vmatpush1.msra.mxu0 0.0
      %1140 = vmatprep.subr.mxu0 0.0
      %1141 = vmatpush1.msra.mxu0 0.0
      %1142 = vmatprep.subr.mxu0 0.0
      %1143 = vmatpush1.msra.mxu0 0.0
      %1144 = vmatprep.subr.mxu0 0.0
      %1145 = vmatpush1.msra.mxu0 0.0
      %1146 = vmatprep.mubr.f32.mxu0 0.0
      %1147 = vmatmul.mubr.f32.gmra.mrb[0].mxu0 %v987
      %v1148 = vpop.f32.mrb[0].mxu0
      %v1149 = vadd.f32 0.0, %v1148
      %v1150 = vpop.f32.mrb[0].mxu0
      %1151 = vmatprep.mubr.f32.mxu0 0.0
      %1152 = vmatmul.mubr.f32.gmra.mrb[0].mxu0 %v990
      %v1153 = vpop.f32.mrb[0].mxu0
      %v1154 = vadd.f32 0.0, %v1153
      %v1155 = vpop.f32.mrb[0].mxu0
      %1156 = vmatprep.mubr.f32.mxu0 0.0
      %1157 = vmatmul.mubr.f32.gmra.mrb[0].mxu0 %v993
      %v1158 = vpop.f32.mrb[0].mxu0
      %v1159 = vadd.f32 0.0, %v1158
      %v1160 = vpop.f32.mrb[0].mxu0
      %1161 = vmatprep.mubr.f32.mxu0 0.0
      %1162 = vmatmul.mubr.f32.gmra.mrb[0].mxu0 %v996
      %v1163 = vpop.f32.mrb[0].mxu0
      %v1164 = vadd.f32 0.0, %v1163
      %v1165 = vpop.f32.mrb[0].mxu0
      %1166 = vmatprep.mubr.f32.mxu0 0.0
      %1167 = vmatmul.mubr.f32.gmra.mrb[0].mxu0 %v999
      %v1168 = vpop.f32.mrb[0].mxu0
      %v1169 = vadd.f32 0.0, %v1168
      %v1170 = vpop.f32.mrb[0].mxu0
      %1171 = vmatprep.mubr.f32.mxu0 0.0
      %1172 = vmatmul.mubr.f32.gmra.mrb[0].mxu0 %v1002
      %v1173 = vpop.f32.mrb[0].mxu0
      %v1174 = vadd.f32 0.0, %v1173
      %v1175 = vpop.f32.mrb[0].mxu0
      %1176 = vmatprep.mubr.f32.mxu0 0.0
      %1177 = vmatmul.mubr.f32.gmra.mrb[0].mxu0 %v1005
      %v1178 = vpop.f32.mrb[0].mxu0
      %v1179 = vadd.f32 0.0, %v1178
      %v1180 = vpop.f32.mrb[0].mxu0
      %1181 = vmatprep.mubr.f32.mxu0 0.0
      %1182 = vmatmul.mubr.f32.gmra.mrb[0].mxu0 %v1008
      %v1183 = vpop.f32.mrb[0].mxu0
      %v1184 = vadd.f32 0.0, %v1183
      %v1185 = vpop.f32.mrb[0].mxu0
      %1186 = vmatprep.mubr.f32.mxu0 0.0
      %1187 = vmatmul.mubr.f32.gmra.mrb[0].mxu0 %v1011
      %v1188 = vpop.f32.mrb[0].mxu0
      %v1189 = vadd.f32 0.0, %v1188
      %v1190 = vpop.f32.mrb[0].mxu0
      %1191 = vmatprep.mubr.f32.mxu0 0.0
      %1192 = vmatmul.mubr.f32.gmra.mrb[0].mxu0 %v1014
      %v1193 = vpop.f32.mrb[0].mxu0
      %v1194 = vadd.f32 0.0, %v1193
      %v1195 = vpop.f32.mrb[0].mxu0
      %1196 = vmatprep.mubr.f32.mxu0 0.0
      %1197 = vmatmul.mubr.f32.gmra.mrb[0].mxu0 %v1017
      %v1198 = vpop.f32.mrb[0].mxu0
      %v1199 = vadd.f32 0.0, %v1198
      %v1200 = vpop.f32.mrb[0].mxu0
      %1201 = vmatprep.mubr.f32.mxu0 0.0
      %1202 = vmatmul.mubr.f32.gmra.mrb[0].mxu0 %v1020
      %v1203 = vpop.f32.mrb[0].mxu0
      %v1204 = vadd.f32 0.0, %v1203
      %v1205 = vpop.f32.mrb[0].mxu0
      %1206 = vmatprep.mubr.f32.mxu0 0.0
      %1207 = vmatmul.mubr.f32.gmra.mrb[0].mxu0 %v1023
      %v1208 = vpop.f32.mrb[0].mxu0
      %v1209 = vadd.f32 0.0, %v1208
      %v1210 = vpop.f32.mrb[0].mxu0
      %1211 = vmatprep.mubr.f32.mxu0 0.0
      %1212 = vmatmul.mubr.f32.gmra.mrb[0].mxu0 %v1026
      %v1213 = vpop.f32.mrb[0].mxu0
      %v1214 = vadd.f32 0.0, %v1213
      %v1215 = vpop.f32.mrb[0].mxu0
      %1216 = vmatprep.mubr.f32.mxu0 0.0
      %1217 = vmatmul.mubr.f32.gmra.mrb[0].mxu0 %v1029
      %v1218 = vpop.f32.mrb[0].mxu0
      %v1219 = vadd.f32 0.0, %v1218
      %v1220 = vpop.f32.mrb[0].mxu0
      %1221 = vmatprep.mubr.f32.mxu0 0.0
      %1222 = vmatmul.mubr.f32.gmra.mrb[0].mxu0 %v1032
      %v1223 = vpop.f32.mrb[0].mxu0
      %v1224 = vadd.f32 0.0, %v1223
      %v1225 = vpop.f32.mrb[0].mxu0
      %1226 = vmatprep.mubr.f32.mxu0 0.0
      %1227 = vmatmul.mubr.f32.gmra.mrb[0].mxu0 %v1035
      %v1228 = vpop.f32.mrb[0].mxu0
      %v1229 = vadd.f32 0.0, %v1228
      %v1230 = vpop.f32.mrb[0].mxu0
      %1231 = vmatprep.mubr.f32.mxu0 0.0
      %1232 = vmatmul.mubr.f32.gmra.mrb[0].mxu0 %v1038
      %v1233 = vpop.f32.mrb[0].mxu0
      %v1234 = vadd.f32 0.0, %v1233
      %v1235 = vpop.f32.mrb[0].mxu0
      %1236 = vmatprep.mubr.f32.mxu0 0.0
      %1237 = vmatmul.mubr.f32.gmra.mrb[0].mxu0 %v1041
      %v1238 = vpop.f32.mrb[0].mxu0
      %v1239 = vadd.f32 0.0, %v1238
      %v1240 = vpop.f32.mrb[0].mxu0
      %1241 = vmatprep.mubr.f32.mxu0 0.0
      %1242 = vmatmul.mubr.f32.gmra.mrb[0].mxu0 %v1044
      %v1243 = vpop.f32.mrb[0].mxu0
      %v1244 = vadd.f32 0.0, %v1243
      %v1245 = vpop.f32.mrb[0].mxu0
      %1246 = vmatprep.mubr.f32.mxu0 0.0
      %1247 = vmatmul.mubr.f32.gmra.mrb[0].mxu0 %v1047
      %v1248 = vpop.f32.mrb[0].mxu0
      %v1249 = vadd.f32 0.0, %v1248
      %v1250 = vpop.f32.mrb[0].mxu0
      %1251 = vmatprep.mubr.f32.mxu0 0.0
      %1252 = vmatmul.mubr.f32.gmra.mrb[0].mxu0 %v1050
      %v1253 = vpop.f32.mrb[0].mxu0
      %v1254 = vadd.f32 0.0, %v1253
      %v1255 = vpop.f32.mrb[0].mxu0
      %1256 = vmatprep.mubr.f32.mxu0 0.0
      %1257 = vmatmul.mubr.f32.gmra.mrb[0].mxu0 %v1053
      %v1258 = vpop.f32.mrb[0].mxu0
      %v1259 = vadd.f32 0.0, %v1258
      %v1260 = vpop.f32.mrb[0].mxu0
      %1261 = vmatprep.mubr.f32.mxu0 0.0
      %1262 = vmatmul.mubr.f32.gmra.mrb[0].mxu0 %v1056
      %v1263 = vpop.f32.mrb[0].mxu0
      %v1264 = vadd.f32 0.0, %v1263
      %v1265 = vpop.f32.mrb[0].mxu0
      %1266 = vmatprep.mubr.f32.mxu0 0.0
      %1267 = vmatmul.mubr.f32.gmra.mrb[0].mxu0 %v1059
      %v1268 = vpop.f32.mrb[0].mxu0
      %v1269 = vadd.f32 0.0, %v1268
      %v1270 = vpop.f32.mrb[0].mxu0
      %1271 = vmatprep.mubr.f32.mxu0 0.0
      %1272 = vmatmul.mubr.f32.gmra.mrb[0].mxu0 %v1062
      %v1273 = vpop.f32.mrb[0].mxu0
      %v1274 = vadd.f32 0.0, %v1273
      %v1275 = vpop.f32.mrb[0].mxu0
      %1276 = vmatprep.mubr.f32.mxu0 0.0
      %1277 = vmatmul.mubr.f32.gmra.mrb[0].mxu0 %v1065
      %v1278 = vpop.f32.mrb[0].mxu0
      %v1279 = vadd.f32 0.0, %v1278
      %v1280 = vpop.f32.mrb[0].mxu0
      %1281 = vmatprep.mubr.f32.mxu0 0.0
      %1282 = vmatmul.mubr.f32.gmra.mrb[0].mxu0 %v1068
      %v1283 = vpop.f32.mrb[0].mxu0
      %v1284 = vadd.f32 0.0, %v1283
      %v1285 = vpop.f32.mrb[0].mxu0
      %1286 = vmatprep.mubr.f32.mxu0 0.0
      %1287 = vmatmul.mubr.f32.gmra.mrb[0].mxu0 %v1071
      %v1288 = vpop.f32.mrb[0].mxu0
      %v1289 = vadd.f32 0.0, %v1288
      %v1290 = vpop.f32.mrb[0].mxu0
      %1291 = vmatprep.mubr.f32.mxu0 0.0
      %1292 = vmatmul.mubr.f32.gmra.mrb[0].mxu0 %v1074
      %v1293 = vpop.f32.mrb[0].mxu0
      %v1294 = vadd.f32 0.0, %v1293
      %v1295 = vpop.f32.mrb[0].mxu0
      %1296 = vmatprep.mubr.f32.mxu0 0.0
      %1297 = vmatmul.mubr.f32.gmra.mrb[0].mxu0 %v1077
      %v1298 = vpop.f32.mrb[0].mxu0
      %v1299 = vadd.f32 0.0, %v1298
      %v1300 = vpop.f32.mrb[0].mxu0
      %1301 = vmatprep.mubr.f32.mxu0 0.0
      %1302 = vmatmul.mubr.f32.gmra.mrb[0].mxu0 %v1080
      %v1303 = vpop.f32.mrb[0].mxu0
      %v1304 = vadd.f32 0.0, %v1303
      %v1305 = vpop.f32.mrb[0].mxu0
      %1306 = vdwg.mxu0
      %v1307 = vadd.f32 %v794, %v1149
      %v1308 = vadd.f32 %v799, %v1154
      %v1309 = vadd.f32 %v804, %v1159
      %v1310 = vadd.f32 %v809, %v1164
      %v1311 = vadd.f32 %v814, %v1169
      %v1312 = vadd.f32 %v819, %v1174
      %v1313 = vadd.f32 %v824, %v1179
      %v1314 = vadd.f32 %v829, %v1184
      %v1315 = vadd.f32 %v834, %v1189
      %v1316 = vadd.f32 %v839, %v1194
      %v1317 = vadd.f32 %v844, %v1199
      %v1318 = vadd.f32 %v849, %v1204
      %v1319 = vadd.f32 %v854, %v1209
      %v1320 = vadd.f32 %v859, %v1214
      %v1321 = vadd.f32 %v864, %v1219
      %v1322 = vadd.f32 %v869, %v1224
      %v1323 = vadd.f32 %v874, %v1229
      %v1324 = vadd.f32 %v879, %v1234
      %v1325 = vadd.f32 %v884, %v1239
      %v1326 = vadd.f32 %v889, %v1244
      %v1327 = vadd.f32 %v894, %v1249
      %v1328 = vadd.f32 %v899, %v1254
      %v1329 = vadd.f32 %v904, %v1259
      %v1330 = vadd.f32 %v909, %v1264
      %v1331 = vadd.f32 %v914, %v1269
      %v1332 = vadd.f32 %v919, %v1274
      %v1333 = vadd.f32 %v924, %v1279
      %v1334 = vadd.f32 %v929, %v1284
      %v1335 = vadd.f32 %v934, %v1289
      %v1336 = vadd.f32 %v939, %v1294
      %v1337 = vadd.f32 %v944, %v1299
      %v1338 = vadd.f32 %v949, %v1304
      %s1339 = scalar_lea.vmem %s230, 24
      %v1340 = vld [vmem:[%s1339] sm:$0xff]
      %v1341 = vld [vmem:[%s1339 + $0x8] sm:$0xff]
      %v1342 = vld [vmem:[%s1339 + $0x18] sm:$0xff]
      %v1343 = vld [vmem:[%s1339 + $0x20] sm:$0xff]
      %v1344 = vld [vmem:[%s1339 + $0x30] sm:$0xff]
      %v1345 = vld [vmem:[%s1339 + $0x38] sm:$0xff]
      %v1346 = vld [vmem:[%s1339 + $0x48] sm:$0xff]
      %v1347 = vld [vmem:[%s1339 + $0x50] sm:$0xff]
      %v1348 = vld [vmem:[%s1339 + $0x60] sm:$0xff]
      %v1349 = vld [vmem:[%s1339 + $0x68] sm:$0xff]
      %v1350 = vld [vmem:[%s1339 + $0x78] sm:$0xff]
      %v1351 = vld [vmem:[%s1339 + $0x80] sm:$0xff]
      %v1352 = vld [vmem:[%s1339 + $0x90] sm:$0xff]
      %v1353 = vld [vmem:[%s1339 + $0x98] sm:$0xff]
      %v1354 = vld [vmem:[%s1339 + $0xa8] sm:$0xff]
      %v1355 = vld [vmem:[%s1339 + $0xb0] sm:$0xff]
      %v1356 = vld [vmem:[%s1339 + $0xc0] sm:$0xff]
      %v1357 = vld [vmem:[%s1339 + $0xc8] sm:$0xff]
      %v1358 = vld [vmem:[%s1339 + $0xd8] sm:$0xff]
      %v1359 = vld [vmem:[%s1339 + $0xe0] sm:$0xff]
      %v1360 = vld [vmem:[%s1339 + $0xf0] sm:$0xff]
      %v1361 = vld [vmem:[%s1339 + $0xf8] sm:$0xff]
      %v1362 = vld [vmem:[%s1339 + $0x108] sm:$0xff]
      %v1363 = vld [vmem:[%s1339 + $0x110] sm:$0xff]
      %v1364 = vld [vmem:[%s1339 + $0x120] sm:$0xff]
      %v1365 = vld [vmem:[%s1339 + $0x128] sm:$0xff]
      %v1366 = vld [vmem:[%s1339 + $0x138] sm:$0xff]
      %v1367 = vld [vmem:[%s1339 + $0x140] sm:$0xff]
      %v1368 = vld [vmem:[%s1339 + $0x150] sm:$0xff]
      %v1369 = vld [vmem:[%s1339 + $0x158] sm:$0xff]
      %v1370 = vld [vmem:[%s1339 + $0x168] sm:$0xff]
      %v1371 = vld [vmem:[%s1339 + $0x170] sm:$0xff]
      %s1372 = scalar_lea.vmem %s1, 24
      %v1373 = vld [vmem:[%s1372] sm:$0xff]
      %v1375 = vsel %vm309, %v1340, 0
      %v1378 = vsel %vm309, %v1341, 0
      %v1381 = vsel %vm309, %v1342, 0
      %v1384 = vsel %vm309, %v1343, 0
      %v1387 = vsel %vm309, %v1344, 0
      %v1390 = vsel %vm309, %v1345, 0
      %v1393 = vsel %vm309, %v1346, 0
      %v1396 = vsel %vm309, %v1347, 0
      %v1399 = vsel %vm309, %v1348, 0
      %v1402 = vsel %vm309, %v1349, 0
      %v1405 = vsel %vm309, %v1350, 0
      %v1408 = vsel %vm309, %v1351, 0
      %v1411 = vsel %vm309, %v1352, 0
      %v1414 = vsel %vm309, %v1353, 0
      %v1417 = vsel %vm309, %v1354, 0
      %v1420 = vsel %vm309, %v1355, 0
      %v1423 = vsel %vm309, %v1356, 0
      %v1426 = vsel %vm309, %v1357, 0
      %v1429 = vsel %vm309, %v1358, 0
      %v1432 = vsel %vm309, %v1359, 0
      %v1435 = vsel %vm309, %v1360, 0
      %v1438 = vsel %vm309, %v1361, 0
      %v1441 = vsel %vm309, %v1362, 0
      %v1444 = vsel %vm309, %v1363, 0
      %v1447 = vsel %vm309, %v1364, 0
      %v1450 = vsel %vm309, %v1365, 0
      %v1453 = vsel %vm309, %v1366, 0
      %v1456 = vsel %vm309, %v1367, 0
      %v1459 = vsel %vm309, %v1368, 0
      %v1462 = vsel %vm309, %v1369, 0
      %v1465 = vsel %vm309, %v1370, 0
      %v1468 = vsel %vm309, %v1371, 0
      %1470 = vmatprep.subr.mxu0 0.0
      %1471 = vmatpush1.msra.mxu0 %v1373
      %1472 = vmatprep.subr.mxu0 0.0
      %1473 = vmatpush1.msra.mxu0 0.0
      %1474 = vmatprep.subr.mxu0 0.0
      %1475 = vmatpush1.msra.mxu0 0.0
      %1476 = vmatprep.subr.mxu0 0.0
      %1477 = vmatpush1.msra.mxu0 0.0
      %1478 = vmatprep.subr.mxu0 0.0
      %1479 = vmatpush1.msra.mxu0 0.0
      %1480 = vmatprep.subr.mxu0 0.0
      %1481 = vmatpush1.msra.mxu0 0.0
      %1482 = vmatprep.subr.mxu0 0.0
      %1483 = vmatpush1.msra.mxu0 0.0
      %1484 = vmatprep.subr.mxu0 0.0
      %1485 = vmatpush1.msra.mxu0 0.0
      %1486 = vmatprep.subr.mxu0 0.0
      %1487 = vmatpush1.msra.mxu0 0.0
      %1488 = vmatprep.subr.mxu0 0.0
      %1489 = vmatpush1.msra.mxu0 0.0
      %1490 = vmatprep.subr.mxu0 0.0
      %1491 = vmatpush1.msra.mxu0 0.0
      %1492 = vmatprep.subr.mxu0 0.0
      %1493 = vmatpush1.msra.mxu0 0.0
      %1494 = vmatprep.subr.mxu0 0.0
      %1495 = vmatpush1.msra.mxu0 0.0
      %1496 = vmatprep.subr.mxu0 0.0
      %1497 = vmatpush1.msra.mxu0 0.0
      %1498 = vmatprep.subr.mxu0 0.0
      %1499 = vmatpush1.msra.mxu0 0.0
      %1500 = vmatprep.subr.mxu0 0.0
      %1501 = vmatpush1.msra.mxu0 0.0
      %1502 = vmatprep.subr.mxu0 0.0
      %1503 = vmatpush1.msra.mxu0 0.0
      %1504 = vmatprep.subr.mxu0 0.0
      %1505 = vmatpush1.msra.mxu0 0.0
      %1506 = vmatprep.subr.mxu0 0.0
      %1507 = vmatpush1.msra.mxu0 0.0
      %1508 = vmatprep.subr.mxu0 0.0
      %1509 = vmatpush1.msra.mxu0 0.0
      %1510 = vmatprep.subr.mxu0 0.0
      %1511 = vmatpush1.msra.mxu0 0.0
      %1512 = vmatprep.subr.mxu0 0.0
      %1513 = vmatpush1.msra.mxu0 0.0
      %1514 = vmatprep.subr.mxu0 0.0
      %1515 = vmatpush1.msra.mxu0 0.0
      %1516 = vmatprep.subr.mxu0 0.0
      %1517 = vmatpush1.msra.mxu0 0.0
      %1518 = vmatprep.subr.mxu0 0.0
      %1519 = vmatpush1.msra.mxu0 0.0
      %1520 = vmatprep.subr.mxu0 0.0
      %1521 = vmatpush1.msra.mxu0 0.0
      %1522 = vmatprep.subr.mxu0 0.0
      %1523 = vmatpush1.msra.mxu0 0.0
      %1524 = vmatprep.subr.mxu0 0.0
      %1525 = vmatpush1.msra.mxu0 0.0
      %1526 = vmatprep.subr.mxu0 0.0
      %1527 = vmatpush1.msra.mxu0 0.0
      %1528 = vmatprep.subr.mxu0 0.0
      %1529 = vmatpush1.msra.mxu0 0.0
      %1530 = vmatprep.subr.mxu0 0.0
      %1531 = vmatpush1.msra.mxu0 0.0
      %1532 = vmatprep.subr.mxu0 0.0
      %1533 = vmatpush1.msra.mxu0 0.0
      %1534 = vmatprep.mubr.f32.mxu0 0.0
      %1535 = vmatmul.mubr.f32.gmra.mrb[0].mxu0 %v1375
      %v1536 = vpop.f32.mrb[0].mxu0
      %v1537 = vadd.f32 0.0, %v1536
      %v1538 = vpop.f32.mrb[0].mxu0
      %1539 = vmatprep.mubr.f32.mxu0 0.0
      %1540 = vmatmul.mubr.f32.gmra.mrb[0].mxu0 %v1378
      %v1541 = vpop.f32.mrb[0].mxu0
      %v1542 = vadd.f32 0.0, %v1541
      %v1543 = vpop.f32.mrb[0].mxu0
      %1544 = vmatprep.mubr.f32.mxu0 0.0
      %1545 = vmatmul.mubr.f32.gmra.mrb[0].mxu0 %v1381
      %v1546 = vpop.f32.mrb[0].mxu0
      %v1547 = vadd.f32 0.0, %v1546
      %v1548 = vpop.f32.mrb[0].mxu0
      %1549 = vmatprep.mubr.f32.mxu0 0.0
      %1550 = vmatmul.mubr.f32.gmra.mrb[0].mxu0 %v1384
      %v1551 = vpop.f32.mrb[0].mxu0
      %v1552 = vadd.f32 0.0, %v1551
      %v1553 = vpop.f32.mrb[0].mxu0
      %1554 = vmatprep.mubr.f32.mxu0 0.0
      %1555 = vmatmul.mubr.f32.gmra.mrb[0].mxu0 %v1387
      %v1556 = vpop.f32.mrb[0].mxu0
      %v1557 = vadd.f32 0.0, %v1556
      %v1558 = vpop.f32.mrb[0].mxu0
      %1559 = vmatprep.mubr.f32.mxu0 0.0
      %1560 = vmatmul.mubr.f32.gmra.mrb[0].mxu0 %v1390
      %v1561 = vpop.f32.mrb[0].mxu0
      %v1562 = vadd.f32 0.0, %v1561
      %v1563 = vpop.f32.mrb[0].mxu0
      %1564 = vmatprep.mubr.f32.mxu0 0.0
      %1565 = vmatmul.mubr.f32.gmra.mrb[0].mxu0 %v1393
      %v1566 = vpop.f32.mrb[0].mxu0
      %v1567 = vadd.f32 0.0, %v1566
      %v1568 = vpop.f32.mrb[0].mxu0
      %1569 = vmatprep.mubr.f32.mxu0 0.0
      %1570 = vmatmul.mubr.f32.gmra.mrb[0].mxu0 %v1396
      %v1571 = vpop.f32.mrb[0].mxu0
      %v1572 = vadd.f32 0.0, %v1571
      %v1573 = vpop.f32.mrb[0].mxu0
      %1574 = vmatprep.mubr.f32.mxu0 0.0
      %1575 = vmatmul.mubr.f32.gmra.mrb[0].mxu0 %v1399
      %v1576 = vpop.f32.mrb[0].mxu0
      %v1577 = vadd.f32 0.0, %v1576
      %v1578 = vpop.f32.mrb[0].mxu0
      %1579 = vmatprep.mubr.f32.mxu0 0.0
      %1580 = vmatmul.mubr.f32.gmra.mrb[0].mxu0 %v1402
      %v1581 = vpop.f32.mrb[0].mxu0
      %v1582 = vadd.f32 0.0, %v1581
      %v1583 = vpop.f32.mrb[0].mxu0
      %1584 = vmatprep.mubr.f32.mxu0 0.0
      %1585 = vmatmul.mubr.f32.gmra.mrb[0].mxu0 %v1405
      %v1586 = vpop.f32.mrb[0].mxu0
      %v1587 = vadd.f32 0.0, %v1586
      %v1588 = vpop.f32.mrb[0].mxu0
      %1589 = vmatprep.mubr.f32.mxu0 0.0
      %1590 = vmatmul.mubr.f32.gmra.mrb[0].mxu0 %v1408
      %v1591 = vpop.f32.mrb[0].mxu0
      %v1592 = vadd.f32 0.0, %v1591
      %v1593 = vpop.f32.mrb[0].mxu0
      %1594 = vmatprep.mubr.f32.mxu0 0.0
      %1595 = vmatmul.mubr.f32.gmra.mrb[0].mxu0 %v1411
      %v1596 = vpop.f32.mrb[0].mxu0
      %v1597 = vadd.f32 0.0, %v1596
      %v1598 = vpop.f32.mrb[0].mxu0
      %1599 = vmatprep.mubr.f32.mxu0 0.0
      %1600 = vmatmul.mubr.f32.gmra.mrb[0].mxu0 %v1414
      %v1601 = vpop.f32.mrb[0].mxu0
      %v1602 = vadd.f32 0.0, %v1601
      %v1603 = vpop.f32.mrb[0].mxu0
      %1604 = vmatprep.mubr.f32.mxu0 0.0
      %1605 = vmatmul.mubr.f32.gmra.mrb[0].mxu0 %v1417
      %v1606 = vpop.f32.mrb[0].mxu0
      %v1607 = vadd.f32 0.0, %v1606
      %v1608 = vpop.f32.mrb[0].mxu0
      %1609 = vmatprep.mubr.f32.mxu0 0.0
      %1610 = vmatmul.mubr.f32.gmra.mrb[0].mxu0 %v1420
      %v1611 = vpop.f32.mrb[0].mxu0
      %v1612 = vadd.f32 0.0, %v1611
      %v1613 = vpop.f32.mrb[0].mxu0
      %1614 = vmatprep.mubr.f32.mxu0 0.0
      %1615 = vmatmul.mubr.f32.gmra.mrb[0].mxu0 %v1423
      %v1616 = vpop.f32.mrb[0].mxu0
      %v1617 = vadd.f32 0.0, %v1616
      %v1618 = vpop.f32.mrb[0].mxu0
      %1619 = vmatprep.mubr.f32.mxu0 0.0
      %1620 = vmatmul.mubr.f32.gmra.mrb[0].mxu0 %v1426
      %v1621 = vpop.f32.mrb[0].mxu0
      %v1622 = vadd.f32 0.0, %v1621
      %v1623 = vpop.f32.mrb[0].mxu0
      %1624 = vmatprep.mubr.f32.mxu0 0.0
      %1625 = vmatmul.mubr.f32.gmra.mrb[0].mxu0 %v1429
      %v1626 = vpop.f32.mrb[0].mxu0
      %v1627 = vadd.f32 0.0, %v1626
      %v1628 = vpop.f32.mrb[0].mxu0
      %1629 = vmatprep.mubr.f32.mxu0 0.0
      %1630 = vmatmul.mubr.f32.gmra.mrb[0].mxu0 %v1432
      %v1631 = vpop.f32.mrb[0].mxu0
      %v1632 = vadd.f32 0.0, %v1631
      %v1633 = vpop.f32.mrb[0].mxu0
      %1634 = vmatprep.mubr.f32.mxu0 0.0
      %1635 = vmatmul.mubr.f32.gmra.mrb[0].mxu0 %v1435
      %v1636 = vpop.f32.mrb[0].mxu0
      %v1637 = vadd.f32 0.0, %v1636
      %v1638 = vpop.f32.mrb[0].mxu0
      %1639 = vmatprep.mubr.f32.mxu0 0.0
      %1640 = vmatmul.mubr.f32.gmra.mrb[0].mxu0 %v1438
      %v1641 = vpop.f32.mrb[0].mxu0
      %v1642 = vadd.f32 0.0, %v1641
      %v1643 = vpop.f32.mrb[0].mxu0
      %1644 = vmatprep.mubr.f32.mxu0 0.0
      %1645 = vmatmul.mubr.f32.gmra.mrb[0].mxu0 %v1441
      %v1646 = vpop.f32.mrb[0].mxu0
      %v1647 = vadd.f32 0.0, %v1646
      %v1648 = vpop.f32.mrb[0].mxu0
      %1649 = vmatprep.mubr.f32.mxu0 0.0
      %1650 = vmatmul.mubr.f32.gmra.mrb[0].mxu0 %v1444
      %v1651 = vpop.f32.mrb[0].mxu0
      %v1652 = vadd.f32 0.0, %v1651
      %v1653 = vpop.f32.mrb[0].mxu0
      %1654 = vmatprep.mubr.f32.mxu0 0.0
      %1655 = vmatmul.mubr.f32.gmra.mrb[0].mxu0 %v1447
      %v1656 = vpop.f32.mrb[0].mxu0
      %v1657 = vadd.f32 0.0, %v1656
      %v1658 = vpop.f32.mrb[0].mxu0
      %1659 = vmatprep.mubr.f32.mxu0 0.0
      %1660 = vmatmul.mubr.f32.gmra.mrb[0].mxu0 %v1450
      %v1661 = vpop.f32.mrb[0].mxu0
      %v1662 = vadd.f32 0.0, %v1661
      %v1663 = vpop.f32.mrb[0].mxu0
      %1664 = vmatprep.mubr.f32.mxu0 0.0
      %1665 = vmatmul.mubr.f32.gmra.mrb[0].mxu0 %v1453
      %v1666 = vpop.f32.mrb[0].mxu0
      %v1667 = vadd.f32 0.0, %v1666
      %v1668 = vpop.f32.mrb[0].mxu0
      %1669 = vmatprep.mubr.f32.mxu0 0.0
      %1670 = vmatmul.mubr.f32.gmra.mrb[0].mxu0 %v1456
      %v1671 = vpop.f32.mrb[0].mxu0
      %v1672 = vadd.f32 0.0, %v1671
      %v1673 = vpop.f32.mrb[0].mxu0
      %1674 = vmatprep.mubr.f32.mxu0 0.0
      %1675 = vmatmul.mubr.f32.gmra.mrb[0].mxu0 %v1459
      %v1676 = vpop.f32.mrb[0].mxu0
      %v1677 = vadd.f32 0.0, %v1676
      %v1678 = vpop.f32.mrb[0].mxu0
      %1679 = vmatprep.mubr.f32.mxu0 0.0
      %1680 = vmatmul.mubr.f32.gmra.mrb[0].mxu0 %v1462
      %v1681 = vpop.f32.mrb[0].mxu0
      %v1682 = vadd.f32 0.0, %v1681
      %v1683 = vpop.f32.mrb[0].mxu0
      %1684 = vmatprep.mubr.f32.mxu0 0.0
      %1685 = vmatmul.mubr.f32.gmra.mrb[0].mxu0 %v1465
      %v1686 = vpop.f32.mrb[0].mxu0
      %v1687 = vadd.f32 0.0, %v1686
      %v1688 = vpop.f32.mrb[0].mxu0
      %1689 = vmatprep.mubr.f32.mxu0 0.0
      %1690 = vmatmul.mubr.f32.gmra.mrb[0].mxu0 %v1468
      %v1691 = vpop.f32.mrb[0].mxu0
      %v1692 = vadd.f32 0.0, %v1691
      %v1693 = vpop.f32.mrb[0].mxu0
      %1694 = vdwg.mxu0
      %v1695 = vadd.f32 %v1307, %v1537
      %v1696 = vadd.f32 %v1308, %v1542
      %v1697 = vadd.f32 %v1309, %v1547
      %v1698 = vadd.f32 %v1310, %v1552
      %v1699 = vadd.f32 %v1311, %v1557
      %v1700 = vadd.f32 %v1312, %v1562
      %v1701 = vadd.f32 %v1313, %v1567
      %v1702 = vadd.f32 %v1314, %v1572
      %v1703 = vadd.f32 %v1315, %v1577
      %v1704 = vadd.f32 %v1316, %v1582
      %v1705 = vadd.f32 %v1317, %v1587
      %v1706 = vadd.f32 %v1318, %v1592
      %v1707 = vadd.f32 %v1319, %v1597
      %v1708 = vadd.f32 %v1320, %v1602
      %v1709 = vadd.f32 %v1321, %v1607
      %v1710 = vadd.f32 %v1322, %v1612
      %v1711 = vadd.f32 %v1323, %v1617
      %v1712 = vadd.f32 %v1324, %v1622
      %v1713 = vadd.f32 %v1325, %v1627
      %v1714 = vadd.f32 %v1326, %v1632
      %v1715 = vadd.f32 %v1327, %v1637
      %v1716 = vadd.f32 %v1328, %v1642
      %v1717 = vadd.f32 %v1329, %v1647
      %v1718 = vadd.f32 %v1330, %v1652
      %v1719 = vadd.f32 %v1331, %v1657
      %v1720 = vadd.f32 %v1332, %v1662
      %v1721 = vadd.f32 %v1333, %v1667
      %v1722 = vadd.f32 %v1334, %v1672
      %v1723 = vadd.f32 %v1335, %v1677
      %v1724 = vadd.f32 %v1336, %v1682
      %v1725 = vadd.f32 %v1337, %v1687
      %v1726 = vadd.f32 %v1338, %v1692
      %v1727 = vld [vmem:[%s1339 + $0x1] sm:$0xff]
      %v1728 = vld [vmem:[%s1339 + $0x9] sm:$0xff]
      %v1729 = vld [vmem:[%s1339 + $0x19] sm:$0xff]
      %v1730 = vld [vmem:[%s1339 + $0x21] sm:$0xff]
      %v1731 = vld [vmem:[%s1339 + $0x31] sm:$0xff]
      %v1732 = vld [vmem:[%s1339 + $0x39] sm:$0xff]
      %v1733 = vld [vmem:[%s1339 + $0x49] sm:$0xff]
      %v1734 = vld [vmem:[%s1339 + $0x51] sm:$0xff]
      %v1735 = vld [vmem:[%s1339 + $0x61] sm:$0xff]
      %v1736 = vld [vmem:[%s1339 + $0x69] sm:$0xff]
      %v1737 = vld [vmem:[%s1339 + $0x79] sm:$0xff]
      %v1738 = vld [vmem:[%s1339 + $0x81] sm:$0xff]
      %v1739 = vld [vmem:[%s1339 + $0x91] sm:$0xff]
      %v1740 = vld [vmem:[%s1339 + $0x99] sm:$0xff]
      %v1741 = vld [vmem:[%s1339 + $0xa9] sm:$0xff]
      %v1742 = vld [vmem:[%s1339 + $0xb1] sm:$0xff]
      %v1743 = vld [vmem:[%s1339 + $0xc1] sm:$0xff]
      %v1744 = vld [vmem:[%s1339 + $0xc9] sm:$0xff]
      %v1745 = vld [vmem:[%s1339 + $0xd9] sm:$0xff]
      %v1746 = vld [vmem:[%s1339 + $0xe1] sm:$0xff]
      %v1747 = vld [vmem:[%s1339 + $0xf1] sm:$0xff]
      %v1748 = vld [vmem:[%s1339 + $0xf9] sm:$0xff]
      %v1749 = vld [vmem:[%s1339 + $0x109] sm:$0xff]
      %v1750 = vld [vmem:[%s1339 + $0x111] sm:$0xff]
      %v1751 = vld [vmem:[%s1339 + $0x121] sm:$0xff]
      %v1752 = vld [vmem:[%s1339 + $0x129] sm:$0xff]
      %v1753 = vld [vmem:[%s1339 + $0x139] sm:$0xff]
      %v1754 = vld [vmem:[%s1339 + $0x141] sm:$0xff]
      %v1755 = vld [vmem:[%s1339 + $0x151] sm:$0xff]
      %v1756 = vld [vmem:[%s1339 + $0x159] sm:$0xff]
      %v1757 = vld [vmem:[%s1339 + $0x169] sm:$0xff]
      %v1758 = vld [vmem:[%s1339 + $0x171] sm:$0xff]
      %s1759 = scalar_lea.vmem %s1, 32
      %v1760 = vld [vmem:[%s1759] sm:$0xff]
      %v1762 = vsel %vm309, %v1727, 0
      %v1765 = vsel %vm309, %v1728, 0
      %v1768 = vsel %vm309, %v1729, 0
      %v1771 = vsel %vm309, %v1730, 0
      %v1774 = vsel %vm309, %v1731, 0
      %v1777 = vsel %vm309, %v1732, 0
      %v1780 = vsel %vm309, %v1733, 0
      %v1783 = vsel %vm309, %v1734, 0
      %v1786 = vsel %vm309, %v1735, 0
      %v1789 = vsel %vm309, %v1736, 0
      %v1792 = vsel %vm309, %v1737, 0
      %v1795 = vsel %vm309, %v1738, 0
      %v1798 = vsel %vm309, %v1739, 0
      %v1801 = vsel %vm309, %v1740, 0
      %v1804 = vsel %vm309, %v1741, 0
      %v1807 = vsel %vm309, %v1742, 0
      %v1810 = vsel %vm309, %v1743, 0
      %v1813 = vsel %vm309, %v1744, 0
      %v1816 = vsel %vm309, %v1745, 0
      %v1819 = vsel %vm309, %v1746, 0
      %v1822 = vsel %vm309, %v1747, 0
      %v1825 = vsel %vm309, %v1748, 0
      %v1828 = vsel %vm309, %v1749, 0
      %v1831 = vsel %vm309, %v1750, 0
      %v1834 = vsel %vm309, %v1751, 0
      %v1837 = vsel %vm309, %v1752, 0
      %v1840 = vsel %vm309, %v1753, 0
      %v1843 = vsel %vm309, %v1754, 0
      %v1846 = vsel %vm309, %v1755, 0
      %v1849 = vsel %vm309, %v1756, 0
      %v1852 = vsel %vm309, %v1757, 0
      %v1855 = vsel %vm309, %v1758, 0
      %1857 = vmatprep.subr.mxu0 0.0
      %1858 = vmatpush1.msra.mxu0 %v1760
      %1859 = vmatprep.subr.mxu0 0.0
      %1860 = vmatpush1.msra.mxu0 0.0
      %1861 = vmatprep.subr.mxu0 0.0
      %1862 = vmatpush1.msra.mxu0 0.0
      %1863 = vmatprep.subr.mxu0 0.0
      %1864 = vmatpush1.msra.mxu0 0.0
      %1865 = vmatprep.subr.mxu0 0.0
      %1866 = vmatpush1.msra.mxu0 0.0
      %1867 = vmatprep.subr.mxu0 0.0
      %1868 = vmatpush1.msra.mxu0 0.0
      %1869 = vmatprep.subr.mxu0 0.0
      %1870 = vmatpush1.msra.mxu0 0.0
      %1871 = vmatprep.subr.mxu0 0.0
      %1872 = vmatpush1.msra.mxu0 0.0
      %1873 = vmatprep.subr.mxu0 0.0
      %1874 = vmatpush1.msra.mxu0 0.0
      %1875 = vmatprep.subr.mxu0 0.0
      %1876 = vmatpush1.msra.mxu0 0.0
      %1877 = vmatprep.subr.mxu0 0.0
      %1878 = vmatpush1.msra.mxu0 0.0
      %1879 = vmatprep.subr.mxu0 0.0
      %1880 = vmatpush1.msra.mxu0 0.0
      %1881 = vmatprep.subr.mxu0 0.0
      %1882 = vmatpush1.msra.mxu0 0.0
      %1883 = vmatprep.subr.mxu0 0.0
      %1884 = vmatpush1.msra.mxu0 0.0
      %1885 = vmatprep.subr.mxu0 0.0
      %1886 = vmatpush1.msra.mxu0 0.0
      %1887 = vmatprep.subr.mxu0 0.0
      %1888 = vmatpush1.msra.mxu0 0.0
      %1889 = vmatprep.subr.mxu0 0.0
      %1890 = vmatpush1.msra.mxu0 0.0
      %1891 = vmatprep.subr.mxu0 0.0
      %1892 = vmatpush1.msra.mxu0 0.0
      %1893 = vmatprep.subr.mxu0 0.0
      %1894 = vmatpush1.msra.mxu0 0.0
      %1895 = vmatprep.subr.mxu0 0.0
      %1896 = vmatpush1.msra.mxu0 0.0
      %1897 = vmatprep.subr.mxu0 0.0
      %1898 = vmatpush1.msra.mxu0 0.0
      %1899 = vmatprep.subr.mxu0 0.0
      %1900 = vmatpush1.msra.mxu0 0.0
      %1901 = vmatprep.subr.mxu0 0.0
      %1902 = vmatpush1.msra.mxu0 0.0
      %1903 = vmatprep.subr.mxu0 0.0
      %1904 = vmatpush1.msra.mxu0 0.0
      %1905 = vmatprep.subr.mxu0 0.0
      %1906 = vmatpush1.msra.mxu0 0.0
      %1907 = vmatprep.subr.mxu0 0.0
      %1908 = vmatpush1.msra.mxu0 0.0
      %1909 = vmatprep.subr.mxu0 0.0
      %1910 = vmatpush1.msra.mxu0 0.0
      %1911 = vmatprep.subr.mxu0 0.0
      %1912 = vmatpush1.msra.mxu0 0.0
      %1913 = vmatprep.subr.mxu0 0.0
      %1914 = vmatpush1.msra.mxu0 0.0
      %1915 = vmatprep.subr.mxu0 0.0
      %1916 = vmatpush1.msra.mxu0 0.0
      %1917 = vmatprep.subr.mxu0 0.0
      %1918 = vmatpush1.msra.mxu0 0.0
      %1919 = vmatprep.subr.mxu0 0.0
      %1920 = vmatpush1.msra.mxu0 0.0
      %1921 = vmatprep.mubr.f32.mxu0 0.0
      %1922 = vmatmul.mubr.f32.gmra.mrb[0].mxu0 %v1762
      %v1923 = vpop.f32.mrb[0].mxu0
      %v1924 = vadd.f32 0.0, %v1923
      %v1925 = vpop.f32.mrb[0].mxu0
      %1926 = vmatprep.mubr.f32.mxu0 0.0
      %1927 = vmatmul.mubr.f32.gmra.mrb[0].mxu0 %v1765
      %v1928 = vpop.f32.mrb[0].mxu0
      %v1929 = vadd.f32 0.0, %v1928
      %v1930 = vpop.f32.mrb[0].mxu0
      %1931 = vmatprep.mubr.f32.mxu0 0.0
      %1932 = vmatmul.mubr.f32.gmra.mrb[0].mxu0 %v1768
      %v1933 = vpop.f32.mrb[0].mxu0
      %v1934 = vadd.f32 0.0, %v1933
      %v1935 = vpop.f32.mrb[0].mxu0
      %1936 = vmatprep.mubr.f32.mxu0 0.0
      %1937 = vmatmul.mubr.f32.gmra.mrb[0].mxu0 %v1771
      %v1938 = vpop.f32.mrb[0].mxu0
      %v1939 = vadd.f32 0.0, %v1938
      %v1940 = vpop.f32.mrb[0].mxu0
      %1941 = vmatprep.mubr.f32.mxu0 0.0
      %1942 = vmatmul.mubr.f32.gmra.mrb[0].mxu0 %v1774
      %v1943 = vpop.f32.mrb[0].mxu0
      %v1944 = vadd.f32 0.0, %v1943
      %v1945 = vpop.f32.mrb[0].mxu0
      %1946 = vmatprep.mubr.f32.mxu0 0.0
      %1947 = vmatmul.mubr.f32.gmra.mrb[0].mxu0 %v1777
      %v1948 = vpop.f32.mrb[0].mxu0
      %v1949 = vadd.f32 0.0, %v1948
      %v1950 = vpop.f32.mrb[0].mxu0
      %1951 = vmatprep.mubr.f32.mxu0 0.0
      %1952 = vmatmul.mubr.f32.gmra.mrb[0].mxu0 %v1780
      %v1953 = vpop.f32.mrb[0].mxu0
      %v1954 = vadd.f32 0.0, %v1953
      %v1955 = vpop.f32.mrb[0].mxu0
      %1956 = vmatprep.mubr.f32.mxu0 0.0
      %1957 = vmatmul.mubr.f32.gmra.mrb[0].mxu0 %v1783
      %v1958 = vpop.f32.mrb[0].mxu0
      %v1959 = vadd.f32 0.0, %v1958
      %v1960 = vpop.f32.mrb[0].mxu0
      %1961 = vmatprep.mubr.f32.mxu0 0.0
      %1962 = vmatmul.mubr.f32.gmra.mrb[0].mxu0 %v1786
      %v1963 = vpop.f32.mrb[0].mxu0
      %v1964 = vadd.f32 0.0, %v1963
      %v1965 = vpop.f32.mrb[0].mxu0
      %1966 = vmatprep.mubr.f32.mxu0 0.0
      %1967 = vmatmul.mubr.f32.gmra.mrb[0].mxu0 %v1789
      %v1968 = vpop.f32.mrb[0].mxu0
      %v1969 = vadd.f32 0.0, %v1968
      %v1970 = vpop.f32.mrb[0].mxu0
      %1971 = vmatprep.mubr.f32.mxu0 0.0
      %1972 = vmatmul.mubr.f32.gmra.mrb[0].mxu0 %v1792
      %v1973 = vpop.f32.mrb[0].mxu0
      %v1974 = vadd.f32 0.0, %v1973
      %v1975 = vpop.f32.mrb[0].mxu0
      %1976 = vmatprep.mubr.f32.mxu0 0.0
      %1977 = vmatmul.mubr.f32.gmra.mrb[0].mxu0 %v1795
      %v1978 = vpop.f32.mrb[0].mxu0
      %v1979 = vadd.f32 0.0, %v1978
      %v1980 = vpop.f32.mrb[0].mxu0
      %1981 = vmatprep.mubr.f32.mxu0 0.0
      %1982 = vmatmul.mubr.f32.gmra.mrb[0].mxu0 %v1798
      %v1983 = vpop.f32.mrb[0].mxu0
      %v1984 = vadd.f32 0.0, %v1983
      %v1985 = vpop.f32.mrb[0].mxu0
      %1986 = vmatprep.mubr.f32.mxu0 0.0
      %1987 = vmatmul.mubr.f32.gmra.mrb[0].mxu0 %v1801
      %v1988 = vpop.f32.mrb[0].mxu0
      %v1989 = vadd.f32 0.0, %v1988
      %v1990 = vpop.f32.mrb[0].mxu0
      %1991 = vmatprep.mubr.f32.mxu0 0.0
      %1992 = vmatmul.mubr.f32.gmra.mrb[0].mxu0 %v1804
      %v1993 = vpop.f32.mrb[0].mxu0
      %v1994 = vadd.f32 0.0, %v1993
      %v1995 = vpop.f32.mrb[0].mxu0
      %1996 = vmatprep.mubr.f32.mxu0 0.0
      %1997 = vmatmul.mubr.f32.gmra.mrb[0].mxu0 %v1807
      %v1998 = vpop.f32.mrb[0].mxu0
      %v1999 = vadd.f32 0.0, %v1998
      %v2000 = vpop.f32.mrb[0].mxu0
      %2001 = vmatprep.mubr.f32.mxu0 0.0
      %2002 = vmatmul.mubr.f32.gmra.mrb[0].mxu0 %v1810
      %v2003 = vpop.f32.mrb[0].mxu0
      %v2004 = vadd.f32 0.0, %v2003
      %v2005 = vpop.f32.mrb[0].mxu0
      %2006 = vmatprep.mubr.f32.mxu0 0.0
      %2007 = vmatmul.mubr.f32.gmra.mrb[0].mxu0 %v1813
      %v2008 = vpop.f32.mrb[0].mxu0
      %v2009 = vadd.f32 0.0, %v2008
      %v2010 = vpop.f32.mrb[0].mxu0
      %2011 = vmatprep.mubr.f32.mxu0 0.0
      %2012 = vmatmul.mubr.f32.gmra.mrb[0].mxu0 %v1816
      %v2013 = vpop.f32.mrb[0].mxu0
      %v2014 = vadd.f32 0.0, %v2013
      %v2015 = vpop.f32.mrb[0].mxu0
      %2016 = vmatprep.mubr.f32.mxu0 0.0
      %2017 = vmatmul.mubr.f32.gmra.mrb[0].mxu0 %v1819
      %v2018 = vpop.f32.mrb[0].mxu0
      %v2019 = vadd.f32 0.0, %v2018
      %v2020 = vpop.f32.mrb[0].mxu0
      %2021 = vmatprep.mubr.f32.mxu0 0.0
      %2022 = vmatmul.mubr.f32.gmra.mrb[0].mxu0 %v1822
      %v2023 = vpop.f32.mrb[0].mxu0
      %v2024 = vadd.f32 0.0, %v2023
      %v2025 = vpop.f32.mrb[0].mxu0
      %2026 = vmatprep.mubr.f32.mxu0 0.0
      %2027 = vmatmul.mubr.f32.gmra.mrb[0].mxu0 %v1825
      %v2028 = vpop.f32.mrb[0].mxu0
      %v2029 = vadd.f32 0.0, %v2028
      %v2030 = vpop.f32.mrb[0].mxu0
      %2031 = vmatprep.mubr.f32.mxu0 0.0
      %2032 = vmatmul.mubr.f32.gmra.mrb[0].mxu0 %v1828
      %v2033 = vpop.f32.mrb[0].mxu0
      %v2034 = vadd.f32 0.0, %v2033
      %v2035 = vpop.f32.mrb[0].mxu0
      %2036 = vmatprep.mubr.f32.mxu0 0.0
      %2037 = vmatmul.mubr.f32.gmra.mrb[0].mxu0 %v1831
      %v2038 = vpop.f32.mrb[0].mxu0
      %v2039 = vadd.f32 0.0, %v2038
      %v2040 = vpop.f32.mrb[0].mxu0
      %2041 = vmatprep.mubr.f32.mxu0 0.0
      %2042 = vmatmul.mubr.f32.gmra.mrb[0].mxu0 %v1834
      %v2043 = vpop.f32.mrb[0].mxu0
      %v2044 = vadd.f32 0.0, %v2043
      %v2045 = vpop.f32.mrb[0].mxu0
      %2046 = vmatprep.mubr.f32.mxu0 0.0
      %2047 = vmatmul.mubr.f32.gmra.mrb[0].mxu0 %v1837
      %v2048 = vpop.f32.mrb[0].mxu0
      %v2049 = vadd.f32 0.0, %v2048
      %v2050 = vpop.f32.mrb[0].mxu0
      %2051 = vmatprep.mubr.f32.mxu0 0.0
      %2052 = vmatmul.mubr.f32.gmra.mrb[0].mxu0 %v1840
      %v2053 = vpop.f32.mrb[0].mxu0
      %v2054 = vadd.f32 0.0, %v2053
      %v2055 = vpop.f32.mrb[0].mxu0
      %2056 = vmatprep.mubr.f32.mxu0 0.0
      %2057 = vmatmul.mubr.f32.gmra.mrb[0].mxu0 %v1843
      %v2058 = vpop.f32.mrb[0].mxu0
      %v2059 = vadd.f32 0.0, %v2058
      %v2060 = vpop.f32.mrb[0].mxu0
      %2061 = vmatprep.mubr.f32.mxu0 0.0
      %2062 = vmatmul.mubr.f32.gmra.mrb[0].mxu0 %v1846
      %v2063 = vpop.f32.mrb[0].mxu0
      %v2064 = vadd.f32 0.0, %v2063
      %v2065 = vpop.f32.mrb[0].mxu0
      %2066 = vmatprep.mubr.f32.mxu0 0.0
      %2067 = vmatmul.mubr.f32.gmra.mrb[0].mxu0 %v1849
      %v2068 = vpop.f32.mrb[0].mxu0
      %v2069 = vadd.f32 0.0, %v2068
      %v2070 = vpop.f32.mrb[0].mxu0
      %2071 = vmatprep.mubr.f32.mxu0 0.0
      %2072 = vmatmul.mubr.f32.gmra.mrb[0].mxu0 %v1852
      %v2073 = vpop.f32.mrb[0].mxu0
      %v2074 = vadd.f32 0.0, %v2073
      %v2075 = vpop.f32.mrb[0].mxu0
      %2076 = vmatprep.mubr.f32.mxu0 0.0
      %2077 = vmatmul.mubr.f32.gmra.mrb[0].mxu0 %v1855
      %v2078 = vpop.f32.mrb[0].mxu0
      %v2079 = vadd.f32 0.0, %v2078
      %v2080 = vpop.f32.mrb[0].mxu0
      %2081 = vdwg.mxu0
      %v2082 = vadd.f32 %v1695, %v1924
      %v2083 = vadd.f32 %v1696, %v1929
      %v2084 = vadd.f32 %v1697, %v1934
      %v2085 = vadd.f32 %v1698, %v1939
      %v2086 = vadd.f32 %v1699, %v1944
      %v2087 = vadd.f32 %v1700, %v1949
      %v2088 = vadd.f32 %v1701, %v1954
      %v2089 = vadd.f32 %v1702, %v1959
      %v2090 = vadd.f32 %v1703, %v1964
      %v2091 = vadd.f32 %v1704, %v1969
      %v2092 = vadd.f32 %v1705, %v1974
      %v2093 = vadd.f32 %v1706, %v1979
      %v2094 = vadd.f32 %v1707, %v1984
      %v2095 = vadd.f32 %v1708, %v1989
      %v2096 = vadd.f32 %v1709, %v1994
      %v2097 = vadd.f32 %v1710, %v1999
      %v2098 = vadd.f32 %v1711, %v2004
      %v2099 = vadd.f32 %v1712, %v2009
      %v2100 = vadd.f32 %v1713, %v2014
      %v2101 = vadd.f32 %v1714, %v2019
      %v2102 = vadd.f32 %v1715, %v2024
      %v2103 = vadd.f32 %v1716, %v2029
      %v2104 = vadd.f32 %v1717, %v2034
      %v2105 = vadd.f32 %v1718, %v2039
      %v2106 = vadd.f32 %v1719, %v2044
      %v2107 = vadd.f32 %v1720, %v2049
      %v2108 = vadd.f32 %v1721, %v2054
      %v2109 = vadd.f32 %v1722, %v2059
      %v2110 = vadd.f32 %v1723, %v2064
      %v2111 = vadd.f32 %v1724, %v2069
      %v2112 = vadd.f32 %v1725, %v2074
      %v2113 = vadd.f32 %v1726, %v2079
      %v2114 = vld [vmem:[%s1339 + $0x2] sm:$0xff]
      %v2115 = vld [vmem:[%s1339 + $0xa] sm:$0xff]
      %v2116 = vld [vmem:[%s1339 + $0x1a] sm:$0xff]
      %v2117 = vld [vmem:[%s1339 + $0x22] sm:$0xff]
      %v2118 = vld [vmem:[%s1339 + $0x32] sm:$0xff]
      %v2119 = vld [vmem:[%s1339 + $0x3a] sm:$0xff]
      %v2120 = vld [vmem:[%s1339 + $0x4a] sm:$0xff]
      %v2121 = vld [vmem:[%s1339 + $0x52] sm:$0xff]
      %v2122 = vld [vmem:[%s1339 + $0x62] sm:$0xff]
      %v2123 = vld [vmem:[%s1339 + $0x6a] sm:$0xff]
      %v2124 = vld [vmem:[%s1339 + $0x7a] sm:$0xff]
      %v2125 = vld [vmem:[%s1339 + $0x82] sm:$0xff]
      %v2126 = vld [vmem:[%s1339 + $0x92] sm:$0xff]
      %v2127 = vld [vmem:[%s1339 + $0x9a] sm:$0xff]
      %v2128 = vld [vmem:[%s1339 + $0xaa] sm:$0xff]
      %v2129 = vld [vmem:[%s1339 + $0xb2] sm:$0xff]
      %v2130 = vld [vmem:[%s1339 + $0xc2] sm:$0xff]
      %v2131 = vld [vmem:[%s1339 + $0xca] sm:$0xff]
      %v2132 = vld [vmem:[%s1339 + $0xda] sm:$0xff]
      %v2133 = vld [vmem:[%s1339 + $0xe2] sm:$0xff]
      %v2134 = vld [vmem:[%s1339 + $0xf2] sm:$0xff]
      %v2135 = vld [vmem:[%s1339 + $0xfa] sm:$0xff]
      %v2136 = vld [vmem:[%s1339 + $0x10a] sm:$0xff]
      %v2137 = vld [vmem:[%s1339 + $0x112] sm:$0xff]
      %v2138 = vld [vmem:[%s1339 + $0x122] sm:$0xff]
      %v2139 = vld [vmem:[%s1339 + $0x12a] sm:$0xff]
      %v2140 = vld [vmem:[%s1339 + $0x13a] sm:$0xff]
      %v2141 = vld [vmem:[%s1339 + $0x142] sm:$0xff]
      %v2142 = vld [vmem:[%s1339 + $0x152] sm:$0xff]
      %v2143 = vld [vmem:[%s1339 + $0x15a] sm:$0xff]
      %v2144 = vld [vmem:[%s1339 + $0x16a] sm:$0xff]
      %v2145 = vld [vmem:[%s1339 + $0x172] sm:$0xff]
      %s2146 = scalar_lea.vmem %s1, 40
      %v2147 = vld [vmem:[%s2146] sm:$0xff]
      %v2149 = vsel %vm309, %v2114, 0
      %v2152 = vsel %vm309, %v2115, 0
      %v2155 = vsel %vm309, %v2116, 0
      %v2158 = vsel %vm309, %v2117, 0
      %v2161 = vsel %vm309, %v2118, 0
      %v2164 = vsel %vm309, %v2119, 0
      %v2167 = vsel %vm309, %v2120, 0
      %v2170 = vsel %vm309, %v2121, 0
      %v2173 = vsel %vm309, %v2122, 0
      %v2176 = vsel %vm309, %v2123, 0
      %v2179 = vsel %vm309, %v2124, 0
      %v2182 = vsel %vm309, %v2125, 0
      %v2185 = vsel %vm309, %v2126, 0
      %v2188 = vsel %vm309, %v2127, 0
      %v2191 = vsel %vm309, %v2128, 0
      %v2194 = vsel %vm309, %v2129, 0
      %v2197 = vsel %vm309, %v2130, 0
      %v2200 = vsel %vm309, %v2131, 0
      %v2203 = vsel %vm309, %v2132, 0
      %v2206 = vsel %vm309, %v2133, 0
      %v2209 = vsel %vm309, %v2134, 0
      %v2212 = vsel %vm309, %v2135, 0
      %v2215 = vsel %vm309, %v2136, 0
      %v2218 = vsel %vm309, %v2137, 0
      %v2221 = vsel %vm309, %v2138, 0
      %v2224 = vsel %vm309, %v2139, 0
      %v2227 = vsel %vm309, %v2140, 0
      %v2230 = vsel %vm309, %v2141, 0
      %v2233 = vsel %vm309, %v2142, 0
      %v2236 = vsel %vm309, %v2143, 0
      %v2239 = vsel %vm309, %v2144, 0
      %v2242 = vsel %vm309, %v2145, 0
      %2244 = vmatprep.subr.mxu0 0.0
      %2245 = vmatpush1.msra.mxu0 %v2147
      %2246 = vmatprep.subr.mxu0 0.0
      %2247 = vmatpush1.msra.mxu0 0.0
      %2248 = vmatprep.subr.mxu0 0.0
      %2249 = vmatpush1.msra.mxu0 0.0
      %2250 = vmatprep.subr.mxu0 0.0
      %2251 = vmatpush1.msra.mxu0 0.0
      %2252 = vmatprep.subr.mxu0 0.0
      %2253 = vmatpush1.msra.mxu0 0.0
      %2254 = vmatprep.subr.mxu0 0.0
      %2255 = vmatpush1.msra.mxu0 0.0
      %2256 = vmatprep.subr.mxu0 0.0
      %2257 = vmatpush1.msra.mxu0 0.0
      %2258 = vmatprep.subr.mxu0 0.0
      %2259 = vmatpush1.msra.mxu0 0.0
      %2260 = vmatprep.subr.mxu0 0.0
      %2261 = vmatpush1.msra.mxu0 0.0
      %2262 = vmatprep.subr.mxu0 0.0
      %2263 = vmatpush1.msra.mxu0 0.0
      %2264 = vmatprep.subr.mxu0 0.0
      %2265 = vmatpush1.msra.mxu0 0.0
      %2266 = vmatprep.subr.mxu0 0.0
      %2267 = vmatpush1.msra.mxu0 0.0
      %2268 = vmatprep.subr.mxu0 0.0
      %2269 = vmatpush1.msra.mxu0 0.0
      %2270 = vmatprep.subr.mxu0 0.0
      %2271 = vmatpush1.msra.mxu0 0.0
      %2272 = vmatprep.subr.mxu0 0.0
      %2273 = vmatpush1.msra.mxu0 0.0
      %2274 = vmatprep.subr.mxu0 0.0
      %2275 = vmatpush1.msra.mxu0 0.0
      %2276 = vmatprep.subr.mxu0 0.0
      %2277 = vmatpush1.msra.mxu0 0.0
      %2278 = vmatprep.subr.mxu0 0.0
      %2279 = vmatpush1.msra.mxu0 0.0
      %2280 = vmatprep.subr.mxu0 0.0
      %2281 = vmatpush1.msra.mxu0 0.0
      %2282 = vmatprep.subr.mxu0 0.0
      %2283 = vmatpush1.msra.mxu0 0.0
      %2284 = vmatprep.subr.mxu0 0.0
      %2285 = vmatpush1.msra.mxu0 0.0
      %2286 = vmatprep.subr.mxu0 0.0
      %2287 = vmatpush1.msra.mxu0 0.0
      %2288 = vmatprep.subr.mxu0 0.0
      %2289 = vmatpush1.msra.mxu0 0.0
      %2290 = vmatprep.subr.mxu0 0.0
      %2291 = vmatpush1.msra.mxu0 0.0
      %2292 = vmatprep.subr.mxu0 0.0
      %2293 = vmatpush1.msra.mxu0 0.0
      %2294 = vmatprep.subr.mxu0 0.0
      %2295 = vmatpush1.msra.mxu0 0.0
      %2296 = vmatprep.subr.mxu0 0.0
      %2297 = vmatpush1.msra.mxu0 0.0
      %2298 = vmatprep.subr.mxu0 0.0
      %2299 = vmatpush1.msra.mxu0 0.0
      %2300 = vmatprep.subr.mxu0 0.0
      %2301 = vmatpush1.msra.mxu0 0.0
      %2302 = vmatprep.subr.mxu0 0.0
      %2303 = vmatpush1.msra.mxu0 0.0
      %2304 = vmatprep.subr.mxu0 0.0
      %2305 = vmatpush1.msra.mxu0 0.0
      %2306 = vmatprep.subr.mxu0 0.0
      %2307 = vmatpush1.msra.mxu0 0.0
      %2308 = vmatprep.mubr.f32.mxu0 0.0
      %2309 = vmatmul.mubr.f32.gmra.mrb[0].mxu0 %v2149
      %v2310 = vpop.f32.mrb[0].mxu0
      %v2311 = vadd.f32 0.0, %v2310
      %v2312 = vpop.f32.mrb[0].mxu0
      %2313 = vmatprep.mubr.f32.mxu0 0.0
      %2314 = vmatmul.mubr.f32.gmra.mrb[0].mxu0 %v2152
      %v2315 = vpop.f32.mrb[0].mxu0
      %v2316 = vadd.f32 0.0, %v2315
      %v2317 = vpop.f32.mrb[0].mxu0
      %2318 = vmatprep.mubr.f32.mxu0 0.0
      %2319 = vmatmul.mubr.f32.gmra.mrb[0].mxu0 %v2155
      %v2320 = vpop.f32.mrb[0].mxu0
      %v2321 = vadd.f32 0.0, %v2320
      %v2322 = vpop.f32.mrb[0].mxu0
      %2323 = vmatprep.mubr.f32.mxu0 0.0
      %2324 = vmatmul.mubr.f32.gmra.mrb[0].mxu0 %v2158
      %v2325 = vpop.f32.mrb[0].mxu0
      %v2326 = vadd.f32 0.0, %v2325
      %v2327 = vpop.f32.mrb[0].mxu0
      %2328 = vmatprep.mubr.f32.mxu0 0.0
      %2329 = vmatmul.mubr.f32.gmra.mrb[0].mxu0 %v2161
      %v2330 = vpop.f32.mrb[0].mxu0
      %v2331 = vadd.f32 0.0, %v2330
      %v2332 = vpop.f32.mrb[0].mxu0
      %2333 = vmatprep.mubr.f32.mxu0 0.0
      %2334 = vmatmul.mubr.f32.gmra.mrb[0].mxu0 %v2164
      %v2335 = vpop.f32.mrb[0].mxu0
      %v2336 = vadd.f32 0.0, %v2335
      %v2337 = vpop.f32.mrb[0].mxu0
      %2338 = vmatprep.mubr.f32.mxu0 0.0
      %2339 = vmatmul.mubr.f32.gmra.mrb[0].mxu0 %v2167
      %v2340 = vpop.f32.mrb[0].mxu0
      %v2341 = vadd.f32 0.0, %v2340
      %v2342 = vpop.f32.mrb[0].mxu0
      %2343 = vmatprep.mubr.f32.mxu0 0.0
      %2344 = vmatmul.mubr.f32.gmra.mrb[0].mxu0 %v2170
      %v2345 = vpop.f32.mrb[0].mxu0
      %v2346 = vadd.f32 0.0, %v2345
      %v2347 = vpop.f32.mrb[0].mxu0
      %2348 = vmatprep.mubr.f32.mxu0 0.0
      %2349 = vmatmul.mubr.f32.gmra.mrb[0].mxu0 %v2173
      %v2350 = vpop.f32.mrb[0].mxu0
      %v2351 = vadd.f32 0.0, %v2350
      %v2352 = vpop.f32.mrb[0].mxu0
      %2353 = vmatprep.mubr.f32.mxu0 0.0
      %2354 = vmatmul.mubr.f32.gmra.mrb[0].mxu0 %v2176
      %v2355 = vpop.f32.mrb[0].mxu0
      %v2356 = vadd.f32 0.0, %v2355
      %v2357 = vpop.f32.mrb[0].mxu0
      %2358 = vmatprep.mubr.f32.mxu0 0.0
      %2359 = vmatmul.mubr.f32.gmra.mrb[0].mxu0 %v2179
      %v2360 = vpop.f32.mrb[0].mxu0
      %v2361 = vadd.f32 0.0, %v2360
      %v2362 = vpop.f32.mrb[0].mxu0
      %2363 = vmatprep.mubr.f32.mxu0 0.0
      %2364 = vmatmul.mubr.f32.gmra.mrb[0].mxu0 %v2182
      %v2365 = vpop.f32.mrb[0].mxu0
      %v2366 = vadd.f32 0.0, %v2365
      %v2367 = vpop.f32.mrb[0].mxu0
      %2368 = vmatprep.mubr.f32.mxu0 0.0
      %2369 = vmatmul.mubr.f32.gmra.mrb[0].mxu0 %v2185
      %v2370 = vpop.f32.mrb[0].mxu0
      %v2371 = vadd.f32 0.0, %v2370
      %v2372 = vpop.f32.mrb[0].mxu0
      %2373 = vmatprep.mubr.f32.mxu0 0.0
      %2374 = vmatmul.mubr.f32.gmra.mrb[0].mxu0 %v2188
      %v2375 = vpop.f32.mrb[0].mxu0
      %v2376 = vadd.f32 0.0, %v2375
      %v2377 = vpop.f32.mrb[0].mxu0
      %2378 = vmatprep.mubr.f32.mxu0 0.0
      %2379 = vmatmul.mubr.f32.gmra.mrb[0].mxu0 %v2191
      %v2380 = vpop.f32.mrb[0].mxu0
      %v2381 = vadd.f32 0.0, %v2380
      %v2382 = vpop.f32.mrb[0].mxu0
      %2383 = vmatprep.mubr.f32.mxu0 0.0
      %2384 = vmatmul.mubr.f32.gmra.mrb[0].mxu0 %v2194
      %v2385 = vpop.f32.mrb[0].mxu0
      %v2386 = vadd.f32 0.0, %v2385
      %v2387 = vpop.f32.mrb[0].mxu0
      %2388 = vmatprep.mubr.f32.mxu0 0.0
      %2389 = vmatmul.mubr.f32.gmra.mrb[0].mxu0 %v2197
      %v2390 = vpop.f32.mrb[0].mxu0
      %v2391 = vadd.f32 0.0, %v2390
      %v2392 = vpop.f32.mrb[0].mxu0
      %2393 = vmatprep.mubr.f32.mxu0 0.0
      %2394 = vmatmul.mubr.f32.gmra.mrb[0].mxu0 %v2200
      %v2395 = vpop.f32.mrb[0].mxu0
      %v2396 = vadd.f32 0.0, %v2395
      %v2397 = vpop.f32.mrb[0].mxu0
      %2398 = vmatprep.mubr.f32.mxu0 0.0
      %2399 = vmatmul.mubr.f32.gmra.mrb[0].mxu0 %v2203
      %v2400 = vpop.f32.mrb[0].mxu0
      %v2401 = vadd.f32 0.0, %v2400
      %v2402 = vpop.f32.mrb[0].mxu0
      %2403 = vmatprep.mubr.f32.mxu0 0.0
      %2404 = vmatmul.mubr.f32.gmra.mrb[0].mxu0 %v2206
      %v2405 = vpop.f32.mrb[0].mxu0
      %v2406 = vadd.f32 0.0, %v2405
      %v2407 = vpop.f32.mrb[0].mxu0
      %2408 = vmatprep.mubr.f32.mxu0 0.0
      %2409 = vmatmul.mubr.f32.gmra.mrb[0].mxu0 %v2209
      %v2410 = vpop.f32.mrb[0].mxu0
      %v2411 = vadd.f32 0.0, %v2410
      %v2412 = vpop.f32.mrb[0].mxu0
      %2413 = vmatprep.mubr.f32.mxu0 0.0
      %2414 = vmatmul.mubr.f32.gmra.mrb[0].mxu0 %v2212
      %v2415 = vpop.f32.mrb[0].mxu0
      %v2416 = vadd.f32 0.0, %v2415
      %v2417 = vpop.f32.mrb[0].mxu0
      %2418 = vmatprep.mubr.f32.mxu0 0.0
      %2419 = vmatmul.mubr.f32.gmra.mrb[0].mxu0 %v2215
      %v2420 = vpop.f32.mrb[0].mxu0
      %v2421 = vadd.f32 0.0, %v2420
      %v2422 = vpop.f32.mrb[0].mxu0
      %2423 = vmatprep.mubr.f32.mxu0 0.0
      %2424 = vmatmul.mubr.f32.gmra.mrb[0].mxu0 %v2218
      %v2425 = vpop.f32.mrb[0].mxu0
      %v2426 = vadd.f32 0.0, %v2425
      %v2427 = vpop.f32.mrb[0].mxu0
      %2428 = vmatprep.mubr.f32.mxu0 0.0
      %2429 = vmatmul.mubr.f32.gmra.mrb[0].mxu0 %v2221
      %v2430 = vpop.f32.mrb[0].mxu0
      %v2431 = vadd.f32 0.0, %v2430
      %v2432 = vpop.f32.mrb[0].mxu0
      %2433 = vmatprep.mubr.f32.mxu0 0.0
      %2434 = vmatmul.mubr.f32.gmra.mrb[0].mxu0 %v2224
      %v2435 = vpop.f32.mrb[0].mxu0
      %v2436 = vadd.f32 0.0, %v2435
      %v2437 = vpop.f32.mrb[0].mxu0
      %2438 = vmatprep.mubr.f32.mxu0 0.0
      %2439 = vmatmul.mubr.f32.gmra.mrb[0].mxu0 %v2227
      %v2440 = vpop.f32.mrb[0].mxu0
      %v2441 = vadd.f32 0.0, %v2440
      %v2442 = vpop.f32.mrb[0].mxu0
      %2443 = vmatprep.mubr.f32.mxu0 0.0
      %2444 = vmatmul.mubr.f32.gmra.mrb[0].mxu0 %v2230
      %v2445 = vpop.f32.mrb[0].mxu0
      %v2446 = vadd.f32 0.0, %v2445
      %v2447 = vpop.f32.mrb[0].mxu0
      %2448 = vmatprep.mubr.f32.mxu0 0.0
      %2449 = vmatmul.mubr.f32.gmra.mrb[0].mxu0 %v2233
      %v2450 = vpop.f32.mrb[0].mxu0
      %v2451 = vadd.f32 0.0, %v2450
      %v2452 = vpop.f32.mrb[0].mxu0
      %2453 = vmatprep.mubr.f32.mxu0 0.0
      %2454 = vmatmul.mubr.f32.gmra.mrb[0].mxu0 %v2236
      %v2455 = vpop.f32.mrb[0].mxu0
      %v2456 = vadd.f32 0.0, %v2455
      %v2457 = vpop.f32.mrb[0].mxu0
      %2458 = vmatprep.mubr.f32.mxu0 0.0
      %2459 = vmatmul.mubr.f32.gmra.mrb[0].mxu0 %v2239
      %v2460 = vpop.f32.mrb[0].mxu0
      %v2461 = vadd.f32 0.0, %v2460
      %v2462 = vpop.f32.mrb[0].mxu0
      %2463 = vmatprep.mubr.f32.mxu0 0.0
      %2464 = vmatmul.mubr.f32.gmra.mrb[0].mxu0 %v2242
      %v2465 = vpop.f32.mrb[0].mxu0
      %v2466 = vadd.f32 0.0, %v2465
      %v2467 = vpop.f32.mrb[0].mxu0
      %2468 = vdwg.mxu0
      %v2469 = vadd.f32 %v2082, %v2311
      %v2470 = vadd.f32 %v2083, %v2316
      %v2471 = vadd.f32 %v2084, %v2321
      %v2472 = vadd.f32 %v2085, %v2326
      %v2473 = vadd.f32 %v2086, %v2331
      %v2474 = vadd.f32 %v2087, %v2336
      %v2475 = vadd.f32 %v2088, %v2341
      %v2476 = vadd.f32 %v2089, %v2346
      %v2477 = vadd.f32 %v2090, %v2351
      %v2478 = vadd.f32 %v2091, %v2356
      %v2479 = vadd.f32 %v2092, %v2361
      %v2480 = vadd.f32 %v2093, %v2366
      %v2481 = vadd.f32 %v2094, %v2371
      %v2482 = vadd.f32 %v2095, %v2376
      %v2483 = vadd.f32 %v2096, %v2381
      %v2484 = vadd.f32 %v2097, %v2386
      %v2485 = vadd.f32 %v2098, %v2391
      %v2486 = vadd.f32 %v2099, %v2396
      %v2487 = vadd.f32 %v2100, %v2401
      %v2488 = vadd.f32 %v2101, %v2406
      %v2489 = vadd.f32 %v2102, %v2411
      %v2490 = vadd.f32 %v2103, %v2416
      %v2491 = vadd.f32 %v2104, %v2421
      %v2492 = vadd.f32 %v2105, %v2426
      %v2493 = vadd.f32 %v2106, %v2431
      %v2494 = vadd.f32 %v2107, %v2436
      %v2495 = vadd.f32 %v2108, %v2441
      %v2496 = vadd.f32 %v2109, %v2446
      %v2497 = vadd.f32 %v2110, %v2451
      %v2498 = vadd.f32 %v2111, %v2456
      %v2499 = vadd.f32 %v2112, %v2461
      %v2500 = vadd.f32 %v2113, %v2466
      %s2501 = scalar_lea.vmem %s230, 48
      %v2502 = vld [vmem:[%s2501] sm:$0xff]
      %v2503 = vld [vmem:[%s2501 + $0x8] sm:$0xff]
      %v2504 = vld [vmem:[%s2501 + $0x18] sm:$0xff]
      %v2505 = vld [vmem:[%s2501 + $0x20] sm:$0xff]
      %v2506 = vld [vmem:[%s2501 + $0x30] sm:$0xff]
      %v2507 = vld [vmem:[%s2501 + $0x38] sm:$0xff]
      %v2508 = vld [vmem:[%s2501 + $0x48] sm:$0xff]
      %v2509 = vld [vmem:[%s2501 + $0x50] sm:$0xff]
      %v2510 = vld [vmem:[%s2501 + $0x60] sm:$0xff]
      %v2511 = vld [vmem:[%s2501 + $0x68] sm:$0xff]
      %v2512 = vld [vmem:[%s2501 + $0x78] sm:$0xff]
      %v2513 = vld [vmem:[%s2501 + $0x80] sm:$0xff]
      %v2514 = vld [vmem:[%s2501 + $0x90] sm:$0xff]
      %v2515 = vld [vmem:[%s2501 + $0x98] sm:$0xff]
      %v2516 = vld [vmem:[%s2501 + $0xa8] sm:$0xff]
      %v2517 = vld [vmem:[%s2501 + $0xb0] sm:$0xff]
      %v2518 = vld [vmem:[%s2501 + $0xc0] sm:$0xff]
      %v2519 = vld [vmem:[%s2501 + $0xc8] sm:$0xff]
      %v2520 = vld [vmem:[%s2501 + $0xd8] sm:$0xff]
      %v2521 = vld [vmem:[%s2501 + $0xe0] sm:$0xff]
      %v2522 = vld [vmem:[%s2501 + $0xf0] sm:$0xff]
      %v2523 = vld [vmem:[%s2501 + $0xf8] sm:$0xff]
      %v2524 = vld [vmem:[%s2501 + $0x108] sm:$0xff]
      %v2525 = vld [vmem:[%s2501 + $0x110] sm:$0xff]
      %v2526 = vld [vmem:[%s2501 + $0x120] sm:$0xff]
      %v2527 = vld [vmem:[%s2501 + $0x128] sm:$0xff]
      %v2528 = vld [vmem:[%s2501 + $0x138] sm:$0xff]
      %v2529 = vld [vmem:[%s2501 + $0x140] sm:$0xff]
      %v2530 = vld [vmem:[%s2501 + $0x150] sm:$0xff]
      %v2531 = vld [vmem:[%s2501 + $0x158] sm:$0xff]
      %v2532 = vld [vmem:[%s2501 + $0x168] sm:$0xff]
      %v2533 = vld [vmem:[%s2501 + $0x170] sm:$0xff]
      %s2534 = scalar_lea.vmem %s1, 48
      %v2535 = vld [vmem:[%s2534] sm:$0xff]
      %v2537 = vsel %vm309, %v2502, 0
      %v2540 = vsel %vm309, %v2503, 0
      %v2543 = vsel %vm309, %v2504, 0
      %v2546 = vsel %vm309, %v2505, 0
      %v2549 = vsel %vm309, %v2506, 0
      %v2552 = vsel %vm309, %v2507, 0
      %v2555 = vsel %vm309, %v2508, 0
      %v2558 = vsel %vm309, %v2509, 0
      %v2561 = vsel %vm309, %v2510, 0
      %v2564 = vsel %vm309, %v2511, 0
      %v2567 = vsel %vm309, %v2512, 0
      %v2570 = vsel %vm309, %v2513, 0
      %v2573 = vsel %vm309, %v2514, 0
      %v2576 = vsel %vm309, %v2515, 0
      %v2579 = vsel %vm309, %v2516, 0
      %v2582 = vsel %vm309, %v2517, 0
      %v2585 = vsel %vm309, %v2518, 0
      %v2588 = vsel %vm309, %v2519, 0
      %v2591 = vsel %vm309, %v2520, 0
      %v2594 = vsel %vm309, %v2521, 0
      %v2597 = vsel %vm309, %v2522, 0
      %v2600 = vsel %vm309, %v2523, 0
      %v2603 = vsel %vm309, %v2524, 0
      %v2606 = vsel %vm309, %v2525, 0
      %v2609 = vsel %vm309, %v2526, 0
      %v2612 = vsel %vm309, %v2527, 0
      %v2615 = vsel %vm309, %v2528, 0
      %v2618 = vsel %vm309, %v2529, 0
      %v2621 = vsel %vm309, %v2530, 0
      %v2624 = vsel %vm309, %v2531, 0
      %v2627 = vsel %vm309, %v2532, 0
      %v2630 = vsel %vm309, %v2533, 0
      %2632 = vmatprep.subr.mxu0 0.0
      %2633 = vmatpush1.msra.mxu0 %v2535
      %2634 = vmatprep.subr.mxu0 0.0
      %2635 = vmatpush1.msra.mxu0 0.0
      %2636 = vmatprep.subr.mxu0 0.0
      %2637 = vmatpush1.msra.mxu0 0.0
      %2638 = vmatprep.subr.mxu0 0.0
      %2639 = vmatpush1.msra.mxu0 0.0
      %2640 = vmatprep.subr.mxu0 0.0
      %2641 = vmatpush1.msra.mxu0 0.0
      %2642 = vmatprep.subr.mxu0 0.0
      %2643 = vmatpush1.msra.mxu0 0.0
      %2644 = vmatprep.subr.mxu0 0.0
      %2645 = vmatpush1.msra.mxu0 0.0
      %2646 = vmatprep.subr.mxu0 0.0
      %2647 = vmatpush1.msra.mxu0 0.0
      %2648 = vmatprep.subr.mxu0 0.0
      %2649 = vmatpush1.msra.mxu0 0.0
      %2650 = vmatprep.subr.mxu0 0.0
      %2651 = vmatpush1.msra.mxu0 0.0
      %2652 = vmatprep.subr.mxu0 0.0
      %2653 = vmatpush1.msra.mxu0 0.0
      %2654 = vmatprep.subr.mxu0 0.0
      %2655 = vmatpush1.msra.mxu0 0.0
      %2656 = vmatprep.subr.mxu0 0.0
      %2657 = vmatpush1.msra.mxu0 0.0
      %2658 = vmatprep.subr.mxu0 0.0
      %2659 = vmatpush1.msra.mxu0 0.0
      %2660 = vmatprep.subr.mxu0 0.0
      %2661 = vmatpush1.msra.mxu0 0.0
      %2662 = vmatprep.subr.mxu0 0.0
      %2663 = vmatpush1.msra.mxu0 0.0
      %2664 = vmatprep.subr.mxu0 0.0
      %2665 = vmatpush1.msra.mxu0 0.0
      %2666 = vmatprep.subr.mxu0 0.0
      %2667 = vmatpush1.msra.mxu0 0.0
      %2668 = vmatprep.subr.mxu0 0.0
      %2669 = vmatpush1.msra.mxu0 0.0
      %2670 = vmatprep.subr.mxu0 0.0
      %2671 = vmatpush1.msra.mxu0 0.0
      %2672 = vmatprep.subr.mxu0 0.0
      %2673 = vmatpush1.msra.mxu0 0.0
      %2674 = vmatprep.subr.mxu0 0.0
      %2675 = vmatpush1.msra.mxu0 0.0
      %2676 = vmatprep.subr.mxu0 0.0
      %2677 = vmatpush1.msra.mxu0 0.0
      %2678 = vmatprep.subr.mxu0 0.0
      %2679 = vmatpush1.msra.mxu0 0.0
      %2680 = vmatprep.subr.mxu0 0.0
      %2681 = vmatpush1.msra.mxu0 0.0
      %2682 = vmatprep.subr.mxu0 0.0
      %2683 = vmatpush1.msra.mxu0 0.0
      %2684 = vmatprep.subr.mxu0 0.0
      %2685 = vmatpush1.msra.mxu0 0.0
      %2686 = vmatprep.subr.mxu0 0.0
      %2687 = vmatpush1.msra.mxu0 0.0
      %2688 = vmatprep.subr.mxu0 0.0
      %2689 = vmatpush1.msra.mxu0 0.0
      %2690 = vmatprep.subr.mxu0 0.0
      %2691 = vmatpush1.msra.mxu0 0.0
      %2692 = vmatprep.subr.mxu0 0.0
      %2693 = vmatpush1.msra.mxu0 0.0
      %2694 = vmatprep.subr.mxu0 0.0
      %2695 = vmatpush1.msra.mxu0 0.0
      %2696 = vmatprep.mubr.f32.mxu0 0.0
      %2697 = vmatmul.mubr.f32.gmra.mrb[0].mxu0 %v2537
      %v2698 = vpop.f32.mrb[0].mxu0
      %v2699 = vadd.f32 0.0, %v2698
      %v2700 = vpop.f32.mrb[0].mxu0
      %2701 = vmatprep.mubr.f32.mxu0 0.0
      %2702 = vmatmul.mubr.f32.gmra.mrb[0].mxu0 %v2540
      %v2703 = vpop.f32.mrb[0].mxu0
      %v2704 = vadd.f32 0.0, %v2703
      %v2705 = vpop.f32.mrb[0].mxu0
      %2706 = vmatprep.mubr.f32.mxu0 0.0
      %2707 = vmatmul.mubr.f32.gmra.mrb[0].mxu0 %v2543
      %v2708 = vpop.f32.mrb[0].mxu0
      %v2709 = vadd.f32 0.0, %v2708
      %v2710 = vpop.f32.mrb[0].mxu0
      %2711 = vmatprep.mubr.f32.mxu0 0.0
      %2712 = vmatmul.mubr.f32.gmra.mrb[0].mxu0 %v2546
      %v2713 = vpop.f32.mrb[0].mxu0
      %v2714 = vadd.f32 0.0, %v2713
      %v2715 = vpop.f32.mrb[0].mxu0
      %2716 = vmatprep.mubr.f32.mxu0 0.0
      %2717 = vmatmul.mubr.f32.gmra.mrb[0].mxu0 %v2549
      %v2718 = vpop.f32.mrb[0].mxu0
      %v2719 = vadd.f32 0.0, %v2718
      %v2720 = vpop.f32.mrb[0].mxu0
      %2721 = vmatprep.mubr.f32.mxu0 0.0
      %2722 = vmatmul.mubr.f32.gmra.mrb[0].mxu0 %v2552
      %v2723 = vpop.f32.mrb[0].mxu0
      %v2724 = vadd.f32 0.0, %v2723
      %v2725 = vpop.f32.mrb[0].mxu0
      %2726 = vmatprep.mubr.f32.mxu0 0.0
      %2727 = vmatmul.mubr.f32.gmra.mrb[0].mxu0 %v2555
      %v2728 = vpop.f32.mrb[0].mxu0
      %v2729 = vadd.f32 0.0, %v2728
      %v2730 = vpop.f32.mrb[0].mxu0
      %2731 = vmatprep.mubr.f32.mxu0 0.0
      %2732 = vmatmul.mubr.f32.gmra.mrb[0].mxu0 %v2558
      %v2733 = vpop.f32.mrb[0].mxu0
      %v2734 = vadd.f32 0.0, %v2733
      %v2735 = vpop.f32.mrb[0].mxu0
      %2736 = vmatprep.mubr.f32.mxu0 0.0
      %2737 = vmatmul.mubr.f32.gmra.mrb[0].mxu0 %v2561
      %v2738 = vpop.f32.mrb[0].mxu0
      %v2739 = vadd.f32 0.0, %v2738
      %v2740 = vpop.f32.mrb[0].mxu0
      %2741 = vmatprep.mubr.f32.mxu0 0.0
      %2742 = vmatmul.mubr.f32.gmra.mrb[0].mxu0 %v2564
      %v2743 = vpop.f32.mrb[0].mxu0
      %v2744 = vadd.f32 0.0, %v2743
      %v2745 = vpop.f32.mrb[0].mxu0
      %2746 = vmatprep.mubr.f32.mxu0 0.0
      %2747 = vmatmul.mubr.f32.gmra.mrb[0].mxu0 %v2567
      %v2748 = vpop.f32.mrb[0].mxu0
      %v2749 = vadd.f32 0.0, %v2748
      %v2750 = vpop.f32.mrb[0].mxu0
      %2751 = vmatprep.mubr.f32.mxu0 0.0
      %2752 = vmatmul.mubr.f32.gmra.mrb[0].mxu0 %v2570
      %v2753 = vpop.f32.mrb[0].mxu0
      %v2754 = vadd.f32 0.0, %v2753
      %v2755 = vpop.f32.mrb[0].mxu0
      %2756 = vmatprep.mubr.f32.mxu0 0.0
      %2757 = vmatmul.mubr.f32.gmra.mrb[0].mxu0 %v2573
      %v2758 = vpop.f32.mrb[0].mxu0
      %v2759 = vadd.f32 0.0, %v2758
      %v2760 = vpop.f32.mrb[0].mxu0
      %2761 = vmatprep.mubr.f32.mxu0 0.0
      %2762 = vmatmul.mubr.f32.gmra.mrb[0].mxu0 %v2576
      %v2763 = vpop.f32.mrb[0].mxu0
      %v2764 = vadd.f32 0.0, %v2763
      %v2765 = vpop.f32.mrb[0].mxu0
      %2766 = vmatprep.mubr.f32.mxu0 0.0
      %2767 = vmatmul.mubr.f32.gmra.mrb[0].mxu0 %v2579
      %v2768 = vpop.f32.mrb[0].mxu0
      %v2769 = vadd.f32 0.0, %v2768
      %v2770 = vpop.f32.mrb[0].mxu0
      %2771 = vmatprep.mubr.f32.mxu0 0.0
      %2772 = vmatmul.mubr.f32.gmra.mrb[0].mxu0 %v2582
      %v2773 = vpop.f32.mrb[0].mxu0
      %v2774 = vadd.f32 0.0, %v2773
      %v2775 = vpop.f32.mrb[0].mxu0
      %2776 = vmatprep.mubr.f32.mxu0 0.0
      %2777 = vmatmul.mubr.f32.gmra.mrb[0].mxu0 %v2585
      %v2778 = vpop.f32.mrb[0].mxu0
      %v2779 = vadd.f32 0.0, %v2778
      %v2780 = vpop.f32.mrb[0].mxu0
      %2781 = vmatprep.mubr.f32.mxu0 0.0
      %2782 = vmatmul.mubr.f32.gmra.mrb[0].mxu0 %v2588
      %v2783 = vpop.f32.mrb[0].mxu0
      %v2784 = vadd.f32 0.0, %v2783
      %v2785 = vpop.f32.mrb[0].mxu0
      %2786 = vmatprep.mubr.f32.mxu0 0.0
      %2787 = vmatmul.mubr.f32.gmra.mrb[0].mxu0 %v2591
      %v2788 = vpop.f32.mrb[0].mxu0
      %v2789 = vadd.f32 0.0, %v2788
      %v2790 = vpop.f32.mrb[0].mxu0
      %2791 = vmatprep.mubr.f32.mxu0 0.0
      %2792 = vmatmul.mubr.f32.gmra.mrb[0].mxu0 %v2594
      %v2793 = vpop.f32.mrb[0].mxu0
      %v2794 = vadd.f32 0.0, %v2793
      %v2795 = vpop.f32.mrb[0].mxu0
      %2796 = vmatprep.mubr.f32.mxu0 0.0
      %2797 = vmatmul.mubr.f32.gmra.mrb[0].mxu0 %v2597
      %v2798 = vpop.f32.mrb[0].mxu0
      %v2799 = vadd.f32 0.0, %v2798
      %v2800 = vpop.f32.mrb[0].mxu0
      %2801 = vmatprep.mubr.f32.mxu0 0.0
      %2802 = vmatmul.mubr.f32.gmra.mrb[0].mxu0 %v2600
      %v2803 = vpop.f32.mrb[0].mxu0
      %v2804 = vadd.f32 0.0, %v2803
      %v2805 = vpop.f32.mrb[0].mxu0
      %2806 = vmatprep.mubr.f32.mxu0 0.0
      %2807 = vmatmul.mubr.f32.gmra.mrb[0].mxu0 %v2603
      %v2808 = vpop.f32.mrb[0].mxu0
      %v2809 = vadd.f32 0.0, %v2808
      %v2810 = vpop.f32.mrb[0].mxu0
      %2811 = vmatprep.mubr.f32.mxu0 0.0
      %2812 = vmatmul.mubr.f32.gmra.mrb[0].mxu0 %v2606
      %v2813 = vpop.f32.mrb[0].mxu0
      %v2814 = vadd.f32 0.0, %v2813
      %v2815 = vpop.f32.mrb[0].mxu0
      %2816 = vmatprep.mubr.f32.mxu0 0.0
      %2817 = vmatmul.mubr.f32.gmra.mrb[0].mxu0 %v2609
      %v2818 = vpop.f32.mrb[0].mxu0
      %v2819 = vadd.f32 0.0, %v2818
      %v2820 = vpop.f32.mrb[0].mxu0
      %2821 = vmatprep.mubr.f32.mxu0 0.0
      %2822 = vmatmul.mubr.f32.gmra.mrb[0].mxu0 %v2612
      %v2823 = vpop.f32.mrb[0].mxu0
      %v2824 = vadd.f32 0.0, %v2823
      %v2825 = vpop.f32.mrb[0].mxu0
      %2826 = vmatprep.mubr.f32.mxu0 0.0
      %2827 = vmatmul.mubr.f32.gmra.mrb[0].mxu0 %v2615
      %v2828 = vpop.f32.mrb[0].mxu0
      %v2829 = vadd.f32 0.0, %v2828
      %v2830 = vpop.f32.mrb[0].mxu0
      %2831 = vmatprep.mubr.f32.mxu0 0.0
      %2832 = vmatmul.mubr.f32.gmra.mrb[0].mxu0 %v2618
      %v2833 = vpop.f32.mrb[0].mxu0
      %v2834 = vadd.f32 0.0, %v2833
      %v2835 = vpop.f32.mrb[0].mxu0
      %2836 = vmatprep.mubr.f32.mxu0 0.0
      %2837 = vmatmul.mubr.f32.gmra.mrb[0].mxu0 %v2621
      %v2838 = vpop.f32.mrb[0].mxu0
      %v2839 = vadd.f32 0.0, %v2838
      %v2840 = vpop.f32.mrb[0].mxu0
      %2841 = vmatprep.mubr.f32.mxu0 0.0
      %2842 = vmatmul.mubr.f32.gmra.mrb[0].mxu0 %v2624
      %v2843 = vpop.f32.mrb[0].mxu0
      %v2844 = vadd.f32 0.0, %v2843
      %v2845 = vpop.f32.mrb[0].mxu0
      %2846 = vmatprep.mubr.f32.mxu0 0.0
      %2847 = vmatmul.mubr.f32.gmra.mrb[0].mxu0 %v2627
      %v2848 = vpop.f32.mrb[0].mxu0
      %v2849 = vadd.f32 0.0, %v2848
      %v2850 = vpop.f32.mrb[0].mxu0
      %2851 = vmatprep.mubr.f32.mxu0 0.0
      %2852 = vmatmul.mubr.f32.gmra.mrb[0].mxu0 %v2630
      %v2853 = vpop.f32.mrb[0].mxu0
      %v2854 = vadd.f32 0.0, %v2853
      %v2855 = vpop.f32.mrb[0].mxu0
      %2856 = vdwg.mxu0
      %v2857 = vadd.f32 %v2469, %v2699
      %v2858 = vadd.f32 %v2470, %v2704
      %v2859 = vadd.f32 %v2471, %v2709
      %v2860 = vadd.f32 %v2472, %v2714
      %v2861 = vadd.f32 %v2473, %v2719
      %v2862 = vadd.f32 %v2474, %v2724
      %v2863 = vadd.f32 %v2475, %v2729
      %v2864 = vadd.f32 %v2476, %v2734
      %v2865 = vadd.f32 %v2477, %v2739
      %v2866 = vadd.f32 %v2478, %v2744
      %v2867 = vadd.f32 %v2479, %v2749
      %v2868 = vadd.f32 %v2480, %v2754
      %v2869 = vadd.f32 %v2481, %v2759
      %v2870 = vadd.f32 %v2482, %v2764
      %v2871 = vadd.f32 %v2483, %v2769
      %v2872 = vadd.f32 %v2484, %v2774
      %v2873 = vadd.f32 %v2485, %v2779
      %v2874 = vadd.f32 %v2486, %v2784
      %v2875 = vadd.f32 %v2487, %v2789
      %v2876 = vadd.f32 %v2488, %v2794
      %v2877 = vadd.f32 %v2489, %v2799
      %v2878 = vadd.f32 %v2490, %v2804
      %v2879 = vadd.f32 %v2491, %v2809
      %v2880 = vadd.f32 %v2492, %v2814
      %v2881 = vadd.f32 %v2493, %v2819
      %v2882 = vadd.f32 %v2494, %v2824
      %v2883 = vadd.f32 %v2495, %v2829
      %v2884 = vadd.f32 %v2496, %v2834
      %v2885 = vadd.f32 %v2497, %v2839
      %v2886 = vadd.f32 %v2498, %v2844
      %v2887 = vadd.f32 %v2499, %v2849
      %v2888 = vadd.f32 %v2500, %v2854
      %v2889 = vld [vmem:[%s2501 + $0x1] sm:$0xff]
      %v2890 = vld [vmem:[%s2501 + $0x9] sm:$0xff]
      %v2891 = vld [vmem:[%s2501 + $0x19] sm:$0xff]
      %v2892 = vld [vmem:[%s2501 + $0x21] sm:$0xff]
      %v2893 = vld [vmem:[%s2501 + $0x31] sm:$0xff]
      %v2894 = vld [vmem:[%s2501 + $0x39] sm:$0xff]
      %v2895 = vld [vmem:[%s2501 + $0x49] sm:$0xff]
      %v2896 = vld [vmem:[%s2501 + $0x51] sm:$0xff]
      %v2897 = vld [vmem:[%s2501 + $0x61] sm:$0xff]
      %v2898 = vld [vmem:[%s2501 + $0x69] sm:$0xff]
      %v2899 = vld [vmem:[%s2501 + $0x79] sm:$0xff]
      %v2900 = vld [vmem:[%s2501 + $0x81] sm:$0xff]
      %v2901 = vld [vmem:[%s2501 + $0x91] sm:$0xff]
      %v2902 = vld [vmem:[%s2501 + $0x99] sm:$0xff]
      %v2903 = vld [vmem:[%s2501 + $0xa9] sm:$0xff]
      %v2904 = vld [vmem:[%s2501 + $0xb1] sm:$0xff]
      %v2905 = vld [vmem:[%s2501 + $0xc1] sm:$0xff]
      %v2906 = vld [vmem:[%s2501 + $0xc9] sm:$0xff]
      %v2907 = vld [vmem:[%s2501 + $0xd9] sm:$0xff]
      %v2908 = vld [vmem:[%s2501 + $0xe1] sm:$0xff]
      %v2909 = vld [vmem:[%s2501 + $0xf1] sm:$0xff]
      %v2910 = vld [vmem:[%s2501 + $0xf9] sm:$0xff]
      %v2911 = vld [vmem:[%s2501 + $0x109] sm:$0xff]
      %v2912 = vld [vmem:[%s2501 + $0x111] sm:$0xff]
      %v2913 = vld [vmem:[%s2501 + $0x121] sm:$0xff]
      %v2914 = vld [vmem:[%s2501 + $0x129] sm:$0xff]
      %v2915 = vld [vmem:[%s2501 + $0x139] sm:$0xff]
      %v2916 = vld [vmem:[%s2501 + $0x141] sm:$0xff]
      %v2917 = vld [vmem:[%s2501 + $0x151] sm:$0xff]
      %v2918 = vld [vmem:[%s2501 + $0x159] sm:$0xff]
      %v2919 = vld [vmem:[%s2501 + $0x169] sm:$0xff]
      %v2920 = vld [vmem:[%s2501 + $0x171] sm:$0xff]
      %s2921 = scalar_lea.vmem %s1, 56
      %v2922 = vld [vmem:[%s2921] sm:$0xff]
      %v2924 = vsel %vm309, %v2889, 0
      %v2927 = vsel %vm309, %v2890, 0
      %v2930 = vsel %vm309, %v2891, 0
      %v2933 = vsel %vm309, %v2892, 0
      %v2936 = vsel %vm309, %v2893, 0
      %v2939 = vsel %vm309, %v2894, 0
      %v2942 = vsel %vm309, %v2895, 0
      %v2945 = vsel %vm309, %v2896, 0
      %v2948 = vsel %vm309, %v2897, 0
      %v2951 = vsel %vm309, %v2898, 0
      %v2954 = vsel %vm309, %v2899, 0
      %v2957 = vsel %vm309, %v2900, 0
      %v2960 = vsel %vm309, %v2901, 0
      %v2963 = vsel %vm309, %v2902, 0
      %v2966 = vsel %vm309, %v2903, 0
      %v2969 = vsel %vm309, %v2904, 0
      %v2972 = vsel %vm309, %v2905, 0
      %v2975 = vsel %vm309, %v2906, 0
      %v2978 = vsel %vm309, %v2907, 0
      %v2981 = vsel %vm309, %v2908, 0
      %v2984 = vsel %vm309, %v2909, 0
      %v2987 = vsel %vm309, %v2910, 0
      %v2990 = vsel %vm309, %v2911, 0
      %v2993 = vsel %vm309, %v2912, 0
      %v2996 = vsel %vm309, %v2913, 0
      %v2999 = vsel %vm309, %v2914, 0
      %v3002 = vsel %vm309, %v2915, 0
      %v3005 = vsel %vm309, %v2916, 0
      %v3008 = vsel %vm309, %v2917, 0
      %v3011 = vsel %vm309, %v2918, 0
      %v3014 = vsel %vm309, %v2919, 0
      %v3017 = vsel %vm309, %v2920, 0
      %3019 = vmatprep.subr.mxu0 0.0
      %3020 = vmatpush1.msra.mxu0 %v2922
      %3021 = vmatprep.subr.mxu0 0.0
      %3022 = vmatpush1.msra.mxu0 0.0
      %3023 = vmatprep.subr.mxu0 0.0
      %3024 = vmatpush1.msra.mxu0 0.0
      %3025 = vmatprep.subr.mxu0 0.0
      %3026 = vmatpush1.msra.mxu0 0.0
      %3027 = vmatprep.subr.mxu0 0.0
      %3028 = vmatpush1.msra.mxu0 0.0
      %3029 = vmatprep.subr.mxu0 0.0
      %3030 = vmatpush1.msra.mxu0 0.0
      %3031 = vmatprep.subr.mxu0 0.0
      %3032 = vmatpush1.msra.mxu0 0.0
      %3033 = vmatprep.subr.mxu0 0.0
      %3034 = vmatpush1.msra.mxu0 0.0
      %3035 = vmatprep.subr.mxu0 0.0
      %3036 = vmatpush1.msra.mxu0 0.0
      %3037 = vmatprep.subr.mxu0 0.0
      %3038 = vmatpush1.msra.mxu0 0.0
      %3039 = vmatprep.subr.mxu0 0.0
      %3040 = vmatpush1.msra.mxu0 0.0
      %3041 = vmatprep.subr.mxu0 0.0
      %3042 = vmatpush1.msra.mxu0 0.0
      %3043 = vmatprep.subr.mxu0 0.0
      %3044 = vmatpush1.msra.mxu0 0.0
      %3045 = vmatprep.subr.mxu0 0.0
      %3046 = vmatpush1.msra.mxu0 0.0
      %3047 = vmatprep.subr.mxu0 0.0
      %3048 = vmatpush1.msra.mxu0 0.0
      %3049 = vmatprep.subr.mxu0 0.0
      %3050 = vmatpush1.msra.mxu0 0.0
      %3051 = vmatprep.subr.mxu0 0.0
      %3052 = vmatpush1.msra.mxu0 0.0
      %3053 = vmatprep.subr.mxu0 0.0
      %3054 = vmatpush1.msra.mxu0 0.0
      %3055 = vmatprep.subr.mxu0 0.0
      %3056 = vmatpush1.msra.mxu0 0.0
      %3057 = vmatprep.subr.mxu0 0.0
      %3058 = vmatpush1.msra.mxu0 0.0
      %3059 = vmatprep.subr.mxu0 0.0
      %3060 = vmatpush1.msra.mxu0 0.0
      %3061 = vmatprep.subr.mxu0 0.0
      %3062 = vmatpush1.msra.mxu0 0.0
      %3063 = vmatprep.subr.mxu0 0.0
      %3064 = vmatpush1.msra.mxu0 0.0
      %3065 = vmatprep.subr.mxu0 0.0
      %3066 = vmatpush1.msra.mxu0 0.0
      %3067 = vmatprep.subr.mxu0 0.0
      %3068 = vmatpush1.msra.mxu0 0.0
      %3069 = vmatprep.subr.mxu0 0.0
      %3070 = vmatpush1.msra.mxu0 0.0
      %3071 = vmatprep.subr.mxu0 0.0
      %3072 = vmatpush1.msra.mxu0 0.0
      %3073 = vmatprep.subr.mxu0 0.0
      %3074 = vmatpush1.msra.mxu0 0.0
      %3075 = vmatprep.subr.mxu0 0.0
      %3076 = vmatpush1.msra.mxu0 0.0
      %3077 = vmatprep.subr.mxu0 0.0
      %3078 = vmatpush1.msra.mxu0 0.0
      %3079 = vmatprep.subr.mxu0 0.0
      %3080 = vmatpush1.msra.mxu0 0.0
      %3081 = vmatprep.subr.mxu0 0.0
      %3082 = vmatpush1.msra.mxu0 0.0
      %3083 = vmatprep.mubr.f32.mxu0 0.0
      %3084 = vmatmul.mubr.f32.gmra.mrb[0].mxu0 %v2924
      %v3085 = vpop.f32.mrb[0].mxu0
      %v3086 = vadd.f32 0.0, %v3085
      %v3087 = vpop.f32.mrb[0].mxu0
      %3088 = vmatprep.mubr.f32.mxu0 0.0
      %3089 = vmatmul.mubr.f32.gmra.mrb[0].mxu0 %v2927
      %v3090 = vpop.f32.mrb[0].mxu0
      %v3091 = vadd.f32 0.0, %v3090
      %v3092 = vpop.f32.mrb[0].mxu0
      %3093 = vmatprep.mubr.f32.mxu0 0.0
      %3094 = vmatmul.mubr.f32.gmra.mrb[0].mxu0 %v2930
      %v3095 = vpop.f32.mrb[0].mxu0
      %v3096 = vadd.f32 0.0, %v3095
      %v3097 = vpop.f32.mrb[0].mxu0
      %3098 = vmatprep.mubr.f32.mxu0 0.0
      %3099 = vmatmul.mubr.f32.gmra.mrb[0].mxu0 %v2933
      %v3100 = vpop.f32.mrb[0].mxu0
      %v3101 = vadd.f32 0.0, %v3100
      %v3102 = vpop.f32.mrb[0].mxu0
      %3103 = vmatprep.mubr.f32.mxu0 0.0
      %3104 = vmatmul.mubr.f32.gmra.mrb[0].mxu0 %v2936
      %v3105 = vpop.f32.mrb[0].mxu0
      %v3106 = vadd.f32 0.0, %v3105
      %v3107 = vpop.f32.mrb[0].mxu0
      %3108 = vmatprep.mubr.f32.mxu0 0.0
      %3109 = vmatmul.mubr.f32.gmra.mrb[0].mxu0 %v2939
      %v3110 = vpop.f32.mrb[0].mxu0
      %v3111 = vadd.f32 0.0, %v3110
      %v3112 = vpop.f32.mrb[0].mxu0
      %3113 = vmatprep.mubr.f32.mxu0 0.0
      %3114 = vmatmul.mubr.f32.gmra.mrb[0].mxu0 %v2942
      %v3115 = vpop.f32.mrb[0].mxu0
      %v3116 = vadd.f32 0.0, %v3115
      %v3117 = vpop.f32.mrb[0].mxu0
      %3118 = vmatprep.mubr.f32.mxu0 0.0
      %3119 = vmatmul.mubr.f32.gmra.mrb[0].mxu0 %v2945
      %v3120 = vpop.f32.mrb[0].mxu0
      %v3121 = vadd.f32 0.0, %v3120
      %v3122 = vpop.f32.mrb[0].mxu0
      %3123 = vmatprep.mubr.f32.mxu0 0.0
      %3124 = vmatmul.mubr.f32.gmra.mrb[0].mxu0 %v2948
      %v3125 = vpop.f32.mrb[0].mxu0
      %v3126 = vadd.f32 0.0, %v3125
      %v3127 = vpop.f32.mrb[0].mxu0
      %3128 = vmatprep.mubr.f32.mxu0 0.0
      %3129 = vmatmul.mubr.f32.gmra.mrb[0].mxu0 %v2951
      %v3130 = vpop.f32.mrb[0].mxu0
      %v3131 = vadd.f32 0.0, %v3130
      %v3132 = vpop.f32.mrb[0].mxu0
      %3133 = vmatprep.mubr.f32.mxu0 0.0
      %3134 = vmatmul.mubr.f32.gmra.mrb[0].mxu0 %v2954
      %v3135 = vpop.f32.mrb[0].mxu0
      %v3136 = vadd.f32 0.0, %v3135
      %v3137 = vpop.f32.mrb[0].mxu0
      %3138 = vmatprep.mubr.f32.mxu0 0.0
      %3139 = vmatmul.mubr.f32.gmra.mrb[0].mxu0 %v2957
      %v3140 = vpop.f32.mrb[0].mxu0
      %v3141 = vadd.f32 0.0, %v3140
      %v3142 = vpop.f32.mrb[0].mxu0
      %3143 = vmatprep.mubr.f32.mxu0 0.0
      %3144 = vmatmul.mubr.f32.gmra.mrb[0].mxu0 %v2960
      %v3145 = vpop.f32.mrb[0].mxu0
      %v3146 = vadd.f32 0.0, %v3145
      %v3147 = vpop.f32.mrb[0].mxu0
      %3148 = vmatprep.mubr.f32.mxu0 0.0
      %3149 = vmatmul.mubr.f32.gmra.mrb[0].mxu0 %v2963
      %v3150 = vpop.f32.mrb[0].mxu0
      %v3151 = vadd.f32 0.0, %v3150
      %v3152 = vpop.f32.mrb[0].mxu0
      %3153 = vmatprep.mubr.f32.mxu0 0.0
      %3154 = vmatmul.mubr.f32.gmra.mrb[0].mxu0 %v2966
      %v3155 = vpop.f32.mrb[0].mxu0
      %v3156 = vadd.f32 0.0, %v3155
      %v3157 = vpop.f32.mrb[0].mxu0
      %3158 = vmatprep.mubr.f32.mxu0 0.0
      %3159 = vmatmul.mubr.f32.gmra.mrb[0].mxu0 %v2969
      %v3160 = vpop.f32.mrb[0].mxu0
      %v3161 = vadd.f32 0.0, %v3160
      %v3162 = vpop.f32.mrb[0].mxu0
      %3163 = vmatprep.mubr.f32.mxu0 0.0
      %3164 = vmatmul.mubr.f32.gmra.mrb[0].mxu0 %v2972
      %v3165 = vpop.f32.mrb[0].mxu0
      %v3166 = vadd.f32 0.0, %v3165
      %v3167 = vpop.f32.mrb[0].mxu0
      %3168 = vmatprep.mubr.f32.mxu0 0.0
      %3169 = vmatmul.mubr.f32.gmra.mrb[0].mxu0 %v2975
      %v3170 = vpop.f32.mrb[0].mxu0
      %v3171 = vadd.f32 0.0, %v3170
      %v3172 = vpop.f32.mrb[0].mxu0
      %3173 = vmatprep.mubr.f32.mxu0 0.0
      %3174 = vmatmul.mubr.f32.gmra.mrb[0].mxu0 %v2978
      %v3175 = vpop.f32.mrb[0].mxu0
      %v3176 = vadd.f32 0.0, %v3175
      %v3177 = vpop.f32.mrb[0].mxu0
      %3178 = vmatprep.mubr.f32.mxu0 0.0
      %3179 = vmatmul.mubr.f32.gmra.mrb[0].mxu0 %v2981
      %v3180 = vpop.f32.mrb[0].mxu0
      %v3181 = vadd.f32 0.0, %v3180
      %v3182 = vpop.f32.mrb[0].mxu0
      %3183 = vmatprep.mubr.f32.mxu0 0.0
      %3184 = vmatmul.mubr.f32.gmra.mrb[0].mxu0 %v2984
      %v3185 = vpop.f32.mrb[0].mxu0
      %v3186 = vadd.f32 0.0, %v3185
      %v3187 = vpop.f32.mrb[0].mxu0
      %3188 = vmatprep.mubr.f32.mxu0 0.0
      %3189 = vmatmul.mubr.f32.gmra.mrb[0].mxu0 %v2987
      %v3190 = vpop.f32.mrb[0].mxu0
      %v3191 = vadd.f32 0.0, %v3190
      %v3192 = vpop.f32.mrb[0].mxu0
      %3193 = vmatprep.mubr.f32.mxu0 0.0
      %3194 = vmatmul.mubr.f32.gmra.mrb[0].mxu0 %v2990
      %v3195 = vpop.f32.mrb[0].mxu0
      %v3196 = vadd.f32 0.0, %v3195
      %v3197 = vpop.f32.mrb[0].mxu0
      %3198 = vmatprep.mubr.f32.mxu0 0.0
      %3199 = vmatmul.mubr.f32.gmra.mrb[0].mxu0 %v2993
      %v3200 = vpop.f32.mrb[0].mxu0
      %v3201 = vadd.f32 0.0, %v3200
      %v3202 = vpop.f32.mrb[0].mxu0
      %3203 = vmatprep.mubr.f32.mxu0 0.0
      %3204 = vmatmul.mubr.f32.gmra.mrb[0].mxu0 %v2996
      %v3205 = vpop.f32.mrb[0].mxu0
      %v3206 = vadd.f32 0.0, %v3205
      %v3207 = vpop.f32.mrb[0].mxu0
      %3208 = vmatprep.mubr.f32.mxu0 0.0
      %3209 = vmatmul.mubr.f32.gmra.mrb[0].mxu0 %v2999
      %v3210 = vpop.f32.mrb[0].mxu0
      %v3211 = vadd.f32 0.0, %v3210
      %v3212 = vpop.f32.mrb[0].mxu0
      %3213 = vmatprep.mubr.f32.mxu0 0.0
      %3214 = vmatmul.mubr.f32.gmra.mrb[0].mxu0 %v3002
      %v3215 = vpop.f32.mrb[0].mxu0
      %v3216 = vadd.f32 0.0, %v3215
      %v3217 = vpop.f32.mrb[0].mxu0
      %3218 = vmatprep.mubr.f32.mxu0 0.0
      %3219 = vmatmul.mubr.f32.gmra.mrb[0].mxu0 %v3005
      %v3220 = vpop.f32.mrb[0].mxu0
      %v3221 = vadd.f32 0.0, %v3220
      %v3222 = vpop.f32.mrb[0].mxu0
      %3223 = vmatprep.mubr.f32.mxu0 0.0
      %3224 = vmatmul.mubr.f32.gmra.mrb[0].mxu0 %v3008
      %v3225 = vpop.f32.mrb[0].mxu0
      %v3226 = vadd.f32 0.0, %v3225
      %v3227 = vpop.f32.mrb[0].mxu0
      %3228 = vmatprep.mubr.f32.mxu0 0.0
      %3229 = vmatmul.mubr.f32.gmra.mrb[0].mxu0 %v3011
      %v3230 = vpop.f32.mrb[0].mxu0
      %v3231 = vadd.f32 0.0, %v3230
      %v3232 = vpop.f32.mrb[0].mxu0
      %3233 = vmatprep.mubr.f32.mxu0 0.0
      %3234 = vmatmul.mubr.f32.gmra.mrb[0].mxu0 %v3014
      %v3235 = vpop.f32.mrb[0].mxu0
      %v3236 = vadd.f32 0.0, %v3235
      %v3237 = vpop.f32.mrb[0].mxu0
      %3238 = vmatprep.mubr.f32.mxu0 0.0
      %3239 = vmatmul.mubr.f32.gmra.mrb[0].mxu0 %v3017
      %v3240 = vpop.f32.mrb[0].mxu0
      %v3241 = vadd.f32 0.0, %v3240
      %v3242 = vpop.f32.mrb[0].mxu0
      %3243 = vdwg.mxu0
      %v3244 = vadd.f32 %v2857, %v3086
      %v3245 = vadd.f32 %v2858, %v3091
      %v3246 = vadd.f32 %v2859, %v3096
      %v3247 = vadd.f32 %v2860, %v3101
      %v3248 = vadd.f32 %v2861, %v3106
      %v3249 = vadd.f32 %v2862, %v3111
      %v3250 = vadd.f32 %v2863, %v3116
      %v3251 = vadd.f32 %v2864, %v3121
      %v3252 = vadd.f32 %v2865, %v3126
      %v3253 = vadd.f32 %v2866, %v3131
      %v3254 = vadd.f32 %v2867, %v3136
      %v3255 = vadd.f32 %v2868, %v3141
      %v3256 = vadd.f32 %v2869, %v3146
      %v3257 = vadd.f32 %v2870, %v3151
      %v3258 = vadd.f32 %v2871, %v3156
      %v3259 = vadd.f32 %v2872, %v3161
      %v3260 = vadd.f32 %v2873, %v3166
      %v3261 = vadd.f32 %v2874, %v3171
      %v3262 = vadd.f32 %v2875, %v3176
      %v3263 = vadd.f32 %v2876, %v3181
      %v3264 = vadd.f32 %v2877, %v3186
      %v3265 = vadd.f32 %v2878, %v3191
      %v3266 = vadd.f32 %v2879, %v3196
      %v3267 = vadd.f32 %v2880, %v3201
      %v3268 = vadd.f32 %v2881, %v3206
      %v3269 = vadd.f32 %v2882, %v3211
      %v3270 = vadd.f32 %v2883, %v3216
      %v3271 = vadd.f32 %v2884, %v3221
      %v3272 = vadd.f32 %v2885, %v3226
      %v3273 = vadd.f32 %v2886, %v3231
      %v3274 = vadd.f32 %v2887, %v3236
      %v3275 = vadd.f32 %v2888, %v3241
      %v3276 = vld [vmem:[%s2501 + $0x2] sm:$0xff]
      %v3277 = vld [vmem:[%s2501 + $0xa] sm:$0xff]
      %v3278 = vld [vmem:[%s2501 + $0x1a] sm:$0xff]
      %v3279 = vld [vmem:[%s2501 + $0x22] sm:$0xff]
      %v3280 = vld [vmem:[%s2501 + $0x32] sm:$0xff]
      %v3281 = vld [vmem:[%s2501 + $0x3a] sm:$0xff]
      %v3282 = vld [vmem:[%s2501 + $0x4a] sm:$0xff]
      %v3283 = vld [vmem:[%s2501 + $0x52] sm:$0xff]
      %v3284 = vld [vmem:[%s2501 + $0x62] sm:$0xff]
      %v3285 = vld [vmem:[%s2501 + $0x6a] sm:$0xff]
      %v3286 = vld [vmem:[%s2501 + $0x7a] sm:$0xff]
      %v3287 = vld [vmem:[%s2501 + $0x82] sm:$0xff]
      %v3288 = vld [vmem:[%s2501 + $0x92] sm:$0xff]
      %v3289 = vld [vmem:[%s2501 + $0x9a] sm:$0xff]
      %v3290 = vld [vmem:[%s2501 + $0xaa] sm:$0xff]
      %v3291 = vld [vmem:[%s2501 + $0xb2] sm:$0xff]
      %v3292 = vld [vmem:[%s2501 + $0xc2] sm:$0xff]
      %v3293 = vld [vmem:[%s2501 + $0xca] sm:$0xff]
      %v3294 = vld [vmem:[%s2501 + $0xda] sm:$0xff]
      %v3295 = vld [vmem:[%s2501 + $0xe2] sm:$0xff]
      %v3296 = vld [vmem:[%s2501 + $0xf2] sm:$0xff]
      %v3297 = vld [vmem:[%s2501 + $0xfa] sm:$0xff]
      %v3298 = vld [vmem:[%s2501 + $0x10a] sm:$0xff]
      %v3299 = vld [vmem:[%s2501 + $0x112] sm:$0xff]
      %v3300 = vld [vmem:[%s2501 + $0x122] sm:$0xff]
      %v3301 = vld [vmem:[%s2501 + $0x12a] sm:$0xff]
      %v3302 = vld [vmem:[%s2501 + $0x13a] sm:$0xff]
      %v3303 = vld [vmem:[%s2501 + $0x142] sm:$0xff]
      %v3304 = vld [vmem:[%s2501 + $0x152] sm:$0xff]
      %v3305 = vld [vmem:[%s2501 + $0x15a] sm:$0xff]
      %v3306 = vld [vmem:[%s2501 + $0x16a] sm:$0xff]
      %v3307 = vld [vmem:[%s2501 + $0x172] sm:$0xff]
      %s3308 = scalar_lea.vmem %s1, 64
      %v3309 = vld [vmem:[%s3308] sm:$0xff]
      %v3311 = vsel %vm309, %v3276, 0
      %v3314 = vsel %vm309, %v3277, 0
      %v3317 = vsel %vm309, %v3278, 0
      %v3320 = vsel %vm309, %v3279, 0
      %v3323 = vsel %vm309, %v3280, 0
      %v3326 = vsel %vm309, %v3281, 0
      %v3329 = vsel %vm309, %v3282, 0
      %v3332 = vsel %vm309, %v3283, 0
      %v3335 = vsel %vm309, %v3284, 0
      %v3338 = vsel %vm309, %v3285, 0
      %v3341 = vsel %vm309, %v3286, 0
      %v3344 = vsel %vm309, %v3287, 0
      %v3347 = vsel %vm309, %v3288, 0
      %v3350 = vsel %vm309, %v3289, 0
      %v3353 = vsel %vm309, %v3290, 0
      %v3356 = vsel %vm309, %v3291, 0
      %v3359 = vsel %vm309, %v3292, 0
      %v3362 = vsel %vm309, %v3293, 0
      %v3365 = vsel %vm309, %v3294, 0
      %v3368 = vsel %vm309, %v3295, 0
      %v3371 = vsel %vm309, %v3296, 0
      %v3374 = vsel %vm309, %v3297, 0
      %v3377 = vsel %vm309, %v3298, 0
      %v3380 = vsel %vm309, %v3299, 0
      %v3383 = vsel %vm309, %v3300, 0
      %v3386 = vsel %vm309, %v3301, 0
      %v3389 = vsel %vm309, %v3302, 0
      %v3392 = vsel %vm309, %v3303, 0
      %v3395 = vsel %vm309, %v3304, 0
      %v3398 = vsel %vm309, %v3305, 0
      %v3401 = vsel %vm309, %v3306, 0
      %v3404 = vsel %vm309, %v3307, 0
      %3406 = vmatprep.subr.mxu0 0.0
      %3407 = vmatpush1.msra.mxu0 %v3309
      %3408 = vmatprep.subr.mxu0 0.0
      %3409 = vmatpush1.msra.mxu0 0.0
      %3410 = vmatprep.subr.mxu0 0.0
      %3411 = vmatpush1.msra.mxu0 0.0
      %3412 = vmatprep.subr.mxu0 0.0
      %3413 = vmatpush1.msra.mxu0 0.0
      %3414 = vmatprep.subr.mxu0 0.0
      %3415 = vmatpush1.msra.mxu0 0.0
      %3416 = vmatprep.subr.mxu0 0.0
      %3417 = vmatpush1.msra.mxu0 0.0
      %3418 = vmatprep.subr.mxu0 0.0
      %3419 = vmatpush1.msra.mxu0 0.0
      %3420 = vmatprep.subr.mxu0 0.0
      %3421 = vmatpush1.msra.mxu0 0.0
      %3422 = vmatprep.subr.mxu0 0.0
      %3423 = vmatpush1.msra.mxu0 0.0
      %3424 = vmatprep.subr.mxu0 0.0
      %3425 = vmatpush1.msra.mxu0 0.0
      %3426 = vmatprep.subr.mxu0 0.0
      %3427 = vmatpush1.msra.mxu0 0.0
      %3428 = vmatprep.subr.mxu0 0.0
      %3429 = vmatpush1.msra.mxu0 0.0
      %3430 = vmatprep.subr.mxu0 0.0
      %3431 = vmatpush1.msra.mxu0 0.0
      %3432 = vmatprep.subr.mxu0 0.0
      %3433 = vmatpush1.msra.mxu0 0.0
      %3434 = vmatprep.subr.mxu0 0.0
      %3435 = vmatpush1.msra.mxu0 0.0
      %3436 = vmatprep.subr.mxu0 0.0
      %3437 = vmatpush1.msra.mxu0 0.0
      %3438 = vmatprep.subr.mxu0 0.0
      %3439 = vmatpush1.msra.mxu0 0.0
      %3440 = vmatprep.subr.mxu0 0.0
      %3441 = vmatpush1.msra.mxu0 0.0
      %3442 = vmatprep.subr.mxu0 0.0
      %3443 = vmatpush1.msra.mxu0 0.0
      %3444 = vmatprep.subr.mxu0 0.0
      %3445 = vmatpush1.msra.mxu0 0.0
      %3446 = vmatprep.subr.mxu0 0.0
      %3447 = vmatpush1.msra.mxu0 0.0
      %3448 = vmatprep.subr.mxu0 0.0
      %3449 = vmatpush1.msra.mxu0 0.0
      %3450 = vmatprep.subr.mxu0 0.0
      %3451 = vmatpush1.msra.mxu0 0.0
      %3452 = vmatprep.subr.mxu0 0.0
      %3453 = vmatpush1.msra.mxu0 0.0
      %3454 = vmatprep.subr.mxu0 0.0
      %3455 = vmatpush1.msra.mxu0 0.0
      %3456 = vmatprep.subr.mxu0 0.0
      %3457 = vmatpush1.msra.mxu0 0.0
      %3458 = vmatprep.subr.mxu0 0.0
      %3459 = vmatpush1.msra.mxu0 0.0
      %3460 = vmatprep.subr.mxu0 0.0
      %3461 = vmatpush1.msra.mxu0 0.0
      %3462 = vmatprep.subr.mxu0 0.0
      %3463 = vmatpush1.msra.mxu0 0.0
      %3464 = vmatprep.subr.mxu0 0.0
      %3465 = vmatpush1.msra.mxu0 0.0
      %3466 = vmatprep.subr.mxu0 0.0
      %3467 = vmatpush1.msra.mxu0 0.0
      %3468 = vmatprep.subr.mxu0 0.0
      %3469 = vmatpush1.msra.mxu0 0.0
      %3470 = vmatprep.mubr.f32.mxu0 0.0
      %3471 = vmatmul.mubr.f32.gmra.mrb[0].mxu0 %v3311
      %v3472 = vpop.f32.mrb[0].mxu0
      %v3473 = vadd.f32 0.0, %v3472
      %v3474 = vpop.f32.mrb[0].mxu0
      %3475 = vmatprep.mubr.f32.mxu0 0.0
      %3476 = vmatmul.mubr.f32.gmra.mrb[0].mxu0 %v3314
      %v3477 = vpop.f32.mrb[0].mxu0
      %v3478 = vadd.f32 0.0, %v3477
      %v3479 = vpop.f32.mrb[0].mxu0
      %3480 = vmatprep.mubr.f32.mxu0 0.0
      %3481 = vmatmul.mubr.f32.gmra.mrb[0].mxu0 %v3317
      %v3482 = vpop.f32.mrb[0].mxu0
      %v3483 = vadd.f32 0.0, %v3482
      %v3484 = vpop.f32.mrb[0].mxu0
      %3485 = vmatprep.mubr.f32.mxu0 0.0
      %3486 = vmatmul.mubr.f32.gmra.mrb[0].mxu0 %v3320
      %v3487 = vpop.f32.mrb[0].mxu0
      %v3488 = vadd.f32 0.0, %v3487
      %v3489 = vpop.f32.mrb[0].mxu0
      %3490 = vmatprep.mubr.f32.mxu0 0.0
      %3491 = vmatmul.mubr.f32.gmra.mrb[0].mxu0 %v3323
      %v3492 = vpop.f32.mrb[0].mxu0
      %v3493 = vadd.f32 0.0, %v3492
      %v3494 = vpop.f32.mrb[0].mxu0
      %3495 = vmatprep.mubr.f32.mxu0 0.0
      %3496 = vmatmul.mubr.f32.gmra.mrb[0].mxu0 %v3326
      %v3497 = vpop.f32.mrb[0].mxu0
      %v3498 = vadd.f32 0.0, %v3497
      %v3499 = vpop.f32.mrb[0].mxu0
      %3500 = vmatprep.mubr.f32.mxu0 0.0
      %3501 = vmatmul.mubr.f32.gmra.mrb[0].mxu0 %v3329
      %v3502 = vpop.f32.mrb[0].mxu0
      %v3503 = vadd.f32 0.0, %v3502
      %v3504 = vpop.f32.mrb[0].mxu0
      %3505 = vmatprep.mubr.f32.mxu0 0.0
      %3506 = vmatmul.mubr.f32.gmra.mrb[0].mxu0 %v3332
      %v3507 = vpop.f32.mrb[0].mxu0
      %v3508 = vadd.f32 0.0, %v3507
      %v3509 = vpop.f32.mrb[0].mxu0
      %3510 = vmatprep.mubr.f32.mxu0 0.0
      %3511 = vmatmul.mubr.f32.gmra.mrb[0].mxu0 %v3335
      %v3512 = vpop.f32.mrb[0].mxu0
      %v3513 = vadd.f32 0.0, %v3512
      %v3514 = vpop.f32.mrb[0].mxu0
      %3515 = vmatprep.mubr.f32.mxu0 0.0
      %3516 = vmatmul.mubr.f32.gmra.mrb[0].mxu0 %v3338
      %v3517 = vpop.f32.mrb[0].mxu0
      %v3518 = vadd.f32 0.0, %v3517
      %v3519 = vpop.f32.mrb[0].mxu0
      %3520 = vmatprep.mubr.f32.mxu0 0.0
      %3521 = vmatmul.mubr.f32.gmra.mrb[0].mxu0 %v3341
      %v3522 = vpop.f32.mrb[0].mxu0
      %v3523 = vadd.f32 0.0, %v3522
      %v3524 = vpop.f32.mrb[0].mxu0
      %3525 = vmatprep.mubr.f32.mxu0 0.0
      %3526 = vmatmul.mubr.f32.gmra.mrb[0].mxu0 %v3344
      %v3527 = vpop.f32.mrb[0].mxu0
      %v3528 = vadd.f32 0.0, %v3527
      %v3529 = vpop.f32.mrb[0].mxu0
      %3530 = vmatprep.mubr.f32.mxu0 0.0
      %3531 = vmatmul.mubr.f32.gmra.mrb[0].mxu0 %v3347
      %v3532 = vpop.f32.mrb[0].mxu0
      %v3533 = vadd.f32 0.0, %v3532
      %v3534 = vpop.f32.mrb[0].mxu0
      %3535 = vmatprep.mubr.f32.mxu0 0.0
      %3536 = vmatmul.mubr.f32.gmra.mrb[0].mxu0 %v3350
      %v3537 = vpop.f32.mrb[0].mxu0
      %v3538 = vadd.f32 0.0, %v3537
      %v3539 = vpop.f32.mrb[0].mxu0
      %3540 = vmatprep.mubr.f32.mxu0 0.0
      %3541 = vmatmul.mubr.f32.gmra.mrb[0].mxu0 %v3353
      %v3542 = vpop.f32.mrb[0].mxu0
      %v3543 = vadd.f32 0.0, %v3542
      %v3544 = vpop.f32.mrb[0].mxu0
      %3545 = vmatprep.mubr.f32.mxu0 0.0
      %3546 = vmatmul.mubr.f32.gmra.mrb[0].mxu0 %v3356
      %v3547 = vpop.f32.mrb[0].mxu0
      %v3548 = vadd.f32 0.0, %v3547
      %v3549 = vpop.f32.mrb[0].mxu0
      %3550 = vmatprep.mubr.f32.mxu0 0.0
      %3551 = vmatmul.mubr.f32.gmra.mrb[0].mxu0 %v3359
      %v3552 = vpop.f32.mrb[0].mxu0
      %v3553 = vadd.f32 0.0, %v3552
      %v3554 = vpop.f32.mrb[0].mxu0
      %3555 = vmatprep.mubr.f32.mxu0 0.0
      %3556 = vmatmul.mubr.f32.gmra.mrb[0].mxu0 %v3362
      %v3557 = vpop.f32.mrb[0].mxu0
      %v3558 = vadd.f32 0.0, %v3557
      %v3559 = vpop.f32.mrb[0].mxu0
      %3560 = vmatprep.mubr.f32.mxu0 0.0
      %3561 = vmatmul.mubr.f32.gmra.mrb[0].mxu0 %v3365
      %v3562 = vpop.f32.mrb[0].mxu0
      %v3563 = vadd.f32 0.0, %v3562
      %v3564 = vpop.f32.mrb[0].mxu0
      %3565 = vmatprep.mubr.f32.mxu0 0.0
      %3566 = vmatmul.mubr.f32.gmra.mrb[0].mxu0 %v3368
      %v3567 = vpop.f32.mrb[0].mxu0
      %v3568 = vadd.f32 0.0, %v3567
      %v3569 = vpop.f32.mrb[0].mxu0
      %3570 = vmatprep.mubr.f32.mxu0 0.0
      %3571 = vmatmul.mubr.f32.gmra.mrb[0].mxu0 %v3371
      %v3572 = vpop.f32.mrb[0].mxu0
      %v3573 = vadd.f32 0.0, %v3572
      %v3574 = vpop.f32.mrb[0].mxu0
      %3575 = vmatprep.mubr.f32.mxu0 0.0
      %3576 = vmatmul.mubr.f32.gmra.mrb[0].mxu0 %v3374
      %v3577 = vpop.f32.mrb[0].mxu0
      %v3578 = vadd.f32 0.0, %v3577
      %v3579 = vpop.f32.mrb[0].mxu0
      %3580 = vmatprep.mubr.f32.mxu0 0.0
      %3581 = vmatmul.mubr.f32.gmra.mrb[0].mxu0 %v3377
      %v3582 = vpop.f32.mrb[0].mxu0
      %v3583 = vadd.f32 0.0, %v3582
      %v3584 = vpop.f32.mrb[0].mxu0
      %3585 = vmatprep.mubr.f32.mxu0 0.0
      %3586 = vmatmul.mubr.f32.gmra.mrb[0].mxu0 %v3380
      %v3587 = vpop.f32.mrb[0].mxu0
      %v3588 = vadd.f32 0.0, %v3587
      %v3589 = vpop.f32.mrb[0].mxu0
      %3590 = vmatprep.mubr.f32.mxu0 0.0
      %3591 = vmatmul.mubr.f32.gmra.mrb[0].mxu0 %v3383
      %v3592 = vpop.f32.mrb[0].mxu0
      %v3593 = vadd.f32 0.0, %v3592
      %v3594 = vpop.f32.mrb[0].mxu0
      %3595 = vmatprep.mubr.f32.mxu0 0.0
      %3596 = vmatmul.mubr.f32.gmra.mrb[0].mxu0 %v3386
      %v3597 = vpop.f32.mrb[0].mxu0
      %v3598 = vadd.f32 0.0, %v3597
      %v3599 = vpop.f32.mrb[0].mxu0
      %3600 = vmatprep.mubr.f32.mxu0 0.0
      %3601 = vmatmul.mubr.f32.gmra.mrb[0].mxu0 %v3389
      %v3602 = vpop.f32.mrb[0].mxu0
      %v3603 = vadd.f32 0.0, %v3602
      %v3604 = vpop.f32.mrb[0].mxu0
      %3605 = vmatprep.mubr.f32.mxu0 0.0
      %3606 = vmatmul.mubr.f32.gmra.mrb[0].mxu0 %v3392
      %v3607 = vpop.f32.mrb[0].mxu0
      %v3608 = vadd.f32 0.0, %v3607
      %v3609 = vpop.f32.mrb[0].mxu0
      %3610 = vmatprep.mubr.f32.mxu0 0.0
      %3611 = vmatmul.mubr.f32.gmra.mrb[0].mxu0 %v3395
      %v3612 = vpop.f32.mrb[0].mxu0
      %v3613 = vadd.f32 0.0, %v3612
      %v3614 = vpop.f32.mrb[0].mxu0
      %3615 = vmatprep.mubr.f32.mxu0 0.0
      %3616 = vmatmul.mubr.f32.gmra.mrb[0].mxu0 %v3398
      %v3617 = vpop.f32.mrb[0].mxu0
      %v3618 = vadd.f32 0.0, %v3617
      %v3619 = vpop.f32.mrb[0].mxu0
      %3620 = vmatprep.mubr.f32.mxu0 0.0
      %3621 = vmatmul.mubr.f32.gmra.mrb[0].mxu0 %v3401
      %v3622 = vpop.f32.mrb[0].mxu0
      %v3623 = vadd.f32 0.0, %v3622
      %v3624 = vpop.f32.mrb[0].mxu0
      %3625 = vmatprep.mubr.f32.mxu0 0.0
      %3626 = vmatmul.mubr.f32.gmra.mrb[0].mxu0 %v3404
      %v3627 = vpop.f32.mrb[0].mxu0
      %v3628 = vadd.f32 0.0, %v3627
      %v3629 = vpop.f32.mrb[0].mxu0
      %3630 = vdwg.mxu0
      %v3631 = vadd.f32 %v3244, %v3473
      %v3632 = vadd.f32 %v3245, %v3478
      %v3633 = vadd.f32 %v3246, %v3483
      %v3634 = vadd.f32 %v3247, %v3488
      %v3635 = vadd.f32 %v3248, %v3493
      %v3636 = vadd.f32 %v3249, %v3498
      %v3637 = vadd.f32 %v3250, %v3503
      %v3638 = vadd.f32 %v3251, %v3508
      %v3639 = vadd.f32 %v3252, %v3513
      %v3640 = vadd.f32 %v3253, %v3518
      %v3641 = vadd.f32 %v3254, %v3523
      %v3642 = vadd.f32 %v3255, %v3528
      %v3643 = vadd.f32 %v3256, %v3533
      %v3644 = vadd.f32 %v3257, %v3538
      %v3645 = vadd.f32 %v3258, %v3543
      %v3646 = vadd.f32 %v3259, %v3548
      %v3647 = vadd.f32 %v3260, %v3553
      %v3648 = vadd.f32 %v3261, %v3558
      %v3649 = vadd.f32 %v3262, %v3563
      %v3650 = vadd.f32 %v3263, %v3568
      %v3651 = vadd.f32 %v3264, %v3573
      %v3652 = vadd.f32 %v3265, %v3578
      %v3653 = vadd.f32 %v3266, %v3583
      %v3654 = vadd.f32 %v3267, %v3588
      %v3655 = vadd.f32 %v3268, %v3593
      %v3656 = vadd.f32 %v3269, %v3598
      %v3657 = vadd.f32 %v3270, %v3603
      %v3658 = vadd.f32 %v3271, %v3608
      %v3659 = vadd.f32 %v3272, %v3613
      %v3660 = vadd.f32 %v3273, %v3618
      %v3661 = vadd.f32 %v3274, %v3623
      %v3662 = vadd.f32 %v3275, %v3628
      %v3663 = vld [vmem:[%s2] sm:$0x1]
      %v3665 = vlaneseq
      %v3666 = vshrl.u32 %v3665, 7
      %v3667 = vsub.s32 0, %v3666
      %v3668 = vrot.slane %v3663, %v3667
      %v3670 = vadd.f32 %v3631, %v3668
      %v3671 = vadd.f32 %v3632, %v3668
      %v3672 = vadd.f32 %v3633, %v3668
      %v3673 = vadd.f32 %v3634, %v3668
      %v3674 = vadd.f32 %v3635, %v3668
      %v3675 = vadd.f32 %v3636, %v3668
      %v3676 = vadd.f32 %v3637, %v3668
      %v3677 = vadd.f32 %v3638, %v3668
      %v3678 = vadd.f32 %v3639, %v3668
      %v3679 = vadd.f32 %v3640, %v3668
      %v3680 = vadd.f32 %v3641, %v3668
      %v3681 = vadd.f32 %v3642, %v3668
      %v3682 = vadd.f32 %v3643, %v3668
      %v3683 = vadd.f32 %v3644, %v3668
      %v3684 = vadd.f32 %v3645, %v3668
      %v3685 = vadd.f32 %v3646, %v3668
      %v3686 = vadd.f32 %v3647, %v3668
      %v3687 = vadd.f32 %v3648, %v3668
      %v3688 = vadd.f32 %v3649, %v3668
      %v3689 = vadd.f32 %v3650, %v3668
      %v3690 = vadd.f32 %v3651, %v3668
      %v3691 = vadd.f32 %v3652, %v3668
      %v3692 = vadd.f32 %v3653, %v3668
      %v3693 = vadd.f32 %v3654, %v3668
      %v3694 = vadd.f32 %v3655, %v3668
      %v3695 = vadd.f32 %v3656, %v3668
      %v3696 = vadd.f32 %v3657, %v3668
      %v3697 = vadd.f32 %v3658, %v3668
      %v3698 = vadd.f32 %v3659, %v3668
      %v3699 = vadd.f32 %v3660, %v3668
      %v3700 = vadd.f32 %v3661, %v3668
      %v3701 = vadd.f32 %v3662, %v3668
      %3702 = vst.msk [vmem:[%s235] sm:$0xff] %vm309, %v3670
      %3703 = vst.msk [vmem:[%s235 + $0x8] sm:$0xff] %vm309, %v3671
      %3704 = vst.msk [vmem:[%s235 + $0x10] sm:$0xff] %vm309, %v3672
      %3705 = vst.msk [vmem:[%s235 + $0x18] sm:$0xff] %vm309, %v3673
      %3706 = vst.msk [vmem:[%s235 + $0x20] sm:$0xff] %vm309, %v3674
      %3707 = vst.msk [vmem:[%s235 + $0x28] sm:$0xff] %vm309, %v3675
      %3708 = vst.msk [vmem:[%s235 + $0x30] sm:$0xff] %vm309, %v3676
      %3709 = vst.msk [vmem:[%s235 + $0x38] sm:$0xff] %vm309, %v3677
      %3710 = vst.msk [vmem:[%s235 + $0x40] sm:$0xff] %vm309, %v3678
      %3711 = vst.msk [vmem:[%s235 + $0x48] sm:$0xff] %vm309, %v3679
      %3712 = vst.msk [vmem:[%s235 + $0x50] sm:$0xff] %vm309, %v3680
      %3713 = vst.msk [vmem:[%s235 + $0x58] sm:$0xff] %vm309, %v3681
      %3714 = vst.msk [vmem:[%s235 + $0x60] sm:$0xff] %vm309, %v3682
      %3715 = vst.msk [vmem:[%s235 + $0x68] sm:$0xff] %vm309, %v3683
      %3716 = vst.msk [vmem:[%s235 + $0x70] sm:$0xff] %vm309, %v3684
      %3717 = vst.msk [vmem:[%s235 + $0x78] sm:$0xff] %vm309, %v3685
      %3718 = vst.msk [vmem:[%s235 + $0x80] sm:$0xff] %vm309, %v3686
      %3719 = vst.msk [vmem:[%s235 + $0x88] sm:$0xff] %vm309, %v3687
      %3720 = vst.msk [vmem:[%s235 + $0x90] sm:$0xff] %vm309, %v3688
      %3721 = vst.msk [vmem:[%s235 + $0x98] sm:$0xff] %vm309, %v3689
      %3722 = vst.msk [vmem:[%s235 + $0xa0] sm:$0xff] %vm309, %v3690
      %3723 = vst.msk [vmem:[%s235 + $0xa8] sm:$0xff] %vm309, %v3691
      %3724 = vst.msk [vmem:[%s235 + $0xb0] sm:$0xff] %vm309, %v3692
      %3725 = vst.msk [vmem:[%s235 + $0xb8] sm:$0xff] %vm309, %v3693
      %3726 = vst.msk [vmem:[%s235 + $0xc0] sm:$0xff] %vm309, %v3694
      %3727 = vst.msk [vmem:[%s235 + $0xc8] sm:$0xff] %vm309, %v3695
      %3728 = vst.msk [vmem:[%s235 + $0xd0] sm:$0xff] %vm309, %v3696
      %3729 = vst.msk [vmem:[%s235 + $0xd8] sm:$0xff] %vm309, %v3697
      %3730 = vst.msk [vmem:[%s235 + $0xe0] sm:$0xff] %vm309, %v3698
      %3731 = vst.msk [vmem:[%s235 + $0xe8] sm:$0xff] %vm309, %v3699
      %3732 = vst.msk [vmem:[%s235 + $0xf0] sm:$0xff] %vm309, %v3700
      %3733 = vst.msk [vmem:[%s235 + $0xf8] sm:$0xff] %vm309, %v3701
      %v3734 = vsel %vm309, %v3670, 0.0
      %v3735 = vsel %vm309, %v3671, 0.0
      %v3736 = vadd.f32 %v3734, %v3735
      %v3737 = vsel %vm309, %v3672, 0.0
      %v3738 = vadd.f32 %v3736, %v3737
      %v3739 = vsel %vm309, %v3673, 0.0
      %v3740 = vadd.f32 %v3738, %v3739
      %v3741 = vsel %vm309, %v3674, 0.0
      %v3742 = vadd.f32 %v3740, %v3741
      %v3743 = vsel %vm309, %v3675, 0.0
      %v3744 = vadd.f32 %v3742, %v3743
      %v3745 = vsel %vm309, %v3676, 0.0
      %v3746 = vadd.f32 %v3744, %v3745
      %v3747 = vsel %vm309, %v3677, 0.0
      %v3748 = vadd.f32 %v3746, %v3747
      %v3749 = vsel %vm309, %v3678, 0.0
      %v3750 = vadd.f32 %v3748, %v3749
      %v3751 = vsel %vm309, %v3679, 0.0
      %v3752 = vadd.f32 %v3750, %v3751
      %v3753 = vsel %vm309, %v3680, 0.0
      %v3754 = vadd.f32 %v3752, %v3753
      %v3755 = vsel %vm309, %v3681, 0.0
      %v3756 = vadd.f32 %v3754, %v3755
      %v3757 = vsel %vm309, %v3682, 0.0
      %v3758 = vadd.f32 %v3756, %v3757
      %v3759 = vsel %vm309, %v3683, 0.0
      %v3760 = vadd.f32 %v3758, %v3759
      %v3761 = vsel %vm309, %v3684, 0.0
      %v3762 = vadd.f32 %v3760, %v3761
      %v3763 = vsel %vm309, %v3685, 0.0
      %v3764 = vadd.f32 %v3762, %v3763
      %v3765 = vsel %vm309, %v3686, 0.0
      %v3766 = vadd.f32 %v3764, %v3765
      %v3767 = vsel %vm309, %v3687, 0.0
      %v3768 = vadd.f32 %v3766, %v3767
      %v3769 = vsel %vm309, %v3688, 0.0
      %v3770 = vadd.f32 %v3768, %v3769
      %v3771 = vsel %vm309, %v3689, 0.0
      %v3772 = vadd.f32 %v3770, %v3771
      %v3773 = vsel %vm309, %v3690, 0.0
      %v3774 = vadd.f32 %v3772, %v3773
      %v3775 = vsel %vm309, %v3691, 0.0
      %v3776 = vadd.f32 %v3774, %v3775
      %v3777 = vsel %vm309, %v3692, 0.0
      %v3778 = vadd.f32 %v3776, %v3777
      %v3779 = vsel %vm309, %v3693, 0.0
      %v3780 = vadd.f32 %v3778, %v3779
      %v3781 = vsel %vm309, %v3694, 0.0
      %v3782 = vadd.f32 %v3780, %v3781
      %v3783 = vsel %vm309, %v3695, 0.0
      %v3784 = vadd.f32 %v3782, %v3783
      %v3785 = vsel %vm309, %v3696, 0.0
      %v3786 = vadd.f32 %v3784, %v3785
      %v3787 = vsel %vm309, %v3697, 0.0
      %v3788 = vadd.f32 %v3786, %v3787
      %v3789 = vsel %vm309, %v3698, 0.0
      %v3790 = vadd.f32 %v3788, %v3789
      %v3791 = vsel %vm309, %v3699, 0.0
      %v3792 = vadd.f32 %v3790, %v3791
      %v3793 = vsel %vm309, %v3700, 0.0
      %v3794 = vadd.f32 %v3792, %v3793
      %v3795 = vsel %vm309, %v3701, 0.0
      %v3796 = vadd.f32 %v3794, %v3795
      %v3797 = vrot.slane %v3796, 4
      %v3798 = vadd.f32 %v3796, %v3797
      %v3799 = vrot.slane %v3798, 2
      %v3800 = vadd.f32 %v3798, %v3799
      %v3801 = vrot.slane %v3800, 1
      %v3802 = vadd.f32 %v3800, %v3801
      %vm3803 = vcmask 57344
      %3804 = vst.msk [vmem:[%s238] sm:$0x1] %vm3803, %v3802
      %v3805 = vmul.f32 %v3670, %v3670
      %v3806 = vmul.f32 %v3671, %v3671
      %v3807 = vmul.f32 %v3672, %v3672
      %v3808 = vmul.f32 %v3673, %v3673
      %v3809 = vmul.f32 %v3674, %v3674
      %v3810 = vmul.f32 %v3675, %v3675
      %v3811 = vmul.f32 %v3676, %v3676
      %v3812 = vmul.f32 %v3677, %v3677
      %v3813 = vmul.f32 %v3678, %v3678
      %v3814 = vmul.f32 %v3679, %v3679
      %v3815 = vmul.f32 %v3680, %v3680
      %v3816 = vmul.f32 %v3681, %v3681
      %v3817 = vmul.f32 %v3682, %v3682
      %v3818 = vmul.f32 %v3683, %v3683
      %v3819 = vmul.f32 %v3684, %v3684
      %v3820 = vmul.f32 %v3685, %v3685
      %v3821 = vmul.f32 %v3686, %v3686
      %v3822 = vmul.f32 %v3687, %v3687
      %v3823 = vmul.f32 %v3688, %v3688
      %v3824 = vmul.f32 %v3689, %v3689
      %v3825 = vmul.f32 %v3690, %v3690
      %v3826 = vmul.f32 %v3691, %v3691
      %v3827 = vmul.f32 %v3692, %v3692
      %v3828 = vmul.f32 %v3693, %v3693
      %v3829 = vmul.f32 %v3694, %v3694
      %v3830 = vmul.f32 %v3695, %v3695
      %v3831 = vmul.f32 %v3696, %v3696
      %v3832 = vmul.f32 %v3697, %v3697
      %v3833 = vmul.f32 %v3698, %v3698
      %v3834 = vmul.f32 %v3699, %v3699
      %v3835 = vmul.f32 %v3700, %v3700
      %v3836 = vmul.f32 %v3701, %v3701
      %v3837 = vsel %vm309, %v3805, 0.0
      %v3838 = vsel %vm309, %v3806, 0.0
      %v3839 = vadd.f32 %v3837, %v3838
      %v3840 = vsel %vm309, %v3807, 0.0
      %v3841 = vadd.f32 %v3839, %v3840
      %v3842 = vsel %vm309, %v3808, 0.0
      %v3843 = vadd.f32 %v3841, %v3842
      %v3844 = vsel %vm309, %v3809, 0.0
      %v3845 = vadd.f32 %v3843, %v3844
      %v3846 = vsel %vm309, %v3810, 0.0
      %v3847 = vadd.f32 %v3845, %v3846
      %v3848 = vsel %vm309, %v3811, 0.0
      %v3849 = vadd.f32 %v3847, %v3848
      %v3850 = vsel %vm309, %v3812, 0.0
      %v3851 = vadd.f32 %v3849, %v3850
      %v3852 = vsel %vm309, %v3813, 0.0
      %v3853 = vadd.f32 %v3851, %v3852
      %v3854 = vsel %vm309, %v3814, 0.0
      %v3855 = vadd.f32 %v3853, %v3854
      %v3856 = vsel %vm309, %v3815, 0.0
      %v3857 = vadd.f32 %v3855, %v3856
      %v3858 = vsel %vm309, %v3816, 0.0
      %v3859 = vadd.f32 %v3857, %v3858
      %v3860 = vsel %vm309, %v3817, 0.0
      %v3861 = vadd.f32 %v3859, %v3860
      %v3862 = vsel %vm309, %v3818, 0.0
      %v3863 = vadd.f32 %v3861, %v3862
      %v3864 = vsel %vm309, %v3819, 0.0
      %v3865 = vadd.f32 %v3863, %v3864
      %v3866 = vsel %vm309, %v3820, 0.0
      %v3867 = vadd.f32 %v3865, %v3866
      %v3868 = vsel %vm309, %v3821, 0.0
      %v3869 = vadd.f32 %v3867, %v3868
      %v3870 = vsel %vm309, %v3822, 0.0
      %v3871 = vadd.f32 %v3869, %v3870
      %v3872 = vsel %vm309, %v3823, 0.0
      %v3873 = vadd.f32 %v3871, %v3872
      %v3874 = vsel %vm309, %v3824, 0.0
      %v3875 = vadd.f32 %v3873, %v3874
      %v3876 = vsel %vm309, %v3825, 0.0
      %v3877 = vadd.f32 %v3875, %v3876
      %v3878 = vsel %vm309, %v3826, 0.0
      %v3879 = vadd.f32 %v3877, %v3878
      %v3880 = vsel %vm309, %v3827, 0.0
      %v3881 = vadd.f32 %v3879, %v3880
      %v3882 = vsel %vm309, %v3828, 0.0
      %v3883 = vadd.f32 %v3881, %v3882
      %v3884 = vsel %vm309, %v3829, 0.0
      %v3885 = vadd.f32 %v3883, %v3884
      %v3886 = vsel %vm309, %v3830, 0.0
      %v3887 = vadd.f32 %v3885, %v3886
      %v3888 = vsel %vm309, %v3831, 0.0
      %v3889 = vadd.f32 %v3887, %v3888
      %v3890 = vsel %vm309, %v3832, 0.0
      %v3891 = vadd.f32 %v3889, %v3890
      %v3892 = vsel %vm309, %v3833, 0.0
      %v3893 = vadd.f32 %v3891, %v3892
      %v3894 = vsel %vm309, %v3834, 0.0
      %v3895 = vadd.f32 %v3893, %v3894
      %v3896 = vsel %vm309, %v3835, 0.0
      %v3897 = vadd.f32 %v3895, %v3896
      %v3898 = vsel %vm309, %v3836, 0.0
      %v3899 = vadd.f32 %v3897, %v3898
      %v3900 = vrot.slane %v3899, 4
      %v3901 = vadd.f32 %v3899, %v3900
      %v3902 = vrot.slane %v3901, 2
      %v3903 = vadd.f32 %v3901, %v3902
      %v3904 = vrot.slane %v3903, 1
      %v3905 = vadd.f32 %v3903, %v3904
      %3906 = vst.msk [vmem:[%s241] sm:$0x1] %vm3803, %v3905
      %p3907 = scmp.lt.s32.totalorder %s17, 1
      %s3908 = scalar_select %p3907, %s17, 1
      %s3909 = smul.addr %s3908, 32
      %s3910 = smul.addr %s3909, 8
      %s3911 = scalar_lea.vmem %s3, %s3910
      %p3912 = scmp.lt.s32.totalorder %s17, 1
      %s3913 = scalar_select %p3912, %s17, 1
      %s3914 = scalar_lea.vmem %s4, %s3913
      %p3915 = scmp.lt.s32.totalorder %s17, 1
      %s3916 = scalar_select %p3915, %s17, 1
      %s3917 = scalar_lea.vmem %s5, %s3916
      // Predicated region
      $region33: #{conv_block_forward.6} parent=31 // pred_check
        %p3918 = pneg %p103
      $region34: #{conv_block_forward.6} parent=31 // pred_check_branch
        %3920 = sbr.rel (%p3918) target = $region36
      $region35: #{conv_block_forward.6} parent=31 // pred_region
        _
      $region36: #{conv_block_forward.6} parent=31 // pred_fallthru
        _
      // Predicated region
      $region37: #{conv_block_forward.6} parent=31 // pred_check
        %p3921 = pneg %p129
      $region38: #{conv_block_forward.6} parent=31 // pred_check_branch
        %3923 = sbr.rel (%p3921) target = $region40
      $region39: #{conv_block_forward.6} parent=31 // pred_region
        _
      $region40: #{conv_block_forward.6} parent=31 // pred_fallthru
        _
      // Predicated region
      $region41: #{conv_block_forward.6} parent=31 // pred_check
        %p3924 = pneg %p155
      $region42: #{conv_block_forward.6} parent=31 // pred_check_branch
        %3926 = sbr.rel (%p3924) target = $region44
      $region43: #{conv_block_forward.6} parent=31 // pred_region
        _
      $region44: #{conv_block_forward.6} parent=31 // pred_fallthru
        _
    $region32: #{conv_block_forward.6} parent=5 // pred_fallthru
      _
    %p3927 = scmp.le.s32.totalorder 2, %s12
    // Predicated region
    $region45: #{conv_block_forward.6} parent=5 // pred_check
      %p3928 = pneg %p3927
    $region46: #{conv_block_forward.6} parent=5 // pred_check_branch
      %3930 = sbr.rel (%p3928) target = $region48
    $region47: #{conv_block_forward.6} parent=5 // pred_region
      %s3931 = ssub.s32 %s12, 2
      // Predicated region
      $region49: #{conv_block_forward.6} parent=47 // pred_check
        %p3932 = pneg %p109
      $region50: #{conv_block_forward.6} parent=47 // pred_check_branch
        %3934 = sbr.rel (%p3932) target = $region52
      $region51: #{conv_block_forward.6} parent=47 // pred_region
        %p3935 = scmp.lt.s32.totalorder %s18, 1
        %s3936 = scalar_select %p3935, %s18, 1
        %s3937 = smul.addr %s3936, 32
        %s3938 = smul.addr %s3937, 8
        %s3939 = scalar_lea.vmem %s3, %s3938
      $region52: #{conv_block_forward.6} parent=47 // pred_fallthru
        _
      // Predicated region
      $region53: #{conv_block_forward.6} parent=47 // pred_check
        %p3940 = pneg %p135
      $region54: #{conv_block_forward.6} parent=47 // pred_check_branch
        %3942 = sbr.rel (%p3940) target = $region56
      $region55: #{conv_block_forward.6} parent=47 // pred_region
        %p3943 = scmp.lt.s32.totalorder %s18, 1
        %s3944 = scalar_select %p3943, %s18, 1
        %s3945 = scalar_lea.vmem %s4, %s3944
      $region56: #{conv_block_forward.6} parent=47 // pred_fallthru
        _
      // Predicated region
      $region57: #{conv_block_forward.6} parent=47 // pred_check
        %p3946 = pneg %p161
      $region58: #{conv_block_forward.6} parent=47 // pred_check_branch
        %3948 = sbr.rel (%p3946) target = $region60
      $region59: #{conv_block_forward.6} parent=47 // pred_region
        %p3949 = scmp.lt.s32.totalorder %s18, 1
        %s3950 = scalar_select %p3949, %s18, 1
        %s3951 = scalar_lea.vmem %s5, %s3950
      $region60: #{conv_block_forward.6} parent=47 // pred_fallthru
        _
    $region48: #{conv_block_forward.6} parent=5 // pred_fallthru
      _
  $region6: #{conv_block_forward.6} parent=0 // loop_footer
    %s16 = sadd.s32 1, %s12
  $region7: #{conv_block_forward.6} parent=0 // loop_footer_branch
    %11 = sbr.rel target = $region3
  $region8: #{conv_block_forward.6} parent=0 // loop_exit
    _

</llo_original>
